<compile_context>
chip_gen: v5e
topology: v5e:2x2
jax: 0.10.0
libtpu: 0.0.40
codegen_flags: <defaults>
</compile_context>

<pallas_src>
import jax
import jax.numpy as jnp
from jax.experimental import pallas as pl
from jax.experimental.pallas import tpu as pltpu


def _fcn_fused_kernel(x_ref, w_inc_ref, b_inc_ref, w_conv_ref, b_conv_ref,
                      w_outc_ref, b_outc_ref, o_ref, act_ref):
    """Whole FCN forward for one batch element, activations resident in VMEM.

    x_ref   : (1, H, W, 3)    input image (NHWC)
    w_*_ref : (9*C, C)        im2col-flattened weights (Cin/Cout zero-padded to C)
    b_*_ref : (1, C)          biases (zero-padded to C)
    o_ref   : (1, 3, H*W)     lane-dense output (reshapes to NCHW for free)
    act_ref : (H+2, W+2, C)   zero-padded activation scratch (VMEM)
    """
    H = x_ref.shape[1]
    W = x_ref.shape[2]
    cin0 = x_ref.shape[3]          # 3
    C = w_conv_ref.shape[1]        # 32
    cout = o_ref.shape[1]          # 3

    # Zero the padded scratch: the 1-pixel border implements 'same' padding and
    # stays zero because only the interior is ever rewritten.
    act_ref[...] = jnp.zeros_like(act_ref)

    # Layer-0 input goes into channels [0:cin0) of the interior; channels
    # [cin0:C) stay zero, matching the zero-padded Cin rows of w_inc.
    x0 = x_ref[0].astype(jnp.float32)                              # (H, W, 3)
    x0 = jnp.concatenate(
        [x0, jnp.zeros((H, W, C - cin0), jnp.float32)], axis=-1)   # (H, W, C)
    act_ref[1:H + 1, 1:W + 1, :] = x0

    def im2col():
        # (H*W, 9*C) patch: nine shifted (H*W, C) views concatenated on lanes.
        pieces = []
        for dy in range(3):
            for dx in range(3):
                pieces.append(
                    act_ref[dy:dy + H, dx:dx + W, :].reshape(H * W, C))
        return jnp.concatenate(pieces, axis=-1)

    def conv3x3_relu(w_ref, b_ref):
        # One K = 9*C MXU matmul per layer, f32 accumulation, bias + ReLU.
        acc = jnp.dot(im2col(), w_ref[...],
                      preferred_element_type=jnp.float32)          # (H*W, C)
        return jnp.maximum(acc + b_ref[...], 0.0)

    # inc
    a = conv3x3_relu(w_inc_ref, b_inc_ref)
    act_ref[1:H + 1, 1:W + 1, :] = a.reshape(H, W, C)
    # conv applied three times with the SAME weights (statically unrolled).
    for _ in range(3):
        a = conv3x3_relu(w_conv_ref, b_conv_ref)
        act_ref[1:H + 1, 1:W + 1, :] = a.reshape(H, W, C)
    # outc (Cout zero-padded to C; only the first `cout` columns are real).
    a = conv3x3_relu(w_outc_ref, b_outc_ref)                       # (H*W, C)
    a_t = jnp.transpose(a)                                         # (C, H*W)
    o_ref[...] = a_t[:cout, :].reshape(1, cout, H * W).astype(o_ref.dtype)


def fcn_forward(x_nchw, params):
    """Full FCN forward. x_nchw: (N, 3, H, W). Returns (N, 3, H, W)."""
    N, cin0, H, W = x_nchw.shape
    C = params["w_conv"].shape[-1]          # 32
    cout = params["w_outc"].shape[-1]       # 3

    # Tiny 3-channel layout reorg for the input (negligible vs. conv work).
    x_nhwc = jnp.transpose(x_nchw, (0, 2, 3, 1))                   # (N, H, W, 3)

    # Flatten weights for im2col; pad inc's Cin and outc's Cout/bias to C with
    # zeros so every layer uses the same (9*C, C) matmul shape.
    w_inc = jnp.pad(params["w_inc"],
                    ((0, 0), (0, 0), (0, C - cin0), (0, 0))).reshape(9 * C, C)
    b_inc = params["b_inc"].reshape(1, C)
    w_conv = params["w_conv"].reshape(9 * C, C)
    b_conv = params["b_conv"].reshape(1, C)
    w_outc = jnp.pad(params["w_outc"],
                     ((0, 0), (0, 0), (0, 0), (0, C - cout))).reshape(9 * C, C)
    b_outc = jnp.pad(params["b_outc"], (0, C - cout)).reshape(1, C)

    cost = pl.CostEstimate(
        flops=2 * N * H * W * (9 * C) * C * 5,
        transcendentals=0,
        bytes_accessed=4 * (N * H * W * cin0 + N * cout * H * W
                            + 3 * (9 * C * C + C)),
    )

    out_flat = pl.pallas_call(
        _fcn_fused_kernel,
        out_shape=jax.ShapeDtypeStruct((N, cout, H * W), x_nchw.dtype),
        grid_spec=pltpu.PrefetchScalarGridSpec(
            num_scalar_prefetch=0,
            grid=(N,),
            in_specs=[
                pl.BlockSpec((1, H, W, cin0), lambda n: (n, 0, 0, 0)),
                pl.BlockSpec((9 * C, C), lambda n: (0, 0)),
                pl.BlockSpec((1, C), lambda n: (0, 0)),
                pl.BlockSpec((9 * C, C), lambda n: (0, 0)),
                pl.BlockSpec((1, C), lambda n: (0, 0)),
                pl.BlockSpec((9 * C, C), lambda n: (0, 0)),
                pl.BlockSpec((1, C), lambda n: (0, 0)),
            ],
            out_specs=pl.BlockSpec((1, cout, H * W), lambda n: (n, 0, 0)),
            scratch_shapes=[pltpu.VMEM((H + 2, W + 2, C), jnp.float32)],
        ),
        compiler_params=pltpu.CompilerParams(
            dimension_semantics=("parallel",),
        ),
        cost_estimate=cost,
    )(x_nhwc, w_inc, b_inc, w_conv, b_conv, w_outc, b_outc)

    # (N, 3, H*W) -> (N, 3, H, W) is a free, layout-preserving reshape.
    return out_flat.reshape(N, cout, H, W)


def init_params(key):
    """Deterministic synthetic weights (shapes match the nn.Module)."""
    ks = jax.random.split(key, 6)

    def conv_w(k, cin, cout):
        # stored as (kh, kw, Cin, Cout)
        fan_in = cin * 3 * 3
        return (jax.random.normal(k, (3, 3, cin, cout), jnp.float32)
                * (2.0 / fan_in) ** 0.5)

    return {
        "w_inc": conv_w(ks[0], 3, 32),
        "b_inc": 0.01 * jax.random.normal(ks[1], (32,), jnp.float32),
        "w_conv": conv_w(ks[2], 32, 32),
        "b_conv": 0.01 * jax.random.normal(ks[3], (32,), jnp.float32),
        "w_outc": conv_w(ks[4], 32, 3),
        "b_outc": 0.01 * jax.random.normal(ks[5], (3,), jnp.float32),
    }


def _reference_forward(x_nchw, params):
    """Pure-JAX reference (lax.conv) for correctness checking."""
    def conv(x, w, b):  # x NCHW, w (kh,kw,Cin,Cout)
        w_oihw = jnp.transpose(w, (3, 2, 0, 1))
        y = jax.lax.conv_general_dilated(
            x, w_oihw, window_strides=(1, 1), padding="SAME",
            dimension_numbers=("NCHW", "OIHW", "NCHW"))
        return jax.nn.relu(y + b.reshape(1, -1, 1, 1))

    h = conv(x_nchw, params["w_inc"], params["b_inc"])
    h = conv(h, params["w_conv"], params["b_conv"])
    h = conv(h, params["w_conv"], params["b_conv"])
    h = conv(h, params["w_conv"], params["b_conv"])
    return conv(h, params["w_outc"], params["b_outc"])


if __name__ == "__main__":
    key = jax.random.PRNGKey(0)
    k_x, k_p = jax.random.split(key)

    # Small example input consistent with the module: N=2, C=3, H=W=16 (NCHW).
    x = jax.random.normal(k_x, (2, 3, 16, 16), jnp.float32)
    params = init_params(k_p)

    out = jax.jit(fcn_forward)(x, params)
    out = jax.block_until_ready(out)
    assert out.shape == (2, 3, 16, 16), out.shape

    ref = _reference_forward(x, params)
    assert jnp.allclose(out, ref, atol=1e-3, rtol=1e-3), (
        float(jnp.max(jnp.abs(out - ref))))

    print("KERNEL_OK")
</pallas_src>

<mosaic_0001>
module attributes {stable_mosaic.version = 11 : i64} {
  func.func @_fcn_fused_kernel(%arg0: i32, %arg1: memref<1x16x16x3xf32, #tpu.memory_space<vmem>>, %arg2: memref<288x32xf32, #tpu.memory_space<vmem>>, %arg3: memref<1x32xf32, #tpu.memory_space<vmem>>, %arg4: memref<288x32xf32, #tpu.memory_space<vmem>>, %arg5: memref<1x32xf32, #tpu.memory_space<vmem>>, %arg6: memref<288x32xf32, #tpu.memory_space<vmem>>, %arg7: memref<1x32xf32, #tpu.memory_space<vmem>>, %arg8: memref<1x3x256xf32, #tpu.memory_space<vmem>>, %arg9: memref<18x18x32xf32, #tpu.memory_space<vmem>>) attributes {dimension_semantics = [#tpu.dimension_semantics<parallel>], iteration_bounds = array<i64: 2>, scalar_prefetch = 0 : i64, scratch_operands = 1 : i64, tpu.core_type = #tpu.core_type<tc>, window_params = [{transform_indices = @transform_0, window_bounds = array<i64: 1, 16, 16, 3>}, {pipeline_mode = #tpu.pipeline_mode<synchronous>, transform_indices = @transform_1, window_bounds = array<i64: 288, 32>}, {pipeline_mode = #tpu.pipeline_mode<synchronous>, transform_indices = @transform_2, window_bounds = array<i64: 1, 32>}, {pipeline_mode = #tpu.pipeline_mode<synchronous>, transform_indices = @transform_3, window_bounds = array<i64: 288, 32>}, {pipeline_mode = #tpu.pipeline_mode<synchronous>, transform_indices = @transform_4, window_bounds = array<i64: 1, 32>}, {pipeline_mode = #tpu.pipeline_mode<synchronous>, transform_indices = @transform_5, window_bounds = array<i64: 288, 32>}, {pipeline_mode = #tpu.pipeline_mode<synchronous>, transform_indices = @transform_6, window_bounds = array<i64: 1, 32>}, {transform_indices = @transform_7, window_bounds = array<i64: 1, 3, 256>}]} {
    %cst = arith.constant 0.000000e+00 : f32
    %0 = vector.broadcast %cst : f32 to vector<18x18x32xf32>
    %c0 = arith.constant 0 : index
    %c0_0 = arith.constant 0 : index
    %c0_1 = arith.constant 0 : index
    %1 = vector.load %arg9[%c0, %c0_0, %c0_1] : memref<18x18x32xf32, #tpu.memory_space<vmem>>, vector<18x18x32xf32>
    tpu.vector_store %arg9[%c0, %c0_0, %c0_1], %0 {strides = array<i32>} : memref<18x18x32xf32, #tpu.memory_space<vmem>>, vector<18x18x32xf32>,
    %c0_2 = arith.constant 0 : index
    %c0_3 = arith.constant 0 : index
    %c0_4 = arith.constant 0 : index
    %c0_5 = arith.constant 0 : index
    %2 = vector.load %arg1[%c0_2, %c0_3, %c0_4, %c0_5] : memref<1x16x16x3xf32, #tpu.memory_space<vmem>>, vector<1x16x16x3xf32>
    %3 = vector.shape_cast %2 : vector<1x16x16x3xf32> to vector<16x16x3xf32>
    %cst_6 = arith.constant 0.000000e+00 : f32
    %4 = vector.broadcast %cst_6 : f32 to vector<16x16x29xf32>
    %5 = tpu.concatenate %3, %4 in 2 : vector<16x16x3xf32>, vector<16x16x29xf32> -> vector<16x16x32xf32>
    %c1 = arith.constant 1 : index
    %c1_7 = arith.constant 1 : index
    %c0_8 = arith.constant 0 : index
    %6 = vector.load %arg9[%c1, %c1_7, %c0_8] : memref<18x18x32xf32, #tpu.memory_space<vmem>>, vector<16x16x32xf32>
    tpu.vector_store %arg9[%c1, %c1_7, %c0_8], %5 {strides = array<i32>} : memref<18x18x32xf32, #tpu.memory_space<vmem>>, vector<16x16x32xf32>,
    %c0_9 = arith.constant 0 : index
    %c0_10 = arith.constant 0 : index
    %c0_11 = arith.constant 0 : index
    %7 = vector.load %arg9[%c0_9, %c0_10, %c0_11] : memref<18x18x32xf32, #tpu.memory_space<vmem>>, vector<16x16x32xf32>
    %8 = vector.shape_cast %7 : vector<16x16x32xf32> to vector<256x32xf32>
    %c0_12 = arith.constant 0 : index
    %c1_13 = arith.constant 1 : index
    %c0_14 = arith.constant 0 : index
    %9 = vector.load %arg9[%c0_12, %c1_13, %c0_14] : memref<18x18x32xf32, #tpu.memory_space<vmem>>, vector<16x16x32xf32>
    %10 = vector.shape_cast %9 : vector<16x16x32xf32> to vector<256x32xf32>
    %c0_15 = arith.constant 0 : index
    %c2 = arith.constant 2 : index
    %c0_16 = arith.constant 0 : index
    %11 = vector.load %arg9[%c0_15, %c2, %c0_16] : memref<18x18x32xf32, #tpu.memory_space<vmem>>, vector<16x16x32xf32>
    %12 = vector.shape_cast %11 : vector<16x16x32xf32> to vector<256x32xf32>
    %c1_17 = arith.constant 1 : index
    %c0_18 = arith.constant 0 : index
    %c0_19 = arith.constant 0 : index
    %13 = vector.load %arg9[%c1_17, %c0_18, %c0_19] : memref<18x18x32xf32, #tpu.memory_space<vmem>>, vector<16x16x32xf32>
    %14 = vector.shape_cast %13 : vector<16x16x32xf32> to vector<256x32xf32>
    %c1_20 = arith.constant 1 : index
    %c1_21 = arith.constant 1 : index
    %c0_22 = arith.constant 0 : index
    %15 = vector.load %arg9[%c1_20, %c1_21, %c0_22] : memref<18x18x32xf32, #tpu.memory_space<vmem>>, vector<16x16x32xf32>
    %16 = vector.shape_cast %15 : vector<16x16x32xf32> to vector<256x32xf32>
    %c1_23 = arith.constant 1 : index
    %c2_24 = arith.constant 2 : index
    %c0_25 = arith.constant 0 : index
    %17 = vector.load %arg9[%c1_23, %c2_24, %c0_25] : memref<18x18x32xf32, #tpu.memory_space<vmem>>, vector<16x16x32xf32>
    %18 = vector.shape_cast %17 : vector<16x16x32xf32> to vector<256x32xf32>
    %c2_26 = arith.constant 2 : index
    %c0_27 = arith.constant 0 : index
    %c0_28 = arith.constant 0 : index
    %19 = vector.load %arg9[%c2_26, %c0_27, %c0_28] : memref<18x18x32xf32, #tpu.memory_space<vmem>>, vector<16x16x32xf32>
    %20 = vector.shape_cast %19 : vector<16x16x32xf32> to vector<256x32xf32>
    %c2_29 = arith.constant 2 : index
    %c1_30 = arith.constant 1 : index
    %c0_31 = arith.constant 0 : index
    %21 = vector.load %arg9[%c2_29, %c1_30, %c0_31] : memref<18x18x32xf32, #tpu.memory_space<vmem>>, vector<16x16x32xf32>
    %22 = vector.shape_cast %21 : vector<16x16x32xf32> to vector<256x32xf32>
    %c2_32 = arith.constant 2 : index
    %c2_33 = arith.constant 2 : index
    %c0_34 = arith.constant 0 : index
    %23 = vector.load %arg9[%c2_32, %c2_33, %c0_34] : memref<18x18x32xf32, #tpu.memory_space<vmem>>, vector<16x16x32xf32>
    %24 = vector.shape_cast %23 : vector<16x16x32xf32> to vector<256x32xf32>
    %25 = tpu.concatenate %8, %10, %12, %14, %16, %18, %20, %22, %24 in 1 : vector<256x32xf32>, vector<256x32xf32>, vector<256x32xf32>, vector<256x32xf32>, vector<256x32xf32>, vector<256x32xf32>, vector<256x32xf32>, vector<256x32xf32>, vector<256x32xf32> -> vector<256x288xf32>
    %c0_35 = arith.constant 0 : index
    %c0_36 = arith.constant 0 : index
    %26 = vector.load %arg2[%c0_35, %c0_36] : memref<288x32xf32, #tpu.memory_space<vmem>>, vector<288x32xf32>
    %cst_37 = arith.constant dense<0.000000e+00> : vector<256x32xf32>
    %27 = tpu.matmul %25, %26, %cst_37 {dimension_numbers = #tpu.dot_dimension_numbers<[1], [0], [0], [1], [0, 0, 1, 1], [], []>} : vector<256x288xf32>, vector<288x32xf32>, vector<256x32xf32> -> vector<256x32xf32>
    %c0_38 = arith.constant 0 : index
    %c0_39 = arith.constant 0 : index
    %28 = vector.load %arg3[%c0_38, %c0_39] : memref<1x32xf32, #tpu.memory_space<vmem>>, vector<1x32xf32>
    %29 = vector.broadcast %28 : vector<1x32xf32> to vector<256x32xf32>
    %30 = arith.addf %27, %29 : vector<256x32xf32>
    %cst_40 = arith.constant 0.000000e+00 : f32
    %31 = vector.broadcast %cst_40 : f32 to vector<256x32xf32>
    %32 = arith.maximumf %30, %31 : vector<256x32xf32>
    %33 = vector.shape_cast %32 : vector<256x32xf32> to vector<16x16x32xf32>
    %c1_41 = arith.constant 1 : index
    %c1_42 = arith.constant 1 : index
    %c0_43 = arith.constant 0 : index
    %34 = vector.load %arg9[%c1_41, %c1_42, %c0_43] : memref<18x18x32xf32, #tpu.memory_space<vmem>>, vector<16x16x32xf32>
    tpu.vector_store %arg9[%c1_41, %c1_42, %c0_43], %33 {strides = array<i32>} : memref<18x18x32xf32, #tpu.memory_space<vmem>>, vector<16x16x32xf32>,
    %c0_44 = arith.constant 0 : index
    %c0_45 = arith.constant 0 : index
    %c0_46 = arith.constant 0 : index
    %35 = vector.load %arg9[%c0_44, %c0_45, %c0_46] : memref<18x18x32xf32, #tpu.memory_space<vmem>>, vector<16x16x32xf32>
    %36 = vector.shape_cast %35 : vector<16x16x32xf32> to vector<256x32xf32>
    %c0_47 = arith.constant 0 : index
    %c1_48 = arith.constant 1 : index
    %c0_49 = arith.constant 0 : index
    %37 = vector.load %arg9[%c0_47, %c1_48, %c0_49] : memref<18x18x32xf32, #tpu.memory_space<vmem>>, vector<16x16x32xf32>
    %38 = vector.shape_cast %37 : vector<16x16x32xf32> to vector<256x32xf32>
    %c0_50 = arith.constant 0 : index
    %c2_51 = arith.constant 2 : index
    %c0_52 = arith.constant 0 : index
    %39 = vector.load %arg9[%c0_50, %c2_51, %c0_52] : memref<18x18x32xf32, #tpu.memory_space<vmem>>, vector<16x16x32xf32>
    %40 = vector.shape_cast %39 : vector<16x16x32xf32> to vector<256x32xf32>
    %c1_53 = arith.constant 1 : index
    %c0_54 = arith.constant 0 : index
    %c0_55 = arith.constant 0 : index
    %41 = vector.load %arg9[%c1_53, %c0_54, %c0_55] : memref<18x18x32xf32, #tpu.memory_space<vmem>>, vector<16x16x32xf32>
    %42 = vector.shape_cast %41 : vector<16x16x32xf32> to vector<256x32xf32>
    %c1_56 = arith.constant 1 : index
    %c1_57 = arith.constant 1 : index
    %c0_58 = arith.constant 0 : index
    %43 = vector.load %arg9[%c1_56, %c1_57, %c0_58] : memref<18x18x32xf32, #tpu.memory_space<vmem>>, vector<16x16x32xf32>
    %44 = vector.shape_cast %43 : vector<16x16x32xf32> to vector<256x32xf32>
    %c1_59 = arith.constant 1 : index
    %c2_60 = arith.constant 2 : index
    %c0_61 = arith.constant 0 : index
    %45 = vector.load %arg9[%c1_59, %c2_60, %c0_61] : memref<18x18x32xf32, #tpu.memory_space<vmem>>, vector<16x16x32xf32>
    %46 = vector.shape_cast %45 : vector<16x16x32xf32> to vector<256x32xf32>
    %c2_62 = arith.constant 2 : index
    %c0_63 = arith.constant 0 : index
    %c0_64 = arith.constant 0 : index
    %47 = vector.load %arg9[%c2_62, %c0_63, %c0_64] : memref<18x18x32xf32, #tpu.memory_space<vmem>>, vector<16x16x32xf32>
    %48 = vector.shape_cast %47 : vector<16x16x32xf32> to vector<256x32xf32>
    %c2_65 = arith.constant 2 : index
    %c1_66 = arith.constant 1 : index
    %c0_67 = arith.constant 0 : index
    %49 = vector.load %arg9[%c2_65, %c1_66, %c0_67] : memref<18x18x32xf32, #tpu.memory_space<vmem>>, vector<16x16x32xf32>
    %50 = vector.shape_cast %49 : vector<16x16x32xf32> to vector<256x32xf32>
    %c2_68 = arith.constant 2 : index
    %c2_69 = arith.constant 2 : index
    %c0_70 = arith.constant 0 : index
    %51 = vector.load %arg9[%c2_68, %c2_69, %c0_70] : memref<18x18x32xf32, #tpu.memory_space<vmem>>, vector<16x16x32xf32>
    %52 = vector.shape_cast %51 : vector<16x16x32xf32> to vector<256x32xf32>
    %53 = tpu.concatenate %36, %38, %40, %42, %44, %46, %48, %50, %52 in 1 : vector<256x32xf32>, vector<256x32xf32>, vector<256x32xf32>, vector<256x32xf32>, vector<256x32xf32>, vector<256x32xf32>, vector<256x32xf32>, vector<256x32xf32>, vector<256x32xf32> -> vector<256x288xf32>
    %c0_71 = arith.constant 0 : index
    %c0_72 = arith.constant 0 : index
    %54 = vector.load %arg4[%c0_71, %c0_72] : memref<288x32xf32, #tpu.memory_space<vmem>>, vector<288x32xf32>
    %cst_73 = arith.constant dense<0.000000e+00> : vector<256x32xf32>
    %55 = tpu.matmul %53, %54, %cst_73 {dimension_numbers = #tpu.dot_dimension_numbers<[1], [0], [0], [1], [0, 0, 1, 1], [], []>} : vector<256x288xf32>, vector<288x32xf32>, vector<256x32xf32> -> vector<256x32xf32>
    %c0_74 = arith.constant 0 : index
    %c0_75 = arith.constant 0 : index
    %56 = vector.load %arg5[%c0_74, %c0_75] : memref<1x32xf32, #tpu.memory_space<vmem>>, vector<1x32xf32>
    %57 = vector.broadcast %56 : vector<1x32xf32> to vector<256x32xf32>
    %58 = arith.addf %55, %57 : vector<256x32xf32>
    %cst_76 = arith.constant 0.000000e+00 : f32
    %59 = vector.broadcast %cst_76 : f32 to vector<256x32xf32>
    %60 = arith.maximumf %58, %59 : vector<256x32xf32>
    %61 = vector.shape_cast %60 : vector<256x32xf32> to vector<16x16x32xf32>
    %c1_77 = arith.constant 1 : index
    %c1_78 = arith.constant 1 : index
    %c0_79 = arith.constant 0 : index
    %62 = vector.load %arg9[%c1_77, %c1_78, %c0_79] : memref<18x18x32xf32, #tpu.memory_space<vmem>>, vector<16x16x32xf32>
    tpu.vector_store %arg9[%c1_77, %c1_78, %c0_79], %61 {strides = array<i32>} : memref<18x18x32xf32, #tpu.memory_space<vmem>>, vector<16x16x32xf32>,
    %c0_80 = arith.constant 0 : index
    %c0_81 = arith.constant 0 : index
    %c0_82 = arith.constant 0 : index
    %63 = vector.load %arg9[%c0_80, %c0_81, %c0_82] : memref<18x18x32xf32, #tpu.memory_space<vmem>>, vector<16x16x32xf32>
    %64 = vector.shape_cast %63 : vector<16x16x32xf32> to vector<256x32xf32>
    %c0_83 = arith.constant 0 : index
    %c1_84 = arith.constant 1 : index
    %c0_85 = arith.constant 0 : index
    %65 = vector.load %arg9[%c0_83, %c1_84, %c0_85] : memref<18x18x32xf32, #tpu.memory_space<vmem>>, vector<16x16x32xf32>
    %66 = vector.shape_cast %65 : vector<16x16x32xf32> to vector<256x32xf32>
    %c0_86 = arith.constant 0 : index
    %c2_87 = arith.constant 2 : index
    %c0_88 = arith.constant 0 : index
    %67 = vector.load %arg9[%c0_86, %c2_87, %c0_88] : memref<18x18x32xf32, #tpu.memory_space<vmem>>, vector<16x16x32xf32>
    %68 = vector.shape_cast %67 : vector<16x16x32xf32> to vector<256x32xf32>
    %c1_89 = arith.constant 1 : index
    %c0_90 = arith.constant 0 : index
    %c0_91 = arith.constant 0 : index
    %69 = vector.load %arg9[%c1_89, %c0_90, %c0_91] : memref<18x18x32xf32, #tpu.memory_space<vmem>>, vector<16x16x32xf32>
    %70 = vector.shape_cast %69 : vector<16x16x32xf32> to vector<256x32xf32>
    %c1_92 = arith.constant 1 : index
    %c1_93 = arith.constant 1 : index
    %c0_94 = arith.constant 0 : index
    %71 = vector.load %arg9[%c1_92, %c1_93, %c0_94] : memref<18x18x32xf32, #tpu.memory_space<vmem>>, vector<16x16x32xf32>
    %72 = vector.shape_cast %71 : vector<16x16x32xf32> to vector<256x32xf32>
    %c1_95 = arith.constant 1 : index
    %c2_96 = arith.constant 2 : index
    %c0_97 = arith.constant 0 : index
    %73 = vector.load %arg9[%c1_95, %c2_96, %c0_97] : memref<18x18x32xf32, #tpu.memory_space<vmem>>, vector<16x16x32xf32>
    %74 = vector.shape_cast %73 : vector<16x16x32xf32> to vector<256x32xf32>
    %c2_98 = arith.constant 2 : index
    %c0_99 = arith.constant 0 : index
    %c0_100 = arith.constant 0 : index
    %75 = vector.load %arg9[%c2_98, %c0_99, %c0_100] : memref<18x18x32xf32, #tpu.memory_space<vmem>>, vector<16x16x32xf32>
    %76 = vector.shape_cast %75 : vector<16x16x32xf32> to vector<256x32xf32>
    %c2_101 = arith.constant 2 : index
    %c1_102 = arith.constant 1 : index
    %c0_103 = arith.constant 0 : index
    %77 = vector.load %arg9[%c2_101, %c1_102, %c0_103] : memref<18x18x32xf32, #tpu.memory_space<vmem>>, vector<16x16x32xf32>
    %78 = vector.shape_cast %77 : vector<16x16x32xf32> to vector<256x32xf32>
    %c2_104 = arith.constant 2 : index
    %c2_105 = arith.constant 2 : index
    %c0_106 = arith.constant 0 : index
    %79 = vector.load %arg9[%c2_104, %c2_105, %c0_106] : memref<18x18x32xf32, #tpu.memory_space<vmem>>, vector<16x16x32xf32>
    %80 = vector.shape_cast %79 : vector<16x16x32xf32> to vector<256x32xf32>
    %81 = tpu.concatenate %64, %66, %68, %70, %72, %74, %76, %78, %80 in 1 : vector<256x32xf32>, vector<256x32xf32>, vector<256x32xf32>, vector<256x32xf32>, vector<256x32xf32>, vector<256x32xf32>, vector<256x32xf32>, vector<256x32xf32>, vector<256x32xf32> -> vector<256x288xf32>
    %c0_107 = arith.constant 0 : index
    %c0_108 = arith.constant 0 : index
    %82 = vector.load %arg4[%c0_107, %c0_108] : memref<288x32xf32, #tpu.memory_space<vmem>>, vector<288x32xf32>
    %cst_109 = arith.constant dense<0.000000e+00> : vector<256x32xf32>
    %83 = tpu.matmul %81, %82, %cst_109 {dimension_numbers = #tpu.dot_dimension_numbers<[1], [0], [0], [1], [0, 0, 1, 1], [], []>} : vector<256x288xf32>, vector<288x32xf32>, vector<256x32xf32> -> vector<256x32xf32>
    %c0_110 = arith.constant 0 : index
    %c0_111 = arith.constant 0 : index
    %84 = vector.load %arg5[%c0_110, %c0_111] : memref<1x32xf32, #tpu.memory_space<vmem>>, vector<1x32xf32>
    %85 = vector.broadcast %84 : vector<1x32xf32> to vector<256x32xf32>
    %86 = arith.addf %83, %85 : vector<256x32xf32>
    %cst_112 = arith.constant 0.000000e+00 : f32
    %87 = vector.broadcast %cst_112 : f32 to vector<256x32xf32>
    %88 = arith.maximumf %86, %87 : vector<256x32xf32>
    %89 = vector.shape_cast %88 : vector<256x32xf32> to vector<16x16x32xf32>
    %c1_113 = arith.constant 1 : index
    %c1_114 = arith.constant 1 : index
    %c0_115 = arith.constant 0 : index
    %90 = vector.load %arg9[%c1_113, %c1_114, %c0_115] : memref<18x18x32xf32, #tpu.memory_space<vmem>>, vector<16x16x32xf32>
    tpu.vector_store %arg9[%c1_113, %c1_114, %c0_115], %89 {strides = array<i32>} : memref<18x18x32xf32, #tpu.memory_space<vmem>>, vector<16x16x32xf32>,
    %c0_116 = arith.constant 0 : index
    %c0_117 = arith.constant 0 : index
    %c0_118 = arith.constant 0 : index
    %91 = vector.load %arg9[%c0_116, %c0_117, %c0_118] : memref<18x18x32xf32, #tpu.memory_space<vmem>>, vector<16x16x32xf32>
    %92 = vector.shape_cast %91 : vector<16x16x32xf32> to vector<256x32xf32>
    %c0_119 = arith.constant 0 : index
    %c1_120 = arith.constant 1 : index
    %c0_121 = arith.constant 0 : index
    %93 = vector.load %arg9[%c0_119, %c1_120, %c0_121] : memref<18x18x32xf32, #tpu.memory_space<vmem>>, vector<16x16x32xf32>
    %94 = vector.shape_cast %93 : vector<16x16x32xf32> to vector<256x32xf32>
    %c0_122 = arith.constant 0 : index
    %c2_123 = arith.constant 2 : index
    %c0_124 = arith.constant 0 : index
    %95 = vector.load %arg9[%c0_122, %c2_123, %c0_124] : memref<18x18x32xf32, #tpu.memory_space<vmem>>, vector<16x16x32xf32>
    %96 = vector.shape_cast %95 : vector<16x16x32xf32> to vector<256x32xf32>
    %c1_125 = arith.constant 1 : index
    %c0_126 = arith.constant 0 : index
    %c0_127 = arith.constant 0 : index
    %97 = vector.load %arg9[%c1_125, %c0_126, %c0_127] : memref<18x18x32xf32, #tpu.memory_space<vmem>>, vector<16x16x32xf32>
    %98 = vector.shape_cast %97 : vector<16x16x32xf32> to vector<256x32xf32>
    %c1_128 = arith.constant 1 : index
    %c1_129 = arith.constant 1 : index
    %c0_130 = arith.constant 0 : index
    %99 = vector.load %arg9[%c1_128, %c1_129, %c0_130] : memref<18x18x32xf32, #tpu.memory_space<vmem>>, vector<16x16x32xf32>
    %100 = vector.shape_cast %99 : vector<16x16x32xf32> to vector<256x32xf32>
    %c1_131 = arith.constant 1 : index
    %c2_132 = arith.constant 2 : index
    %c0_133 = arith.constant 0 : index
    %101 = vector.load %arg9[%c1_131, %c2_132, %c0_133] : memref<18x18x32xf32, #tpu.memory_space<vmem>>, vector<16x16x32xf32>
    %102 = vector.shape_cast %101 : vector<16x16x32xf32> to vector<256x32xf32>
    %c2_134 = arith.constant 2 : index
    %c0_135 = arith.constant 0 : index
    %c0_136 = arith.constant 0 : index
    %103 = vector.load %arg9[%c2_134, %c0_135, %c0_136] : memref<18x18x32xf32, #tpu.memory_space<vmem>>, vector<16x16x32xf32>
    %104 = vector.shape_cast %103 : vector<16x16x32xf32> to vector<256x32xf32>
    %c2_137 = arith.constant 2 : index
    %c1_138 = arith.constant 1 : index
    %c0_139 = arith.constant 0 : index
    %105 = vector.load %arg9[%c2_137, %c1_138, %c0_139] : memref<18x18x32xf32, #tpu.memory_space<vmem>>, vector<16x16x32xf32>
    %106 = vector.shape_cast %105 : vector<16x16x32xf32> to vector<256x32xf32>
    %c2_140 = arith.constant 2 : index
    %c2_141 = arith.constant 2 : index
    %c0_142 = arith.constant 0 : index
    %107 = vector.load %arg9[%c2_140, %c2_141, %c0_142] : memref<18x18x32xf32, #tpu.memory_space<vmem>>, vector<16x16x32xf32>
    %108 = vector.shape_cast %107 : vector<16x16x32xf32> to vector<256x32xf32>
    %109 = tpu.concatenate %92, %94, %96, %98, %100, %102, %104, %106, %108 in 1 : vector<256x32xf32>, vector<256x32xf32>, vector<256x32xf32>, vector<256x32xf32>, vector<256x32xf32>, vector<256x32xf32>, vector<256x32xf32>, vector<256x32xf32>, vector<256x32xf32> -> vector<256x288xf32>
    %c0_143 = arith.constant 0 : index
    %c0_144 = arith.constant 0 : index
    %110 = vector.load %arg4[%c0_143, %c0_144] : memref<288x32xf32, #tpu.memory_space<vmem>>, vector<288x32xf32>
    %cst_145 = arith.constant dense<0.000000e+00> : vector<256x32xf32>
    %111 = tpu.matmul %109, %110, %cst_145 {dimension_numbers = #tpu.dot_dimension_numbers<[1], [0], [0], [1], [0, 0, 1, 1], [], []>} : vector<256x288xf32>, vector<288x32xf32>, vector<256x32xf32> -> vector<256x32xf32>
    %c0_146 = arith.constant 0 : index
    %c0_147 = arith.constant 0 : index
    %112 = vector.load %arg5[%c0_146, %c0_147] : memref<1x32xf32, #tpu.memory_space<vmem>>, vector<1x32xf32>
    %113 = vector.broadcast %112 : vector<1x32xf32> to vector<256x32xf32>
    %114 = arith.addf %111, %113 : vector<256x32xf32>
    %cst_148 = arith.constant 0.000000e+00 : f32
    %115 = vector.broadcast %cst_148 : f32 to vector<256x32xf32>
    %116 = arith.maximumf %114, %115 : vector<256x32xf32>
    %117 = vector.shape_cast %116 : vector<256x32xf32> to vector<16x16x32xf32>
    %c1_149 = arith.constant 1 : index
    %c1_150 = arith.constant 1 : index
    %c0_151 = arith.constant 0 : index
    %118 = vector.load %arg9[%c1_149, %c1_150, %c0_151] : memref<18x18x32xf32, #tpu.memory_space<vmem>>, vector<16x16x32xf32>
    tpu.vector_store %arg9[%c1_149, %c1_150, %c0_151], %117 {strides = array<i32>} : memref<18x18x32xf32, #tpu.memory_space<vmem>>, vector<16x16x32xf32>,
    %c0_152 = arith.constant 0 : index
    %c0_153 = arith.constant 0 : index
    %c0_154 = arith.constant 0 : index
    %119 = vector.load %arg9[%c0_152, %c0_153, %c0_154] : memref<18x18x32xf32, #tpu.memory_space<vmem>>, vector<16x16x32xf32>
    %120 = vector.shape_cast %119 : vector<16x16x32xf32> to vector<256x32xf32>
    %c0_155 = arith.constant 0 : index
    %c1_156 = arith.constant 1 : index
    %c0_157 = arith.constant 0 : index
    %121 = vector.load %arg9[%c0_155, %c1_156, %c0_157] : memref<18x18x32xf32, #tpu.memory_space<vmem>>, vector<16x16x32xf32>
    %122 = vector.shape_cast %121 : vector<16x16x32xf32> to vector<256x32xf32>
    %c0_158 = arith.constant 0 : index
    %c2_159 = arith.constant 2 : index
    %c0_160 = arith.constant 0 : index
    %123 = vector.load %arg9[%c0_158, %c2_159, %c0_160] : memref<18x18x32xf32, #tpu.memory_space<vmem>>, vector<16x16x32xf32>
    %124 = vector.shape_cast %123 : vector<16x16x32xf32> to vector<256x32xf32>
    %c1_161 = arith.constant 1 : index
    %c0_162 = arith.constant 0 : index
    %c0_163 = arith.constant 0 : index
    %125 = vector.load %arg9[%c1_161, %c0_162, %c0_163] : memref<18x18x32xf32, #tpu.memory_space<vmem>>, vector<16x16x32xf32>
    %126 = vector.shape_cast %125 : vector<16x16x32xf32> to vector<256x32xf32>
    %c1_164 = arith.constant 1 : index
    %c1_165 = arith.constant 1 : index
    %c0_166 = arith.constant 0 : index
    %127 = vector.load %arg9[%c1_164, %c1_165, %c0_166] : memref<18x18x32xf32, #tpu.memory_space<vmem>>, vector<16x16x32xf32>
    %128 = vector.shape_cast %127 : vector<16x16x32xf32> to vector<256x32xf32>
    %c1_167 = arith.constant 1 : index
    %c2_168 = arith.constant 2 : index
    %c0_169 = arith.constant 0 : index
    %129 = vector.load %arg9[%c1_167, %c2_168, %c0_169] : memref<18x18x32xf32, #tpu.memory_space<vmem>>, vector<16x16x32xf32>
    %130 = vector.shape_cast %129 : vector<16x16x32xf32> to vector<256x32xf32>
    %c2_170 = arith.constant 2 : index
    %c0_171 = arith.constant 0 : index
    %c0_172 = arith.constant 0 : index
    %131 = vector.load %arg9[%c2_170, %c0_171, %c0_172] : memref<18x18x32xf32, #tpu.memory_space<vmem>>, vector<16x16x32xf32>
    %132 = vector.shape_cast %131 : vector<16x16x32xf32> to vector<256x32xf32>
    %c2_173 = arith.constant 2 : index
    %c1_174 = arith.constant 1 : index
    %c0_175 = arith.constant 0 : index
    %133 = vector.load %arg9[%c2_173, %c1_174, %c0_175] : memref<18x18x32xf32, #tpu.memory_space<vmem>>, vector<16x16x32xf32>
    %134 = vector.shape_cast %133 : vector<16x16x32xf32> to vector<256x32xf32>
    %c2_176 = arith.constant 2 : index
    %c2_177 = arith.constant 2 : index
    %c0_178 = arith.constant 0 : index
    %135 = vector.load %arg9[%c2_176, %c2_177, %c0_178] : memref<18x18x32xf32, #tpu.memory_space<vmem>>, vector<16x16x32xf32>
    %136 = vector.shape_cast %135 : vector<16x16x32xf32> to vector<256x32xf32>
    %137 = tpu.concatenate %120, %122, %124, %126, %128, %130, %132, %134, %136 in 1 : vector<256x32xf32>, vector<256x32xf32>, vector<256x32xf32>, vector<256x32xf32>, vector<256x32xf32>, vector<256x32xf32>, vector<256x32xf32>, vector<256x32xf32>, vector<256x32xf32> -> vector<256x288xf32>
    %c0_179 = arith.constant 0 : index
    %c0_180 = arith.constant 0 : index
    %138 = vector.load %arg6[%c0_179, %c0_180] : memref<288x32xf32, #tpu.memory_space<vmem>>, vector<288x32xf32>
    %cst_181 = arith.constant dense<0.000000e+00> : vector<256x32xf32>
    %139 = tpu.matmul %137, %138, %cst_181 {dimension_numbers = #tpu.dot_dimension_numbers<[1], [0], [0], [1], [0, 0, 1, 1], [], []>} : vector<256x288xf32>, vector<288x32xf32>, vector<256x32xf32> -> vector<256x32xf32>
    %c0_182 = arith.constant 0 : index
    %c0_183 = arith.constant 0 : index
    %140 = vector.load %arg7[%c0_182, %c0_183] : memref<1x32xf32, #tpu.memory_space<vmem>>, vector<1x32xf32>
    %141 = vector.broadcast %140 : vector<1x32xf32> to vector<256x32xf32>
    %142 = arith.addf %139, %141 : vector<256x32xf32>
    %cst_184 = arith.constant 0.000000e+00 : f32
    %143 = vector.broadcast %cst_184 : f32 to vector<256x32xf32>
    %144 = arith.maximumf %142, %143 : vector<256x32xf32>
    %145 = tpu.transpose %144, [1, 0] : vector<256x32xf32> -> vector<32x256xf32>
    %146 = vector.extract_strided_slice %145 {offsets = [0, 0], sizes = [3, 256], strides = [1, 1]} : vector<32x256xf32> to vector<3x256xf32>
    %147 = vector.shape_cast %146 : vector<3x256xf32> to vector<1x3x256xf32>
    %c0_185 = arith.constant 0 : index
    %c0_186 = arith.constant 0 : index
    %c0_187 = arith.constant 0 : index
    %148 = vector.load %arg8[%c0_185, %c0_186, %c0_187] : memref<1x3x256xf32, #tpu.memory_space<vmem>>, vector<1x3x256xf32>
    tpu.vector_store %arg8[%c0_185, %c0_186, %c0_187], %147 {strides = array<i32>} : memref<1x3x256xf32, #tpu.memory_space<vmem>>, vector<1x3x256xf32>,
    return
  }
  func.func @transform_0(%arg0: i32) -> (i32, i32, i32, i32) {
    %c0_i32 = arith.constant 0 : i32
    %c0_i32_0 = arith.constant 0 : i32
    %c0_i32_1 = arith.constant 0 : i32
    %c0_i32_2 = arith.constant 0 : i32
    return %arg0, %c0_i32, %c0_i32_0, %c0_i32_1 : i32, i32, i32, i32
  }
  func.func @transform_1(%arg0: i32) -> (i32, i32) {
    %c0_i32 = arith.constant 0 : i32
    %c0_i32_0 = arith.constant 0 : i32
    %c0_i32_1 = arith.constant 0 : i32
    return %c0_i32, %c0_i32_0 : i32, i32
  }
  func.func @transform_2(%arg0: i32) -> (i32, i32) {
    %c0_i32 = arith.constant 0 : i32
    %c0_i32_0 = arith.constant 0 : i32
    %c0_i32_1 = arith.constant 0 : i32
    return %c0_i32, %c0_i32_0 : i32, i32
  }
  func.func @transform_3(%arg0: i32) -> (i32, i32) {
    %c0_i32 = arith.constant 0 : i32
    %c0_i32_0 = arith.constant 0 : i32
    %c0_i32_1 = arith.constant 0 : i32
    return %c0_i32, %c0_i32_0 : i32, i32
  }
  func.func @transform_4(%arg0: i32) -> (i32, i32) {
    %c0_i32 = arith.constant 0 : i32
    %c0_i32_0 = arith.constant 0 : i32
    %c0_i32_1 = arith.constant 0 : i32
    return %c0_i32, %c0_i32_0 : i32, i32
  }
  func.func @transform_5(%arg0: i32) -> (i32, i32) {
    %c0_i32 = arith.constant 0 : i32
    %c0_i32_0 = arith.constant 0 : i32
    %c0_i32_1 = arith.constant 0 : i32
    return %c0_i32, %c0_i32_0 : i32, i32
  }
  func.func @transform_6(%arg0: i32) -> (i32, i32) {
    %c0_i32 = arith.constant 0 : i32
    %c0_i32_0 = arith.constant 0 : i32
    %c0_i32_1 = arith.constant 0 : i32
    return %c0_i32, %c0_i32_0 : i32, i32
  }
  func.func @transform_7(%arg0: i32) -> (i32, i32, i32) {
    %c0_i32 = arith.constant 0 : i32
    %c0_i32_0 = arith.constant 0 : i32
    %c0_i32_1 = arith.constant 0 : i32
    return %arg0, %c0_i32, %c0_i32_0 : i32, i32, i32
  }
}

</mosaic_0001>

<llo_original>
// kernel: fcn_forward.1
$region0: #{fcn_forward.1}
  #allocation0 [shape = 'u32[]', space=smem, size = 0x4, offset = 0x4, fixed_abs, tag = 'smem constant byte address 0x4 - core index']
  #allocation1 [shape = 'u32[72,128]{1,0:T(1,128)}', space=vmem, size = 0x9000, scoped, tag = 'internal scratch']
  #allocation2 [shape = 'f32[18,18,32]{2,1,0:T(8,128)}', space=vmem, size = 0x36000, scoped, tag = 'scratch operand']
  %s0 = inlined_call_operand.vmem [shape: f32[2,16,16,3], index: 0, kind: input, shape index: {}]
  %s1 = inlined_call_operand.vmem [shape: f32[288,32], index: 1, kind: input, shape index: {}]
  %s2 = inlined_call_operand.vmem [shape: f32[1,32], index: 2, kind: input, shape index: {}]
  %s3 = inlined_call_operand.vmem [shape: f32[288,32], index: 3, kind: input, shape index: {}]
  %s4 = inlined_call_operand.vmem [shape: f32[1,32], index: 4, kind: input, shape index: {}]
  %s5 = inlined_call_operand.vmem [shape: f32[288,32], index: 5, kind: input, shape index: {}]
  %s6 = inlined_call_operand.vmem [shape: f32[1,32], index: 6, kind: input, shape index: {}]
  %s7 = inlined_call_operand.vmem [shape: f32[2,3,256], index: 7, kind: output, shape index: {}]
  %s8 = sld [smem:[#allocation0]]
  $region61: #{fcn_forward.1} parent=0
    _
  %s10 = ssub.s32 1, %s8
  %s11 = scalar_select 0, %s10, %s8
  loop: start=0, step=1, limit=4
  $region2: #{fcn_forward.1} parent=0 // loop_pre_header
    _
  $region3: #{fcn_forward.1} parent=0 // loop_header
    %s13 = sphi 0, %s17
    %p14 = scmp.ge.s32.totalorder %s13, 4
    %s23 = sphi 0, %s25
    %s26 = sphi 0, %s23
    %s27 = sphi 0, %s26
    %s43 = sphi 0, %s27
    %s47 = sphi 0, %s47
    %s49 = sphi 0, %s47
    %s50 = sphi 0, %s49
    %s64 = sphi 0, %s50
    %s68 = sphi 0, %s68
    %s70 = sphi 0, %s68
    %s71 = sphi 0, %s70
    %s85 = sphi 0, %s71
    %s89 = sphi 0, %s89
    %s91 = sphi 0, %s89
    %s92 = sphi 0, %s91
    %s106 = sphi 0, %s92
    %s110 = sphi 0, %s110
    %s112 = sphi 0, %s110
    %s113 = sphi 0, %s112
    %s127 = sphi 0, %s113
    %s131 = sphi 0, %s131
    %s133 = sphi 0, %s131
    %s134 = sphi 0, %s133
    %s148 = sphi 0, %s134
    %s152 = sphi 0, %s152
    %s154 = sphi 0, %s152
    %s155 = sphi 0, %s154
    %s169 = sphi 0, %s155
    %s175 = sphi 0, %s177
    %s178 = sphi 0, %s175
    %s179 = sphi 0, %s178
    %s195 = sphi 0, %s179
  $region4: #{fcn_forward.1} parent=0 // loop_header_branch
    %16 = sbr.rel (%p14) target = $region8
  $region5: #{fcn_forward.1} parent=0 // loop_body
    %s18 = ssub.s32 %s13, 1
    %s19 = ssub.s32 %s13, 2
    %s20 = sadd.s32 %s13, 1
    %s21 = ssub.s32 %s13, %s20
    %p22 = scmp.eq.s32.totalorder %s21, 0
    %s24 = sadd.s32 %s23, 1
    %s25 = scalar_select %p22, %s23, %s24
    %p28 = pneg %p22
    %p29 = scmp.eq.s32.totalorder %s13, 1
    %p30 = por %p28, %p29
    %p31 = scmp.ne.s32.totalorder %s23, %s26
    %p32 = scmp.eq.s32.totalorder %s13, 0
    %p33 = por %p31, %p32
    %p34 = scmp.ne.s32.totalorder %s23, %s26
    %p35 = scmp.eq.s32.totalorder %s18, 1
    %p36 = por %p34, %p35
    %p37 = scmp.ne.s32.totalorder %s26, %s27
    %p38 = scmp.eq.s32.totalorder %s18, 0
    %p39 = por %p37, %p38
    %p40 = scmp.ne.s32.totalorder %s26, %s27
    %p41 = scmp.eq.s32.totalorder %s19, 1
    %p42 = por %p40, %p41
    %p44 = scmp.ne.s32.totalorder %s27, %s43
    %p45 = scmp.eq.s32.totalorder %s19, 0
    %p46 = por %p44, %p45
    %s48 = sadd.s32 %s47, 1
    %p51 = scmp.eq.s32.totalorder %s13, 1
    %p52 = scmp.ne.s32.totalorder %s47, %s49
    %p53 = scmp.eq.s32.totalorder %s13, 0
    %p54 = por %p52, %p53
    %p55 = scmp.ne.s32.totalorder %s47, %s49
    %p56 = scmp.eq.s32.totalorder %s18, 1
    %p57 = por %p55, %p56
    %p58 = scmp.ne.s32.totalorder %s49, %s50
    %p59 = scmp.eq.s32.totalorder %s18, 0
    %p60 = por %p58, %p59
    %p61 = scmp.ne.s32.totalorder %s49, %s50
    %p62 = scmp.eq.s32.totalorder %s19, 1
    %p63 = por %p61, %p62
    %p65 = scmp.ne.s32.totalorder %s50, %s64
    %p66 = scmp.eq.s32.totalorder %s19, 0
    %p67 = por %p65, %p66
    %s69 = sadd.s32 %s68, 1
    %p72 = scmp.eq.s32.totalorder %s13, 1
    %p73 = scmp.ne.s32.totalorder %s68, %s70
    %p74 = scmp.eq.s32.totalorder %s13, 0
    %p75 = por %p73, %p74
    %p76 = scmp.ne.s32.totalorder %s68, %s70
    %p77 = scmp.eq.s32.totalorder %s18, 1
    %p78 = por %p76, %p77
    %p79 = scmp.ne.s32.totalorder %s70, %s71
    %p80 = scmp.eq.s32.totalorder %s18, 0
    %p81 = por %p79, %p80
    %p82 = scmp.ne.s32.totalorder %s70, %s71
    %p83 = scmp.eq.s32.totalorder %s19, 1
    %p84 = por %p82, %p83
    %p86 = scmp.ne.s32.totalorder %s71, %s85
    %p87 = scmp.eq.s32.totalorder %s19, 0
    %p88 = por %p86, %p87
    %s90 = sadd.s32 %s89, 1
    %p93 = scmp.eq.s32.totalorder %s13, 1
    %p94 = scmp.ne.s32.totalorder %s89, %s91
    %p95 = scmp.eq.s32.totalorder %s13, 0
    %p96 = por %p94, %p95
    %p97 = scmp.ne.s32.totalorder %s89, %s91
    %p98 = scmp.eq.s32.totalorder %s18, 1
    %p99 = por %p97, %p98
    %p100 = scmp.ne.s32.totalorder %s91, %s92
    %p101 = scmp.eq.s32.totalorder %s18, 0
    %p102 = por %p100, %p101
    %p103 = scmp.ne.s32.totalorder %s91, %s92
    %p104 = scmp.eq.s32.totalorder %s19, 1
    %p105 = por %p103, %p104
    %p107 = scmp.ne.s32.totalorder %s92, %s106
    %p108 = scmp.eq.s32.totalorder %s19, 0
    %p109 = por %p107, %p108
    %s111 = sadd.s32 %s110, 1
    %p114 = scmp.eq.s32.totalorder %s13, 1
    %p115 = scmp.ne.s32.totalorder %s110, %s112
    %p116 = scmp.eq.s32.totalorder %s13, 0
    %p117 = por %p115, %p116
    %p118 = scmp.ne.s32.totalorder %s110, %s112
    %p119 = scmp.eq.s32.totalorder %s18, 1
    %p120 = por %p118, %p119
    %p121 = scmp.ne.s32.totalorder %s112, %s113
    %p122 = scmp.eq.s32.totalorder %s18, 0
    %p123 = por %p121, %p122
    %p124 = scmp.ne.s32.totalorder %s112, %s113
    %p125 = scmp.eq.s32.totalorder %s19, 1
    %p126 = por %p124, %p125
    %p128 = scmp.ne.s32.totalorder %s113, %s127
    %p129 = scmp.eq.s32.totalorder %s19, 0
    %p130 = por %p128, %p129
    %s132 = sadd.s32 %s131, 1
    %p135 = scmp.eq.s32.totalorder %s13, 1
    %p136 = scmp.ne.s32.totalorder %s131, %s133
    %p137 = scmp.eq.s32.totalorder %s13, 0
    %p138 = por %p136, %p137
    %p139 = scmp.ne.s32.totalorder %s131, %s133
    %p140 = scmp.eq.s32.totalorder %s18, 1
    %p141 = por %p139, %p140
    %p142 = scmp.ne.s32.totalorder %s133, %s134
    %p143 = scmp.eq.s32.totalorder %s18, 0
    %p144 = por %p142, %p143
    %p145 = scmp.ne.s32.totalorder %s133, %s134
    %p146 = scmp.eq.s32.totalorder %s19, 1
    %p147 = por %p145, %p146
    %p149 = scmp.ne.s32.totalorder %s134, %s148
    %p150 = scmp.eq.s32.totalorder %s19, 0
    %p151 = por %p149, %p150
    %s153 = sadd.s32 %s152, 1
    %p156 = scmp.eq.s32.totalorder %s13, 1
    %p157 = scmp.ne.s32.totalorder %s152, %s154
    %p158 = scmp.eq.s32.totalorder %s13, 0
    %p159 = por %p157, %p158
    %p160 = scmp.ne.s32.totalorder %s152, %s154
    %p161 = scmp.eq.s32.totalorder %s18, 1
    %p162 = por %p160, %p161
    %p163 = scmp.ne.s32.totalorder %s154, %s155
    %p164 = scmp.eq.s32.totalorder %s18, 0
    %p165 = por %p163, %p164
    %p166 = scmp.ne.s32.totalorder %s154, %s155
    %p167 = scmp.eq.s32.totalorder %s19, 1
    %p168 = por %p166, %p167
    %p170 = scmp.ne.s32.totalorder %s155, %s169
    %p171 = scmp.eq.s32.totalorder %s19, 0
    %p172 = por %p170, %p171
    %s173 = ssub.s32 %s13, %s20
    %p174 = scmp.eq.s32.totalorder %s173, 0
    %s176 = sadd.s32 %s175, 1
    %s177 = scalar_select %p174, %s175, %s176
    %p180 = pneg %p174
    %p181 = scmp.eq.s32.totalorder %s13, 1
    %p182 = por %p180, %p181
    %p183 = scmp.ne.s32.totalorder %s175, %s178
    %p184 = scmp.eq.s32.totalorder %s13, 0
    %p185 = por %p183, %p184
    %p186 = scmp.ne.s32.totalorder %s175, %s178
    %p187 = scmp.eq.s32.totalorder %s18, 1
    %p188 = por %p186, %p187
    %p189 = scmp.ne.s32.totalorder %s178, %s179
    %p190 = scmp.eq.s32.totalorder %s18, 0
    %p191 = por %p189, %p190
    %p192 = scmp.ne.s32.totalorder %s178, %s179
    %p193 = scmp.eq.s32.totalorder %s19, 1
    %p194 = por %p192, %p193
    %p196 = scmp.ne.s32.totalorder %s179, %s195
    %p197 = scmp.eq.s32.totalorder %s19, 0
    %p198 = por %p196, %p197
    %p199 = scmp.le.s32.totalorder 1, %s13
    %p200 = scmp.lt.s32.totalorder %s13, 3
    %p201 = pnand %p199, %p200
    %p202 = pneg %p201
    // Predicated region
    $region9: #{fcn_forward.1} parent=5 // pred_check
      _
    $region10: #{fcn_forward.1} parent=5 // pred_check_branch
      %204 = sbr.rel (%p201) target = $region12
    $region11: #{fcn_forward.1} parent=5 // pred_region
      %s205 = ssub.s32 %s13, 1
      // Predicated region
      $region13: #{fcn_forward.1} parent=11 // pred_check
        %p206 = pneg %p60
      $region14: #{fcn_forward.1} parent=11 // pred_check_branch
        %208 = sbr.rel (%p206) target = $region16
      $region15: #{fcn_forward.1} parent=11 // pred_region
        _
      $region16: #{fcn_forward.1} parent=11 // pred_fallthru
        _
      // Predicated region
      $region17: #{fcn_forward.1} parent=11 // pred_check
        %p209 = pneg %p81
      $region18: #{fcn_forward.1} parent=11 // pred_check_branch
        %211 = sbr.rel (%p209) target = $region20
      $region19: #{fcn_forward.1} parent=11 // pred_region
        _
      $region20: #{fcn_forward.1} parent=11 // pred_fallthru
        _
      // Predicated region
      $region21: #{fcn_forward.1} parent=11 // pred_check
        %p212 = pneg %p102
      $region22: #{fcn_forward.1} parent=11 // pred_check_branch
        %214 = sbr.rel (%p212) target = $region24
      $region23: #{fcn_forward.1} parent=11 // pred_region
        _
      $region24: #{fcn_forward.1} parent=11 // pred_fallthru
        _
      // Predicated region
      $region25: #{fcn_forward.1} parent=11 // pred_check
        %p215 = pneg %p123
      $region26: #{fcn_forward.1} parent=11 // pred_check_branch
        %217 = sbr.rel (%p215) target = $region28
      $region27: #{fcn_forward.1} parent=11 // pred_region
        _
      $region28: #{fcn_forward.1} parent=11 // pred_fallthru
        _
      // Predicated region
      $region29: #{fcn_forward.1} parent=11 // pred_check
        %p218 = pneg %p144
      $region30: #{fcn_forward.1} parent=11 // pred_check_branch
        %220 = sbr.rel (%p218) target = $region32
      $region31: #{fcn_forward.1} parent=11 // pred_region
        _
      $region32: #{fcn_forward.1} parent=11 // pred_fallthru
        _
      // Predicated region
      $region33: #{fcn_forward.1} parent=11 // pred_check
        %p221 = pneg %p165
      $region34: #{fcn_forward.1} parent=11 // pred_check_branch
        %223 = sbr.rel (%p221) target = $region36
      $region35: #{fcn_forward.1} parent=11 // pred_region
        _
      $region36: #{fcn_forward.1} parent=11 // pred_fallthru
        _
    $region12: #{fcn_forward.1} parent=5 // pred_fallthru
      _
    %p224 = scmp.lt.s32.totalorder %s13, 2
    // Predicated region
    $region37: #{fcn_forward.1} parent=5 // pred_check
      %p225 = pneg %p224
    $region38: #{fcn_forward.1} parent=5 // pred_check_branch
      %227 = sbr.rel (%p225) target = $region40
    $region39: #{fcn_forward.1} parent=5 // pred_region
      // Predicated region
      $region41: #{fcn_forward.1} parent=39 // pred_check
        %p228 = pneg %p33
      $region42: #{fcn_forward.1} parent=39 // pred_check_branch
        %230 = sbr.rel (%p228) target = $region44
      $region43: #{fcn_forward.1} parent=39 // pred_region
        %p231 = scmp.lt.s32.totalorder %s13, 1
        %s232 = scalar_select %p231, %s13, 1
        %s233 = smul.addr %s232, 32
        %s234 = smul.addr %s233, 8
        %s235 = scalar_lea.vmem %s0, %s234
      $region44: #{fcn_forward.1} parent=39 // pred_fallthru
        _
    $region40: #{fcn_forward.1} parent=5 // pred_fallthru
      _
    %p236 = scmp.le.s32.totalorder 1, %s13
    %p237 = scmp.lt.s32.totalorder %s13, 3
    %p238 = pnand %p236, %p237
    %p239 = pneg %p238
    // Predicated region
    $region45: #{fcn_forward.1} parent=5 // pred_check
      _
    $region46: #{fcn_forward.1} parent=5 // pred_check_branch
      %241 = sbr.rel (%p238) target = $region48
    $region47: #{fcn_forward.1} parent=5 // pred_region
      %s242 = ssub.s32 %s13, 1
      %p243 = scmp.lt.s32.totalorder %s18, 1
      %s244 = scalar_select %p243, %s18, 1
      %s245 = smul.addr %s244, 32
      %s246 = smul.addr %s245, 8
      %s247 = scalar_lea.vmem %s0, %s246
      %p248 = pneg %p39
      %p249 = pneg %p36
      %p250 = pneg %p60
      %p251 = pneg %p57
      %p252 = pneg %p81
      %p253 = pneg %p78
      %p254 = pneg %p102
      %p255 = pneg %p99
      %p256 = pneg %p123
      %p257 = pneg %p120
      %p258 = pneg %p144
      %p259 = pneg %p141
      %p260 = pneg %p165
      %p261 = pneg %p162
      %p262 = pneg %p191
      %p263 = pneg %p188
      %p264 = scmp.lt.s32.totalorder %s18, 1
      %s265 = scalar_select %p264, %s18, 1
      %s266 = smul.addr %s265, 2
      %s267 = smul.addr %s266, 4
      %s268 = scalar_lea.vmem %s7, %s267
      %p269 = scmp.lt.s32.totalorder %s18, 1
      %s270 = scalar_select %p269, %s18, 1
      %s271 = smul.addr %s270, 32
      %s272 = smul.addr %s271, 8
      %s273 = scalar_lea.vmem %s0, %s272
      %p274 = scmp.lt.s32.totalorder %s18, 1
      %s275 = scalar_select %p274, %s18, 1
      %s276 = smul.addr %s275, 2
      %s277 = smul.addr %s276, 4
      %s278 = scalar_lea.vmem %s7, %s277
      %vm279 = vcmask 261120
      %280 = vst.msk [vmem:[#allocation2] sm:$0xff] %vm279, 0.0
      %281 = vst.msk [vmem:[#allocation2 + $0x8] sm:$0xff] %vm279, 0.0
      %vm282 = vcmask 254976
      %283 = vst.msk [vmem:[#allocation2 + $0x10] sm:$0x3] %vm282, 0.0
      %284 = vst.msk [vmem:[#allocation2 + $0x18] sm:$0xff] %vm279, 0.0
      %285 = vst.msk [vmem:[#allocation2 + $0x20] sm:$0xff] %vm279, 0.0
      %286 = vst.msk [vmem:[#allocation2 + $0x28] sm:$0x3] %vm282, 0.0
      %287 = vst.msk [vmem:[#allocation2 + $0x30] sm:$0xff] %vm279, 0.0
      %288 = vst.msk [vmem:[#allocation2 + $0x38] sm:$0xff] %vm279, 0.0
      %289 = vst.msk [vmem:[#allocation2 + $0x40] sm:$0x3] %vm282, 0.0
      %290 = vst.msk [vmem:[#allocation2 + $0x48] sm:$0xff] %vm279, 0.0
      %291 = vst.msk [vmem:[#allocation2 + $0x50] sm:$0xff] %vm279, 0.0
      %292 = vst.msk [vmem:[#allocation2 + $0x58] sm:$0x3] %vm282, 0.0
      %293 = vst.msk [vmem:[#allocation2 + $0x60] sm:$0xff] %vm279, 0.0
      %294 = vst.msk [vmem:[#allocation2 + $0x68] sm:$0xff] %vm279, 0.0
      %295 = vst.msk [vmem:[#allocation2 + $0x70] sm:$0x3] %vm282, 0.0
      %296 = vst.msk [vmem:[#allocation2 + $0x78] sm:$0xff] %vm279, 0.0
      %297 = vst.msk [vmem:[#allocation2 + $0x80] sm:$0xff] %vm279, 0.0
      %298 = vst.msk [vmem:[#allocation2 + $0x88] sm:$0x3] %vm282, 0.0
      %299 = vst.msk [vmem:[#allocation2 + $0x90] sm:$0xff] %vm279, 0.0
      %300 = vst.msk [vmem:[#allocation2 + $0x98] sm:$0xff] %vm279, 0.0
      %301 = vst.msk [vmem:[#allocation2 + $0xa0] sm:$0x3] %vm282, 0.0
      %302 = vst.msk [vmem:[#allocation2 + $0xa8] sm:$0xff] %vm279, 0.0
      %303 = vst.msk [vmem:[#allocation2 + $0xb0] sm:$0xff] %vm279, 0.0
      %304 = vst.msk [vmem:[#allocation2 + $0xb8] sm:$0x3] %vm282, 0.0
      %305 = vst.msk [vmem:[#allocation2 + $0xc0] sm:$0xff] %vm279, 0.0
      %306 = vst.msk [vmem:[#allocation2 + $0xc8] sm:$0xff] %vm279, 0.0
      %307 = vst.msk [vmem:[#allocation2 + $0xd0] sm:$0x3] %vm282, 0.0
      %308 = vst.msk [vmem:[#allocation2 + $0xd8] sm:$0xff] %vm279, 0.0
      %309 = vst.msk [vmem:[#allocation2 + $0xe0] sm:$0xff] %vm279, 0.0
      %310 = vst.msk [vmem:[#allocation2 + $0xe8] sm:$0x3] %vm282, 0.0
      %311 = vst.msk [vmem:[#allocation2 + $0xf0] sm:$0xff] %vm279, 0.0
      %312 = vst.msk [vmem:[#allocation2 + $0xf8] sm:$0xff] %vm279, 0.0
      %313 = vst.msk [vmem:[#allocation2 + $0x100] sm:$0x3] %vm282, 0.0
      %314 = vst.msk [vmem:[#allocation2 + $0x108] sm:$0xff] %vm279, 0.0
      %315 = vst.msk [vmem:[#allocation2 + $0x110] sm:$0xff] %vm279, 0.0
      %316 = vst.msk [vmem:[#allocation2 + $0x118] sm:$0x3] %vm282, 0.0
      %317 = vst.msk [vmem:[#allocation2 + $0x120] sm:$0xff] %vm279, 0.0
      %318 = vst.msk [vmem:[#allocation2 + $0x128] sm:$0xff] %vm279, 0.0
      %319 = vst.msk [vmem:[#allocation2 + $0x130] sm:$0x3] %vm282, 0.0
      %320 = vst.msk [vmem:[#allocation2 + $0x138] sm:$0xff] %vm279, 0.0
      %321 = vst.msk [vmem:[#allocation2 + $0x140] sm:$0xff] %vm279, 0.0
      %322 = vst.msk [vmem:[#allocation2 + $0x148] sm:$0x3] %vm282, 0.0
      %323 = vst.msk [vmem:[#allocation2 + $0x150] sm:$0xff] %vm279, 0.0
      %324 = vst.msk [vmem:[#allocation2 + $0x158] sm:$0xff] %vm279, 0.0
      %325 = vst.msk [vmem:[#allocation2 + $0x160] sm:$0x3] %vm282, 0.0
      %326 = vst.msk [vmem:[#allocation2 + $0x168] sm:$0xff] %vm279, 0.0
      %327 = vst.msk [vmem:[#allocation2 + $0x170] sm:$0xff] %vm279, 0.0
      %328 = vst.msk [vmem:[#allocation2 + $0x178] sm:$0x3] %vm282, 0.0
      %329 = vst.msk [vmem:[#allocation2 + $0x180] sm:$0xff] %vm279, 0.0
      %330 = vst.msk [vmem:[#allocation2 + $0x188] sm:$0xff] %vm279, 0.0
      %331 = vst.msk [vmem:[#allocation2 + $0x190] sm:$0x3] %vm282, 0.0
      %332 = vst.msk [vmem:[#allocation2 + $0x198] sm:$0xff] %vm279, 0.0
      %333 = vst.msk [vmem:[#allocation2 + $0x1a0] sm:$0xff] %vm279, 0.0
      %334 = vst.msk [vmem:[#allocation2 + $0x1a8] sm:$0x3] %vm282, 0.0
      %v335 = vld [vmem:[%s273] sm:$0xff]
      %v336 = vld [vmem:[%s273 + $0x8] sm:$0xff]
      %v337 = vld [vmem:[%s273 + $0x10] sm:$0xff]
      %v338 = vld [vmem:[%s273 + $0x18] sm:$0xff]
      %v339 = vld [vmem:[%s273 + $0x20] sm:$0xff]
      %v340 = vld [vmem:[%s273 + $0x28] sm:$0xff]
      %v341 = vld [vmem:[%s273 + $0x30] sm:$0xff]
      %v342 = vld [vmem:[%s273 + $0x38] sm:$0xff]
      %v343 = vld [vmem:[%s273 + $0x40] sm:$0xff]
      %v344 = vld [vmem:[%s273 + $0x48] sm:$0xff]
      %v345 = vld [vmem:[%s273 + $0x50] sm:$0xff]
      %v346 = vld [vmem:[%s273 + $0x58] sm:$0xff]
      %v347 = vld [vmem:[%s273 + $0x60] sm:$0xff]
      %v348 = vld [vmem:[%s273 + $0x68] sm:$0xff]
      %v349 = vld [vmem:[%s273 + $0x70] sm:$0xff]
      %v350 = vld [vmem:[%s273 + $0x78] sm:$0xff]
      %v351 = vld [vmem:[%s273 + $0x80] sm:$0xff]
      %v352 = vld [vmem:[%s273 + $0x88] sm:$0xff]
      %v353 = vld [vmem:[%s273 + $0x90] sm:$0xff]
      %v354 = vld [vmem:[%s273 + $0x98] sm:$0xff]
      %v355 = vld [vmem:[%s273 + $0xa0] sm:$0xff]
      %v356 = vld [vmem:[%s273 + $0xa8] sm:$0xff]
      %v357 = vld [vmem:[%s273 + $0xb0] sm:$0xff]
      %v358 = vld [vmem:[%s273 + $0xb8] sm:$0xff]
      %v359 = vld [vmem:[%s273 + $0xc0] sm:$0xff]
      %v360 = vld [vmem:[%s273 + $0xc8] sm:$0xff]
      %v361 = vld [vmem:[%s273 + $0xd0] sm:$0xff]
      %v362 = vld [vmem:[%s273 + $0xd8] sm:$0xff]
      %v363 = vld [vmem:[%s273 + $0xe0] sm:$0xff]
      %v364 = vld [vmem:[%s273 + $0xe8] sm:$0xff]
      %v365 = vld [vmem:[%s273 + $0xf0] sm:$0xff]
      %v366 = vld [vmem:[%s273 + $0xf8] sm:$0xff]
      %vm367 = vcmask 23552
      %v368 = vsel %vm367, %v335, 0.0
      %v369 = vsel %vm367, %v336, 0.0
      %v370 = vsel %vm367, %v337, 0.0
      %v371 = vsel %vm367, %v338, 0.0
      %v372 = vsel %vm367, %v339, 0.0
      %v373 = vsel %vm367, %v340, 0.0
      %v374 = vsel %vm367, %v341, 0.0
      %v375 = vsel %vm367, %v342, 0.0
      %v376 = vsel %vm367, %v343, 0.0
      %v377 = vsel %vm367, %v344, 0.0
      %v378 = vsel %vm367, %v345, 0.0
      %v379 = vsel %vm367, %v346, 0.0
      %v380 = vsel %vm367, %v347, 0.0
      %v381 = vsel %vm367, %v348, 0.0
      %v382 = vsel %vm367, %v349, 0.0
      %v383 = vsel %vm367, %v350, 0.0
      %v384 = vsel %vm367, %v351, 0.0
      %v385 = vsel %vm367, %v352, 0.0
      %v386 = vsel %vm367, %v353, 0.0
      %v387 = vsel %vm367, %v354, 0.0
      %v388 = vsel %vm367, %v355, 0.0
      %v389 = vsel %vm367, %v356, 0.0
      %v390 = vsel %vm367, %v357, 0.0
      %v391 = vsel %vm367, %v358, 0.0
      %v392 = vsel %vm367, %v359, 0.0
      %v393 = vsel %vm367, %v360, 0.0
      %v394 = vsel %vm367, %v361, 0.0
      %v395 = vsel %vm367, %v362, 0.0
      %v396 = vsel %vm367, %v363, 0.0
      %v397 = vsel %vm367, %v364, 0.0
      %v398 = vsel %vm367, %v365, 0.0
      %v399 = vsel %vm367, %v366, 0.0
      %s400 = scalar_lea.vmem [#allocation2], 24
      %401 = vst.msk [vmem:[%s400 + $0x1] sm:$0xff] %vm279, %v368
      %402 = vst.msk [vmem:[%s400 + $0x9] sm:$0xff] %vm279, %v369
      %403 = vst.msk [vmem:[%s400 + $0x19] sm:$0xff] %vm279, %v370
      %404 = vst.msk [vmem:[%s400 + $0x21] sm:$0xff] %vm279, %v371
      %405 = vst.msk [vmem:[%s400 + $0x31] sm:$0xff] %vm279, %v372
      %406 = vst.msk [vmem:[%s400 + $0x39] sm:$0xff] %vm279, %v373
      %407 = vst.msk [vmem:[%s400 + $0x49] sm:$0xff] %vm279, %v374
      %408 = vst.msk [vmem:[%s400 + $0x51] sm:$0xff] %vm279, %v375
      %409 = vst.msk [vmem:[%s400 + $0x61] sm:$0xff] %vm279, %v376
      %410 = vst.msk [vmem:[%s400 + $0x69] sm:$0xff] %vm279, %v377
      %411 = vst.msk [vmem:[%s400 + $0x79] sm:$0xff] %vm279, %v378
      %412 = vst.msk [vmem:[%s400 + $0x81] sm:$0xff] %vm279, %v379
      %413 = vst.msk [vmem:[%s400 + $0x91] sm:$0xff] %vm279, %v380
      %414 = vst.msk [vmem:[%s400 + $0x99] sm:$0xff] %vm279, %v381
      %415 = vst.msk [vmem:[%s400 + $0xa9] sm:$0xff] %vm279, %v382
      %416 = vst.msk [vmem:[%s400 + $0xb1] sm:$0xff] %vm279, %v383
      %417 = vst.msk [vmem:[%s400 + $0xc1] sm:$0xff] %vm279, %v384
      %418 = vst.msk [vmem:[%s400 + $0xc9] sm:$0xff] %vm279, %v385
      %419 = vst.msk [vmem:[%s400 + $0xd9] sm:$0xff] %vm279, %v386
      %420 = vst.msk [vmem:[%s400 + $0xe1] sm:$0xff] %vm279, %v387
      %421 = vst.msk [vmem:[%s400 + $0xf1] sm:$0xff] %vm279, %v388
      %422 = vst.msk [vmem:[%s400 + $0xf9] sm:$0xff] %vm279, %v389
      %423 = vst.msk [vmem:[%s400 + $0x109] sm:$0xff] %vm279, %v390
      %424 = vst.msk [vmem:[%s400 + $0x111] sm:$0xff] %vm279, %v391
      %425 = vst.msk [vmem:[%s400 + $0x121] sm:$0xff] %vm279, %v392
      %426 = vst.msk [vmem:[%s400 + $0x129] sm:$0xff] %vm279, %v393
      %427 = vst.msk [vmem:[%s400 + $0x139] sm:$0xff] %vm279, %v394
      %428 = vst.msk [vmem:[%s400 + $0x141] sm:$0xff] %vm279, %v395
      %429 = vst.msk [vmem:[%s400 + $0x151] sm:$0xff] %vm279, %v396
      %430 = vst.msk [vmem:[%s400 + $0x159] sm:$0xff] %vm279, %v397
      %431 = vst.msk [vmem:[%s400 + $0x169] sm:$0xff] %vm279, %v398
      %432 = vst.msk [vmem:[%s400 + $0x171] sm:$0xff] %vm279, %v399
      %v433 = vld [vmem:[#allocation2] sm:$0xff]
      %v434 = vld [vmem:[#allocation2 + $0x8] sm:$0xff]
      %v435 = vld [vmem:[#allocation2 + $0x18] sm:$0xff]
      %v436 = vld [vmem:[#allocation2 + $0x20] sm:$0xff]
      %v437 = vld [vmem:[#allocation2 + $0x30] sm:$0xff]
      %v438 = vld [vmem:[#allocation2 + $0x38] sm:$0xff]
      %v439 = vld [vmem:[#allocation2 + $0x48] sm:$0xff]
      %v440 = vld [vmem:[#allocation2 + $0x50] sm:$0xff]
      %v441 = vld [vmem:[#allocation2 + $0x60] sm:$0xff]
      %v442 = vld [vmem:[#allocation2 + $0x68] sm:$0xff]
      %v443 = vld [vmem:[#allocation2 + $0x78] sm:$0xff]
      %v444 = vld [vmem:[#allocation2 + $0x80] sm:$0xff]
      %v445 = vld [vmem:[#allocation2 + $0x90] sm:$0xff]
      %v446 = vld [vmem:[#allocation2 + $0x98] sm:$0xff]
      %v447 = vld [vmem:[#allocation2 + $0xa8] sm:$0xff]
      %v448 = vld [vmem:[#allocation2 + $0xb0] sm:$0xff]
      %v449 = vld [vmem:[#allocation2 + $0xc0] sm:$0xff]
      %v450 = vld [vmem:[#allocation2 + $0xc8] sm:$0xff]
      %v451 = vld [vmem:[#allocation2 + $0xd8] sm:$0xff]
      %v452 = vld [vmem:[#allocation2 + $0xe0] sm:$0xff]
      %v453 = vld [vmem:[#allocation2 + $0xf0] sm:$0xff]
      %v454 = vld [vmem:[#allocation2 + $0xf8] sm:$0xff]
      %v455 = vld [vmem:[#allocation2 + $0x108] sm:$0xff]
      %v456 = vld [vmem:[#allocation2 + $0x110] sm:$0xff]
      %v457 = vld [vmem:[#allocation2 + $0x120] sm:$0xff]
      %v458 = vld [vmem:[#allocation2 + $0x128] sm:$0xff]
      %v459 = vld [vmem:[#allocation2 + $0x138] sm:$0xff]
      %v460 = vld [vmem:[#allocation2 + $0x140] sm:$0xff]
      %v461 = vld [vmem:[#allocation2 + $0x150] sm:$0xff]
      %v462 = vld [vmem:[#allocation2 + $0x158] sm:$0xff]
      %v463 = vld [vmem:[#allocation2 + $0x168] sm:$0xff]
      %v464 = vld [vmem:[#allocation2 + $0x170] sm:$0xff]
      %v465 = vld [vmem:[#allocation2 + $0x1] sm:$0xff]
      %v466 = vld [vmem:[#allocation2 + $0x9] sm:$0xff]
      %v467 = vld [vmem:[#allocation2 + $0x19] sm:$0xff]
      %v468 = vld [vmem:[#allocation2 + $0x21] sm:$0xff]
      %v469 = vld [vmem:[#allocation2 + $0x31] sm:$0xff]
      %v470 = vld [vmem:[#allocation2 + $0x39] sm:$0xff]
      %v471 = vld [vmem:[#allocation2 + $0x49] sm:$0xff]
      %v472 = vld [vmem:[#allocation2 + $0x51] sm:$0xff]
      %v473 = vld [vmem:[#allocation2 + $0x61] sm:$0xff]
      %v474 = vld [vmem:[#allocation2 + $0x69] sm:$0xff]
      %v475 = vld [vmem:[#allocation2 + $0x79] sm:$0xff]
      %v476 = vld [vmem:[#allocation2 + $0x81] sm:$0xff]
      %v477 = vld [vmem:[#allocation2 + $0x91] sm:$0xff]
      %v478 = vld [vmem:[#allocation2 + $0x99] sm:$0xff]
      %v479 = vld [vmem:[#allocation2 + $0xa9] sm:$0xff]
      %v480 = vld [vmem:[#allocation2 + $0xb1] sm:$0xff]
      %v481 = vld [vmem:[#allocation2 + $0xc1] sm:$0xff]
      %v482 = vld [vmem:[#allocation2 + $0xc9] sm:$0xff]
      %v483 = vld [vmem:[#allocation2 + $0xd9] sm:$0xff]
      %v484 = vld [vmem:[#allocation2 + $0xe1] sm:$0xff]
      %v485 = vld [vmem:[#allocation2 + $0xf1] sm:$0xff]
      %v486 = vld [vmem:[#allocation2 + $0xf9] sm:$0xff]
      %v487 = vld [vmem:[#allocation2 + $0x109] sm:$0xff]
      %v488 = vld [vmem:[#allocation2 + $0x111] sm:$0xff]
      %v489 = vld [vmem:[#allocation2 + $0x121] sm:$0xff]
      %v490 = vld [vmem:[#allocation2 + $0x129] sm:$0xff]
      %v491 = vld [vmem:[#allocation2 + $0x139] sm:$0xff]
      %v492 = vld [vmem:[#allocation2 + $0x141] sm:$0xff]
      %v493 = vld [vmem:[#allocation2 + $0x151] sm:$0xff]
      %v494 = vld [vmem:[#allocation2 + $0x159] sm:$0xff]
      %v495 = vld [vmem:[#allocation2 + $0x169] sm:$0xff]
      %v496 = vld [vmem:[#allocation2 + $0x171] sm:$0xff]
      %v497 = vld [vmem:[#allocation2 + $0x2] sm:$0xff]
      %v498 = vld [vmem:[#allocation2 + $0xa] sm:$0xff]
      %v499 = vld [vmem:[#allocation2 + $0x1a] sm:$0xff]
      %v500 = vld [vmem:[#allocation2 + $0x22] sm:$0xff]
      %v501 = vld [vmem:[#allocation2 + $0x32] sm:$0xff]
      %v502 = vld [vmem:[#allocation2 + $0x3a] sm:$0xff]
      %v503 = vld [vmem:[#allocation2 + $0x4a] sm:$0xff]
      %v504 = vld [vmem:[#allocation2 + $0x52] sm:$0xff]
      %v505 = vld [vmem:[#allocation2 + $0x62] sm:$0xff]
      %v506 = vld [vmem:[#allocation2 + $0x6a] sm:$0xff]
      %v507 = vld [vmem:[#allocation2 + $0x7a] sm:$0xff]
      %v508 = vld [vmem:[#allocation2 + $0x82] sm:$0xff]
      %v509 = vld [vmem:[#allocation2 + $0x92] sm:$0xff]
      %v510 = vld [vmem:[#allocation2 + $0x9a] sm:$0xff]
      %v511 = vld [vmem:[#allocation2 + $0xaa] sm:$0xff]
      %v512 = vld [vmem:[#allocation2 + $0xb2] sm:$0xff]
      %v513 = vld [vmem:[#allocation2 + $0xc2] sm:$0xff]
      %v514 = vld [vmem:[#allocation2 + $0xca] sm:$0xff]
      %v515 = vld [vmem:[#allocation2 + $0xda] sm:$0xff]
      %v516 = vld [vmem:[#allocation2 + $0xe2] sm:$0xff]
      %v517 = vld [vmem:[#allocation2 + $0xf2] sm:$0xff]
      %v518 = vld [vmem:[#allocation2 + $0xfa] sm:$0xff]
      %v519 = vld [vmem:[#allocation2 + $0x10a] sm:$0xff]
      %v520 = vld [vmem:[#allocation2 + $0x112] sm:$0xff]
      %v521 = vld [vmem:[#allocation2 + $0x122] sm:$0xff]
      %v522 = vld [vmem:[#allocation2 + $0x12a] sm:$0xff]
      %v523 = vld [vmem:[#allocation2 + $0x13a] sm:$0xff]
      %v524 = vld [vmem:[#allocation2 + $0x142] sm:$0xff]
      %v525 = vld [vmem:[#allocation2 + $0x152] sm:$0xff]
      %v526 = vld [vmem:[#allocation2 + $0x15a] sm:$0xff]
      %v527 = vld [vmem:[#allocation2 + $0x16a] sm:$0xff]
      %v528 = vld [vmem:[#allocation2 + $0x172] sm:$0xff]
      %v529 = vld [vmem:[%s400] sm:$0xff]
      %v530 = vld [vmem:[%s400 + $0x8] sm:$0xff]
      %v531 = vld [vmem:[%s400 + $0x18] sm:$0xff]
      %v532 = vld [vmem:[%s400 + $0x20] sm:$0xff]
      %v533 = vld [vmem:[%s400 + $0x30] sm:$0xff]
      %v534 = vld [vmem:[%s400 + $0x38] sm:$0xff]
      %v535 = vld [vmem:[%s400 + $0x48] sm:$0xff]
      %v536 = vld [vmem:[%s400 + $0x50] sm:$0xff]
      %v537 = vld [vmem:[%s400 + $0x60] sm:$0xff]
      %v538 = vld [vmem:[%s400 + $0x68] sm:$0xff]
      %v539 = vld [vmem:[%s400 + $0x78] sm:$0xff]
      %v540 = vld [vmem:[%s400 + $0x80] sm:$0xff]
      %v541 = vld [vmem:[%s400 + $0x90] sm:$0xff]
      %v542 = vld [vmem:[%s400 + $0x98] sm:$0xff]
      %v543 = vld [vmem:[%s400 + $0xa8] sm:$0xff]
      %v544 = vld [vmem:[%s400 + $0xb0] sm:$0xff]
      %v545 = vld [vmem:[%s400 + $0xc0] sm:$0xff]
      %v546 = vld [vmem:[%s400 + $0xc8] sm:$0xff]
      %v547 = vld [vmem:[%s400 + $0xd8] sm:$0xff]
      %v548 = vld [vmem:[%s400 + $0xe0] sm:$0xff]
      %v549 = vld [vmem:[%s400 + $0xf0] sm:$0xff]
      %v550 = vld [vmem:[%s400 + $0xf8] sm:$0xff]
      %v551 = vld [vmem:[%s400 + $0x108] sm:$0xff]
      %v552 = vld [vmem:[%s400 + $0x110] sm:$0xff]
      %v553 = vld [vmem:[%s400 + $0x120] sm:$0xff]
      %v554 = vld [vmem:[%s400 + $0x128] sm:$0xff]
      %v555 = vld [vmem:[%s400 + $0x138] sm:$0xff]
      %v556 = vld [vmem:[%s400 + $0x140] sm:$0xff]
      %v557 = vld [vmem:[%s400 + $0x150] sm:$0xff]
      %v558 = vld [vmem:[%s400 + $0x158] sm:$0xff]
      %v559 = vld [vmem:[%s400 + $0x168] sm:$0xff]
      %v560 = vld [vmem:[%s400 + $0x170] sm:$0xff]
      %v561 = vld [vmem:[%s400 + $0x1] sm:$0xff]
      %v562 = vld [vmem:[%s400 + $0x9] sm:$0xff]
      %v563 = vld [vmem:[%s400 + $0x19] sm:$0xff]
      %v564 = vld [vmem:[%s400 + $0x21] sm:$0xff]
      %v565 = vld [vmem:[%s400 + $0x31] sm:$0xff]
      %v566 = vld [vmem:[%s400 + $0x39] sm:$0xff]
      %v567 = vld [vmem:[%s400 + $0x49] sm:$0xff]
      %v568 = vld [vmem:[%s400 + $0x51] sm:$0xff]
      %v569 = vld [vmem:[%s400 + $0x61] sm:$0xff]
      %v570 = vld [vmem:[%s400 + $0x69] sm:$0xff]
      %v571 = vld [vmem:[%s400 + $0x79] sm:$0xff]
      %v572 = vld [vmem:[%s400 + $0x81] sm:$0xff]
      %v573 = vld [vmem:[%s400 + $0x91] sm:$0xff]
      %v574 = vld [vmem:[%s400 + $0x99] sm:$0xff]
      %v575 = vld [vmem:[%s400 + $0xa9] sm:$0xff]
      %v576 = vld [vmem:[%s400 + $0xb1] sm:$0xff]
      %v577 = vld [vmem:[%s400 + $0xc1] sm:$0xff]
      %v578 = vld [vmem:[%s400 + $0xc9] sm:$0xff]
      %v579 = vld [vmem:[%s400 + $0xd9] sm:$0xff]
      %v580 = vld [vmem:[%s400 + $0xe1] sm:$0xff]
      %v581 = vld [vmem:[%s400 + $0xf1] sm:$0xff]
      %v582 = vld [vmem:[%s400 + $0xf9] sm:$0xff]
      %v583 = vld [vmem:[%s400 + $0x109] sm:$0xff]
      %v584 = vld [vmem:[%s400 + $0x111] sm:$0xff]
      %v585 = vld [vmem:[%s400 + $0x121] sm:$0xff]
      %v586 = vld [vmem:[%s400 + $0x129] sm:$0xff]
      %v587 = vld [vmem:[%s400 + $0x139] sm:$0xff]
      %v588 = vld [vmem:[%s400 + $0x141] sm:$0xff]
      %v589 = vld [vmem:[%s400 + $0x151] sm:$0xff]
      %v590 = vld [vmem:[%s400 + $0x159] sm:$0xff]
      %v591 = vld [vmem:[%s400 + $0x169] sm:$0xff]
      %v592 = vld [vmem:[%s400 + $0x171] sm:$0xff]
      %v593 = vld [vmem:[%s400 + $0x2] sm:$0xff]
      %v594 = vld [vmem:[%s400 + $0xa] sm:$0xff]
      %v595 = vld [vmem:[%s400 + $0x1a] sm:$0xff]
      %v596 = vld [vmem:[%s400 + $0x22] sm:$0xff]
      %v597 = vld [vmem:[%s400 + $0x32] sm:$0xff]
      %v598 = vld [vmem:[%s400 + $0x3a] sm:$0xff]
      %v599 = vld [vmem:[%s400 + $0x4a] sm:$0xff]
      %v600 = vld [vmem:[%s400 + $0x52] sm:$0xff]
      %v601 = vld [vmem:[%s400 + $0x62] sm:$0xff]
      %v602 = vld [vmem:[%s400 + $0x6a] sm:$0xff]
      %v603 = vld [vmem:[%s400 + $0x7a] sm:$0xff]
      %v604 = vld [vmem:[%s400 + $0x82] sm:$0xff]
      %v605 = vld [vmem:[%s400 + $0x92] sm:$0xff]
      %v606 = vld [vmem:[%s400 + $0x9a] sm:$0xff]
      %v607 = vld [vmem:[%s400 + $0xaa] sm:$0xff]
      %v608 = vld [vmem:[%s400 + $0xb2] sm:$0xff]
      %v609 = vld [vmem:[%s400 + $0xc2] sm:$0xff]
      %v610 = vld [vmem:[%s400 + $0xca] sm:$0xff]
      %v611 = vld [vmem:[%s400 + $0xda] sm:$0xff]
      %v612 = vld [vmem:[%s400 + $0xe2] sm:$0xff]
      %v613 = vld [vmem:[%s400 + $0xf2] sm:$0xff]
      %v614 = vld [vmem:[%s400 + $0xfa] sm:$0xff]
      %v615 = vld [vmem:[%s400 + $0x10a] sm:$0xff]
      %v616 = vld [vmem:[%s400 + $0x112] sm:$0xff]
      %v617 = vld [vmem:[%s400 + $0x122] sm:$0xff]
      %v618 = vld [vmem:[%s400 + $0x12a] sm:$0xff]
      %v619 = vld [vmem:[%s400 + $0x13a] sm:$0xff]
      %v620 = vld [vmem:[%s400 + $0x142] sm:$0xff]
      %v621 = vld [vmem:[%s400 + $0x152] sm:$0xff]
      %v622 = vld [vmem:[%s400 + $0x15a] sm:$0xff]
      %v623 = vld [vmem:[%s400 + $0x16a] sm:$0xff]
      %v624 = vld [vmem:[%s400 + $0x172] sm:$0xff]
      %s625 = scalar_lea.vmem [#allocation2], 48
      %v626 = vld [vmem:[%s625] sm:$0xff]
      %v627 = vld [vmem:[%s625 + $0x8] sm:$0xff]
      %v628 = vld [vmem:[%s625 + $0x18] sm:$0xff]
      %v629 = vld [vmem:[%s625 + $0x20] sm:$0xff]
      %v630 = vld [vmem:[%s625 + $0x30] sm:$0xff]
      %v631 = vld [vmem:[%s625 + $0x38] sm:$0xff]
      %v632 = vld [vmem:[%s625 + $0x48] sm:$0xff]
      %v633 = vld [vmem:[%s625 + $0x50] sm:$0xff]
      %v634 = vld [vmem:[%s625 + $0x60] sm:$0xff]
      %v635 = vld [vmem:[%s625 + $0x68] sm:$0xff]
      %v636 = vld [vmem:[%s625 + $0x78] sm:$0xff]
      %v637 = vld [vmem:[%s625 + $0x80] sm:$0xff]
      %v638 = vld [vmem:[%s625 + $0x90] sm:$0xff]
      %v639 = vld [vmem:[%s625 + $0x98] sm:$0xff]
      %v640 = vld [vmem:[%s625 + $0xa8] sm:$0xff]
      %v641 = vld [vmem:[%s625 + $0xb0] sm:$0xff]
      %v642 = vld [vmem:[%s625 + $0xc0] sm:$0xff]
      %v643 = vld [vmem:[%s625 + $0xc8] sm:$0xff]
      %v644 = vld [vmem:[%s625 + $0xd8] sm:$0xff]
      %v645 = vld [vmem:[%s625 + $0xe0] sm:$0xff]
      %v646 = vld [vmem:[%s625 + $0xf0] sm:$0xff]
      %v647 = vld [vmem:[%s625 + $0xf8] sm:$0xff]
      %v648 = vld [vmem:[%s625 + $0x108] sm:$0xff]
      %v649 = vld [vmem:[%s625 + $0x110] sm:$0xff]
      %v650 = vld [vmem:[%s625 + $0x120] sm:$0xff]
      %v651 = vld [vmem:[%s625 + $0x128] sm:$0xff]
      %v652 = vld [vmem:[%s625 + $0x138] sm:$0xff]
      %v653 = vld [vmem:[%s625 + $0x140] sm:$0xff]
      %v654 = vld [vmem:[%s625 + $0x150] sm:$0xff]
      %v655 = vld [vmem:[%s625 + $0x158] sm:$0xff]
      %v656 = vld [vmem:[%s625 + $0x168] sm:$0xff]
      %v657 = vld [vmem:[%s625 + $0x170] sm:$0xff]
      %v658 = vld [vmem:[%s625 + $0x1] sm:$0xff]
      %v659 = vld [vmem:[%s625 + $0x9] sm:$0xff]
      %v660 = vld [vmem:[%s625 + $0x19] sm:$0xff]
      %v661 = vld [vmem:[%s625 + $0x21] sm:$0xff]
      %v662 = vld [vmem:[%s625 + $0x31] sm:$0xff]
      %v663 = vld [vmem:[%s625 + $0x39] sm:$0xff]
      %v664 = vld [vmem:[%s625 + $0x49] sm:$0xff]
      %v665 = vld [vmem:[%s625 + $0x51] sm:$0xff]
      %v666 = vld [vmem:[%s625 + $0x61] sm:$0xff]
      %v667 = vld [vmem:[%s625 + $0x69] sm:$0xff]
      %v668 = vld [vmem:[%s625 + $0x79] sm:$0xff]
      %v669 = vld [vmem:[%s625 + $0x81] sm:$0xff]
      %v670 = vld [vmem:[%s625 + $0x91] sm:$0xff]
      %v671 = vld [vmem:[%s625 + $0x99] sm:$0xff]
      %v672 = vld [vmem:[%s625 + $0xa9] sm:$0xff]
      %v673 = vld [vmem:[%s625 + $0xb1] sm:$0xff]
      %v674 = vld [vmem:[%s625 + $0xc1] sm:$0xff]
      %v675 = vld [vmem:[%s625 + $0xc9] sm:$0xff]
      %v676 = vld [vmem:[%s625 + $0xd9] sm:$0xff]
      %v677 = vld [vmem:[%s625 + $0xe1] sm:$0xff]
      %v678 = vld [vmem:[%s625 + $0xf1] sm:$0xff]
      %v679 = vld [vmem:[%s625 + $0xf9] sm:$0xff]
      %v680 = vld [vmem:[%s625 + $0x109] sm:$0xff]
      %v681 = vld [vmem:[%s625 + $0x111] sm:$0xff]
      %v682 = vld [vmem:[%s625 + $0x121] sm:$0xff]
      %v683 = vld [vmem:[%s625 + $0x129] sm:$0xff]
      %v684 = vld [vmem:[%s625 + $0x139] sm:$0xff]
      %v685 = vld [vmem:[%s625 + $0x141] sm:$0xff]
      %v686 = vld [vmem:[%s625 + $0x151] sm:$0xff]
      %v687 = vld [vmem:[%s625 + $0x159] sm:$0xff]
      %v688 = vld [vmem:[%s625 + $0x169] sm:$0xff]
      %v689 = vld [vmem:[%s625 + $0x171] sm:$0xff]
      %v690 = vld [vmem:[%s625 + $0x2] sm:$0xff]
      %v691 = vld [vmem:[%s625 + $0xa] sm:$0xff]
      %v692 = vld [vmem:[%s625 + $0x1a] sm:$0xff]
      %v693 = vld [vmem:[%s625 + $0x22] sm:$0xff]
      %v694 = vld [vmem:[%s625 + $0x32] sm:$0xff]
      %v695 = vld [vmem:[%s625 + $0x3a] sm:$0xff]
      %v696 = vld [vmem:[%s625 + $0x4a] sm:$0xff]
      %v697 = vld [vmem:[%s625 + $0x52] sm:$0xff]
      %v698 = vld [vmem:[%s625 + $0x62] sm:$0xff]
      %v699 = vld [vmem:[%s625 + $0x6a] sm:$0xff]
      %v700 = vld [vmem:[%s625 + $0x7a] sm:$0xff]
      %v701 = vld [vmem:[%s625 + $0x82] sm:$0xff]
      %v702 = vld [vmem:[%s625 + $0x92] sm:$0xff]
      %v703 = vld [vmem:[%s625 + $0x9a] sm:$0xff]
      %v704 = vld [vmem:[%s625 + $0xaa] sm:$0xff]
      %v705 = vld [vmem:[%s625 + $0xb2] sm:$0xff]
      %v706 = vld [vmem:[%s625 + $0xc2] sm:$0xff]
      %v707 = vld [vmem:[%s625 + $0xca] sm:$0xff]
      %v708 = vld [vmem:[%s625 + $0xda] sm:$0xff]
      %v709 = vld [vmem:[%s625 + $0xe2] sm:$0xff]
      %v710 = vld [vmem:[%s625 + $0xf2] sm:$0xff]
      %v711 = vld [vmem:[%s625 + $0xfa] sm:$0xff]
      %v712 = vld [vmem:[%s625 + $0x10a] sm:$0xff]
      %v713 = vld [vmem:[%s625 + $0x112] sm:$0xff]
      %v714 = vld [vmem:[%s625 + $0x122] sm:$0xff]
      %v715 = vld [vmem:[%s625 + $0x12a] sm:$0xff]
      %v716 = vld [vmem:[%s625 + $0x13a] sm:$0xff]
      %v717 = vld [vmem:[%s625 + $0x142] sm:$0xff]
      %v718 = vld [vmem:[%s625 + $0x152] sm:$0xff]
      %v719 = vld [vmem:[%s625 + $0x15a] sm:$0xff]
      %v720 = vld [vmem:[%s625 + $0x16a] sm:$0xff]
      %v721 = vld [vmem:[%s625 + $0x172] sm:$0xff]
      %754 = vrot.lane.b32.xlu0 %v465, 32
      %v755 = vpop.permute.xlu0 %754
      %756 = vrot.lane.b32.xlu0 %v466, 32
      %v757 = vpop.permute.xlu0 %756
      %758 = vrot.lane.b32.xlu0 %v467, 32
      %v759 = vpop.permute.xlu0 %758
      %760 = vrot.lane.b32.xlu0 %v468, 32
      %v761 = vpop.permute.xlu0 %760
      %762 = vrot.lane.b32.xlu0 %v469, 32
      %v763 = vpop.permute.xlu0 %762
      %764 = vrot.lane.b32.xlu0 %v470, 32
      %v765 = vpop.permute.xlu0 %764
      %766 = vrot.lane.b32.xlu0 %v471, 32
      %v767 = vpop.permute.xlu0 %766
      %768 = vrot.lane.b32.xlu0 %v472, 32
      %v769 = vpop.permute.xlu0 %768
      %770 = vrot.lane.b32.xlu0 %v473, 32
      %v771 = vpop.permute.xlu0 %770
      %772 = vrot.lane.b32.xlu0 %v474, 32
      %v773 = vpop.permute.xlu0 %772
      %774 = vrot.lane.b32.xlu0 %v475, 32
      %v775 = vpop.permute.xlu0 %774
      %776 = vrot.lane.b32.xlu0 %v476, 32
      %v777 = vpop.permute.xlu0 %776
      %778 = vrot.lane.b32.xlu0 %v477, 32
      %v779 = vpop.permute.xlu0 %778
      %780 = vrot.lane.b32.xlu0 %v478, 32
      %v781 = vpop.permute.xlu0 %780
      %782 = vrot.lane.b32.xlu0 %v479, 32
      %v783 = vpop.permute.xlu0 %782
      %784 = vrot.lane.b32.xlu0 %v480, 32
      %v785 = vpop.permute.xlu0 %784
      %786 = vrot.lane.b32.xlu0 %v481, 32
      %v787 = vpop.permute.xlu0 %786
      %788 = vrot.lane.b32.xlu0 %v482, 32
      %v789 = vpop.permute.xlu0 %788
      %790 = vrot.lane.b32.xlu0 %v483, 32
      %v791 = vpop.permute.xlu0 %790
      %792 = vrot.lane.b32.xlu0 %v484, 32
      %v793 = vpop.permute.xlu0 %792
      %794 = vrot.lane.b32.xlu0 %v485, 32
      %v795 = vpop.permute.xlu0 %794
      %796 = vrot.lane.b32.xlu0 %v486, 32
      %v797 = vpop.permute.xlu0 %796
      %798 = vrot.lane.b32.xlu0 %v487, 32
      %v799 = vpop.permute.xlu0 %798
      %800 = vrot.lane.b32.xlu0 %v488, 32
      %v801 = vpop.permute.xlu0 %800
      %802 = vrot.lane.b32.xlu0 %v489, 32
      %v803 = vpop.permute.xlu0 %802
      %804 = vrot.lane.b32.xlu0 %v490, 32
      %v805 = vpop.permute.xlu0 %804
      %806 = vrot.lane.b32.xlu0 %v491, 32
      %v807 = vpop.permute.xlu0 %806
      %808 = vrot.lane.b32.xlu0 %v492, 32
      %v809 = vpop.permute.xlu0 %808
      %810 = vrot.lane.b32.xlu0 %v493, 32
      %v811 = vpop.permute.xlu0 %810
      %812 = vrot.lane.b32.xlu0 %v494, 32
      %v813 = vpop.permute.xlu0 %812
      %814 = vrot.lane.b32.xlu0 %v495, 32
      %v815 = vpop.permute.xlu0 %814
      %816 = vrot.lane.b32.xlu0 %v496, 32
      %v817 = vpop.permute.xlu0 %816
      %882 = vrot.lane.b32.xlu0 %v497, 64
      %v883 = vpop.permute.xlu0 %882
      %884 = vrot.lane.b32.xlu0 %v498, 64
      %v885 = vpop.permute.xlu0 %884
      %886 = vrot.lane.b32.xlu0 %v499, 64
      %v887 = vpop.permute.xlu0 %886
      %888 = vrot.lane.b32.xlu0 %v500, 64
      %v889 = vpop.permute.xlu0 %888
      %890 = vrot.lane.b32.xlu0 %v501, 64
      %v891 = vpop.permute.xlu0 %890
      %892 = vrot.lane.b32.xlu0 %v502, 64
      %v893 = vpop.permute.xlu0 %892
      %894 = vrot.lane.b32.xlu0 %v503, 64
      %v895 = vpop.permute.xlu0 %894
      %896 = vrot.lane.b32.xlu0 %v504, 64
      %v897 = vpop.permute.xlu0 %896
      %898 = vrot.lane.b32.xlu0 %v505, 64
      %v899 = vpop.permute.xlu0 %898
      %900 = vrot.lane.b32.xlu0 %v506, 64
      %v901 = vpop.permute.xlu0 %900
      %902 = vrot.lane.b32.xlu0 %v507, 64
      %v903 = vpop.permute.xlu0 %902
      %904 = vrot.lane.b32.xlu0 %v508, 64
      %v905 = vpop.permute.xlu0 %904
      %906 = vrot.lane.b32.xlu0 %v509, 64
      %v907 = vpop.permute.xlu0 %906
      %908 = vrot.lane.b32.xlu0 %v510, 64
      %v909 = vpop.permute.xlu0 %908
      %910 = vrot.lane.b32.xlu0 %v511, 64
      %v911 = vpop.permute.xlu0 %910
      %912 = vrot.lane.b32.xlu0 %v512, 64
      %v913 = vpop.permute.xlu0 %912
      %914 = vrot.lane.b32.xlu0 %v513, 64
      %v915 = vpop.permute.xlu0 %914
      %916 = vrot.lane.b32.xlu0 %v514, 64
      %v917 = vpop.permute.xlu0 %916
      %918 = vrot.lane.b32.xlu0 %v515, 64
      %v919 = vpop.permute.xlu0 %918
      %920 = vrot.lane.b32.xlu0 %v516, 64
      %v921 = vpop.permute.xlu0 %920
      %922 = vrot.lane.b32.xlu0 %v517, 64
      %v923 = vpop.permute.xlu0 %922
      %924 = vrot.lane.b32.xlu0 %v518, 64
      %v925 = vpop.permute.xlu0 %924
      %926 = vrot.lane.b32.xlu0 %v519, 64
      %v927 = vpop.permute.xlu0 %926
      %928 = vrot.lane.b32.xlu0 %v520, 64
      %v929 = vpop.permute.xlu0 %928
      %930 = vrot.lane.b32.xlu0 %v521, 64
      %v931 = vpop.permute.xlu0 %930
      %932 = vrot.lane.b32.xlu0 %v522, 64
      %v933 = vpop.permute.xlu0 %932
      %934 = vrot.lane.b32.xlu0 %v523, 64
      %v935 = vpop.permute.xlu0 %934
      %936 = vrot.lane.b32.xlu0 %v524, 64
      %v937 = vpop.permute.xlu0 %936
      %938 = vrot.lane.b32.xlu0 %v525, 64
      %v939 = vpop.permute.xlu0 %938
      %940 = vrot.lane.b32.xlu0 %v526, 64
      %v941 = vpop.permute.xlu0 %940
      %942 = vrot.lane.b32.xlu0 %v527, 64
      %v943 = vpop.permute.xlu0 %942
      %944 = vrot.lane.b32.xlu0 %v528, 64
      %v945 = vpop.permute.xlu0 %944
      %1010 = vrot.lane.b32.xlu0 %v529, 96
      %v1011 = vpop.permute.xlu0 %1010
      %1012 = vrot.lane.b32.xlu0 %v530, 96
      %v1013 = vpop.permute.xlu0 %1012
      %1014 = vrot.lane.b32.xlu0 %v531, 96
      %v1015 = vpop.permute.xlu0 %1014
      %1016 = vrot.lane.b32.xlu0 %v532, 96
      %v1017 = vpop.permute.xlu0 %1016
      %1018 = vrot.lane.b32.xlu0 %v533, 96
      %v1019 = vpop.permute.xlu0 %1018
      %1020 = vrot.lane.b32.xlu0 %v534, 96
      %v1021 = vpop.permute.xlu0 %1020
      %1022 = vrot.lane.b32.xlu0 %v535, 96
      %v1023 = vpop.permute.xlu0 %1022
      %1024 = vrot.lane.b32.xlu0 %v536, 96
      %v1025 = vpop.permute.xlu0 %1024
      %1026 = vrot.lane.b32.xlu0 %v537, 96
      %v1027 = vpop.permute.xlu0 %1026
      %1028 = vrot.lane.b32.xlu0 %v538, 96
      %v1029 = vpop.permute.xlu0 %1028
      %1030 = vrot.lane.b32.xlu0 %v539, 96
      %v1031 = vpop.permute.xlu0 %1030
      %1032 = vrot.lane.b32.xlu0 %v540, 96
      %v1033 = vpop.permute.xlu0 %1032
      %1034 = vrot.lane.b32.xlu0 %v541, 96
      %v1035 = vpop.permute.xlu0 %1034
      %1036 = vrot.lane.b32.xlu0 %v542, 96
      %v1037 = vpop.permute.xlu0 %1036
      %1038 = vrot.lane.b32.xlu0 %v543, 96
      %v1039 = vpop.permute.xlu0 %1038
      %1040 = vrot.lane.b32.xlu0 %v544, 96
      %v1041 = vpop.permute.xlu0 %1040
      %1042 = vrot.lane.b32.xlu0 %v545, 96
      %v1043 = vpop.permute.xlu0 %1042
      %1044 = vrot.lane.b32.xlu0 %v546, 96
      %v1045 = vpop.permute.xlu0 %1044
      %1046 = vrot.lane.b32.xlu0 %v547, 96
      %v1047 = vpop.permute.xlu0 %1046
      %1048 = vrot.lane.b32.xlu0 %v548, 96
      %v1049 = vpop.permute.xlu0 %1048
      %1050 = vrot.lane.b32.xlu0 %v549, 96
      %v1051 = vpop.permute.xlu0 %1050
      %1052 = vrot.lane.b32.xlu0 %v550, 96
      %v1053 = vpop.permute.xlu0 %1052
      %1054 = vrot.lane.b32.xlu0 %v551, 96
      %v1055 = vpop.permute.xlu0 %1054
      %1056 = vrot.lane.b32.xlu0 %v552, 96
      %v1057 = vpop.permute.xlu0 %1056
      %1058 = vrot.lane.b32.xlu0 %v553, 96
      %v1059 = vpop.permute.xlu0 %1058
      %1060 = vrot.lane.b32.xlu0 %v554, 96
      %v1061 = vpop.permute.xlu0 %1060
      %1062 = vrot.lane.b32.xlu0 %v555, 96
      %v1063 = vpop.permute.xlu0 %1062
      %1064 = vrot.lane.b32.xlu0 %v556, 96
      %v1065 = vpop.permute.xlu0 %1064
      %1066 = vrot.lane.b32.xlu0 %v557, 96
      %v1067 = vpop.permute.xlu0 %1066
      %1068 = vrot.lane.b32.xlu0 %v558, 96
      %v1069 = vpop.permute.xlu0 %1068
      %1070 = vrot.lane.b32.xlu0 %v559, 96
      %v1071 = vpop.permute.xlu0 %1070
      %1072 = vrot.lane.b32.xlu0 %v560, 96
      %v1073 = vpop.permute.xlu0 %1072
      %1138 = vrot.lane.b32.xlu0 %v593, 32
      %v1139 = vpop.permute.xlu0 %1138
      %1140 = vrot.lane.b32.xlu0 %v594, 32
      %v1141 = vpop.permute.xlu0 %1140
      %1142 = vrot.lane.b32.xlu0 %v595, 32
      %v1143 = vpop.permute.xlu0 %1142
      %1144 = vrot.lane.b32.xlu0 %v596, 32
      %v1145 = vpop.permute.xlu0 %1144
      %1146 = vrot.lane.b32.xlu0 %v597, 32
      %v1147 = vpop.permute.xlu0 %1146
      %1148 = vrot.lane.b32.xlu0 %v598, 32
      %v1149 = vpop.permute.xlu0 %1148
      %1150 = vrot.lane.b32.xlu0 %v599, 32
      %v1151 = vpop.permute.xlu0 %1150
      %1152 = vrot.lane.b32.xlu0 %v600, 32
      %v1153 = vpop.permute.xlu0 %1152
      %1154 = vrot.lane.b32.xlu0 %v601, 32
      %v1155 = vpop.permute.xlu0 %1154
      %1156 = vrot.lane.b32.xlu0 %v602, 32
      %v1157 = vpop.permute.xlu0 %1156
      %1158 = vrot.lane.b32.xlu0 %v603, 32
      %v1159 = vpop.permute.xlu0 %1158
      %1160 = vrot.lane.b32.xlu0 %v604, 32
      %v1161 = vpop.permute.xlu0 %1160
      %1162 = vrot.lane.b32.xlu0 %v605, 32
      %v1163 = vpop.permute.xlu0 %1162
      %1164 = vrot.lane.b32.xlu0 %v606, 32
      %v1165 = vpop.permute.xlu0 %1164
      %1166 = vrot.lane.b32.xlu0 %v607, 32
      %v1167 = vpop.permute.xlu0 %1166
      %1168 = vrot.lane.b32.xlu0 %v608, 32
      %v1169 = vpop.permute.xlu0 %1168
      %1170 = vrot.lane.b32.xlu0 %v609, 32
      %v1171 = vpop.permute.xlu0 %1170
      %1172 = vrot.lane.b32.xlu0 %v610, 32
      %v1173 = vpop.permute.xlu0 %1172
      %1174 = vrot.lane.b32.xlu0 %v611, 32
      %v1175 = vpop.permute.xlu0 %1174
      %1176 = vrot.lane.b32.xlu0 %v612, 32
      %v1177 = vpop.permute.xlu0 %1176
      %1178 = vrot.lane.b32.xlu0 %v613, 32
      %v1179 = vpop.permute.xlu0 %1178
      %1180 = vrot.lane.b32.xlu0 %v614, 32
      %v1181 = vpop.permute.xlu0 %1180
      %1182 = vrot.lane.b32.xlu0 %v615, 32
      %v1183 = vpop.permute.xlu0 %1182
      %1184 = vrot.lane.b32.xlu0 %v616, 32
      %v1185 = vpop.permute.xlu0 %1184
      %1186 = vrot.lane.b32.xlu0 %v617, 32
      %v1187 = vpop.permute.xlu0 %1186
      %1188 = vrot.lane.b32.xlu0 %v618, 32
      %v1189 = vpop.permute.xlu0 %1188
      %1190 = vrot.lane.b32.xlu0 %v619, 32
      %v1191 = vpop.permute.xlu0 %1190
      %1192 = vrot.lane.b32.xlu0 %v620, 32
      %v1193 = vpop.permute.xlu0 %1192
      %1194 = vrot.lane.b32.xlu0 %v621, 32
      %v1195 = vpop.permute.xlu0 %1194
      %1196 = vrot.lane.b32.xlu0 %v622, 32
      %v1197 = vpop.permute.xlu0 %1196
      %1198 = vrot.lane.b32.xlu0 %v623, 32
      %v1199 = vpop.permute.xlu0 %1198
      %1200 = vrot.lane.b32.xlu0 %v624, 32
      %v1201 = vpop.permute.xlu0 %1200
      %1266 = vrot.lane.b32.xlu0 %v626, 64
      %v1267 = vpop.permute.xlu0 %1266
      %1268 = vrot.lane.b32.xlu0 %v627, 64
      %v1269 = vpop.permute.xlu0 %1268
      %1270 = vrot.lane.b32.xlu0 %v628, 64
      %v1271 = vpop.permute.xlu0 %1270
      %1272 = vrot.lane.b32.xlu0 %v629, 64
      %v1273 = vpop.permute.xlu0 %1272
      %1274 = vrot.lane.b32.xlu0 %v630, 64
      %v1275 = vpop.permute.xlu0 %1274
      %1276 = vrot.lane.b32.xlu0 %v631, 64
      %v1277 = vpop.permute.xlu0 %1276
      %1278 = vrot.lane.b32.xlu0 %v632, 64
      %v1279 = vpop.permute.xlu0 %1278
      %1280 = vrot.lane.b32.xlu0 %v633, 64
      %v1281 = vpop.permute.xlu0 %1280
      %1282 = vrot.lane.b32.xlu0 %v634, 64
      %v1283 = vpop.permute.xlu0 %1282
      %1284 = vrot.lane.b32.xlu0 %v635, 64
      %v1285 = vpop.permute.xlu0 %1284
      %1286 = vrot.lane.b32.xlu0 %v636, 64
      %v1287 = vpop.permute.xlu0 %1286
      %1288 = vrot.lane.b32.xlu0 %v637, 64
      %v1289 = vpop.permute.xlu0 %1288
      %1290 = vrot.lane.b32.xlu0 %v638, 64
      %v1291 = vpop.permute.xlu0 %1290
      %1292 = vrot.lane.b32.xlu0 %v639, 64
      %v1293 = vpop.permute.xlu0 %1292
      %1294 = vrot.lane.b32.xlu0 %v640, 64
      %v1295 = vpop.permute.xlu0 %1294
      %1296 = vrot.lane.b32.xlu0 %v641, 64
      %v1297 = vpop.permute.xlu0 %1296
      %1298 = vrot.lane.b32.xlu0 %v642, 64
      %v1299 = vpop.permute.xlu0 %1298
      %1300 = vrot.lane.b32.xlu0 %v643, 64
      %v1301 = vpop.permute.xlu0 %1300
      %1302 = vrot.lane.b32.xlu0 %v644, 64
      %v1303 = vpop.permute.xlu0 %1302
      %1304 = vrot.lane.b32.xlu0 %v645, 64
      %v1305 = vpop.permute.xlu0 %1304
      %1306 = vrot.lane.b32.xlu0 %v646, 64
      %v1307 = vpop.permute.xlu0 %1306
      %1308 = vrot.lane.b32.xlu0 %v647, 64
      %v1309 = vpop.permute.xlu0 %1308
      %1310 = vrot.lane.b32.xlu0 %v648, 64
      %v1311 = vpop.permute.xlu0 %1310
      %1312 = vrot.lane.b32.xlu0 %v649, 64
      %v1313 = vpop.permute.xlu0 %1312
      %1314 = vrot.lane.b32.xlu0 %v650, 64
      %v1315 = vpop.permute.xlu0 %1314
      %1316 = vrot.lane.b32.xlu0 %v651, 64
      %v1317 = vpop.permute.xlu0 %1316
      %1318 = vrot.lane.b32.xlu0 %v652, 64
      %v1319 = vpop.permute.xlu0 %1318
      %1320 = vrot.lane.b32.xlu0 %v653, 64
      %v1321 = vpop.permute.xlu0 %1320
      %1322 = vrot.lane.b32.xlu0 %v654, 64
      %v1323 = vpop.permute.xlu0 %1322
      %1324 = vrot.lane.b32.xlu0 %v655, 64
      %v1325 = vpop.permute.xlu0 %1324
      %1326 = vrot.lane.b32.xlu0 %v656, 64
      %v1327 = vpop.permute.xlu0 %1326
      %1328 = vrot.lane.b32.xlu0 %v657, 64
      %v1329 = vpop.permute.xlu0 %1328
      %1394 = vrot.lane.b32.xlu0 %v658, 96
      %v1395 = vpop.permute.xlu0 %1394
      %1396 = vrot.lane.b32.xlu0 %v659, 96
      %v1397 = vpop.permute.xlu0 %1396
      %1398 = vrot.lane.b32.xlu0 %v660, 96
      %v1399 = vpop.permute.xlu0 %1398
      %1400 = vrot.lane.b32.xlu0 %v661, 96
      %v1401 = vpop.permute.xlu0 %1400
      %1402 = vrot.lane.b32.xlu0 %v662, 96
      %v1403 = vpop.permute.xlu0 %1402
      %1404 = vrot.lane.b32.xlu0 %v663, 96
      %v1405 = vpop.permute.xlu0 %1404
      %1406 = vrot.lane.b32.xlu0 %v664, 96
      %v1407 = vpop.permute.xlu0 %1406
      %1408 = vrot.lane.b32.xlu0 %v665, 96
      %v1409 = vpop.permute.xlu0 %1408
      %1410 = vrot.lane.b32.xlu0 %v666, 96
      %v1411 = vpop.permute.xlu0 %1410
      %1412 = vrot.lane.b32.xlu0 %v667, 96
      %v1413 = vpop.permute.xlu0 %1412
      %1414 = vrot.lane.b32.xlu0 %v668, 96
      %v1415 = vpop.permute.xlu0 %1414
      %1416 = vrot.lane.b32.xlu0 %v669, 96
      %v1417 = vpop.permute.xlu0 %1416
      %1418 = vrot.lane.b32.xlu0 %v670, 96
      %v1419 = vpop.permute.xlu0 %1418
      %1420 = vrot.lane.b32.xlu0 %v671, 96
      %v1421 = vpop.permute.xlu0 %1420
      %1422 = vrot.lane.b32.xlu0 %v672, 96
      %v1423 = vpop.permute.xlu0 %1422
      %1424 = vrot.lane.b32.xlu0 %v673, 96
      %v1425 = vpop.permute.xlu0 %1424
      %1426 = vrot.lane.b32.xlu0 %v674, 96
      %v1427 = vpop.permute.xlu0 %1426
      %1428 = vrot.lane.b32.xlu0 %v675, 96
      %v1429 = vpop.permute.xlu0 %1428
      %1430 = vrot.lane.b32.xlu0 %v676, 96
      %v1431 = vpop.permute.xlu0 %1430
      %1432 = vrot.lane.b32.xlu0 %v677, 96
      %v1433 = vpop.permute.xlu0 %1432
      %1434 = vrot.lane.b32.xlu0 %v678, 96
      %v1435 = vpop.permute.xlu0 %1434
      %1436 = vrot.lane.b32.xlu0 %v679, 96
      %v1437 = vpop.permute.xlu0 %1436
      %1438 = vrot.lane.b32.xlu0 %v680, 96
      %v1439 = vpop.permute.xlu0 %1438
      %1440 = vrot.lane.b32.xlu0 %v681, 96
      %v1441 = vpop.permute.xlu0 %1440
      %1442 = vrot.lane.b32.xlu0 %v682, 96
      %v1443 = vpop.permute.xlu0 %1442
      %1444 = vrot.lane.b32.xlu0 %v683, 96
      %v1445 = vpop.permute.xlu0 %1444
      %1446 = vrot.lane.b32.xlu0 %v684, 96
      %v1447 = vpop.permute.xlu0 %1446
      %1448 = vrot.lane.b32.xlu0 %v685, 96
      %v1449 = vpop.permute.xlu0 %1448
      %1450 = vrot.lane.b32.xlu0 %v686, 96
      %v1451 = vpop.permute.xlu0 %1450
      %1452 = vrot.lane.b32.xlu0 %v687, 96
      %v1453 = vpop.permute.xlu0 %1452
      %1454 = vrot.lane.b32.xlu0 %v688, 96
      %v1455 = vpop.permute.xlu0 %1454
      %1456 = vrot.lane.b32.xlu0 %v689, 96
      %v1457 = vpop.permute.xlu0 %1456
      %v1490 = vsel %vm279, %v433, %v755
      %v1491 = vsel %vm279, %v434, %v757
      %v1492 = vsel %vm279, %v435, %v759
      %v1493 = vsel %vm279, %v436, %v761
      %v1494 = vsel %vm279, %v437, %v763
      %v1495 = vsel %vm279, %v438, %v765
      %v1496 = vsel %vm279, %v439, %v767
      %v1497 = vsel %vm279, %v440, %v769
      %v1498 = vsel %vm279, %v441, %v771
      %v1499 = vsel %vm279, %v442, %v773
      %v1500 = vsel %vm279, %v443, %v775
      %v1501 = vsel %vm279, %v444, %v777
      %v1502 = vsel %vm279, %v445, %v779
      %v1503 = vsel %vm279, %v446, %v781
      %v1504 = vsel %vm279, %v447, %v783
      %v1505 = vsel %vm279, %v448, %v785
      %v1506 = vsel %vm279, %v449, %v787
      %v1507 = vsel %vm279, %v450, %v789
      %v1508 = vsel %vm279, %v451, %v791
      %v1509 = vsel %vm279, %v452, %v793
      %v1510 = vsel %vm279, %v453, %v795
      %v1511 = vsel %vm279, %v454, %v797
      %v1512 = vsel %vm279, %v455, %v799
      %v1513 = vsel %vm279, %v456, %v801
      %v1514 = vsel %vm279, %v457, %v803
      %v1515 = vsel %vm279, %v458, %v805
      %v1516 = vsel %vm279, %v459, %v807
      %v1517 = vsel %vm279, %v460, %v809
      %v1518 = vsel %vm279, %v461, %v811
      %v1519 = vsel %vm279, %v462, %v813
      %v1520 = vsel %vm279, %v463, %v815
      %v1521 = vsel %vm279, %v464, %v817
      %vm1522 = vcmask 523264
      %v1523 = vsel %vm1522, %v1490, %v883
      %v1524 = vsel %vm1522, %v1491, %v885
      %v1525 = vsel %vm1522, %v1492, %v887
      %v1526 = vsel %vm1522, %v1493, %v889
      %v1527 = vsel %vm1522, %v1494, %v891
      %v1528 = vsel %vm1522, %v1495, %v893
      %v1529 = vsel %vm1522, %v1496, %v895
      %v1530 = vsel %vm1522, %v1497, %v897
      %v1531 = vsel %vm1522, %v1498, %v899
      %v1532 = vsel %vm1522, %v1499, %v901
      %v1533 = vsel %vm1522, %v1500, %v903
      %v1534 = vsel %vm1522, %v1501, %v905
      %v1535 = vsel %vm1522, %v1502, %v907
      %v1536 = vsel %vm1522, %v1503, %v909
      %v1537 = vsel %vm1522, %v1504, %v911
      %v1538 = vsel %vm1522, %v1505, %v913
      %v1539 = vsel %vm1522, %v1506, %v915
      %v1540 = vsel %vm1522, %v1507, %v917
      %v1541 = vsel %vm1522, %v1508, %v919
      %v1542 = vsel %vm1522, %v1509, %v921
      %v1543 = vsel %vm1522, %v1510, %v923
      %v1544 = vsel %vm1522, %v1511, %v925
      %v1545 = vsel %vm1522, %v1512, %v927
      %v1546 = vsel %vm1522, %v1513, %v929
      %v1547 = vsel %vm1522, %v1514, %v931
      %v1548 = vsel %vm1522, %v1515, %v933
      %v1549 = vsel %vm1522, %v1516, %v935
      %v1550 = vsel %vm1522, %v1517, %v937
      %v1551 = vsel %vm1522, %v1518, %v939
      %v1552 = vsel %vm1522, %v1519, %v941
      %v1553 = vsel %vm1522, %v1520, %v943
      %v1554 = vsel %vm1522, %v1521, %v945
      %vm1555 = vcmask 785408
      %v1556 = vsel %vm1555, %v1523, %v1011
      %v1557 = vsel %vm1555, %v1524, %v1013
      %v1558 = vsel %vm1555, %v1525, %v1015
      %v1559 = vsel %vm1555, %v1526, %v1017
      %v1560 = vsel %vm1555, %v1527, %v1019
      %v1561 = vsel %vm1555, %v1528, %v1021
      %v1562 = vsel %vm1555, %v1529, %v1023
      %v1563 = vsel %vm1555, %v1530, %v1025
      %v1564 = vsel %vm1555, %v1531, %v1027
      %v1565 = vsel %vm1555, %v1532, %v1029
      %v1566 = vsel %vm1555, %v1533, %v1031
      %v1567 = vsel %vm1555, %v1534, %v1033
      %v1568 = vsel %vm1555, %v1535, %v1035
      %v1569 = vsel %vm1555, %v1536, %v1037
      %v1570 = vsel %vm1555, %v1537, %v1039
      %v1571 = vsel %vm1555, %v1538, %v1041
      %v1572 = vsel %vm1555, %v1539, %v1043
      %v1573 = vsel %vm1555, %v1540, %v1045
      %v1574 = vsel %vm1555, %v1541, %v1047
      %v1575 = vsel %vm1555, %v1542, %v1049
      %v1576 = vsel %vm1555, %v1543, %v1051
      %v1577 = vsel %vm1555, %v1544, %v1053
      %v1578 = vsel %vm1555, %v1545, %v1055
      %v1579 = vsel %vm1555, %v1546, %v1057
      %v1580 = vsel %vm1555, %v1547, %v1059
      %v1581 = vsel %vm1555, %v1548, %v1061
      %v1582 = vsel %vm1555, %v1549, %v1063
      %v1583 = vsel %vm1555, %v1550, %v1065
      %v1584 = vsel %vm1555, %v1551, %v1067
      %v1585 = vsel %vm1555, %v1552, %v1069
      %v1586 = vsel %vm1555, %v1553, %v1071
      %v1587 = vsel %vm1555, %v1554, %v1073
      %v1588 = vsel %vm279, %v561, %v1139
      %v1589 = vsel %vm279, %v562, %v1141
      %v1590 = vsel %vm279, %v563, %v1143
      %v1591 = vsel %vm279, %v564, %v1145
      %v1592 = vsel %vm279, %v565, %v1147
      %v1593 = vsel %vm279, %v566, %v1149
      %v1594 = vsel %vm279, %v567, %v1151
      %v1595 = vsel %vm279, %v568, %v1153
      %v1596 = vsel %vm279, %v569, %v1155
      %v1597 = vsel %vm279, %v570, %v1157
      %v1598 = vsel %vm279, %v571, %v1159
      %v1599 = vsel %vm279, %v572, %v1161
      %v1600 = vsel %vm279, %v573, %v1163
      %v1601 = vsel %vm279, %v574, %v1165
      %v1602 = vsel %vm279, %v575, %v1167
      %v1603 = vsel %vm279, %v576, %v1169
      %v1604 = vsel %vm279, %v577, %v1171
      %v1605 = vsel %vm279, %v578, %v1173
      %v1606 = vsel %vm279, %v579, %v1175
      %v1607 = vsel %vm279, %v580, %v1177
      %v1608 = vsel %vm279, %v581, %v1179
      %v1609 = vsel %vm279, %v582, %v1181
      %v1610 = vsel %vm279, %v583, %v1183
      %v1611 = vsel %vm279, %v584, %v1185
      %v1612 = vsel %vm279, %v585, %v1187
      %v1613 = vsel %vm279, %v586, %v1189
      %v1614 = vsel %vm279, %v587, %v1191
      %v1615 = vsel %vm279, %v588, %v1193
      %v1616 = vsel %vm279, %v589, %v1195
      %v1617 = vsel %vm279, %v590, %v1197
      %v1618 = vsel %vm279, %v591, %v1199
      %v1619 = vsel %vm279, %v592, %v1201
      %v1620 = vsel %vm1522, %v1588, %v1267
      %v1621 = vsel %vm1522, %v1589, %v1269
      %v1622 = vsel %vm1522, %v1590, %v1271
      %v1623 = vsel %vm1522, %v1591, %v1273
      %v1624 = vsel %vm1522, %v1592, %v1275
      %v1625 = vsel %vm1522, %v1593, %v1277
      %v1626 = vsel %vm1522, %v1594, %v1279
      %v1627 = vsel %vm1522, %v1595, %v1281
      %v1628 = vsel %vm1522, %v1596, %v1283
      %v1629 = vsel %vm1522, %v1597, %v1285
      %v1630 = vsel %vm1522, %v1598, %v1287
      %v1631 = vsel %vm1522, %v1599, %v1289
      %v1632 = vsel %vm1522, %v1600, %v1291
      %v1633 = vsel %vm1522, %v1601, %v1293
      %v1634 = vsel %vm1522, %v1602, %v1295
      %v1635 = vsel %vm1522, %v1603, %v1297
      %v1636 = vsel %vm1522, %v1604, %v1299
      %v1637 = vsel %vm1522, %v1605, %v1301
      %v1638 = vsel %vm1522, %v1606, %v1303
      %v1639 = vsel %vm1522, %v1607, %v1305
      %v1640 = vsel %vm1522, %v1608, %v1307
      %v1641 = vsel %vm1522, %v1609, %v1309
      %v1642 = vsel %vm1522, %v1610, %v1311
      %v1643 = vsel %vm1522, %v1611, %v1313
      %v1644 = vsel %vm1522, %v1612, %v1315
      %v1645 = vsel %vm1522, %v1613, %v1317
      %v1646 = vsel %vm1522, %v1614, %v1319
      %v1647 = vsel %vm1522, %v1615, %v1321
      %v1648 = vsel %vm1522, %v1616, %v1323
      %v1649 = vsel %vm1522, %v1617, %v1325
      %v1650 = vsel %vm1522, %v1618, %v1327
      %v1651 = vsel %vm1522, %v1619, %v1329
      %v1652 = vsel %vm1555, %v1620, %v1395
      %v1653 = vsel %vm1555, %v1621, %v1397
      %v1654 = vsel %vm1555, %v1622, %v1399
      %v1655 = vsel %vm1555, %v1623, %v1401
      %v1656 = vsel %vm1555, %v1624, %v1403
      %v1657 = vsel %vm1555, %v1625, %v1405
      %v1658 = vsel %vm1555, %v1626, %v1407
      %v1659 = vsel %vm1555, %v1627, %v1409
      %v1660 = vsel %vm1555, %v1628, %v1411
      %v1661 = vsel %vm1555, %v1629, %v1413
      %v1662 = vsel %vm1555, %v1630, %v1415
      %v1663 = vsel %vm1555, %v1631, %v1417
      %v1664 = vsel %vm1555, %v1632, %v1419
      %v1665 = vsel %vm1555, %v1633, %v1421
      %v1666 = vsel %vm1555, %v1634, %v1423
      %v1667 = vsel %vm1555, %v1635, %v1425
      %v1668 = vsel %vm1555, %v1636, %v1427
      %v1669 = vsel %vm1555, %v1637, %v1429
      %v1670 = vsel %vm1555, %v1638, %v1431
      %v1671 = vsel %vm1555, %v1639, %v1433
      %v1672 = vsel %vm1555, %v1640, %v1435
      %v1673 = vsel %vm1555, %v1641, %v1437
      %v1674 = vsel %vm1555, %v1642, %v1439
      %v1675 = vsel %vm1555, %v1643, %v1441
      %v1676 = vsel %vm1555, %v1644, %v1443
      %v1677 = vsel %vm1555, %v1645, %v1445
      %v1678 = vsel %vm1555, %v1646, %v1447
      %v1679 = vsel %vm1555, %v1647, %v1449
      %v1680 = vsel %vm1555, %v1648, %v1451
      %v1681 = vsel %vm1555, %v1649, %v1453
      %v1682 = vsel %vm1555, %v1650, %v1455
      %v1683 = vsel %vm1555, %v1651, %v1457
      %v1684 = vld [vmem:[%s1] sm:$0xff]
      %v1685 = vld [vmem:[%s1 + $0x8] sm:$0xff]
      %v1686 = vld [vmem:[%s1 + $0x10] sm:$0xff]
      %v1687 = vld [vmem:[%s1 + $0x18] sm:$0xff]
      %v1688 = vld [vmem:[%s1 + $0x20] sm:$0xff]
      %v1689 = vld [vmem:[%s1 + $0x28] sm:$0xff]
      %v1690 = vld [vmem:[%s1 + $0x30] sm:$0xff]
      %v1691 = vld [vmem:[%s1 + $0x38] sm:$0xff]
      %v1692 = vld [vmem:[%s1 + $0x40] sm:$0xff]
      %v1693 = vld [vmem:[%s1 + $0x48] sm:$0xff]
      %v1694 = vld [vmem:[%s1 + $0x50] sm:$0xff]
      %v1695 = vld [vmem:[%s1 + $0x58] sm:$0xff]
      %v1696 = vld [vmem:[%s1 + $0x60] sm:$0xff]
      %v1697 = vld [vmem:[%s1 + $0x68] sm:$0xff]
      %v1698 = vld [vmem:[%s1 + $0x70] sm:$0xff]
      %v1699 = vld [vmem:[%s1 + $0x78] sm:$0xff]
      %v1700 = vld [vmem:[%s1 + $0x80] sm:$0xff]
      %v1701 = vld [vmem:[%s1 + $0x88] sm:$0xff]
      %v1702 = vld [vmem:[%s1 + $0x90] sm:$0xff]
      %v1703 = vld [vmem:[%s1 + $0x98] sm:$0xff]
      %v1704 = vld [vmem:[%s1 + $0xa0] sm:$0xff]
      %v1705 = vld [vmem:[%s1 + $0xa8] sm:$0xff]
      %v1706 = vld [vmem:[%s1 + $0xb0] sm:$0xff]
      %v1707 = vld [vmem:[%s1 + $0xb8] sm:$0xff]
      %v1708 = vld [vmem:[%s1 + $0xc0] sm:$0xff]
      %v1709 = vld [vmem:[%s1 + $0xc8] sm:$0xff]
      %v1710 = vld [vmem:[%s1 + $0xd0] sm:$0xff]
      %v1711 = vld [vmem:[%s1 + $0xd8] sm:$0xff]
      %v1712 = vld [vmem:[%s1 + $0xe0] sm:$0xff]
      %v1713 = vld [vmem:[%s1 + $0xe8] sm:$0xff]
      %v1714 = vld [vmem:[%s1 + $0xf0] sm:$0xff]
      %v1715 = vld [vmem:[%s1 + $0xf8] sm:$0xff]
      %v1716 = vld [vmem:[%s1 + $0x100] sm:$0xff]
      %v1717 = vld [vmem:[%s1 + $0x108] sm:$0xff]
      %v1718 = vld [vmem:[%s1 + $0x110] sm:$0xff]
      %v1719 = vld [vmem:[%s1 + $0x118] sm:$0xff]
      %v1720 = vld [vmem:[%s2] sm:$0x1]
      %v1722 = vperm.slane %v1720, 0
      %v1725 = vsel %vm279, %v690, 0
      %v1728 = vsel %vm279, %v691, 0
      %v1731 = vsel %vm279, %v692, 0
      %v1734 = vsel %vm279, %v693, 0
      %v1737 = vsel %vm279, %v694, 0
      %v1740 = vsel %vm279, %v695, 0
      %v1743 = vsel %vm279, %v696, 0
      %v1746 = vsel %vm279, %v697, 0
      %v1749 = vsel %vm279, %v698, 0
      %v1752 = vsel %vm279, %v699, 0
      %v1755 = vsel %vm279, %v700, 0
      %v1758 = vsel %vm279, %v701, 0
      %v1761 = vsel %vm279, %v702, 0
      %v1764 = vsel %vm279, %v703, 0
      %v1767 = vsel %vm279, %v704, 0
      %v1770 = vsel %vm279, %v705, 0
      %v1773 = vsel %vm279, %v706, 0
      %v1776 = vsel %vm279, %v707, 0
      %v1779 = vsel %vm279, %v708, 0
      %v1782 = vsel %vm279, %v709, 0
      %v1785 = vsel %vm279, %v710, 0
      %v1788 = vsel %vm279, %v711, 0
      %v1791 = vsel %vm279, %v712, 0
      %v1794 = vsel %vm279, %v713, 0
      %v1797 = vsel %vm279, %v714, 0
      %v1800 = vsel %vm279, %v715, 0
      %v1803 = vsel %vm279, %v716, 0
      %v1806 = vsel %vm279, %v717, 0
      %v1809 = vsel %vm279, %v718, 0
      %v1812 = vsel %vm279, %v719, 0
      %v1815 = vsel %vm279, %v720, 0
      %v1818 = vsel %vm279, %v721, 0
      %1820 = vmatpush.msra.mxu0 %v1699
      %1821 = vmatpush.msra.mxu0 %v1698
      %1822 = vmatpush.msra.mxu0 %v1697
      %1823 = vmatpush.msra.mxu0 %v1696
      %1824 = vmatpush.msra.mxu0 %v1695
      %1825 = vmatpush.msra.mxu0 %v1694
      %1826 = vmatpush.msra.mxu0 %v1693
      %1827 = vmatpush.msra.mxu0 %v1692
      %1828 = vmatpush.msra.mxu0 %v1691
      %1829 = vmatpush.msra.mxu0 %v1690
      %1830 = vmatpush.msra.mxu0 %v1689
      %1831 = vmatpush.msra.mxu0 %v1688
      %1832 = vmatpush.msra.mxu0 %v1687
      %1833 = vmatpush.msra.mxu0 %v1686
      %1834 = vmatpush.msra.mxu0 %v1685
      %1835 = vmatpush.msra.mxu0 %v1684
      %1836 = vmatmul.f32.gmra.mxu0 %v1556
      %v1837 = vpop.f32.mrf.mxu0
      %v1838 = vadd.f32 %v1722, %v1837
      %1839 = vmatmul.f32.gmra.mxu0 %v1557
      %v1840 = vpop.f32.mrf.mxu0
      %v1841 = vadd.f32 %v1722, %v1840
      %1842 = vmatmul.f32.gmra.mxu0 %v1558
      %v1843 = vpop.f32.mrf.mxu0
      %v1844 = vadd.f32 %v1722, %v1843
      %1845 = vmatmul.f32.gmra.mxu0 %v1559
      %v1846 = vpop.f32.mrf.mxu0
      %v1847 = vadd.f32 %v1722, %v1846
      %1848 = vmatmul.f32.gmra.mxu0 %v1560
      %v1849 = vpop.f32.mrf.mxu0
      %v1850 = vadd.f32 %v1722, %v1849
      %1851 = vmatmul.f32.gmra.mxu0 %v1561
      %v1852 = vpop.f32.mrf.mxu0
      %v1853 = vadd.f32 %v1722, %v1852
      %1854 = vmatmul.f32.gmra.mxu0 %v1562
      %v1855 = vpop.f32.mrf.mxu0
      %v1856 = vadd.f32 %v1722, %v1855
      %1857 = vmatmul.f32.gmra.mxu0 %v1563
      %v1858 = vpop.f32.mrf.mxu0
      %v1859 = vadd.f32 %v1722, %v1858
      %1860 = vmatmul.f32.gmra.mxu0 %v1564
      %v1861 = vpop.f32.mrf.mxu0
      %v1862 = vadd.f32 %v1722, %v1861
      %1863 = vmatmul.f32.gmra.mxu0 %v1565
      %v1864 = vpop.f32.mrf.mxu0
      %v1865 = vadd.f32 %v1722, %v1864
      %1866 = vmatmul.f32.gmra.mxu0 %v1566
      %v1867 = vpop.f32.mrf.mxu0
      %v1868 = vadd.f32 %v1722, %v1867
      %1869 = vmatmul.f32.gmra.mxu0 %v1567
      %v1870 = vpop.f32.mrf.mxu0
      %v1871 = vadd.f32 %v1722, %v1870
      %1872 = vmatmul.f32.gmra.mxu0 %v1568
      %v1873 = vpop.f32.mrf.mxu0
      %v1874 = vadd.f32 %v1722, %v1873
      %1875 = vmatmul.f32.gmra.mxu0 %v1569
      %v1876 = vpop.f32.mrf.mxu0
      %v1877 = vadd.f32 %v1722, %v1876
      %1878 = vmatmul.f32.gmra.mxu0 %v1570
      %v1879 = vpop.f32.mrf.mxu0
      %v1880 = vadd.f32 %v1722, %v1879
      %1881 = vmatmul.f32.gmra.mxu0 %v1571
      %v1882 = vpop.f32.mrf.mxu0
      %v1883 = vadd.f32 %v1722, %v1882
      %1884 = vmatmul.f32.gmra.mxu0 %v1572
      %v1885 = vpop.f32.mrf.mxu0
      %v1886 = vadd.f32 %v1722, %v1885
      %1887 = vmatmul.f32.gmra.mxu0 %v1573
      %v1888 = vpop.f32.mrf.mxu0
      %v1889 = vadd.f32 %v1722, %v1888
      %1890 = vmatmul.f32.gmra.mxu0 %v1574
      %v1891 = vpop.f32.mrf.mxu0
      %v1892 = vadd.f32 %v1722, %v1891
      %1893 = vmatmul.f32.gmra.mxu0 %v1575
      %v1894 = vpop.f32.mrf.mxu0
      %v1895 = vadd.f32 %v1722, %v1894
      %1896 = vmatmul.f32.gmra.mxu0 %v1576
      %v1897 = vpop.f32.mrf.mxu0
      %v1898 = vadd.f32 %v1722, %v1897
      %1899 = vmatmul.f32.gmra.mxu0 %v1577
      %v1900 = vpop.f32.mrf.mxu0
      %v1901 = vadd.f32 %v1722, %v1900
      %1902 = vmatmul.f32.gmra.mxu0 %v1578
      %v1903 = vpop.f32.mrf.mxu0
      %v1904 = vadd.f32 %v1722, %v1903
      %1905 = vmatmul.f32.gmra.mxu0 %v1579
      %v1906 = vpop.f32.mrf.mxu0
      %v1907 = vadd.f32 %v1722, %v1906
      %1908 = vmatmul.f32.gmra.mxu0 %v1580
      %v1909 = vpop.f32.mrf.mxu0
      %v1910 = vadd.f32 %v1722, %v1909
      %1911 = vmatmul.f32.gmra.mxu0 %v1581
      %v1912 = vpop.f32.mrf.mxu0
      %v1913 = vadd.f32 %v1722, %v1912
      %1914 = vmatmul.f32.gmra.mxu0 %v1582
      %v1915 = vpop.f32.mrf.mxu0
      %v1916 = vadd.f32 %v1722, %v1915
      %1917 = vmatmul.f32.gmra.mxu0 %v1583
      %v1918 = vpop.f32.mrf.mxu0
      %v1919 = vadd.f32 %v1722, %v1918
      %1920 = vmatmul.f32.gmra.mxu0 %v1584
      %v1921 = vpop.f32.mrf.mxu0
      %v1922 = vadd.f32 %v1722, %v1921
      %1923 = vmatmul.f32.gmra.mxu0 %v1585
      %v1924 = vpop.f32.mrf.mxu0
      %v1925 = vadd.f32 %v1722, %v1924
      %1926 = vmatmul.f32.gmra.mxu0 %v1586
      %v1927 = vpop.f32.mrf.mxu0
      %v1928 = vadd.f32 %v1722, %v1927
      %1929 = vmatmul.f32.gmra.mxu0 %v1587
      %v1930 = vpop.f32.mrf.mxu0
      %v1931 = vadd.f32 %v1722, %v1930
      %1932 = vdwg.mxu0
      %1933 = vmatpush.msra.mxu0 %v1715
      %1934 = vmatpush.msra.mxu0 %v1714
      %1935 = vmatpush.msra.mxu0 %v1713
      %1936 = vmatpush.msra.mxu0 %v1712
      %1937 = vmatpush.msra.mxu0 %v1711
      %1938 = vmatpush.msra.mxu0 %v1710
      %1939 = vmatpush.msra.mxu0 %v1709
      %1940 = vmatpush.msra.mxu0 %v1708
      %1941 = vmatpush.msra.mxu0 %v1707
      %1942 = vmatpush.msra.mxu0 %v1706
      %1943 = vmatpush.msra.mxu0 %v1705
      %1944 = vmatpush.msra.mxu0 %v1704
      %1945 = vmatpush.msra.mxu0 %v1703
      %1946 = vmatpush.msra.mxu0 %v1702
      %1947 = vmatpush.msra.mxu0 %v1701
      %1948 = vmatpush.msra.mxu0 %v1700
      %1949 = vmatmul.f32.gmra.mxu0 %v1652
      %v1950 = vpop.f32.mrf.mxu0
      %v1951 = vadd.f32 %v1838, %v1950
      %1952 = vmatmul.f32.gmra.mxu0 %v1653
      %v1953 = vpop.f32.mrf.mxu0
      %v1954 = vadd.f32 %v1841, %v1953
      %1955 = vmatmul.f32.gmra.mxu0 %v1654
      %v1956 = vpop.f32.mrf.mxu0
      %v1957 = vadd.f32 %v1844, %v1956
      %1958 = vmatmul.f32.gmra.mxu0 %v1655
      %v1959 = vpop.f32.mrf.mxu0
      %v1960 = vadd.f32 %v1847, %v1959
      %1961 = vmatmul.f32.gmra.mxu0 %v1656
      %v1962 = vpop.f32.mrf.mxu0
      %v1963 = vadd.f32 %v1850, %v1962
      %1964 = vmatmul.f32.gmra.mxu0 %v1657
      %v1965 = vpop.f32.mrf.mxu0
      %v1966 = vadd.f32 %v1853, %v1965
      %1967 = vmatmul.f32.gmra.mxu0 %v1658
      %v1968 = vpop.f32.mrf.mxu0
      %v1969 = vadd.f32 %v1856, %v1968
      %1970 = vmatmul.f32.gmra.mxu0 %v1659
      %v1971 = vpop.f32.mrf.mxu0
      %v1972 = vadd.f32 %v1859, %v1971
      %1973 = vmatmul.f32.gmra.mxu0 %v1660
      %v1974 = vpop.f32.mrf.mxu0
      %v1975 = vadd.f32 %v1862, %v1974
      %1976 = vmatmul.f32.gmra.mxu0 %v1661
      %v1977 = vpop.f32.mrf.mxu0
      %v1978 = vadd.f32 %v1865, %v1977
      %1979 = vmatmul.f32.gmra.mxu0 %v1662
      %v1980 = vpop.f32.mrf.mxu0
      %v1981 = vadd.f32 %v1868, %v1980
      %1982 = vmatmul.f32.gmra.mxu0 %v1663
      %v1983 = vpop.f32.mrf.mxu0
      %v1984 = vadd.f32 %v1871, %v1983
      %1985 = vmatmul.f32.gmra.mxu0 %v1664
      %v1986 = vpop.f32.mrf.mxu0
      %v1987 = vadd.f32 %v1874, %v1986
      %1988 = vmatmul.f32.gmra.mxu0 %v1665
      %v1989 = vpop.f32.mrf.mxu0
      %v1990 = vadd.f32 %v1877, %v1989
      %1991 = vmatmul.f32.gmra.mxu0 %v1666
      %v1992 = vpop.f32.mrf.mxu0
      %v1993 = vadd.f32 %v1880, %v1992
      %1994 = vmatmul.f32.gmra.mxu0 %v1667
      %v1995 = vpop.f32.mrf.mxu0
      %v1996 = vadd.f32 %v1883, %v1995
      %1997 = vmatmul.f32.gmra.mxu0 %v1668
      %v1998 = vpop.f32.mrf.mxu0
      %v1999 = vadd.f32 %v1886, %v1998
      %2000 = vmatmul.f32.gmra.mxu0 %v1669
      %v2001 = vpop.f32.mrf.mxu0
      %v2002 = vadd.f32 %v1889, %v2001
      %2003 = vmatmul.f32.gmra.mxu0 %v1670
      %v2004 = vpop.f32.mrf.mxu0
      %v2005 = vadd.f32 %v1892, %v2004
      %2006 = vmatmul.f32.gmra.mxu0 %v1671
      %v2007 = vpop.f32.mrf.mxu0
      %v2008 = vadd.f32 %v1895, %v2007
      %2009 = vmatmul.f32.gmra.mxu0 %v1672
      %v2010 = vpop.f32.mrf.mxu0
      %v2011 = vadd.f32 %v1898, %v2010
      %2012 = vmatmul.f32.gmra.mxu0 %v1673
      %v2013 = vpop.f32.mrf.mxu0
      %v2014 = vadd.f32 %v1901, %v2013
      %2015 = vmatmul.f32.gmra.mxu0 %v1674
      %v2016 = vpop.f32.mrf.mxu0
      %v2017 = vadd.f32 %v1904, %v2016
      %2018 = vmatmul.f32.gmra.mxu0 %v1675
      %v2019 = vpop.f32.mrf.mxu0
      %v2020 = vadd.f32 %v1907, %v2019
      %2021 = vmatmul.f32.gmra.mxu0 %v1676
      %v2022 = vpop.f32.mrf.mxu0
      %v2023 = vadd.f32 %v1910, %v2022
      %2024 = vmatmul.f32.gmra.mxu0 %v1677
      %v2025 = vpop.f32.mrf.mxu0
      %v2026 = vadd.f32 %v1913, %v2025
      %2027 = vmatmul.f32.gmra.mxu0 %v1678
      %v2028 = vpop.f32.mrf.mxu0
      %v2029 = vadd.f32 %v1916, %v2028
      %2030 = vmatmul.f32.gmra.mxu0 %v1679
      %v2031 = vpop.f32.mrf.mxu0
      %v2032 = vadd.f32 %v1919, %v2031
      %2033 = vmatmul.f32.gmra.mxu0 %v1680
      %v2034 = vpop.f32.mrf.mxu0
      %v2035 = vadd.f32 %v1922, %v2034
      %2036 = vmatmul.f32.gmra.mxu0 %v1681
      %v2037 = vpop.f32.mrf.mxu0
      %v2038 = vadd.f32 %v1925, %v2037
      %2039 = vmatmul.f32.gmra.mxu0 %v1682
      %v2040 = vpop.f32.mrf.mxu0
      %v2041 = vadd.f32 %v1928, %v2040
      %2042 = vmatmul.f32.gmra.mxu0 %v1683
      %v2043 = vpop.f32.mrf.mxu0
      %v2044 = vadd.f32 %v1931, %v2043
      %2045 = vdwg.mxu0
      %2046 = vmatpush.msra.mxu0 0.0
      %2047 = vmatpush.msra.mxu0 0.0
      %2048 = vmatpush.msra.mxu0 0.0
      %2049 = vmatpush.msra.mxu0 0.0
      %2050 = vmatpush.msra.mxu0 0.0
      %2051 = vmatpush.msra.mxu0 0.0
      %2052 = vmatpush.msra.mxu0 0.0
      %2053 = vmatpush.msra.mxu0 0.0
      %2054 = vmatpush.msra.mxu0 0.0
      %2055 = vmatpush.msra.mxu0 0.0
      %2056 = vmatpush.msra.mxu0 0.0
      %2057 = vmatpush.msra.mxu0 0.0
      %2058 = vmatpush.msra.mxu0 %v1719
      %2059 = vmatpush.msra.mxu0 %v1718
      %2060 = vmatpush.msra.mxu0 %v1717
      %2061 = vmatpush.msra.mxu0 %v1716
      %2062 = vmatmul.f32.gmra.mxu0 %v1725
      %v2063 = vpop.f32.mrf.mxu0
      %v2064 = vadd.f32 %v1951, %v2063
      %2065 = vmatmul.f32.gmra.mxu0 %v1728
      %v2066 = vpop.f32.mrf.mxu0
      %v2067 = vadd.f32 %v1954, %v2066
      %2068 = vmatmul.f32.gmra.mxu0 %v1731
      %v2069 = vpop.f32.mrf.mxu0
      %v2070 = vadd.f32 %v1957, %v2069
      %2071 = vmatmul.f32.gmra.mxu0 %v1734
      %v2072 = vpop.f32.mrf.mxu0
      %v2073 = vadd.f32 %v1960, %v2072
      %2074 = vmatmul.f32.gmra.mxu0 %v1737
      %v2075 = vpop.f32.mrf.mxu0
      %v2076 = vadd.f32 %v1963, %v2075
      %2077 = vmatmul.f32.gmra.mxu0 %v1740
      %v2078 = vpop.f32.mrf.mxu0
      %v2079 = vadd.f32 %v1966, %v2078
      %2080 = vmatmul.f32.gmra.mxu0 %v1743
      %v2081 = vpop.f32.mrf.mxu0
      %v2082 = vadd.f32 %v1969, %v2081
      %2083 = vmatmul.f32.gmra.mxu0 %v1746
      %v2084 = vpop.f32.mrf.mxu0
      %v2085 = vadd.f32 %v1972, %v2084
      %2086 = vmatmul.f32.gmra.mxu0 %v1749
      %v2087 = vpop.f32.mrf.mxu0
      %v2088 = vadd.f32 %v1975, %v2087
      %2089 = vmatmul.f32.gmra.mxu0 %v1752
      %v2090 = vpop.f32.mrf.mxu0
      %v2091 = vadd.f32 %v1978, %v2090
      %2092 = vmatmul.f32.gmra.mxu0 %v1755
      %v2093 = vpop.f32.mrf.mxu0
      %v2094 = vadd.f32 %v1981, %v2093
      %2095 = vmatmul.f32.gmra.mxu0 %v1758
      %v2096 = vpop.f32.mrf.mxu0
      %v2097 = vadd.f32 %v1984, %v2096
      %2098 = vmatmul.f32.gmra.mxu0 %v1761
      %v2099 = vpop.f32.mrf.mxu0
      %v2100 = vadd.f32 %v1987, %v2099
      %2101 = vmatmul.f32.gmra.mxu0 %v1764
      %v2102 = vpop.f32.mrf.mxu0
      %v2103 = vadd.f32 %v1990, %v2102
      %2104 = vmatmul.f32.gmra.mxu0 %v1767
      %v2105 = vpop.f32.mrf.mxu0
      %v2106 = vadd.f32 %v1993, %v2105
      %2107 = vmatmul.f32.gmra.mxu0 %v1770
      %v2108 = vpop.f32.mrf.mxu0
      %v2109 = vadd.f32 %v1996, %v2108
      %2110 = vmatmul.f32.gmra.mxu0 %v1773
      %v2111 = vpop.f32.mrf.mxu0
      %v2112 = vadd.f32 %v1999, %v2111
      %2113 = vmatmul.f32.gmra.mxu0 %v1776
      %v2114 = vpop.f32.mrf.mxu0
      %v2115 = vadd.f32 %v2002, %v2114
      %2116 = vmatmul.f32.gmra.mxu0 %v1779
      %v2117 = vpop.f32.mrf.mxu0
      %v2118 = vadd.f32 %v2005, %v2117
      %2119 = vmatmul.f32.gmra.mxu0 %v1782
      %v2120 = vpop.f32.mrf.mxu0
      %v2121 = vadd.f32 %v2008, %v2120
      %2122 = vmatmul.f32.gmra.mxu0 %v1785
      %v2123 = vpop.f32.mrf.mxu0
      %v2124 = vadd.f32 %v2011, %v2123
      %2125 = vmatmul.f32.gmra.mxu0 %v1788
      %v2126 = vpop.f32.mrf.mxu0
      %v2127 = vadd.f32 %v2014, %v2126
      %2128 = vmatmul.f32.gmra.mxu0 %v1791
      %v2129 = vpop.f32.mrf.mxu0
      %v2130 = vadd.f32 %v2017, %v2129
      %2131 = vmatmul.f32.gmra.mxu0 %v1794
      %v2132 = vpop.f32.mrf.mxu0
      %v2133 = vadd.f32 %v2020, %v2132
      %2134 = vmatmul.f32.gmra.mxu0 %v1797
      %v2135 = vpop.f32.mrf.mxu0
      %v2136 = vadd.f32 %v2023, %v2135
      %2137 = vmatmul.f32.gmra.mxu0 %v1800
      %v2138 = vpop.f32.mrf.mxu0
      %v2139 = vadd.f32 %v2026, %v2138
      %2140 = vmatmul.f32.gmra.mxu0 %v1803
      %v2141 = vpop.f32.mrf.mxu0
      %v2142 = vadd.f32 %v2029, %v2141
      %2143 = vmatmul.f32.gmra.mxu0 %v1806
      %v2144 = vpop.f32.mrf.mxu0
      %v2145 = vadd.f32 %v2032, %v2144
      %2146 = vmatmul.f32.gmra.mxu0 %v1809
      %v2147 = vpop.f32.mrf.mxu0
      %v2148 = vadd.f32 %v2035, %v2147
      %2149 = vmatmul.f32.gmra.mxu0 %v1812
      %v2150 = vpop.f32.mrf.mxu0
      %v2151 = vadd.f32 %v2038, %v2150
      %2152 = vmatmul.f32.gmra.mxu0 %v1815
      %v2153 = vpop.f32.mrf.mxu0
      %v2154 = vadd.f32 %v2041, %v2153
      %2155 = vmatmul.f32.gmra.mxu0 %v1818
      %v2156 = vpop.f32.mrf.mxu0
      %v2157 = vadd.f32 %v2044, %v2156
      %2158 = vdwg.mxu0
      %v2159 = vmax.f32 %v2064, 0.0
      %v2160 = vmax.f32 %v2067, 0.0
      %v2161 = vmax.f32 %v2070, 0.0
      %v2162 = vmax.f32 %v2073, 0.0
      %v2163 = vmax.f32 %v2076, 0.0
      %v2164 = vmax.f32 %v2079, 0.0
      %v2165 = vmax.f32 %v2082, 0.0
      %v2166 = vmax.f32 %v2085, 0.0
      %v2167 = vmax.f32 %v2088, 0.0
      %v2168 = vmax.f32 %v2091, 0.0
      %v2169 = vmax.f32 %v2094, 0.0
      %v2170 = vmax.f32 %v2097, 0.0
      %v2171 = vmax.f32 %v2100, 0.0
      %v2172 = vmax.f32 %v2103, 0.0
      %v2173 = vmax.f32 %v2106, 0.0
      %v2174 = vmax.f32 %v2109, 0.0
      %v2175 = vmax.f32 %v2112, 0.0
      %v2176 = vmax.f32 %v2115, 0.0
      %v2177 = vmax.f32 %v2118, 0.0
      %v2178 = vmax.f32 %v2121, 0.0
      %v2179 = vmax.f32 %v2124, 0.0
      %v2180 = vmax.f32 %v2127, 0.0
      %v2181 = vmax.f32 %v2130, 0.0
      %v2182 = vmax.f32 %v2133, 0.0
      %v2183 = vmax.f32 %v2136, 0.0
      %v2184 = vmax.f32 %v2139, 0.0
      %v2185 = vmax.f32 %v2142, 0.0
      %v2186 = vmax.f32 %v2145, 0.0
      %v2187 = vmax.f32 %v2148, 0.0
      %v2188 = vmax.f32 %v2151, 0.0
      %v2189 = vmax.f32 %v2154, 0.0
      %v2190 = vmax.f32 %v2157, 0.0
      %2191 = vst.msk [vmem:[%s400 + $0x1] sm:$0xff] %vm279, %v2159
      %2192 = vst.msk [vmem:[%s400 + $0x9] sm:$0xff] %vm279, %v2160
      %2193 = vst.msk [vmem:[%s400 + $0x19] sm:$0xff] %vm279, %v2161
      %2194 = vst.msk [vmem:[%s400 + $0x21] sm:$0xff] %vm279, %v2162
      %2195 = vst.msk [vmem:[%s400 + $0x31] sm:$0xff] %vm279, %v2163
      %2196 = vst.msk [vmem:[%s400 + $0x39] sm:$0xff] %vm279, %v2164
      %2197 = vst.msk [vmem:[%s400 + $0x49] sm:$0xff] %vm279, %v2165
      %2198 = vst.msk [vmem:[%s400 + $0x51] sm:$0xff] %vm279, %v2166
      %2199 = vst.msk [vmem:[%s400 + $0x61] sm:$0xff] %vm279, %v2167
      %2200 = vst.msk [vmem:[%s400 + $0x69] sm:$0xff] %vm279, %v2168
      %2201 = vst.msk [vmem:[%s400 + $0x79] sm:$0xff] %vm279, %v2169
      %2202 = vst.msk [vmem:[%s400 + $0x81] sm:$0xff] %vm279, %v2170
      %2203 = vst.msk [vmem:[%s400 + $0x91] sm:$0xff] %vm279, %v2171
      %2204 = vst.msk [vmem:[%s400 + $0x99] sm:$0xff] %vm279, %v2172
      %2205 = vst.msk [vmem:[%s400 + $0xa9] sm:$0xff] %vm279, %v2173
      %2206 = vst.msk [vmem:[%s400 + $0xb1] sm:$0xff] %vm279, %v2174
      %2207 = vst.msk [vmem:[%s400 + $0xc1] sm:$0xff] %vm279, %v2175
      %2208 = vst.msk [vmem:[%s400 + $0xc9] sm:$0xff] %vm279, %v2176
      %2209 = vst.msk [vmem:[%s400 + $0xd9] sm:$0xff] %vm279, %v2177
      %2210 = vst.msk [vmem:[%s400 + $0xe1] sm:$0xff] %vm279, %v2178
      %2211 = vst.msk [vmem:[%s400 + $0xf1] sm:$0xff] %vm279, %v2179
      %2212 = vst.msk [vmem:[%s400 + $0xf9] sm:$0xff] %vm279, %v2180
      %2213 = vst.msk [vmem:[%s400 + $0x109] sm:$0xff] %vm279, %v2181
      %2214 = vst.msk [vmem:[%s400 + $0x111] sm:$0xff] %vm279, %v2182
      %2215 = vst.msk [vmem:[%s400 + $0x121] sm:$0xff] %vm279, %v2183
      %2216 = vst.msk [vmem:[%s400 + $0x129] sm:$0xff] %vm279, %v2184
      %2217 = vst.msk [vmem:[%s400 + $0x139] sm:$0xff] %vm279, %v2185
      %2218 = vst.msk [vmem:[%s400 + $0x141] sm:$0xff] %vm279, %v2186
      %2219 = vst.msk [vmem:[%s400 + $0x151] sm:$0xff] %vm279, %v2187
      %2220 = vst.msk [vmem:[%s400 + $0x159] sm:$0xff] %vm279, %v2188
      %2221 = vst.msk [vmem:[%s400 + $0x169] sm:$0xff] %vm279, %v2189
      %2222 = vst.msk [vmem:[%s400 + $0x171] sm:$0xff] %vm279, %v2190
      %v2223 = vld [vmem:[#allocation2] sm:$0xff]
      %v2224 = vld [vmem:[#allocation2 + $0x8] sm:$0xff]
      %v2225 = vld [vmem:[#allocation2 + $0x18] sm:$0xff]
      %v2226 = vld [vmem:[#allocation2 + $0x20] sm:$0xff]
      %v2227 = vld [vmem:[#allocation2 + $0x30] sm:$0xff]
      %v2228 = vld [vmem:[#allocation2 + $0x38] sm:$0xff]
      %v2229 = vld [vmem:[#allocation2 + $0x48] sm:$0xff]
      %v2230 = vld [vmem:[#allocation2 + $0x50] sm:$0xff]
      %v2231 = vld [vmem:[#allocation2 + $0x60] sm:$0xff]
      %v2232 = vld [vmem:[#allocation2 + $0x68] sm:$0xff]
      %v2233 = vld [vmem:[#allocation2 + $0x78] sm:$0xff]
      %v2234 = vld [vmem:[#allocation2 + $0x80] sm:$0xff]
      %v2235 = vld [vmem:[#allocation2 + $0x90] sm:$0xff]
      %v2236 = vld [vmem:[#allocation2 + $0x98] sm:$0xff]
      %v2237 = vld [vmem:[#allocation2 + $0xa8] sm:$0xff]
      %v2238 = vld [vmem:[#allocation2 + $0xb0] sm:$0xff]
      %v2239 = vld [vmem:[#allocation2 + $0xc0] sm:$0xff]
      %v2240 = vld [vmem:[#allocation2 + $0xc8] sm:$0xff]
      %v2241 = vld [vmem:[#allocation2 + $0xd8] sm:$0xff]
      %v2242 = vld [vmem:[#allocation2 + $0xe0] sm:$0xff]
      %v2243 = vld [vmem:[#allocation2 + $0xf0] sm:$0xff]
      %v2244 = vld [vmem:[#allocation2 + $0xf8] sm:$0xff]
      %v2245 = vld [vmem:[#allocation2 + $0x108] sm:$0xff]
      %v2246 = vld [vmem:[#allocation2 + $0x110] sm:$0xff]
      %v2247 = vld [vmem:[#allocation2 + $0x120] sm:$0xff]
      %v2248 = vld [vmem:[#allocation2 + $0x128] sm:$0xff]
      %v2249 = vld [vmem:[#allocation2 + $0x138] sm:$0xff]
      %v2250 = vld [vmem:[#allocation2 + $0x140] sm:$0xff]
      %v2251 = vld [vmem:[#allocation2 + $0x150] sm:$0xff]
      %v2252 = vld [vmem:[#allocation2 + $0x158] sm:$0xff]
      %v2253 = vld [vmem:[#allocation2 + $0x168] sm:$0xff]
      %v2254 = vld [vmem:[#allocation2 + $0x170] sm:$0xff]
      %v2255 = vld [vmem:[#allocation2 + $0x1] sm:$0xff]
      %v2256 = vld [vmem:[#allocation2 + $0x9] sm:$0xff]
      %v2257 = vld [vmem:[#allocation2 + $0x19] sm:$0xff]
      %v2258 = vld [vmem:[#allocation2 + $0x21] sm:$0xff]
      %v2259 = vld [vmem:[#allocation2 + $0x31] sm:$0xff]
      %v2260 = vld [vmem:[#allocation2 + $0x39] sm:$0xff]
      %v2261 = vld [vmem:[#allocation2 + $0x49] sm:$0xff]
      %v2262 = vld [vmem:[#allocation2 + $0x51] sm:$0xff]
      %v2263 = vld [vmem:[#allocation2 + $0x61] sm:$0xff]
      %v2264 = vld [vmem:[#allocation2 + $0x69] sm:$0xff]
      %v2265 = vld [vmem:[#allocation2 + $0x79] sm:$0xff]
      %v2266 = vld [vmem:[#allocation2 + $0x81] sm:$0xff]
      %v2267 = vld [vmem:[#allocation2 + $0x91] sm:$0xff]
      %v2268 = vld [vmem:[#allocation2 + $0x99] sm:$0xff]
      %v2269 = vld [vmem:[#allocation2 + $0xa9] sm:$0xff]
      %v2270 = vld [vmem:[#allocation2 + $0xb1] sm:$0xff]
      %v2271 = vld [vmem:[#allocation2 + $0xc1] sm:$0xff]
      %v2272 = vld [vmem:[#allocation2 + $0xc9] sm:$0xff]
      %v2273 = vld [vmem:[#allocation2 + $0xd9] sm:$0xff]
      %v2274 = vld [vmem:[#allocation2 + $0xe1] sm:$0xff]
      %v2275 = vld [vmem:[#allocation2 + $0xf1] sm:$0xff]
      %v2276 = vld [vmem:[#allocation2 + $0xf9] sm:$0xff]
      %v2277 = vld [vmem:[#allocation2 + $0x109] sm:$0xff]
      %v2278 = vld [vmem:[#allocation2 + $0x111] sm:$0xff]
      %v2279 = vld [vmem:[#allocation2 + $0x121] sm:$0xff]
      %v2280 = vld [vmem:[#allocation2 + $0x129] sm:$0xff]
      %v2281 = vld [vmem:[#allocation2 + $0x139] sm:$0xff]
      %v2282 = vld [vmem:[#allocation2 + $0x141] sm:$0xff]
      %v2283 = vld [vmem:[#allocation2 + $0x151] sm:$0xff]
      %v2284 = vld [vmem:[#allocation2 + $0x159] sm:$0xff]
      %v2285 = vld [vmem:[#allocation2 + $0x169] sm:$0xff]
      %v2286 = vld [vmem:[#allocation2 + $0x171] sm:$0xff]
      %v2287 = vld [vmem:[#allocation2 + $0x2] sm:$0xff]
      %v2288 = vld [vmem:[#allocation2 + $0xa] sm:$0xff]
      %v2289 = vld [vmem:[#allocation2 + $0x1a] sm:$0xff]
      %v2290 = vld [vmem:[#allocation2 + $0x22] sm:$0xff]
      %v2291 = vld [vmem:[#allocation2 + $0x32] sm:$0xff]
      %v2292 = vld [vmem:[#allocation2 + $0x3a] sm:$0xff]
      %v2293 = vld [vmem:[#allocation2 + $0x4a] sm:$0xff]
      %v2294 = vld [vmem:[#allocation2 + $0x52] sm:$0xff]
      %v2295 = vld [vmem:[#allocation2 + $0x62] sm:$0xff]
      %v2296 = vld [vmem:[#allocation2 + $0x6a] sm:$0xff]
      %v2297 = vld [vmem:[#allocation2 + $0x7a] sm:$0xff]
      %v2298 = vld [vmem:[#allocation2 + $0x82] sm:$0xff]
      %v2299 = vld [vmem:[#allocation2 + $0x92] sm:$0xff]
      %v2300 = vld [vmem:[#allocation2 + $0x9a] sm:$0xff]
      %v2301 = vld [vmem:[#allocation2 + $0xaa] sm:$0xff]
      %v2302 = vld [vmem:[#allocation2 + $0xb2] sm:$0xff]
      %v2303 = vld [vmem:[#allocation2 + $0xc2] sm:$0xff]
      %v2304 = vld [vmem:[#allocation2 + $0xca] sm:$0xff]
      %v2305 = vld [vmem:[#allocation2 + $0xda] sm:$0xff]
      %v2306 = vld [vmem:[#allocation2 + $0xe2] sm:$0xff]
      %v2307 = vld [vmem:[#allocation2 + $0xf2] sm:$0xff]
      %v2308 = vld [vmem:[#allocation2 + $0xfa] sm:$0xff]
      %v2309 = vld [vmem:[#allocation2 + $0x10a] sm:$0xff]
      %v2310 = vld [vmem:[#allocation2 + $0x112] sm:$0xff]
      %v2311 = vld [vmem:[#allocation2 + $0x122] sm:$0xff]
      %v2312 = vld [vmem:[#allocation2 + $0x12a] sm:$0xff]
      %v2313 = vld [vmem:[#allocation2 + $0x13a] sm:$0xff]
      %v2314 = vld [vmem:[#allocation2 + $0x142] sm:$0xff]
      %v2315 = vld [vmem:[#allocation2 + $0x152] sm:$0xff]
      %v2316 = vld [vmem:[#allocation2 + $0x15a] sm:$0xff]
      %v2317 = vld [vmem:[#allocation2 + $0x16a] sm:$0xff]
      %v2318 = vld [vmem:[#allocation2 + $0x172] sm:$0xff]
      %v2319 = vld [vmem:[%s400] sm:$0xff]
      %v2320 = vld [vmem:[%s400 + $0x8] sm:$0xff]
      %v2321 = vld [vmem:[%s400 + $0x18] sm:$0xff]
      %v2322 = vld [vmem:[%s400 + $0x20] sm:$0xff]
      %v2323 = vld [vmem:[%s400 + $0x30] sm:$0xff]
      %v2324 = vld [vmem:[%s400 + $0x38] sm:$0xff]
      %v2325 = vld [vmem:[%s400 + $0x48] sm:$0xff]
      %v2326 = vld [vmem:[%s400 + $0x50] sm:$0xff]
      %v2327 = vld [vmem:[%s400 + $0x60] sm:$0xff]
      %v2328 = vld [vmem:[%s400 + $0x68] sm:$0xff]
      %v2329 = vld [vmem:[%s400 + $0x78] sm:$0xff]
      %v2330 = vld [vmem:[%s400 + $0x80] sm:$0xff]
      %v2331 = vld [vmem:[%s400 + $0x90] sm:$0xff]
      %v2332 = vld [vmem:[%s400 + $0x98] sm:$0xff]
      %v2333 = vld [vmem:[%s400 + $0xa8] sm:$0xff]
      %v2334 = vld [vmem:[%s400 + $0xb0] sm:$0xff]
      %v2335 = vld [vmem:[%s400 + $0xc0] sm:$0xff]
      %v2336 = vld [vmem:[%s400 + $0xc8] sm:$0xff]
      %v2337 = vld [vmem:[%s400 + $0xd8] sm:$0xff]
      %v2338 = vld [vmem:[%s400 + $0xe0] sm:$0xff]
      %v2339 = vld [vmem:[%s400 + $0xf0] sm:$0xff]
      %v2340 = vld [vmem:[%s400 + $0xf8] sm:$0xff]
      %v2341 = vld [vmem:[%s400 + $0x108] sm:$0xff]
      %v2342 = vld [vmem:[%s400 + $0x110] sm:$0xff]
      %v2343 = vld [vmem:[%s400 + $0x120] sm:$0xff]
      %v2344 = vld [vmem:[%s400 + $0x128] sm:$0xff]
      %v2345 = vld [vmem:[%s400 + $0x138] sm:$0xff]
      %v2346 = vld [vmem:[%s400 + $0x140] sm:$0xff]
      %v2347 = vld [vmem:[%s400 + $0x150] sm:$0xff]
      %v2348 = vld [vmem:[%s400 + $0x158] sm:$0xff]
      %v2349 = vld [vmem:[%s400 + $0x168] sm:$0xff]
      %v2350 = vld [vmem:[%s400 + $0x170] sm:$0xff]
      %v2351 = vld [vmem:[%s400 + $0x1] sm:$0xff]
      %v2352 = vld [vmem:[%s400 + $0x9] sm:$0xff]
      %v2353 = vld [vmem:[%s400 + $0x19] sm:$0xff]
      %v2354 = vld [vmem:[%s400 + $0x21] sm:$0xff]
      %v2355 = vld [vmem:[%s400 + $0x31] sm:$0xff]
      %v2356 = vld [vmem:[%s400 + $0x39] sm:$0xff]
      %v2357 = vld [vmem:[%s400 + $0x49] sm:$0xff]
      %v2358 = vld [vmem:[%s400 + $0x51] sm:$0xff]
      %v2359 = vld [vmem:[%s400 + $0x61] sm:$0xff]
      %v2360 = vld [vmem:[%s400 + $0x69] sm:$0xff]
      %v2361 = vld [vmem:[%s400 + $0x79] sm:$0xff]
      %v2362 = vld [vmem:[%s400 + $0x81] sm:$0xff]
      %v2363 = vld [vmem:[%s400 + $0x91] sm:$0xff]
      %v2364 = vld [vmem:[%s400 + $0x99] sm:$0xff]
      %v2365 = vld [vmem:[%s400 + $0xa9] sm:$0xff]
      %v2366 = vld [vmem:[%s400 + $0xb1] sm:$0xff]
      %v2367 = vld [vmem:[%s400 + $0xc1] sm:$0xff]
      %v2368 = vld [vmem:[%s400 + $0xc9] sm:$0xff]
      %v2369 = vld [vmem:[%s400 + $0xd9] sm:$0xff]
      %v2370 = vld [vmem:[%s400 + $0xe1] sm:$0xff]
      %v2371 = vld [vmem:[%s400 + $0xf1] sm:$0xff]
      %v2372 = vld [vmem:[%s400 + $0xf9] sm:$0xff]
      %v2373 = vld [vmem:[%s400 + $0x109] sm:$0xff]
      %v2374 = vld [vmem:[%s400 + $0x111] sm:$0xff]
      %v2375 = vld [vmem:[%s400 + $0x121] sm:$0xff]
      %v2376 = vld [vmem:[%s400 + $0x129] sm:$0xff]
      %v2377 = vld [vmem:[%s400 + $0x139] sm:$0xff]
      %v2378 = vld [vmem:[%s400 + $0x141] sm:$0xff]
      %v2379 = vld [vmem:[%s400 + $0x151] sm:$0xff]
      %v2380 = vld [vmem:[%s400 + $0x159] sm:$0xff]
      %v2381 = vld [vmem:[%s400 + $0x169] sm:$0xff]
      %v2382 = vld [vmem:[%s400 + $0x171] sm:$0xff]
      %v2383 = vld [vmem:[%s400 + $0x2] sm:$0xff]
      %v2384 = vld [vmem:[%s400 + $0xa] sm:$0xff]
      %v2385 = vld [vmem:[%s400 + $0x1a] sm:$0xff]
      %v2386 = vld [vmem:[%s400 + $0x22] sm:$0xff]
      %v2387 = vld [vmem:[%s400 + $0x32] sm:$0xff]
      %v2388 = vld [vmem:[%s400 + $0x3a] sm:$0xff]
      %v2389 = vld [vmem:[%s400 + $0x4a] sm:$0xff]
      %v2390 = vld [vmem:[%s400 + $0x52] sm:$0xff]
      %v2391 = vld [vmem:[%s400 + $0x62] sm:$0xff]
      %v2392 = vld [vmem:[%s400 + $0x6a] sm:$0xff]
      %v2393 = vld [vmem:[%s400 + $0x7a] sm:$0xff]
      %v2394 = vld [vmem:[%s400 + $0x82] sm:$0xff]
      %v2395 = vld [vmem:[%s400 + $0x92] sm:$0xff]
      %v2396 = vld [vmem:[%s400 + $0x9a] sm:$0xff]
      %v2397 = vld [vmem:[%s400 + $0xaa] sm:$0xff]
      %v2398 = vld [vmem:[%s400 + $0xb2] sm:$0xff]
      %v2399 = vld [vmem:[%s400 + $0xc2] sm:$0xff]
      %v2400 = vld [vmem:[%s400 + $0xca] sm:$0xff]
      %v2401 = vld [vmem:[%s400 + $0xda] sm:$0xff]
      %v2402 = vld [vmem:[%s400 + $0xe2] sm:$0xff]
      %v2403 = vld [vmem:[%s400 + $0xf2] sm:$0xff]
      %v2404 = vld [vmem:[%s400 + $0xfa] sm:$0xff]
      %v2405 = vld [vmem:[%s400 + $0x10a] sm:$0xff]
      %v2406 = vld [vmem:[%s400 + $0x112] sm:$0xff]
      %v2407 = vld [vmem:[%s400 + $0x122] sm:$0xff]
      %v2408 = vld [vmem:[%s400 + $0x12a] sm:$0xff]
      %v2409 = vld [vmem:[%s400 + $0x13a] sm:$0xff]
      %v2410 = vld [vmem:[%s400 + $0x142] sm:$0xff]
      %v2411 = vld [vmem:[%s400 + $0x152] sm:$0xff]
      %v2412 = vld [vmem:[%s400 + $0x15a] sm:$0xff]
      %v2413 = vld [vmem:[%s400 + $0x16a] sm:$0xff]
      %v2414 = vld [vmem:[%s400 + $0x172] sm:$0xff]
      %v2415 = vld [vmem:[%s625] sm:$0xff]
      %v2416 = vld [vmem:[%s625 + $0x8] sm:$0xff]
      %v2417 = vld [vmem:[%s625 + $0x18] sm:$0xff]
      %v2418 = vld [vmem:[%s625 + $0x20] sm:$0xff]
      %v2419 = vld [vmem:[%s625 + $0x30] sm:$0xff]
      %v2420 = vld [vmem:[%s625 + $0x38] sm:$0xff]
      %v2421 = vld [vmem:[%s625 + $0x48] sm:$0xff]
      %v2422 = vld [vmem:[%s625 + $0x50] sm:$0xff]
      %v2423 = vld [vmem:[%s625 + $0x60] sm:$0xff]
      %v2424 = vld [vmem:[%s625 + $0x68] sm:$0xff]
      %v2425 = vld [vmem:[%s625 + $0x78] sm:$0xff]
      %v2426 = vld [vmem:[%s625 + $0x80] sm:$0xff]
      %v2427 = vld [vmem:[%s625 + $0x90] sm:$0xff]
      %v2428 = vld [vmem:[%s625 + $0x98] sm:$0xff]
      %v2429 = vld [vmem:[%s625 + $0xa8] sm:$0xff]
      %v2430 = vld [vmem:[%s625 + $0xb0] sm:$0xff]
      %v2431 = vld [vmem:[%s625 + $0xc0] sm:$0xff]
      %v2432 = vld [vmem:[%s625 + $0xc8] sm:$0xff]
      %v2433 = vld [vmem:[%s625 + $0xd8] sm:$0xff]
      %v2434 = vld [vmem:[%s625 + $0xe0] sm:$0xff]
      %v2435 = vld [vmem:[%s625 + $0xf0] sm:$0xff]
      %v2436 = vld [vmem:[%s625 + $0xf8] sm:$0xff]
      %v2437 = vld [vmem:[%s625 + $0x108] sm:$0xff]
      %v2438 = vld [vmem:[%s625 + $0x110] sm:$0xff]
      %v2439 = vld [vmem:[%s625 + $0x120] sm:$0xff]
      %v2440 = vld [vmem:[%s625 + $0x128] sm:$0xff]
      %v2441 = vld [vmem:[%s625 + $0x138] sm:$0xff]
      %v2442 = vld [vmem:[%s625 + $0x140] sm:$0xff]
      %v2443 = vld [vmem:[%s625 + $0x150] sm:$0xff]
      %v2444 = vld [vmem:[%s625 + $0x158] sm:$0xff]
      %v2445 = vld [vmem:[%s625 + $0x168] sm:$0xff]
      %v2446 = vld [vmem:[%s625 + $0x170] sm:$0xff]
      %v2447 = vld [vmem:[%s625 + $0x1] sm:$0xff]
      %v2448 = vld [vmem:[%s625 + $0x9] sm:$0xff]
      %v2449 = vld [vmem:[%s625 + $0x19] sm:$0xff]
      %v2450 = vld [vmem:[%s625 + $0x21] sm:$0xff]
      %v2451 = vld [vmem:[%s625 + $0x31] sm:$0xff]
      %v2452 = vld [vmem:[%s625 + $0x39] sm:$0xff]
      %v2453 = vld [vmem:[%s625 + $0x49] sm:$0xff]
      %v2454 = vld [vmem:[%s625 + $0x51] sm:$0xff]
      %v2455 = vld [vmem:[%s625 + $0x61] sm:$0xff]
      %v2456 = vld [vmem:[%s625 + $0x69] sm:$0xff]
      %v2457 = vld [vmem:[%s625 + $0x79] sm:$0xff]
      %v2458 = vld [vmem:[%s625 + $0x81] sm:$0xff]
      %v2459 = vld [vmem:[%s625 + $0x91] sm:$0xff]
      %v2460 = vld [vmem:[%s625 + $0x99] sm:$0xff]
      %v2461 = vld [vmem:[%s625 + $0xa9] sm:$0xff]
      %v2462 = vld [vmem:[%s625 + $0xb1] sm:$0xff]
      %v2463 = vld [vmem:[%s625 + $0xc1] sm:$0xff]
      %v2464 = vld [vmem:[%s625 + $0xc9] sm:$0xff]
      %v2465 = vld [vmem:[%s625 + $0xd9] sm:$0xff]
      %v2466 = vld [vmem:[%s625 + $0xe1] sm:$0xff]
      %v2467 = vld [vmem:[%s625 + $0xf1] sm:$0xff]
      %v2468 = vld [vmem:[%s625 + $0xf9] sm:$0xff]
      %v2469 = vld [vmem:[%s625 + $0x109] sm:$0xff]
      %v2470 = vld [vmem:[%s625 + $0x111] sm:$0xff]
      %v2471 = vld [vmem:[%s625 + $0x121] sm:$0xff]
      %v2472 = vld [vmem:[%s625 + $0x129] sm:$0xff]
      %v2473 = vld [vmem:[%s625 + $0x139] sm:$0xff]
      %v2474 = vld [vmem:[%s625 + $0x141] sm:$0xff]
      %v2475 = vld [vmem:[%s625 + $0x151] sm:$0xff]
      %v2476 = vld [vmem:[%s625 + $0x159] sm:$0xff]
      %v2477 = vld [vmem:[%s625 + $0x169] sm:$0xff]
      %v2478 = vld [vmem:[%s625 + $0x171] sm:$0xff]
      %v2479 = vld [vmem:[%s625 + $0x2] sm:$0xff]
      %v2480 = vld [vmem:[%s625 + $0xa] sm:$0xff]
      %v2481 = vld [vmem:[%s625 + $0x1a] sm:$0xff]
      %v2482 = vld [vmem:[%s625 + $0x22] sm:$0xff]
      %v2483 = vld [vmem:[%s625 + $0x32] sm:$0xff]
      %v2484 = vld [vmem:[%s625 + $0x3a] sm:$0xff]
      %v2485 = vld [vmem:[%s625 + $0x4a] sm:$0xff]
      %v2486 = vld [vmem:[%s625 + $0x52] sm:$0xff]
      %v2487 = vld [vmem:[%s625 + $0x62] sm:$0xff]
      %v2488 = vld [vmem:[%s625 + $0x6a] sm:$0xff]
      %v2489 = vld [vmem:[%s625 + $0x7a] sm:$0xff]
      %v2490 = vld [vmem:[%s625 + $0x82] sm:$0xff]
      %v2491 = vld [vmem:[%s625 + $0x92] sm:$0xff]
      %v2492 = vld [vmem:[%s625 + $0x9a] sm:$0xff]
      %v2493 = vld [vmem:[%s625 + $0xaa] sm:$0xff]
      %v2494 = vld [vmem:[%s625 + $0xb2] sm:$0xff]
      %v2495 = vld [vmem:[%s625 + $0xc2] sm:$0xff]
      %v2496 = vld [vmem:[%s625 + $0xca] sm:$0xff]
      %v2497 = vld [vmem:[%s625 + $0xda] sm:$0xff]
      %v2498 = vld [vmem:[%s625 + $0xe2] sm:$0xff]
      %v2499 = vld [vmem:[%s625 + $0xf2] sm:$0xff]
      %v2500 = vld [vmem:[%s625 + $0xfa] sm:$0xff]
      %v2501 = vld [vmem:[%s625 + $0x10a] sm:$0xff]
      %v2502 = vld [vmem:[%s625 + $0x112] sm:$0xff]
      %v2503 = vld [vmem:[%s625 + $0x122] sm:$0xff]
      %v2504 = vld [vmem:[%s625 + $0x12a] sm:$0xff]
      %v2505 = vld [vmem:[%s625 + $0x13a] sm:$0xff]
      %v2506 = vld [vmem:[%s625 + $0x142] sm:$0xff]
      %v2507 = vld [vmem:[%s625 + $0x152] sm:$0xff]
      %v2508 = vld [vmem:[%s625 + $0x15a] sm:$0xff]
      %v2509 = vld [vmem:[%s625 + $0x16a] sm:$0xff]
      %v2510 = vld [vmem:[%s625 + $0x172] sm:$0xff]
      %2543 = vrot.lane.b32.xlu0 %v2255, 32
      %v2544 = vpop.permute.xlu0 %2543
      %2545 = vrot.lane.b32.xlu0 %v2256, 32
      %v2546 = vpop.permute.xlu0 %2545
      %2547 = vrot.lane.b32.xlu0 %v2257, 32
      %v2548 = vpop.permute.xlu0 %2547
      %2549 = vrot.lane.b32.xlu0 %v2258, 32
      %v2550 = vpop.permute.xlu0 %2549
      %2551 = vrot.lane.b32.xlu0 %v2259, 32
      %v2552 = vpop.permute.xlu0 %2551
      %2553 = vrot.lane.b32.xlu0 %v2260, 32
      %v2554 = vpop.permute.xlu0 %2553
      %2555 = vrot.lane.b32.xlu0 %v2261, 32
      %v2556 = vpop.permute.xlu0 %2555
      %2557 = vrot.lane.b32.xlu0 %v2262, 32
      %v2558 = vpop.permute.xlu0 %2557
      %2559 = vrot.lane.b32.xlu0 %v2263, 32
      %v2560 = vpop.permute.xlu0 %2559
      %2561 = vrot.lane.b32.xlu0 %v2264, 32
      %v2562 = vpop.permute.xlu0 %2561
      %2563 = vrot.lane.b32.xlu0 %v2265, 32
      %v2564 = vpop.permute.xlu0 %2563
      %2565 = vrot.lane.b32.xlu0 %v2266, 32
      %v2566 = vpop.permute.xlu0 %2565
      %2567 = vrot.lane.b32.xlu0 %v2267, 32
      %v2568 = vpop.permute.xlu0 %2567
      %2569 = vrot.lane.b32.xlu0 %v2268, 32
      %v2570 = vpop.permute.xlu0 %2569
      %2571 = vrot.lane.b32.xlu0 %v2269, 32
      %v2572 = vpop.permute.xlu0 %2571
      %2573 = vrot.lane.b32.xlu0 %v2270, 32
      %v2574 = vpop.permute.xlu0 %2573
      %2575 = vrot.lane.b32.xlu0 %v2271, 32
      %v2576 = vpop.permute.xlu0 %2575
      %2577 = vrot.lane.b32.xlu0 %v2272, 32
      %v2578 = vpop.permute.xlu0 %2577
      %2579 = vrot.lane.b32.xlu0 %v2273, 32
      %v2580 = vpop.permute.xlu0 %2579
      %2581 = vrot.lane.b32.xlu0 %v2274, 32
      %v2582 = vpop.permute.xlu0 %2581
      %2583 = vrot.lane.b32.xlu0 %v2275, 32
      %v2584 = vpop.permute.xlu0 %2583
      %2585 = vrot.lane.b32.xlu0 %v2276, 32
      %v2586 = vpop.permute.xlu0 %2585
      %2587 = vrot.lane.b32.xlu0 %v2277, 32
      %v2588 = vpop.permute.xlu0 %2587
      %2589 = vrot.lane.b32.xlu0 %v2278, 32
      %v2590 = vpop.permute.xlu0 %2589
      %2591 = vrot.lane.b32.xlu0 %v2279, 32
      %v2592 = vpop.permute.xlu0 %2591
      %2593 = vrot.lane.b32.xlu0 %v2280, 32
      %v2594 = vpop.permute.xlu0 %2593
      %2595 = vrot.lane.b32.xlu0 %v2281, 32
      %v2596 = vpop.permute.xlu0 %2595
      %2597 = vrot.lane.b32.xlu0 %v2282, 32
      %v2598 = vpop.permute.xlu0 %2597
      %2599 = vrot.lane.b32.xlu0 %v2283, 32
      %v2600 = vpop.permute.xlu0 %2599
      %2601 = vrot.lane.b32.xlu0 %v2284, 32
      %v2602 = vpop.permute.xlu0 %2601
      %2603 = vrot.lane.b32.xlu0 %v2285, 32
      %v2604 = vpop.permute.xlu0 %2603
      %2605 = vrot.lane.b32.xlu0 %v2286, 32
      %v2606 = vpop.permute.xlu0 %2605
      %2671 = vrot.lane.b32.xlu0 %v2287, 64
      %v2672 = vpop.permute.xlu0 %2671
      %2673 = vrot.lane.b32.xlu0 %v2288, 64
      %v2674 = vpop.permute.xlu0 %2673
      %2675 = vrot.lane.b32.xlu0 %v2289, 64
      %v2676 = vpop.permute.xlu0 %2675
      %2677 = vrot.lane.b32.xlu0 %v2290, 64
      %v2678 = vpop.permute.xlu0 %2677
      %2679 = vrot.lane.b32.xlu0 %v2291, 64
      %v2680 = vpop.permute.xlu0 %2679
      %2681 = vrot.lane.b32.xlu0 %v2292, 64
      %v2682 = vpop.permute.xlu0 %2681
      %2683 = vrot.lane.b32.xlu0 %v2293, 64
      %v2684 = vpop.permute.xlu0 %2683
      %2685 = vrot.lane.b32.xlu0 %v2294, 64
      %v2686 = vpop.permute.xlu0 %2685
      %2687 = vrot.lane.b32.xlu0 %v2295, 64
      %v2688 = vpop.permute.xlu0 %2687
      %2689 = vrot.lane.b32.xlu0 %v2296, 64
      %v2690 = vpop.permute.xlu0 %2689
      %2691 = vrot.lane.b32.xlu0 %v2297, 64
      %v2692 = vpop.permute.xlu0 %2691
      %2693 = vrot.lane.b32.xlu0 %v2298, 64
      %v2694 = vpop.permute.xlu0 %2693
      %2695 = vrot.lane.b32.xlu0 %v2299, 64
      %v2696 = vpop.permute.xlu0 %2695
      %2697 = vrot.lane.b32.xlu0 %v2300, 64
      %v2698 = vpop.permute.xlu0 %2697
      %2699 = vrot.lane.b32.xlu0 %v2301, 64
      %v2700 = vpop.permute.xlu0 %2699
      %2701 = vrot.lane.b32.xlu0 %v2302, 64
      %v2702 = vpop.permute.xlu0 %2701
      %2703 = vrot.lane.b32.xlu0 %v2303, 64
      %v2704 = vpop.permute.xlu0 %2703
      %2705 = vrot.lane.b32.xlu0 %v2304, 64
      %v2706 = vpop.permute.xlu0 %2705
      %2707 = vrot.lane.b32.xlu0 %v2305, 64
      %v2708 = vpop.permute.xlu0 %2707
      %2709 = vrot.lane.b32.xlu0 %v2306, 64
      %v2710 = vpop.permute.xlu0 %2709
      %2711 = vrot.lane.b32.xlu0 %v2307, 64
      %v2712 = vpop.permute.xlu0 %2711
      %2713 = vrot.lane.b32.xlu0 %v2308, 64
      %v2714 = vpop.permute.xlu0 %2713
      %2715 = vrot.lane.b32.xlu0 %v2309, 64
      %v2716 = vpop.permute.xlu0 %2715
      %2717 = vrot.lane.b32.xlu0 %v2310, 64
      %v2718 = vpop.permute.xlu0 %2717
      %2719 = vrot.lane.b32.xlu0 %v2311, 64
      %v2720 = vpop.permute.xlu0 %2719
      %2721 = vrot.lane.b32.xlu0 %v2312, 64
      %v2722 = vpop.permute.xlu0 %2721
      %2723 = vrot.lane.b32.xlu0 %v2313, 64
      %v2724 = vpop.permute.xlu0 %2723
      %2725 = vrot.lane.b32.xlu0 %v2314, 64
      %v2726 = vpop.permute.xlu0 %2725
      %2727 = vrot.lane.b32.xlu0 %v2315, 64
      %v2728 = vpop.permute.xlu0 %2727
      %2729 = vrot.lane.b32.xlu0 %v2316, 64
      %v2730 = vpop.permute.xlu0 %2729
      %2731 = vrot.lane.b32.xlu0 %v2317, 64
      %v2732 = vpop.permute.xlu0 %2731
      %2733 = vrot.lane.b32.xlu0 %v2318, 64
      %v2734 = vpop.permute.xlu0 %2733
      %2799 = vrot.lane.b32.xlu0 %v2319, 96
      %v2800 = vpop.permute.xlu0 %2799
      %2801 = vrot.lane.b32.xlu0 %v2320, 96
      %v2802 = vpop.permute.xlu0 %2801
      %2803 = vrot.lane.b32.xlu0 %v2321, 96
      %v2804 = vpop.permute.xlu0 %2803
      %2805 = vrot.lane.b32.xlu0 %v2322, 96
      %v2806 = vpop.permute.xlu0 %2805
      %2807 = vrot.lane.b32.xlu0 %v2323, 96
      %v2808 = vpop.permute.xlu0 %2807
      %2809 = vrot.lane.b32.xlu0 %v2324, 96
      %v2810 = vpop.permute.xlu0 %2809
      %2811 = vrot.lane.b32.xlu0 %v2325, 96
      %v2812 = vpop.permute.xlu0 %2811
      %2813 = vrot.lane.b32.xlu0 %v2326, 96
      %v2814 = vpop.permute.xlu0 %2813
      %2815 = vrot.lane.b32.xlu0 %v2327, 96
      %v2816 = vpop.permute.xlu0 %2815
      %2817 = vrot.lane.b32.xlu0 %v2328, 96
      %v2818 = vpop.permute.xlu0 %2817
      %2819 = vrot.lane.b32.xlu0 %v2329, 96
      %v2820 = vpop.permute.xlu0 %2819
      %2821 = vrot.lane.b32.xlu0 %v2330, 96
      %v2822 = vpop.permute.xlu0 %2821
      %2823 = vrot.lane.b32.xlu0 %v2331, 96
      %v2824 = vpop.permute.xlu0 %2823
      %2825 = vrot.lane.b32.xlu0 %v2332, 96
      %v2826 = vpop.permute.xlu0 %2825
      %2827 = vrot.lane.b32.xlu0 %v2333, 96
      %v2828 = vpop.permute.xlu0 %2827
      %2829 = vrot.lane.b32.xlu0 %v2334, 96
      %v2830 = vpop.permute.xlu0 %2829
      %2831 = vrot.lane.b32.xlu0 %v2335, 96
      %v2832 = vpop.permute.xlu0 %2831
      %2833 = vrot.lane.b32.xlu0 %v2336, 96
      %v2834 = vpop.permute.xlu0 %2833
      %2835 = vrot.lane.b32.xlu0 %v2337, 96
      %v2836 = vpop.permute.xlu0 %2835
      %2837 = vrot.lane.b32.xlu0 %v2338, 96
      %v2838 = vpop.permute.xlu0 %2837
      %2839 = vrot.lane.b32.xlu0 %v2339, 96
      %v2840 = vpop.permute.xlu0 %2839
      %2841 = vrot.lane.b32.xlu0 %v2340, 96
      %v2842 = vpop.permute.xlu0 %2841
      %2843 = vrot.lane.b32.xlu0 %v2341, 96
      %v2844 = vpop.permute.xlu0 %2843
      %2845 = vrot.lane.b32.xlu0 %v2342, 96
      %v2846 = vpop.permute.xlu0 %2845
      %2847 = vrot.lane.b32.xlu0 %v2343, 96
      %v2848 = vpop.permute.xlu0 %2847
      %2849 = vrot.lane.b32.xlu0 %v2344, 96
      %v2850 = vpop.permute.xlu0 %2849
      %2851 = vrot.lane.b32.xlu0 %v2345, 96
      %v2852 = vpop.permute.xlu0 %2851
      %2853 = vrot.lane.b32.xlu0 %v2346, 96
      %v2854 = vpop.permute.xlu0 %2853
      %2855 = vrot.lane.b32.xlu0 %v2347, 96
      %v2856 = vpop.permute.xlu0 %2855
      %2857 = vrot.lane.b32.xlu0 %v2348, 96
      %v2858 = vpop.permute.xlu0 %2857
      %2859 = vrot.lane.b32.xlu0 %v2349, 96
      %v2860 = vpop.permute.xlu0 %2859
      %2861 = vrot.lane.b32.xlu0 %v2350, 96
      %v2862 = vpop.permute.xlu0 %2861
      %2927 = vrot.lane.b32.xlu0 %v2383, 32
      %v2928 = vpop.permute.xlu0 %2927
      %2929 = vrot.lane.b32.xlu0 %v2384, 32
      %v2930 = vpop.permute.xlu0 %2929
      %2931 = vrot.lane.b32.xlu0 %v2385, 32
      %v2932 = vpop.permute.xlu0 %2931
      %2933 = vrot.lane.b32.xlu0 %v2386, 32
      %v2934 = vpop.permute.xlu0 %2933
      %2935 = vrot.lane.b32.xlu0 %v2387, 32
      %v2936 = vpop.permute.xlu0 %2935
      %2937 = vrot.lane.b32.xlu0 %v2388, 32
      %v2938 = vpop.permute.xlu0 %2937
      %2939 = vrot.lane.b32.xlu0 %v2389, 32
      %v2940 = vpop.permute.xlu0 %2939
      %2941 = vrot.lane.b32.xlu0 %v2390, 32
      %v2942 = vpop.permute.xlu0 %2941
      %2943 = vrot.lane.b32.xlu0 %v2391, 32
      %v2944 = vpop.permute.xlu0 %2943
      %2945 = vrot.lane.b32.xlu0 %v2392, 32
      %v2946 = vpop.permute.xlu0 %2945
      %2947 = vrot.lane.b32.xlu0 %v2393, 32
      %v2948 = vpop.permute.xlu0 %2947
      %2949 = vrot.lane.b32.xlu0 %v2394, 32
      %v2950 = vpop.permute.xlu0 %2949
      %2951 = vrot.lane.b32.xlu0 %v2395, 32
      %v2952 = vpop.permute.xlu0 %2951
      %2953 = vrot.lane.b32.xlu0 %v2396, 32
      %v2954 = vpop.permute.xlu0 %2953
      %2955 = vrot.lane.b32.xlu0 %v2397, 32
      %v2956 = vpop.permute.xlu0 %2955
      %2957 = vrot.lane.b32.xlu0 %v2398, 32
      %v2958 = vpop.permute.xlu0 %2957
      %2959 = vrot.lane.b32.xlu0 %v2399, 32
      %v2960 = vpop.permute.xlu0 %2959
      %2961 = vrot.lane.b32.xlu0 %v2400, 32
      %v2962 = vpop.permute.xlu0 %2961
      %2963 = vrot.lane.b32.xlu0 %v2401, 32
      %v2964 = vpop.permute.xlu0 %2963
      %2965 = vrot.lane.b32.xlu0 %v2402, 32
      %v2966 = vpop.permute.xlu0 %2965
      %2967 = vrot.lane.b32.xlu0 %v2403, 32
      %v2968 = vpop.permute.xlu0 %2967
      %2969 = vrot.lane.b32.xlu0 %v2404, 32
      %v2970 = vpop.permute.xlu0 %2969
      %2971 = vrot.lane.b32.xlu0 %v2405, 32
      %v2972 = vpop.permute.xlu0 %2971
      %2973 = vrot.lane.b32.xlu0 %v2406, 32
      %v2974 = vpop.permute.xlu0 %2973
      %2975 = vrot.lane.b32.xlu0 %v2407, 32
      %v2976 = vpop.permute.xlu0 %2975
      %2977 = vrot.lane.b32.xlu0 %v2408, 32
      %v2978 = vpop.permute.xlu0 %2977
      %2979 = vrot.lane.b32.xlu0 %v2409, 32
      %v2980 = vpop.permute.xlu0 %2979
      %2981 = vrot.lane.b32.xlu0 %v2410, 32
      %v2982 = vpop.permute.xlu0 %2981
      %2983 = vrot.lane.b32.xlu0 %v2411, 32
      %v2984 = vpop.permute.xlu0 %2983
      %2985 = vrot.lane.b32.xlu0 %v2412, 32
      %v2986 = vpop.permute.xlu0 %2985
      %2987 = vrot.lane.b32.xlu0 %v2413, 32
      %v2988 = vpop.permute.xlu0 %2987
      %2989 = vrot.lane.b32.xlu0 %v2414, 32
      %v2990 = vpop.permute.xlu0 %2989
      %3055 = vrot.lane.b32.xlu0 %v2415, 64
      %v3056 = vpop.permute.xlu0 %3055
      %3057 = vrot.lane.b32.xlu0 %v2416, 64
      %v3058 = vpop.permute.xlu0 %3057
      %3059 = vrot.lane.b32.xlu0 %v2417, 64
      %v3060 = vpop.permute.xlu0 %3059
      %3061 = vrot.lane.b32.xlu0 %v2418, 64
      %v3062 = vpop.permute.xlu0 %3061
      %3063 = vrot.lane.b32.xlu0 %v2419, 64
      %v3064 = vpop.permute.xlu0 %3063
      %3065 = vrot.lane.b32.xlu0 %v2420, 64
      %v3066 = vpop.permute.xlu0 %3065
      %3067 = vrot.lane.b32.xlu0 %v2421, 64
      %v3068 = vpop.permute.xlu0 %3067
      %3069 = vrot.lane.b32.xlu0 %v2422, 64
      %v3070 = vpop.permute.xlu0 %3069
      %3071 = vrot.lane.b32.xlu0 %v2423, 64
      %v3072 = vpop.permute.xlu0 %3071
      %3073 = vrot.lane.b32.xlu0 %v2424, 64
      %v3074 = vpop.permute.xlu0 %3073
      %3075 = vrot.lane.b32.xlu0 %v2425, 64
      %v3076 = vpop.permute.xlu0 %3075
      %3077 = vrot.lane.b32.xlu0 %v2426, 64
      %v3078 = vpop.permute.xlu0 %3077
      %3079 = vrot.lane.b32.xlu0 %v2427, 64
      %v3080 = vpop.permute.xlu0 %3079
      %3081 = vrot.lane.b32.xlu0 %v2428, 64
      %v3082 = vpop.permute.xlu0 %3081
      %3083 = vrot.lane.b32.xlu0 %v2429, 64
      %v3084 = vpop.permute.xlu0 %3083
      %3085 = vrot.lane.b32.xlu0 %v2430, 64
      %v3086 = vpop.permute.xlu0 %3085
      %3087 = vrot.lane.b32.xlu0 %v2431, 64
      %v3088 = vpop.permute.xlu0 %3087
      %3089 = vrot.lane.b32.xlu0 %v2432, 64
      %v3090 = vpop.permute.xlu0 %3089
      %3091 = vrot.lane.b32.xlu0 %v2433, 64
      %v3092 = vpop.permute.xlu0 %3091
      %3093 = vrot.lane.b32.xlu0 %v2434, 64
      %v3094 = vpop.permute.xlu0 %3093
      %3095 = vrot.lane.b32.xlu0 %v2435, 64
      %v3096 = vpop.permute.xlu0 %3095
      %3097 = vrot.lane.b32.xlu0 %v2436, 64
      %v3098 = vpop.permute.xlu0 %3097
      %3099 = vrot.lane.b32.xlu0 %v2437, 64
      %v3100 = vpop.permute.xlu0 %3099
      %3101 = vrot.lane.b32.xlu0 %v2438, 64
      %v3102 = vpop.permute.xlu0 %3101
      %3103 = vrot.lane.b32.xlu0 %v2439, 64
      %v3104 = vpop.permute.xlu0 %3103
      %3105 = vrot.lane.b32.xlu0 %v2440, 64
      %v3106 = vpop.permute.xlu0 %3105
      %3107 = vrot.lane.b32.xlu0 %v2441, 64
      %v3108 = vpop.permute.xlu0 %3107
      %3109 = vrot.lane.b32.xlu0 %v2442, 64
      %v3110 = vpop.permute.xlu0 %3109
      %3111 = vrot.lane.b32.xlu0 %v2443, 64
      %v3112 = vpop.permute.xlu0 %3111
      %3113 = vrot.lane.b32.xlu0 %v2444, 64
      %v3114 = vpop.permute.xlu0 %3113
      %3115 = vrot.lane.b32.xlu0 %v2445, 64
      %v3116 = vpop.permute.xlu0 %3115
      %3117 = vrot.lane.b32.xlu0 %v2446, 64
      %v3118 = vpop.permute.xlu0 %3117
      %3183 = vrot.lane.b32.xlu0 %v2447, 96
      %v3184 = vpop.permute.xlu0 %3183
      %3185 = vrot.lane.b32.xlu0 %v2448, 96
      %v3186 = vpop.permute.xlu0 %3185
      %3187 = vrot.lane.b32.xlu0 %v2449, 96
      %v3188 = vpop.permute.xlu0 %3187
      %3189 = vrot.lane.b32.xlu0 %v2450, 96
      %v3190 = vpop.permute.xlu0 %3189
      %3191 = vrot.lane.b32.xlu0 %v2451, 96
      %v3192 = vpop.permute.xlu0 %3191
      %3193 = vrot.lane.b32.xlu0 %v2452, 96
      %v3194 = vpop.permute.xlu0 %3193
      %3195 = vrot.lane.b32.xlu0 %v2453, 96
      %v3196 = vpop.permute.xlu0 %3195
      %3197 = vrot.lane.b32.xlu0 %v2454, 96
      %v3198 = vpop.permute.xlu0 %3197
      %3199 = vrot.lane.b32.xlu0 %v2455, 96
      %v3200 = vpop.permute.xlu0 %3199
      %3201 = vrot.lane.b32.xlu0 %v2456, 96
      %v3202 = vpop.permute.xlu0 %3201
      %3203 = vrot.lane.b32.xlu0 %v2457, 96
      %v3204 = vpop.permute.xlu0 %3203
      %3205 = vrot.lane.b32.xlu0 %v2458, 96
      %v3206 = vpop.permute.xlu0 %3205
      %3207 = vrot.lane.b32.xlu0 %v2459, 96
      %v3208 = vpop.permute.xlu0 %3207
      %3209 = vrot.lane.b32.xlu0 %v2460, 96
      %v3210 = vpop.permute.xlu0 %3209
      %3211 = vrot.lane.b32.xlu0 %v2461, 96
      %v3212 = vpop.permute.xlu0 %3211
      %3213 = vrot.lane.b32.xlu0 %v2462, 96
      %v3214 = vpop.permute.xlu0 %3213
      %3215 = vrot.lane.b32.xlu0 %v2463, 96
      %v3216 = vpop.permute.xlu0 %3215
      %3217 = vrot.lane.b32.xlu0 %v2464, 96
      %v3218 = vpop.permute.xlu0 %3217
      %3219 = vrot.lane.b32.xlu0 %v2465, 96
      %v3220 = vpop.permute.xlu0 %3219
      %3221 = vrot.lane.b32.xlu0 %v2466, 96
      %v3222 = vpop.permute.xlu0 %3221
      %3223 = vrot.lane.b32.xlu0 %v2467, 96
      %v3224 = vpop.permute.xlu0 %3223
      %3225 = vrot.lane.b32.xlu0 %v2468, 96
      %v3226 = vpop.permute.xlu0 %3225
      %3227 = vrot.lane.b32.xlu0 %v2469, 96
      %v3228 = vpop.permute.xlu0 %3227
      %3229 = vrot.lane.b32.xlu0 %v2470, 96
      %v3230 = vpop.permute.xlu0 %3229
      %3231 = vrot.lane.b32.xlu0 %v2471, 96
      %v3232 = vpop.permute.xlu0 %3231
      %3233 = vrot.lane.b32.xlu0 %v2472, 96
      %v3234 = vpop.permute.xlu0 %3233
      %3235 = vrot.lane.b32.xlu0 %v2473, 96
      %v3236 = vpop.permute.xlu0 %3235
      %3237 = vrot.lane.b32.xlu0 %v2474, 96
      %v3238 = vpop.permute.xlu0 %3237
      %3239 = vrot.lane.b32.xlu0 %v2475, 96
      %v3240 = vpop.permute.xlu0 %3239
      %3241 = vrot.lane.b32.xlu0 %v2476, 96
      %v3242 = vpop.permute.xlu0 %3241
      %3243 = vrot.lane.b32.xlu0 %v2477, 96
      %v3244 = vpop.permute.xlu0 %3243
      %3245 = vrot.lane.b32.xlu0 %v2478, 96
      %v3246 = vpop.permute.xlu0 %3245
      %v3279 = vsel %vm279, %v2223, %v2544
      %v3280 = vsel %vm279, %v2224, %v2546
      %v3281 = vsel %vm279, %v2225, %v2548
      %v3282 = vsel %vm279, %v2226, %v2550
      %v3283 = vsel %vm279, %v2227, %v2552
      %v3284 = vsel %vm279, %v2228, %v2554
      %v3285 = vsel %vm279, %v2229, %v2556
      %v3286 = vsel %vm279, %v2230, %v2558
      %v3287 = vsel %vm279, %v2231, %v2560
      %v3288 = vsel %vm279, %v2232, %v2562
      %v3289 = vsel %vm279, %v2233, %v2564
      %v3290 = vsel %vm279, %v2234, %v2566
      %v3291 = vsel %vm279, %v2235, %v2568
      %v3292 = vsel %vm279, %v2236, %v2570
      %v3293 = vsel %vm279, %v2237, %v2572
      %v3294 = vsel %vm279, %v2238, %v2574
      %v3295 = vsel %vm279, %v2239, %v2576
      %v3296 = vsel %vm279, %v2240, %v2578
      %v3297 = vsel %vm279, %v2241, %v2580
      %v3298 = vsel %vm279, %v2242, %v2582
      %v3299 = vsel %vm279, %v2243, %v2584
      %v3300 = vsel %vm279, %v2244, %v2586
      %v3301 = vsel %vm279, %v2245, %v2588
      %v3302 = vsel %vm279, %v2246, %v2590
      %v3303 = vsel %vm279, %v2247, %v2592
      %v3304 = vsel %vm279, %v2248, %v2594
      %v3305 = vsel %vm279, %v2249, %v2596
      %v3306 = vsel %vm279, %v2250, %v2598
      %v3307 = vsel %vm279, %v2251, %v2600
      %v3308 = vsel %vm279, %v2252, %v2602
      %v3309 = vsel %vm279, %v2253, %v2604
      %v3310 = vsel %vm279, %v2254, %v2606
      %v3311 = vsel %vm1522, %v3279, %v2672
      %v3312 = vsel %vm1522, %v3280, %v2674
      %v3313 = vsel %vm1522, %v3281, %v2676
      %v3314 = vsel %vm1522, %v3282, %v2678
      %v3315 = vsel %vm1522, %v3283, %v2680
      %v3316 = vsel %vm1522, %v3284, %v2682
      %v3317 = vsel %vm1522, %v3285, %v2684
      %v3318 = vsel %vm1522, %v3286, %v2686
      %v3319 = vsel %vm1522, %v3287, %v2688
      %v3320 = vsel %vm1522, %v3288, %v2690
      %v3321 = vsel %vm1522, %v3289, %v2692
      %v3322 = vsel %vm1522, %v3290, %v2694
      %v3323 = vsel %vm1522, %v3291, %v2696
      %v3324 = vsel %vm1522, %v3292, %v2698
      %v3325 = vsel %vm1522, %v3293, %v2700
      %v3326 = vsel %vm1522, %v3294, %v2702
      %v3327 = vsel %vm1522, %v3295, %v2704
      %v3328 = vsel %vm1522, %v3296, %v2706
      %v3329 = vsel %vm1522, %v3297, %v2708
      %v3330 = vsel %vm1522, %v3298, %v2710
      %v3331 = vsel %vm1522, %v3299, %v2712
      %v3332 = vsel %vm1522, %v3300, %v2714
      %v3333 = vsel %vm1522, %v3301, %v2716
      %v3334 = vsel %vm1522, %v3302, %v2718
      %v3335 = vsel %vm1522, %v3303, %v2720
      %v3336 = vsel %vm1522, %v3304, %v2722
      %v3337 = vsel %vm1522, %v3305, %v2724
      %v3338 = vsel %vm1522, %v3306, %v2726
      %v3339 = vsel %vm1522, %v3307, %v2728
      %v3340 = vsel %vm1522, %v3308, %v2730
      %v3341 = vsel %vm1522, %v3309, %v2732
      %v3342 = vsel %vm1522, %v3310, %v2734
      %v3343 = vsel %vm1555, %v3311, %v2800
      %v3344 = vsel %vm1555, %v3312, %v2802
      %v3345 = vsel %vm1555, %v3313, %v2804
      %v3346 = vsel %vm1555, %v3314, %v2806
      %v3347 = vsel %vm1555, %v3315, %v2808
      %v3348 = vsel %vm1555, %v3316, %v2810
      %v3349 = vsel %vm1555, %v3317, %v2812
      %v3350 = vsel %vm1555, %v3318, %v2814
      %v3351 = vsel %vm1555, %v3319, %v2816
      %v3352 = vsel %vm1555, %v3320, %v2818
      %v3353 = vsel %vm1555, %v3321, %v2820
      %v3354 = vsel %vm1555, %v3322, %v2822
      %v3355 = vsel %vm1555, %v3323, %v2824
      %v3356 = vsel %vm1555, %v3324, %v2826
      %v3357 = vsel %vm1555, %v3325, %v2828
      %v3358 = vsel %vm1555, %v3326, %v2830
      %v3359 = vsel %vm1555, %v3327, %v2832
      %v3360 = vsel %vm1555, %v3328, %v2834
      %v3361 = vsel %vm1555, %v3329, %v2836
      %v3362 = vsel %vm1555, %v3330, %v2838
      %v3363 = vsel %vm1555, %v3331, %v2840
      %v3364 = vsel %vm1555, %v3332, %v2842
      %v3365 = vsel %vm1555, %v3333, %v2844
      %v3366 = vsel %vm1555, %v3334, %v2846
      %v3367 = vsel %vm1555, %v3335, %v2848
      %v3368 = vsel %vm1555, %v3336, %v2850
      %v3369 = vsel %vm1555, %v3337, %v2852
      %v3370 = vsel %vm1555, %v3338, %v2854
      %v3371 = vsel %vm1555, %v3339, %v2856
      %v3372 = vsel %vm1555, %v3340, %v2858
      %v3373 = vsel %vm1555, %v3341, %v2860
      %v3374 = vsel %vm1555, %v3342, %v2862
      %v3375 = vsel %vm279, %v2351, %v2928
      %v3376 = vsel %vm279, %v2352, %v2930
      %v3377 = vsel %vm279, %v2353, %v2932
      %v3378 = vsel %vm279, %v2354, %v2934
      %v3379 = vsel %vm279, %v2355, %v2936
      %v3380 = vsel %vm279, %v2356, %v2938
      %v3381 = vsel %vm279, %v2357, %v2940
      %v3382 = vsel %vm279, %v2358, %v2942
      %v3383 = vsel %vm279, %v2359, %v2944
      %v3384 = vsel %vm279, %v2360, %v2946
      %v3385 = vsel %vm279, %v2361, %v2948
      %v3386 = vsel %vm279, %v2362, %v2950
      %v3387 = vsel %vm279, %v2363, %v2952
      %v3388 = vsel %vm279, %v2364, %v2954
      %v3389 = vsel %vm279, %v2365, %v2956
      %v3390 = vsel %vm279, %v2366, %v2958
      %v3391 = vsel %vm279, %v2367, %v2960
      %v3392 = vsel %vm279, %v2368, %v2962
      %v3393 = vsel %vm279, %v2369, %v2964
      %v3394 = vsel %vm279, %v2370, %v2966
      %v3395 = vsel %vm279, %v2371, %v2968
      %v3396 = vsel %vm279, %v2372, %v2970
      %v3397 = vsel %vm279, %v2373, %v2972
      %v3398 = vsel %vm279, %v2374, %v2974
      %v3399 = vsel %vm279, %v2375, %v2976
      %v3400 = vsel %vm279, %v2376, %v2978
      %v3401 = vsel %vm279, %v2377, %v2980
      %v3402 = vsel %vm279, %v2378, %v2982
      %v3403 = vsel %vm279, %v2379, %v2984
      %v3404 = vsel %vm279, %v2380, %v2986
      %v3405 = vsel %vm279, %v2381, %v2988
      %v3406 = vsel %vm279, %v2382, %v2990
      %v3407 = vsel %vm1522, %v3375, %v3056
      %v3408 = vsel %vm1522, %v3376, %v3058
      %v3409 = vsel %vm1522, %v3377, %v3060
      %v3410 = vsel %vm1522, %v3378, %v3062
      %v3411 = vsel %vm1522, %v3379, %v3064
      %v3412 = vsel %vm1522, %v3380, %v3066
      %v3413 = vsel %vm1522, %v3381, %v3068
      %v3414 = vsel %vm1522, %v3382, %v3070
      %v3415 = vsel %vm1522, %v3383, %v3072
      %v3416 = vsel %vm1522, %v3384, %v3074
      %v3417 = vsel %vm1522, %v3385, %v3076
      %v3418 = vsel %vm1522, %v3386, %v3078
      %v3419 = vsel %vm1522, %v3387, %v3080
      %v3420 = vsel %vm1522, %v3388, %v3082
      %v3421 = vsel %vm1522, %v3389, %v3084
      %v3422 = vsel %vm1522, %v3390, %v3086
      %v3423 = vsel %vm1522, %v3391, %v3088
      %v3424 = vsel %vm1522, %v3392, %v3090
      %v3425 = vsel %vm1522, %v3393, %v3092
      %v3426 = vsel %vm1522, %v3394, %v3094
      %v3427 = vsel %vm1522, %v3395, %v3096
      %v3428 = vsel %vm1522, %v3396, %v3098
      %v3429 = vsel %vm1522, %v3397, %v3100
      %v3430 = vsel %vm1522, %v3398, %v3102
      %v3431 = vsel %vm1522, %v3399, %v3104
      %v3432 = vsel %vm1522, %v3400, %v3106
      %v3433 = vsel %vm1522, %v3401, %v3108
      %v3434 = vsel %vm1522, %v3402, %v3110
      %v3435 = vsel %vm1522, %v3403, %v3112
      %v3436 = vsel %vm1522, %v3404, %v3114
      %v3437 = vsel %vm1522, %v3405, %v3116
      %v3438 = vsel %vm1522, %v3406, %v3118
      %v3439 = vsel %vm1555, %v3407, %v3184
      %v3440 = vsel %vm1555, %v3408, %v3186
      %v3441 = vsel %vm1555, %v3409, %v3188
      %v3442 = vsel %vm1555, %v3410, %v3190
      %v3443 = vsel %vm1555, %v3411, %v3192
      %v3444 = vsel %vm1555, %v3412, %v3194
      %v3445 = vsel %vm1555, %v3413, %v3196
      %v3446 = vsel %vm1555, %v3414, %v3198
      %v3447 = vsel %vm1555, %v3415, %v3200
      %v3448 = vsel %vm1555, %v3416, %v3202
      %v3449 = vsel %vm1555, %v3417, %v3204
      %v3450 = vsel %vm1555, %v3418, %v3206
      %v3451 = vsel %vm1555, %v3419, %v3208
      %v3452 = vsel %vm1555, %v3420, %v3210
      %v3453 = vsel %vm1555, %v3421, %v3212
      %v3454 = vsel %vm1555, %v3422, %v3214
      %v3455 = vsel %vm1555, %v3423, %v3216
      %v3456 = vsel %vm1555, %v3424, %v3218
      %v3457 = vsel %vm1555, %v3425, %v3220
      %v3458 = vsel %vm1555, %v3426, %v3222
      %v3459 = vsel %vm1555, %v3427, %v3224
      %v3460 = vsel %vm1555, %v3428, %v3226
      %v3461 = vsel %vm1555, %v3429, %v3228
      %v3462 = vsel %vm1555, %v3430, %v3230
      %v3463 = vsel %vm1555, %v3431, %v3232
      %v3464 = vsel %vm1555, %v3432, %v3234
      %v3465 = vsel %vm1555, %v3433, %v3236
      %v3466 = vsel %vm1555, %v3434, %v3238
      %v3467 = vsel %vm1555, %v3435, %v3240
      %v3468 = vsel %vm1555, %v3436, %v3242
      %v3469 = vsel %vm1555, %v3437, %v3244
      %v3470 = vsel %vm1555, %v3438, %v3246
      %v3471 = vld [vmem:[%s3] sm:$0xff]
      %v3472 = vld [vmem:[%s3 + $0x8] sm:$0xff]
      %v3473 = vld [vmem:[%s3 + $0x10] sm:$0xff]
      %v3474 = vld [vmem:[%s3 + $0x18] sm:$0xff]
      %v3475 = vld [vmem:[%s3 + $0x20] sm:$0xff]
      %v3476 = vld [vmem:[%s3 + $0x28] sm:$0xff]
      %v3477 = vld [vmem:[%s3 + $0x30] sm:$0xff]
      %v3478 = vld [vmem:[%s3 + $0x38] sm:$0xff]
      %v3479 = vld [vmem:[%s3 + $0x40] sm:$0xff]
      %v3480 = vld [vmem:[%s3 + $0x48] sm:$0xff]
      %v3481 = vld [vmem:[%s3 + $0x50] sm:$0xff]
      %v3482 = vld [vmem:[%s3 + $0x58] sm:$0xff]
      %v3483 = vld [vmem:[%s3 + $0x60] sm:$0xff]
      %v3484 = vld [vmem:[%s3 + $0x68] sm:$0xff]
      %v3485 = vld [vmem:[%s3 + $0x70] sm:$0xff]
      %v3486 = vld [vmem:[%s3 + $0x78] sm:$0xff]
      %v3487 = vld [vmem:[%s3 + $0x80] sm:$0xff]
      %v3488 = vld [vmem:[%s3 + $0x88] sm:$0xff]
      %v3489 = vld [vmem:[%s3 + $0x90] sm:$0xff]
      %v3490 = vld [vmem:[%s3 + $0x98] sm:$0xff]
      %v3491 = vld [vmem:[%s3 + $0xa0] sm:$0xff]
      %v3492 = vld [vmem:[%s3 + $0xa8] sm:$0xff]
      %v3493 = vld [vmem:[%s3 + $0xb0] sm:$0xff]
      %v3494 = vld [vmem:[%s3 + $0xb8] sm:$0xff]
      %v3495 = vld [vmem:[%s3 + $0xc0] sm:$0xff]
      %v3496 = vld [vmem:[%s3 + $0xc8] sm:$0xff]
      %v3497 = vld [vmem:[%s3 + $0xd0] sm:$0xff]
      %v3498 = vld [vmem:[%s3 + $0xd8] sm:$0xff]
      %v3499 = vld [vmem:[%s3 + $0xe0] sm:$0xff]
      %v3500 = vld [vmem:[%s3 + $0xe8] sm:$0xff]
      %v3501 = vld [vmem:[%s3 + $0xf0] sm:$0xff]
      %v3502 = vld [vmem:[%s3 + $0xf8] sm:$0xff]
      %v3503 = vld [vmem:[%s3 + $0x100] sm:$0xff]
      %v3504 = vld [vmem:[%s3 + $0x108] sm:$0xff]
      %v3505 = vld [vmem:[%s3 + $0x110] sm:$0xff]
      %v3506 = vld [vmem:[%s3 + $0x118] sm:$0xff]
      %v3507 = vld [vmem:[%s4] sm:$0x1]
      %v3509 = vperm.slane %v3507, 0
      %v3512 = vsel %vm279, %v2479, 0
      %v3515 = vsel %vm279, %v2480, 0
      %v3518 = vsel %vm279, %v2481, 0
      %v3521 = vsel %vm279, %v2482, 0
      %v3524 = vsel %vm279, %v2483, 0
      %v3527 = vsel %vm279, %v2484, 0
      %v3530 = vsel %vm279, %v2485, 0
      %v3533 = vsel %vm279, %v2486, 0
      %v3536 = vsel %vm279, %v2487, 0
      %v3539 = vsel %vm279, %v2488, 0
      %v3542 = vsel %vm279, %v2489, 0
      %v3545 = vsel %vm279, %v2490, 0
      %v3548 = vsel %vm279, %v2491, 0
      %v3551 = vsel %vm279, %v2492, 0
      %v3554 = vsel %vm279, %v2493, 0
      %v3557 = vsel %vm279, %v2494, 0
      %v3560 = vsel %vm279, %v2495, 0
      %v3563 = vsel %vm279, %v2496, 0
      %v3566 = vsel %vm279, %v2497, 0
      %v3569 = vsel %vm279, %v2498, 0
      %v3572 = vsel %vm279, %v2499, 0
      %v3575 = vsel %vm279, %v2500, 0
      %v3578 = vsel %vm279, %v2501, 0
      %v3581 = vsel %vm279, %v2502, 0
      %v3584 = vsel %vm279, %v2503, 0
      %v3587 = vsel %vm279, %v2504, 0
      %v3590 = vsel %vm279, %v2505, 0
      %v3593 = vsel %vm279, %v2506, 0
      %v3596 = vsel %vm279, %v2507, 0
      %v3599 = vsel %vm279, %v2508, 0
      %v3602 = vsel %vm279, %v2509, 0
      %v3605 = vsel %vm279, %v2510, 0
      %3607 = vmatpush.msra.mxu0 %v3486
      %3608 = vmatpush.msra.mxu0 %v3485
      %3609 = vmatpush.msra.mxu0 %v3484
      %3610 = vmatpush.msra.mxu0 %v3483
      %3611 = vmatpush.msra.mxu0 %v3482
      %3612 = vmatpush.msra.mxu0 %v3481
      %3613 = vmatpush.msra.mxu0 %v3480
      %3614 = vmatpush.msra.mxu0 %v3479
      %3615 = vmatpush.msra.mxu0 %v3478
      %3616 = vmatpush.msra.mxu0 %v3477
      %3617 = vmatpush.msra.mxu0 %v3476
      %3618 = vmatpush.msra.mxu0 %v3475
      %3619 = vmatpush.msra.mxu0 %v3474
      %3620 = vmatpush.msra.mxu0 %v3473
      %3621 = vmatpush.msra.mxu0 %v3472
      %3622 = vmatpush.msra.mxu0 %v3471
      %3623 = vmatmul.f32.gmra.mxu0 %v3343
      %v3624 = vpop.f32.mrf.mxu0
      %v3625 = vadd.f32 %v3509, %v3624
      %3626 = vmatmul.f32.gmra.mxu0 %v3344
      %v3627 = vpop.f32.mrf.mxu0
      %v3628 = vadd.f32 %v3509, %v3627
      %3629 = vmatmul.f32.gmra.mxu0 %v3345
      %v3630 = vpop.f32.mrf.mxu0
      %v3631 = vadd.f32 %v3509, %v3630
      %3632 = vmatmul.f32.gmra.mxu0 %v3346
      %v3633 = vpop.f32.mrf.mxu0
      %v3634 = vadd.f32 %v3509, %v3633
      %3635 = vmatmul.f32.gmra.mxu0 %v3347
      %v3636 = vpop.f32.mrf.mxu0
      %v3637 = vadd.f32 %v3509, %v3636
      %3638 = vmatmul.f32.gmra.mxu0 %v3348
      %v3639 = vpop.f32.mrf.mxu0
      %v3640 = vadd.f32 %v3509, %v3639
      %3641 = vmatmul.f32.gmra.mxu0 %v3349
      %v3642 = vpop.f32.mrf.mxu0
      %v3643 = vadd.f32 %v3509, %v3642
      %3644 = vmatmul.f32.gmra.mxu0 %v3350
      %v3645 = vpop.f32.mrf.mxu0
      %v3646 = vadd.f32 %v3509, %v3645
      %3647 = vmatmul.f32.gmra.mxu0 %v3351
      %v3648 = vpop.f32.mrf.mxu0
      %v3649 = vadd.f32 %v3509, %v3648
      %3650 = vmatmul.f32.gmra.mxu0 %v3352
      %v3651 = vpop.f32.mrf.mxu0
      %v3652 = vadd.f32 %v3509, %v3651
      %3653 = vmatmul.f32.gmra.mxu0 %v3353
      %v3654 = vpop.f32.mrf.mxu0
      %v3655 = vadd.f32 %v3509, %v3654
      %3656 = vmatmul.f32.gmra.mxu0 %v3354
      %v3657 = vpop.f32.mrf.mxu0
      %v3658 = vadd.f32 %v3509, %v3657
      %3659 = vmatmul.f32.gmra.mxu0 %v3355
      %v3660 = vpop.f32.mrf.mxu0
      %v3661 = vadd.f32 %v3509, %v3660
      %3662 = vmatmul.f32.gmra.mxu0 %v3356
      %v3663 = vpop.f32.mrf.mxu0
      %v3664 = vadd.f32 %v3509, %v3663
      %3665 = vmatmul.f32.gmra.mxu0 %v3357
      %v3666 = vpop.f32.mrf.mxu0
      %v3667 = vadd.f32 %v3509, %v3666
      %3668 = vmatmul.f32.gmra.mxu0 %v3358
      %v3669 = vpop.f32.mrf.mxu0
      %v3670 = vadd.f32 %v3509, %v3669
      %3671 = vmatmul.f32.gmra.mxu0 %v3359
      %v3672 = vpop.f32.mrf.mxu0
      %v3673 = vadd.f32 %v3509, %v3672
      %3674 = vmatmul.f32.gmra.mxu0 %v3360
      %v3675 = vpop.f32.mrf.mxu0
      %v3676 = vadd.f32 %v3509, %v3675
      %3677 = vmatmul.f32.gmra.mxu0 %v3361
      %v3678 = vpop.f32.mrf.mxu0
      %v3679 = vadd.f32 %v3509, %v3678
      %3680 = vmatmul.f32.gmra.mxu0 %v3362
      %v3681 = vpop.f32.mrf.mxu0
      %v3682 = vadd.f32 %v3509, %v3681
      %3683 = vmatmul.f32.gmra.mxu0 %v3363
      %v3684 = vpop.f32.mrf.mxu0
      %v3685 = vadd.f32 %v3509, %v3684
      %3686 = vmatmul.f32.gmra.mxu0 %v3364
      %v3687 = vpop.f32.mrf.mxu0
      %v3688 = vadd.f32 %v3509, %v3687
      %3689 = vmatmul.f32.gmra.mxu0 %v3365
      %v3690 = vpop.f32.mrf.mxu0
      %v3691 = vadd.f32 %v3509, %v3690
      %3692 = vmatmul.f32.gmra.mxu0 %v3366
      %v3693 = vpop.f32.mrf.mxu0
      %v3694 = vadd.f32 %v3509, %v3693
      %3695 = vmatmul.f32.gmra.mxu0 %v3367
      %v3696 = vpop.f32.mrf.mxu0
      %v3697 = vadd.f32 %v3509, %v3696
      %3698 = vmatmul.f32.gmra.mxu0 %v3368
      %v3699 = vpop.f32.mrf.mxu0
      %v3700 = vadd.f32 %v3509, %v3699
      %3701 = vmatmul.f32.gmra.mxu0 %v3369
      %v3702 = vpop.f32.mrf.mxu0
      %v3703 = vadd.f32 %v3509, %v3702
      %3704 = vmatmul.f32.gmra.mxu0 %v3370
      %v3705 = vpop.f32.mrf.mxu0
      %v3706 = vadd.f32 %v3509, %v3705
      %3707 = vmatmul.f32.gmra.mxu0 %v3371
      %v3708 = vpop.f32.mrf.mxu0
      %v3709 = vadd.f32 %v3509, %v3708
      %3710 = vmatmul.f32.gmra.mxu0 %v3372
      %v3711 = vpop.f32.mrf.mxu0
      %v3712 = vadd.f32 %v3509, %v3711
      %3713 = vmatmul.f32.gmra.mxu0 %v3373
      %v3714 = vpop.f32.mrf.mxu0
      %v3715 = vadd.f32 %v3509, %v3714
      %3716 = vmatmul.f32.gmra.mxu0 %v3374
      %v3717 = vpop.f32.mrf.mxu0
      %v3718 = vadd.f32 %v3509, %v3717
      %3719 = vdwg.mxu0
      %3720 = vmatpush.msra.mxu0 %v3502
      %3721 = vmatpush.msra.mxu0 %v3501
      %3722 = vmatpush.msra.mxu0 %v3500
      %3723 = vmatpush.msra.mxu0 %v3499
      %3724 = vmatpush.msra.mxu0 %v3498
      %3725 = vmatpush.msra.mxu0 %v3497
      %3726 = vmatpush.msra.mxu0 %v3496
      %3727 = vmatpush.msra.mxu0 %v3495
      %3728 = vmatpush.msra.mxu0 %v3494
      %3729 = vmatpush.msra.mxu0 %v3493
      %3730 = vmatpush.msra.mxu0 %v3492
      %3731 = vmatpush.msra.mxu0 %v3491
      %3732 = vmatpush.msra.mxu0 %v3490
      %3733 = vmatpush.msra.mxu0 %v3489
      %3734 = vmatpush.msra.mxu0 %v3488
      %3735 = vmatpush.msra.mxu0 %v3487
      %3736 = vmatmul.f32.gmra.mxu0 %v3439
      %v3737 = vpop.f32.mrf.mxu0
      %v3738 = vadd.f32 %v3625, %v3737
      %3739 = vmatmul.f32.gmra.mxu0 %v3440
      %v3740 = vpop.f32.mrf.mxu0
      %v3741 = vadd.f32 %v3628, %v3740
      %3742 = vmatmul.f32.gmra.mxu0 %v3441
      %v3743 = vpop.f32.mrf.mxu0
      %v3744 = vadd.f32 %v3631, %v3743
      %3745 = vmatmul.f32.gmra.mxu0 %v3442
      %v3746 = vpop.f32.mrf.mxu0
      %v3747 = vadd.f32 %v3634, %v3746
      %3748 = vmatmul.f32.gmra.mxu0 %v3443
      %v3749 = vpop.f32.mrf.mxu0
      %v3750 = vadd.f32 %v3637, %v3749
      %3751 = vmatmul.f32.gmra.mxu0 %v3444
      %v3752 = vpop.f32.mrf.mxu0
      %v3753 = vadd.f32 %v3640, %v3752
      %3754 = vmatmul.f32.gmra.mxu0 %v3445
      %v3755 = vpop.f32.mrf.mxu0
      %v3756 = vadd.f32 %v3643, %v3755
      %3757 = vmatmul.f32.gmra.mxu0 %v3446
      %v3758 = vpop.f32.mrf.mxu0
      %v3759 = vadd.f32 %v3646, %v3758
      %3760 = vmatmul.f32.gmra.mxu0 %v3447
      %v3761 = vpop.f32.mrf.mxu0
      %v3762 = vadd.f32 %v3649, %v3761
      %3763 = vmatmul.f32.gmra.mxu0 %v3448
      %v3764 = vpop.f32.mrf.mxu0
      %v3765 = vadd.f32 %v3652, %v3764
      %3766 = vmatmul.f32.gmra.mxu0 %v3449
      %v3767 = vpop.f32.mrf.mxu0
      %v3768 = vadd.f32 %v3655, %v3767
      %3769 = vmatmul.f32.gmra.mxu0 %v3450
      %v3770 = vpop.f32.mrf.mxu0
      %v3771 = vadd.f32 %v3658, %v3770
      %3772 = vmatmul.f32.gmra.mxu0 %v3451
      %v3773 = vpop.f32.mrf.mxu0
      %v3774 = vadd.f32 %v3661, %v3773
      %3775 = vmatmul.f32.gmra.mxu0 %v3452
      %v3776 = vpop.f32.mrf.mxu0
      %v3777 = vadd.f32 %v3664, %v3776
      %3778 = vmatmul.f32.gmra.mxu0 %v3453
      %v3779 = vpop.f32.mrf.mxu0
      %v3780 = vadd.f32 %v3667, %v3779
      %3781 = vmatmul.f32.gmra.mxu0 %v3454
      %v3782 = vpop.f32.mrf.mxu0
      %v3783 = vadd.f32 %v3670, %v3782
      %3784 = vmatmul.f32.gmra.mxu0 %v3455
      %v3785 = vpop.f32.mrf.mxu0
      %v3786 = vadd.f32 %v3673, %v3785
      %3787 = vmatmul.f32.gmra.mxu0 %v3456
      %v3788 = vpop.f32.mrf.mxu0
      %v3789 = vadd.f32 %v3676, %v3788
      %3790 = vmatmul.f32.gmra.mxu0 %v3457
      %v3791 = vpop.f32.mrf.mxu0
      %v3792 = vadd.f32 %v3679, %v3791
      %3793 = vmatmul.f32.gmra.mxu0 %v3458
      %v3794 = vpop.f32.mrf.mxu0
      %v3795 = vadd.f32 %v3682, %v3794
      %3796 = vmatmul.f32.gmra.mxu0 %v3459
      %v3797 = vpop.f32.mrf.mxu0
      %v3798 = vadd.f32 %v3685, %v3797
      %3799 = vmatmul.f32.gmra.mxu0 %v3460
      %v3800 = vpop.f32.mrf.mxu0
      %v3801 = vadd.f32 %v3688, %v3800
      %3802 = vmatmul.f32.gmra.mxu0 %v3461
      %v3803 = vpop.f32.mrf.mxu0
      %v3804 = vadd.f32 %v3691, %v3803
      %3805 = vmatmul.f32.gmra.mxu0 %v3462
      %v3806 = vpop.f32.mrf.mxu0
      %v3807 = vadd.f32 %v3694, %v3806
      %3808 = vmatmul.f32.gmra.mxu0 %v3463
      %v3809 = vpop.f32.mrf.mxu0
      %v3810 = vadd.f32 %v3697, %v3809
      %3811 = vmatmul.f32.gmra.mxu0 %v3464
      %v3812 = vpop.f32.mrf.mxu0
      %v3813 = vadd.f32 %v3700, %v3812
      %3814 = vmatmul.f32.gmra.mxu0 %v3465
      %v3815 = vpop.f32.mrf.mxu0
      %v3816 = vadd.f32 %v3703, %v3815
      %3817 = vmatmul.f32.gmra.mxu0 %v3466
      %v3818 = vpop.f32.mrf.mxu0
      %v3819 = vadd.f32 %v3706, %v3818
      %3820 = vmatmul.f32.gmra.mxu0 %v3467
      %v3821 = vpop.f32.mrf.mxu0
      %v3822 = vadd.f32 %v3709, %v3821
      %3823 = vmatmul.f32.gmra.mxu0 %v3468
      %v3824 = vpop.f32.mrf.mxu0
      %v3825 = vadd.f32 %v3712, %v3824
      %3826 = vmatmul.f32.gmra.mxu0 %v3469
      %v3827 = vpop.f32.mrf.mxu0
      %v3828 = vadd.f32 %v3715, %v3827
      %3829 = vmatmul.f32.gmra.mxu0 %v3470
      %v3830 = vpop.f32.mrf.mxu0
      %v3831 = vadd.f32 %v3718, %v3830
      %3832 = vdwg.mxu0
      %3833 = vmatpush.msra.mxu0 0.0
      %3834 = vmatpush.msra.mxu0 0.0
      %3835 = vmatpush.msra.mxu0 0.0
      %3836 = vmatpush.msra.mxu0 0.0
      %3837 = vmatpush.msra.mxu0 0.0
      %3838 = vmatpush.msra.mxu0 0.0
      %3839 = vmatpush.msra.mxu0 0.0
      %3840 = vmatpush.msra.mxu0 0.0
      %3841 = vmatpush.msra.mxu0 0.0
      %3842 = vmatpush.msra.mxu0 0.0
      %3843 = vmatpush.msra.mxu0 0.0
      %3844 = vmatpush.msra.mxu0 0.0
      %3845 = vmatpush.msra.mxu0 %v3506
      %3846 = vmatpush.msra.mxu0 %v3505
      %3847 = vmatpush.msra.mxu0 %v3504
      %3848 = vmatpush.msra.mxu0 %v3503
      %3849 = vmatmul.f32.gmra.mxu0 %v3512
      %v3850 = vpop.f32.mrf.mxu0
      %v3851 = vadd.f32 %v3738, %v3850
      %3852 = vmatmul.f32.gmra.mxu0 %v3515
      %v3853 = vpop.f32.mrf.mxu0
      %v3854 = vadd.f32 %v3741, %v3853
      %3855 = vmatmul.f32.gmra.mxu0 %v3518
      %v3856 = vpop.f32.mrf.mxu0
      %v3857 = vadd.f32 %v3744, %v3856
      %3858 = vmatmul.f32.gmra.mxu0 %v3521
      %v3859 = vpop.f32.mrf.mxu0
      %v3860 = vadd.f32 %v3747, %v3859
      %3861 = vmatmul.f32.gmra.mxu0 %v3524
      %v3862 = vpop.f32.mrf.mxu0
      %v3863 = vadd.f32 %v3750, %v3862
      %3864 = vmatmul.f32.gmra.mxu0 %v3527
      %v3865 = vpop.f32.mrf.mxu0
      %v3866 = vadd.f32 %v3753, %v3865
      %3867 = vmatmul.f32.gmra.mxu0 %v3530
      %v3868 = vpop.f32.mrf.mxu0
      %v3869 = vadd.f32 %v3756, %v3868
      %3870 = vmatmul.f32.gmra.mxu0 %v3533
      %v3871 = vpop.f32.mrf.mxu0
      %v3872 = vadd.f32 %v3759, %v3871
      %3873 = vmatmul.f32.gmra.mxu0 %v3536
      %v3874 = vpop.f32.mrf.mxu0
      %v3875 = vadd.f32 %v3762, %v3874
      %3876 = vmatmul.f32.gmra.mxu0 %v3539
      %v3877 = vpop.f32.mrf.mxu0
      %v3878 = vadd.f32 %v3765, %v3877
      %3879 = vmatmul.f32.gmra.mxu0 %v3542
      %v3880 = vpop.f32.mrf.mxu0
      %v3881 = vadd.f32 %v3768, %v3880
      %3882 = vmatmul.f32.gmra.mxu0 %v3545
      %v3883 = vpop.f32.mrf.mxu0
      %v3884 = vadd.f32 %v3771, %v3883
      %3885 = vmatmul.f32.gmra.mxu0 %v3548
      %v3886 = vpop.f32.mrf.mxu0
      %v3887 = vadd.f32 %v3774, %v3886
      %3888 = vmatmul.f32.gmra.mxu0 %v3551
      %v3889 = vpop.f32.mrf.mxu0
      %v3890 = vadd.f32 %v3777, %v3889
      %3891 = vmatmul.f32.gmra.mxu0 %v3554
      %v3892 = vpop.f32.mrf.mxu0
      %v3893 = vadd.f32 %v3780, %v3892
      %3894 = vmatmul.f32.gmra.mxu0 %v3557
      %v3895 = vpop.f32.mrf.mxu0
      %v3896 = vadd.f32 %v3783, %v3895
      %3897 = vmatmul.f32.gmra.mxu0 %v3560
      %v3898 = vpop.f32.mrf.mxu0
      %v3899 = vadd.f32 %v3786, %v3898
      %3900 = vmatmul.f32.gmra.mxu0 %v3563
      %v3901 = vpop.f32.mrf.mxu0
      %v3902 = vadd.f32 %v3789, %v3901
      %3903 = vmatmul.f32.gmra.mxu0 %v3566
      %v3904 = vpop.f32.mrf.mxu0
      %v3905 = vadd.f32 %v3792, %v3904
      %3906 = vmatmul.f32.gmra.mxu0 %v3569
      %v3907 = vpop.f32.mrf.mxu0
      %v3908 = vadd.f32 %v3795, %v3907
      %3909 = vmatmul.f32.gmra.mxu0 %v3572
      %v3910 = vpop.f32.mrf.mxu0
      %v3911 = vadd.f32 %v3798, %v3910
      %3912 = vmatmul.f32.gmra.mxu0 %v3575
      %v3913 = vpop.f32.mrf.mxu0
      %v3914 = vadd.f32 %v3801, %v3913
      %3915 = vmatmul.f32.gmra.mxu0 %v3578
      %v3916 = vpop.f32.mrf.mxu0
      %v3917 = vadd.f32 %v3804, %v3916
      %3918 = vmatmul.f32.gmra.mxu0 %v3581
      %v3919 = vpop.f32.mrf.mxu0
      %v3920 = vadd.f32 %v3807, %v3919
      %3921 = vmatmul.f32.gmra.mxu0 %v3584
      %v3922 = vpop.f32.mrf.mxu0
      %v3923 = vadd.f32 %v3810, %v3922
      %3924 = vmatmul.f32.gmra.mxu0 %v3587
      %v3925 = vpop.f32.mrf.mxu0
      %v3926 = vadd.f32 %v3813, %v3925
      %3927 = vmatmul.f32.gmra.mxu0 %v3590
      %v3928 = vpop.f32.mrf.mxu0
      %v3929 = vadd.f32 %v3816, %v3928
      %3930 = vmatmul.f32.gmra.mxu0 %v3593
      %v3931 = vpop.f32.mrf.mxu0
      %v3932 = vadd.f32 %v3819, %v3931
      %3933 = vmatmul.f32.gmra.mxu0 %v3596
      %v3934 = vpop.f32.mrf.mxu0
      %v3935 = vadd.f32 %v3822, %v3934
      %3936 = vmatmul.f32.gmra.mxu0 %v3599
      %v3937 = vpop.f32.mrf.mxu0
      %v3938 = vadd.f32 %v3825, %v3937
      %3939 = vmatmul.f32.gmra.mxu0 %v3602
      %v3940 = vpop.f32.mrf.mxu0
      %v3941 = vadd.f32 %v3828, %v3940
      %3942 = vmatmul.f32.gmra.mxu0 %v3605
      %v3943 = vpop.f32.mrf.mxu0
      %v3944 = vadd.f32 %v3831, %v3943
      %3945 = vdwg.mxu0
      %v3946 = vmax.f32 %v3851, 0.0
      %v3947 = vmax.f32 %v3854, 0.0
      %v3948 = vmax.f32 %v3857, 0.0
      %v3949 = vmax.f32 %v3860, 0.0
      %v3950 = vmax.f32 %v3863, 0.0
      %v3951 = vmax.f32 %v3866, 0.0
      %v3952 = vmax.f32 %v3869, 0.0
      %v3953 = vmax.f32 %v3872, 0.0
      %v3954 = vmax.f32 %v3875, 0.0
      %v3955 = vmax.f32 %v3878, 0.0
      %v3956 = vmax.f32 %v3881, 0.0
      %v3957 = vmax.f32 %v3884, 0.0
      %v3958 = vmax.f32 %v3887, 0.0
      %v3959 = vmax.f32 %v3890, 0.0
      %v3960 = vmax.f32 %v3893, 0.0
      %v3961 = vmax.f32 %v3896, 0.0
      %v3962 = vmax.f32 %v3899, 0.0
      %v3963 = vmax.f32 %v3902, 0.0
      %v3964 = vmax.f32 %v3905, 0.0
      %v3965 = vmax.f32 %v3908, 0.0
      %v3966 = vmax.f32 %v3911, 0.0
      %v3967 = vmax.f32 %v3914, 0.0
      %v3968 = vmax.f32 %v3917, 0.0
      %v3969 = vmax.f32 %v3920, 0.0
      %v3970 = vmax.f32 %v3923, 0.0
      %v3971 = vmax.f32 %v3926, 0.0
      %v3972 = vmax.f32 %v3929, 0.0
      %v3973 = vmax.f32 %v3932, 0.0
      %v3974 = vmax.f32 %v3935, 0.0
      %v3975 = vmax.f32 %v3938, 0.0
      %v3976 = vmax.f32 %v3941, 0.0
      %v3977 = vmax.f32 %v3944, 0.0
      %3978 = vst.msk [vmem:[%s400 + $0x1] sm:$0xff] %vm279, %v3946
      %3979 = vst.msk [vmem:[%s400 + $0x9] sm:$0xff] %vm279, %v3947
      %3980 = vst.msk [vmem:[%s400 + $0x19] sm:$0xff] %vm279, %v3948
      %3981 = vst.msk [vmem:[%s400 + $0x21] sm:$0xff] %vm279, %v3949
      %3982 = vst.msk [vmem:[%s400 + $0x31] sm:$0xff] %vm279, %v3950
      %3983 = vst.msk [vmem:[%s400 + $0x39] sm:$0xff] %vm279, %v3951
      %3984 = vst.msk [vmem:[%s400 + $0x49] sm:$0xff] %vm279, %v3952
      %3985 = vst.msk [vmem:[%s400 + $0x51] sm:$0xff] %vm279, %v3953
      %3986 = vst.msk [vmem:[%s400 + $0x61] sm:$0xff] %vm279, %v3954
      %3987 = vst.msk [vmem:[%s400 + $0x69] sm:$0xff] %vm279, %v3955
      %3988 = vst.msk [vmem:[%s400 + $0x79] sm:$0xff] %vm279, %v3956
      %3989 = vst.msk [vmem:[%s400 + $0x81] sm:$0xff] %vm279, %v3957
      %3990 = vst.msk [vmem:[%s400 + $0x91] sm:$0xff] %vm279, %v3958
      %3991 = vst.msk [vmem:[%s400 + $0x99] sm:$0xff] %vm279, %v3959
      %3992 = vst.msk [vmem:[%s400 + $0xa9] sm:$0xff] %vm279, %v3960
      %3993 = vst.msk [vmem:[%s400 + $0xb1] sm:$0xff] %vm279, %v3961
      %3994 = vst.msk [vmem:[%s400 + $0xc1] sm:$0xff] %vm279, %v3962
      %3995 = vst.msk [vmem:[%s400 + $0xc9] sm:$0xff] %vm279, %v3963
      %3996 = vst.msk [vmem:[%s400 + $0xd9] sm:$0xff] %vm279, %v3964
      %3997 = vst.msk [vmem:[%s400 + $0xe1] sm:$0xff] %vm279, %v3965
      %3998 = vst.msk [vmem:[%s400 + $0xf1] sm:$0xff] %vm279, %v3966
      %3999 = vst.msk [vmem:[%s400 + $0xf9] sm:$0xff] %vm279, %v3967
      %4000 = vst.msk [vmem:[%s400 + $0x109] sm:$0xff] %vm279, %v3968
      %4001 = vst.msk [vmem:[%s400 + $0x111] sm:$0xff] %vm279, %v3969
      %4002 = vst.msk [vmem:[%s400 + $0x121] sm:$0xff] %vm279, %v3970
      %4003 = vst.msk [vmem:[%s400 + $0x129] sm:$0xff] %vm279, %v3971
      %4004 = vst.msk [vmem:[%s400 + $0x139] sm:$0xff] %vm279, %v3972
      %4005 = vst.msk [vmem:[%s400 + $0x141] sm:$0xff] %vm279, %v3973
      %4006 = vst.msk [vmem:[%s400 + $0x151] sm:$0xff] %vm279, %v3974
      %4007 = vst.msk [vmem:[%s400 + $0x159] sm:$0xff] %vm279, %v3975
      %4008 = vst.msk [vmem:[%s400 + $0x169] sm:$0xff] %vm279, %v3976
      %4009 = vst.msk [vmem:[%s400 + $0x171] sm:$0xff] %vm279, %v3977
      %v4010 = vld [vmem:[#allocation2] sm:$0xff]
      %v4011 = vld [vmem:[#allocation2 + $0x8] sm:$0xff]
      %v4012 = vld [vmem:[#allocation2 + $0x18] sm:$0xff]
      %v4013 = vld [vmem:[#allocation2 + $0x20] sm:$0xff]
      %v4014 = vld [vmem:[#allocation2 + $0x30] sm:$0xff]
      %v4015 = vld [vmem:[#allocation2 + $0x38] sm:$0xff]
      %v4016 = vld [vmem:[#allocation2 + $0x48] sm:$0xff]
      %v4017 = vld [vmem:[#allocation2 + $0x50] sm:$0xff]
      %v4018 = vld [vmem:[#allocation2 + $0x60] sm:$0xff]
      %v4019 = vld [vmem:[#allocation2 + $0x68] sm:$0xff]
      %v4020 = vld [vmem:[#allocation2 + $0x78] sm:$0xff]
      %v4021 = vld [vmem:[#allocation2 + $0x80] sm:$0xff]
      %v4022 = vld [vmem:[#allocation2 + $0x90] sm:$0xff]
      %v4023 = vld [vmem:[#allocation2 + $0x98] sm:$0xff]
      %v4024 = vld [vmem:[#allocation2 + $0xa8] sm:$0xff]
      %v4025 = vld [vmem:[#allocation2 + $0xb0] sm:$0xff]
      %v4026 = vld [vmem:[#allocation2 + $0xc0] sm:$0xff]
      %v4027 = vld [vmem:[#allocation2 + $0xc8] sm:$0xff]
      %v4028 = vld [vmem:[#allocation2 + $0xd8] sm:$0xff]
      %v4029 = vld [vmem:[#allocation2 + $0xe0] sm:$0xff]
      %v4030 = vld [vmem:[#allocation2 + $0xf0] sm:$0xff]
      %v4031 = vld [vmem:[#allocation2 + $0xf8] sm:$0xff]
      %v4032 = vld [vmem:[#allocation2 + $0x108] sm:$0xff]
      %v4033 = vld [vmem:[#allocation2 + $0x110] sm:$0xff]
      %v4034 = vld [vmem:[#allocation2 + $0x120] sm:$0xff]
      %v4035 = vld [vmem:[#allocation2 + $0x128] sm:$0xff]
      %v4036 = vld [vmem:[#allocation2 + $0x138] sm:$0xff]
      %v4037 = vld [vmem:[#allocation2 + $0x140] sm:$0xff]
      %v4038 = vld [vmem:[#allocation2 + $0x150] sm:$0xff]
      %v4039 = vld [vmem:[#allocation2 + $0x158] sm:$0xff]
      %v4040 = vld [vmem:[#allocation2 + $0x168] sm:$0xff]
      %v4041 = vld [vmem:[#allocation2 + $0x170] sm:$0xff]
      %v4042 = vld [vmem:[#allocation2 + $0x1] sm:$0xff]
      %v4043 = vld [vmem:[#allocation2 + $0x9] sm:$0xff]
      %v4044 = vld [vmem:[#allocation2 + $0x19] sm:$0xff]
      %v4045 = vld [vmem:[#allocation2 + $0x21] sm:$0xff]
      %v4046 = vld [vmem:[#allocation2 + $0x31] sm:$0xff]
      %v4047 = vld [vmem:[#allocation2 + $0x39] sm:$0xff]
      %v4048 = vld [vmem:[#allocation2 + $0x49] sm:$0xff]
      %v4049 = vld [vmem:[#allocation2 + $0x51] sm:$0xff]
      %v4050 = vld [vmem:[#allocation2 + $0x61] sm:$0xff]
      %v4051 = vld [vmem:[#allocation2 + $0x69] sm:$0xff]
      %v4052 = vld [vmem:[#allocation2 + $0x79] sm:$0xff]
      %v4053 = vld [vmem:[#allocation2 + $0x81] sm:$0xff]
      %v4054 = vld [vmem:[#allocation2 + $0x91] sm:$0xff]
      %v4055 = vld [vmem:[#allocation2 + $0x99] sm:$0xff]
      %v4056 = vld [vmem:[#allocation2 + $0xa9] sm:$0xff]
      %v4057 = vld [vmem:[#allocation2 + $0xb1] sm:$0xff]
      %v4058 = vld [vmem:[#allocation2 + $0xc1] sm:$0xff]
      %v4059 = vld [vmem:[#allocation2 + $0xc9] sm:$0xff]
      %v4060 = vld [vmem:[#allocation2 + $0xd9] sm:$0xff]
      %v4061 = vld [vmem:[#allocation2 + $0xe1] sm:$0xff]
      %v4062 = vld [vmem:[#allocation2 + $0xf1] sm:$0xff]
      %v4063 = vld [vmem:[#allocation2 + $0xf9] sm:$0xff]
      %v4064 = vld [vmem:[#allocation2 + $0x109] sm:$0xff]
      %v4065 = vld [vmem:[#allocation2 + $0x111] sm:$0xff]
      %v4066 = vld [vmem:[#allocation2 + $0x121] sm:$0xff]
      %v4067 = vld [vmem:[#allocation2 + $0x129] sm:$0xff]
      %v4068 = vld [vmem:[#allocation2 + $0x139] sm:$0xff]
      %v4069 = vld [vmem:[#allocation2 + $0x141] sm:$0xff]
      %v4070 = vld [vmem:[#allocation2 + $0x151] sm:$0xff]
      %v4071 = vld [vmem:[#allocation2 + $0x159] sm:$0xff]
      %v4072 = vld [vmem:[#allocation2 + $0x169] sm:$0xff]
      %v4073 = vld [vmem:[#allocation2 + $0x171] sm:$0xff]
      %v4074 = vld [vmem:[#allocation2 + $0x2] sm:$0xff]
      %v4075 = vld [vmem:[#allocation2 + $0xa] sm:$0xff]
      %v4076 = vld [vmem:[#allocation2 + $0x1a] sm:$0xff]
      %v4077 = vld [vmem:[#allocation2 + $0x22] sm:$0xff]
      %v4078 = vld [vmem:[#allocation2 + $0x32] sm:$0xff]
      %v4079 = vld [vmem:[#allocation2 + $0x3a] sm:$0xff]
      %v4080 = vld [vmem:[#allocation2 + $0x4a] sm:$0xff]
      %v4081 = vld [vmem:[#allocation2 + $0x52] sm:$0xff]
      %v4082 = vld [vmem:[#allocation2 + $0x62] sm:$0xff]
      %v4083 = vld [vmem:[#allocation2 + $0x6a] sm:$0xff]
      %v4084 = vld [vmem:[#allocation2 + $0x7a] sm:$0xff]
      %v4085 = vld [vmem:[#allocation2 + $0x82] sm:$0xff]
      %v4086 = vld [vmem:[#allocation2 + $0x92] sm:$0xff]
      %v4087 = vld [vmem:[#allocation2 + $0x9a] sm:$0xff]
      %v4088 = vld [vmem:[#allocation2 + $0xaa] sm:$0xff]
      %v4089 = vld [vmem:[#allocation2 + $0xb2] sm:$0xff]
      %v4090 = vld [vmem:[#allocation2 + $0xc2] sm:$0xff]
      %v4091 = vld [vmem:[#allocation2 + $0xca] sm:$0xff]
      %v4092 = vld [vmem:[#allocation2 + $0xda] sm:$0xff]
      %v4093 = vld [vmem:[#allocation2 + $0xe2] sm:$0xff]
      %v4094 = vld [vmem:[#allocation2 + $0xf2] sm:$0xff]
      %v4095 = vld [vmem:[#allocation2 + $0xfa] sm:$0xff]
      %v4096 = vld [vmem:[#allocation2 + $0x10a] sm:$0xff]
      %v4097 = vld [vmem:[#allocation2 + $0x112] sm:$0xff]
      %v4098 = vld [vmem:[#allocation2 + $0x122] sm:$0xff]
      %v4099 = vld [vmem:[#allocation2 + $0x12a] sm:$0xff]
      %v4100 = vld [vmem:[#allocation2 + $0x13a] sm:$0xff]
      %v4101 = vld [vmem:[#allocation2 + $0x142] sm:$0xff]
      %v4102 = vld [vmem:[#allocation2 + $0x152] sm:$0xff]
      %v4103 = vld [vmem:[#allocation2 + $0x15a] sm:$0xff]
      %v4104 = vld [vmem:[#allocation2 + $0x16a] sm:$0xff]
      %v4105 = vld [vmem:[#allocation2 + $0x172] sm:$0xff]
      %v4106 = vld [vmem:[%s400] sm:$0xff]
      %v4107 = vld [vmem:[%s400 + $0x8] sm:$0xff]
      %v4108 = vld [vmem:[%s400 + $0x18] sm:$0xff]
      %v4109 = vld [vmem:[%s400 + $0x20] sm:$0xff]
      %v4110 = vld [vmem:[%s400 + $0x30] sm:$0xff]
      %v4111 = vld [vmem:[%s400 + $0x38] sm:$0xff]
      %v4112 = vld [vmem:[%s400 + $0x48] sm:$0xff]
      %v4113 = vld [vmem:[%s400 + $0x50] sm:$0xff]
      %v4114 = vld [vmem:[%s400 + $0x60] sm:$0xff]
      %v4115 = vld [vmem:[%s400 + $0x68] sm:$0xff]
      %v4116 = vld [vmem:[%s400 + $0x78] sm:$0xff]
      %v4117 = vld [vmem:[%s400 + $0x80] sm:$0xff]
      %v4118 = vld [vmem:[%s400 + $0x90] sm:$0xff]
      %v4119 = vld [vmem:[%s400 + $0x98] sm:$0xff]
      %v4120 = vld [vmem:[%s400 + $0xa8] sm:$0xff]
      %v4121 = vld [vmem:[%s400 + $0xb0] sm:$0xff]
      %v4122 = vld [vmem:[%s400 + $0xc0] sm:$0xff]
      %v4123 = vld [vmem:[%s400 + $0xc8] sm:$0xff]
      %v4124 = vld [vmem:[%s400 + $0xd8] sm:$0xff]
      %v4125 = vld [vmem:[%s400 + $0xe0] sm:$0xff]
      %v4126 = vld [vmem:[%s400 + $0xf0] sm:$0xff]
      %v4127 = vld [vmem:[%s400 + $0xf8] sm:$0xff]
      %v4128 = vld [vmem:[%s400 + $0x108] sm:$0xff]
      %v4129 = vld [vmem:[%s400 + $0x110] sm:$0xff]
      %v4130 = vld [vmem:[%s400 + $0x120] sm:$0xff]
      %v4131 = vld [vmem:[%s400 + $0x128] sm:$0xff]
      %v4132 = vld [vmem:[%s400 + $0x138] sm:$0xff]
      %v4133 = vld [vmem:[%s400 + $0x140] sm:$0xff]
      %v4134 = vld [vmem:[%s400 + $0x150] sm:$0xff]
      %v4135 = vld [vmem:[%s400 + $0x158] sm:$0xff]
      %v4136 = vld [vmem:[%s400 + $0x168] sm:$0xff]
      %v4137 = vld [vmem:[%s400 + $0x170] sm:$0xff]
      %v4138 = vld [vmem:[%s400 + $0x1] sm:$0xff]
      %v4139 = vld [vmem:[%s400 + $0x9] sm:$0xff]
      %v4140 = vld [vmem:[%s400 + $0x19] sm:$0xff]
      %v4141 = vld [vmem:[%s400 + $0x21] sm:$0xff]
      %v4142 = vld [vmem:[%s400 + $0x31] sm:$0xff]
      %v4143 = vld [vmem:[%s400 + $0x39] sm:$0xff]
      %v4144 = vld [vmem:[%s400 + $0x49] sm:$0xff]
      %v4145 = vld [vmem:[%s400 + $0x51] sm:$0xff]
      %v4146 = vld [vmem:[%s400 + $0x61] sm:$0xff]
      %v4147 = vld [vmem:[%s400 + $0x69] sm:$0xff]
      %v4148 = vld [vmem:[%s400 + $0x79] sm:$0xff]
      %v4149 = vld [vmem:[%s400 + $0x81] sm:$0xff]
      %v4150 = vld [vmem:[%s400 + $0x91] sm:$0xff]
      %v4151 = vld [vmem:[%s400 + $0x99] sm:$0xff]
      %v4152 = vld [vmem:[%s400 + $0xa9] sm:$0xff]
      %v4153 = vld [vmem:[%s400 + $0xb1] sm:$0xff]
      %v4154 = vld [vmem:[%s400 + $0xc1] sm:$0xff]
      %v4155 = vld [vmem:[%s400 + $0xc9] sm:$0xff]
      %v4156 = vld [vmem:[%s400 + $0xd9] sm:$0xff]
      %v4157 = vld [vmem:[%s400 + $0xe1] sm:$0xff]
      %v4158 = vld [vmem:[%s400 + $0xf1] sm:$0xff]
      %v4159 = vld [vmem:[%s400 + $0xf9] sm:$0xff]
      %v4160 = vld [vmem:[%s400 + $0x109] sm:$0xff]
      %v4161 = vld [vmem:[%s400 + $0x111] sm:$0xff]
      %v4162 = vld [vmem:[%s400 + $0x121] sm:$0xff]
      %v4163 = vld [vmem:[%s400 + $0x129] sm:$0xff]
      %v4164 = vld [vmem:[%s400 + $0x139] sm:$0xff]
      %v4165 = vld [vmem:[%s400 + $0x141] sm:$0xff]
      %v4166 = vld [vmem:[%s400 + $0x151] sm:$0xff]
      %v4167 = vld [vmem:[%s400 + $0x159] sm:$0xff]
      %v4168 = vld [vmem:[%s400 + $0x169] sm:$0xff]
      %v4169 = vld [vmem:[%s400 + $0x171] sm:$0xff]
      %v4170 = vld [vmem:[%s400 + $0x2] sm:$0xff]
      %v4171 = vld [vmem:[%s400 + $0xa] sm:$0xff]
      %v4172 = vld [vmem:[%s400 + $0x1a] sm:$0xff]
      %v4173 = vld [vmem:[%s400 + $0x22] sm:$0xff]
      %v4174 = vld [vmem:[%s400 + $0x32] sm:$0xff]
      %v4175 = vld [vmem:[%s400 + $0x3a] sm:$0xff]
      %v4176 = vld [vmem:[%s400 + $0x4a] sm:$0xff]
      %v4177 = vld [vmem:[%s400 + $0x52] sm:$0xff]
      %v4178 = vld [vmem:[%s400 + $0x62] sm:$0xff]
      %v4179 = vld [vmem:[%s400 + $0x6a] sm:$0xff]
      %v4180 = vld [vmem:[%s400 + $0x7a] sm:$0xff]
      %v4181 = vld [vmem:[%s400 + $0x82] sm:$0xff]
      %v4182 = vld [vmem:[%s400 + $0x92] sm:$0xff]
      %v4183 = vld [vmem:[%s400 + $0x9a] sm:$0xff]
      %v4184 = vld [vmem:[%s400 + $0xaa] sm:$0xff]
      %v4185 = vld [vmem:[%s400 + $0xb2] sm:$0xff]
      %v4186 = vld [vmem:[%s400 + $0xc2] sm:$0xff]
      %v4187 = vld [vmem:[%s400 + $0xca] sm:$0xff]
      %v4188 = vld [vmem:[%s400 + $0xda] sm:$0xff]
      %v4189 = vld [vmem:[%s400 + $0xe2] sm:$0xff]
      %v4190 = vld [vmem:[%s400 + $0xf2] sm:$0xff]
      %v4191 = vld [vmem:[%s400 + $0xfa] sm:$0xff]
      %v4192 = vld [vmem:[%s400 + $0x10a] sm:$0xff]
      %v4193 = vld [vmem:[%s400 + $0x112] sm:$0xff]
      %v4194 = vld [vmem:[%s400 + $0x122] sm:$0xff]
      %v4195 = vld [vmem:[%s400 + $0x12a] sm:$0xff]
      %v4196 = vld [vmem:[%s400 + $0x13a] sm:$0xff]
      %v4197 = vld [vmem:[%s400 + $0x142] sm:$0xff]
      %v4198 = vld [vmem:[%s400 + $0x152] sm:$0xff]
      %v4199 = vld [vmem:[%s400 + $0x15a] sm:$0xff]
      %v4200 = vld [vmem:[%s400 + $0x16a] sm:$0xff]
      %v4201 = vld [vmem:[%s400 + $0x172] sm:$0xff]
      %v4202 = vld [vmem:[%s625] sm:$0xff]
      %v4203 = vld [vmem:[%s625 + $0x8] sm:$0xff]
      %v4204 = vld [vmem:[%s625 + $0x18] sm:$0xff]
      %v4205 = vld [vmem:[%s625 + $0x20] sm:$0xff]
      %v4206 = vld [vmem:[%s625 + $0x30] sm:$0xff]
      %v4207 = vld [vmem:[%s625 + $0x38] sm:$0xff]
      %v4208 = vld [vmem:[%s625 + $0x48] sm:$0xff]
      %v4209 = vld [vmem:[%s625 + $0x50] sm:$0xff]
      %v4210 = vld [vmem:[%s625 + $0x60] sm:$0xff]
      %v4211 = vld [vmem:[%s625 + $0x68] sm:$0xff]
      %v4212 = vld [vmem:[%s625 + $0x78] sm:$0xff]
      %v4213 = vld [vmem:[%s625 + $0x80] sm:$0xff]
      %v4214 = vld [vmem:[%s625 + $0x90] sm:$0xff]
      %v4215 = vld [vmem:[%s625 + $0x98] sm:$0xff]
      %v4216 = vld [vmem:[%s625 + $0xa8] sm:$0xff]
      %v4217 = vld [vmem:[%s625 + $0xb0] sm:$0xff]
      %v4218 = vld [vmem:[%s625 + $0xc0] sm:$0xff]
      %v4219 = vld [vmem:[%s625 + $0xc8] sm:$0xff]
      %v4220 = vld [vmem:[%s625 + $0xd8] sm:$0xff]
      %v4221 = vld [vmem:[%s625 + $0xe0] sm:$0xff]
      %v4222 = vld [vmem:[%s625 + $0xf0] sm:$0xff]
      %v4223 = vld [vmem:[%s625 + $0xf8] sm:$0xff]
      %v4224 = vld [vmem:[%s625 + $0x108] sm:$0xff]
      %v4225 = vld [vmem:[%s625 + $0x110] sm:$0xff]
      %v4226 = vld [vmem:[%s625 + $0x120] sm:$0xff]
      %v4227 = vld [vmem:[%s625 + $0x128] sm:$0xff]
      %v4228 = vld [vmem:[%s625 + $0x138] sm:$0xff]
      %v4229 = vld [vmem:[%s625 + $0x140] sm:$0xff]
      %v4230 = vld [vmem:[%s625 + $0x150] sm:$0xff]
      %v4231 = vld [vmem:[%s625 + $0x158] sm:$0xff]
      %v4232 = vld [vmem:[%s625 + $0x168] sm:$0xff]
      %v4233 = vld [vmem:[%s625 + $0x170] sm:$0xff]
      %v4234 = vld [vmem:[%s625 + $0x1] sm:$0xff]
      %v4235 = vld [vmem:[%s625 + $0x9] sm:$0xff]
      %v4236 = vld [vmem:[%s625 + $0x19] sm:$0xff]
      %v4237 = vld [vmem:[%s625 + $0x21] sm:$0xff]
      %v4238 = vld [vmem:[%s625 + $0x31] sm:$0xff]
      %v4239 = vld [vmem:[%s625 + $0x39] sm:$0xff]
      %v4240 = vld [vmem:[%s625 + $0x49] sm:$0xff]
      %v4241 = vld [vmem:[%s625 + $0x51] sm:$0xff]
      %v4242 = vld [vmem:[%s625 + $0x61] sm:$0xff]
      %v4243 = vld [vmem:[%s625 + $0x69] sm:$0xff]
      %v4244 = vld [vmem:[%s625 + $0x79] sm:$0xff]
      %v4245 = vld [vmem:[%s625 + $0x81] sm:$0xff]
      %v4246 = vld [vmem:[%s625 + $0x91] sm:$0xff]
      %v4247 = vld [vmem:[%s625 + $0x99] sm:$0xff]
      %v4248 = vld [vmem:[%s625 + $0xa9] sm:$0xff]
      %v4249 = vld [vmem:[%s625 + $0xb1] sm:$0xff]
      %v4250 = vld [vmem:[%s625 + $0xc1] sm:$0xff]
      %v4251 = vld [vmem:[%s625 + $0xc9] sm:$0xff]
      %v4252 = vld [vmem:[%s625 + $0xd9] sm:$0xff]
      %v4253 = vld [vmem:[%s625 + $0xe1] sm:$0xff]
      %v4254 = vld [vmem:[%s625 + $0xf1] sm:$0xff]
      %v4255 = vld [vmem:[%s625 + $0xf9] sm:$0xff]
      %v4256 = vld [vmem:[%s625 + $0x109] sm:$0xff]
      %v4257 = vld [vmem:[%s625 + $0x111] sm:$0xff]
      %v4258 = vld [vmem:[%s625 + $0x121] sm:$0xff]
      %v4259 = vld [vmem:[%s625 + $0x129] sm:$0xff]
      %v4260 = vld [vmem:[%s625 + $0x139] sm:$0xff]
      %v4261 = vld [vmem:[%s625 + $0x141] sm:$0xff]
      %v4262 = vld [vmem:[%s625 + $0x151] sm:$0xff]
      %v4263 = vld [vmem:[%s625 + $0x159] sm:$0xff]
      %v4264 = vld [vmem:[%s625 + $0x169] sm:$0xff]
      %v4265 = vld [vmem:[%s625 + $0x171] sm:$0xff]
      %v4266 = vld [vmem:[%s625 + $0x2] sm:$0xff]
      %v4267 = vld [vmem:[%s625 + $0xa] sm:$0xff]
      %v4268 = vld [vmem:[%s625 + $0x1a] sm:$0xff]
      %v4269 = vld [vmem:[%s625 + $0x22] sm:$0xff]
      %v4270 = vld [vmem:[%s625 + $0x32] sm:$0xff]
      %v4271 = vld [vmem:[%s625 + $0x3a] sm:$0xff]
      %v4272 = vld [vmem:[%s625 + $0x4a] sm:$0xff]
      %v4273 = vld [vmem:[%s625 + $0x52] sm:$0xff]
      %v4274 = vld [vmem:[%s625 + $0x62] sm:$0xff]
      %v4275 = vld [vmem:[%s625 + $0x6a] sm:$0xff]
      %v4276 = vld [vmem:[%s625 + $0x7a] sm:$0xff]
      %v4277 = vld [vmem:[%s625 + $0x82] sm:$0xff]
      %v4278 = vld [vmem:[%s625 + $0x92] sm:$0xff]
      %v4279 = vld [vmem:[%s625 + $0x9a] sm:$0xff]
      %v4280 = vld [vmem:[%s625 + $0xaa] sm:$0xff]
      %v4281 = vld [vmem:[%s625 + $0xb2] sm:$0xff]
      %v4282 = vld [vmem:[%s625 + $0xc2] sm:$0xff]
      %v4283 = vld [vmem:[%s625 + $0xca] sm:$0xff]
      %v4284 = vld [vmem:[%s625 + $0xda] sm:$0xff]
      %v4285 = vld [vmem:[%s625 + $0xe2] sm:$0xff]
      %v4286 = vld [vmem:[%s625 + $0xf2] sm:$0xff]
      %v4287 = vld [vmem:[%s625 + $0xfa] sm:$0xff]
      %v4288 = vld [vmem:[%s625 + $0x10a] sm:$0xff]
      %v4289 = vld [vmem:[%s625 + $0x112] sm:$0xff]
      %v4290 = vld [vmem:[%s625 + $0x122] sm:$0xff]
      %v4291 = vld [vmem:[%s625 + $0x12a] sm:$0xff]
      %v4292 = vld [vmem:[%s625 + $0x13a] sm:$0xff]
      %v4293 = vld [vmem:[%s625 + $0x142] sm:$0xff]
      %v4294 = vld [vmem:[%s625 + $0x152] sm:$0xff]
      %v4295 = vld [vmem:[%s625 + $0x15a] sm:$0xff]
      %v4296 = vld [vmem:[%s625 + $0x16a] sm:$0xff]
      %v4297 = vld [vmem:[%s625 + $0x172] sm:$0xff]
      %4330 = vrot.lane.b32.xlu0 %v4042, 32
      %v4331 = vpop.permute.xlu0 %4330
      %4332 = vrot.lane.b32.xlu0 %v4043, 32
      %v4333 = vpop.permute.xlu0 %4332
      %4334 = vrot.lane.b32.xlu0 %v4044, 32
      %v4335 = vpop.permute.xlu0 %4334
      %4336 = vrot.lane.b32.xlu0 %v4045, 32
      %v4337 = vpop.permute.xlu0 %4336
      %4338 = vrot.lane.b32.xlu0 %v4046, 32
      %v4339 = vpop.permute.xlu0 %4338
      %4340 = vrot.lane.b32.xlu0 %v4047, 32
      %v4341 = vpop.permute.xlu0 %4340
      %4342 = vrot.lane.b32.xlu0 %v4048, 32
      %v4343 = vpop.permute.xlu0 %4342
      %4344 = vrot.lane.b32.xlu0 %v4049, 32
      %v4345 = vpop.permute.xlu0 %4344
      %4346 = vrot.lane.b32.xlu0 %v4050, 32
      %v4347 = vpop.permute.xlu0 %4346
      %4348 = vrot.lane.b32.xlu0 %v4051, 32
      %v4349 = vpop.permute.xlu0 %4348
      %4350 = vrot.lane.b32.xlu0 %v4052, 32
      %v4351 = vpop.permute.xlu0 %4350
      %4352 = vrot.lane.b32.xlu0 %v4053, 32
      %v4353 = vpop.permute.xlu0 %4352
      %4354 = vrot.lane.b32.xlu0 %v4054, 32
      %v4355 = vpop.permute.xlu0 %4354
      %4356 = vrot.lane.b32.xlu0 %v4055, 32
      %v4357 = vpop.permute.xlu0 %4356
      %4358 = vrot.lane.b32.xlu0 %v4056, 32
      %v4359 = vpop.permute.xlu0 %4358
      %4360 = vrot.lane.b32.xlu0 %v4057, 32
      %v4361 = vpop.permute.xlu0 %4360
      %4362 = vrot.lane.b32.xlu0 %v4058, 32
      %v4363 = vpop.permute.xlu0 %4362
      %4364 = vrot.lane.b32.xlu0 %v4059, 32
      %v4365 = vpop.permute.xlu0 %4364
      %4366 = vrot.lane.b32.xlu0 %v4060, 32
      %v4367 = vpop.permute.xlu0 %4366
      %4368 = vrot.lane.b32.xlu0 %v4061, 32
      %v4369 = vpop.permute.xlu0 %4368
      %4370 = vrot.lane.b32.xlu0 %v4062, 32
      %v4371 = vpop.permute.xlu0 %4370
      %4372 = vrot.lane.b32.xlu0 %v4063, 32
      %v4373 = vpop.permute.xlu0 %4372
      %4374 = vrot.lane.b32.xlu0 %v4064, 32
      %v4375 = vpop.permute.xlu0 %4374
      %4376 = vrot.lane.b32.xlu0 %v4065, 32
      %v4377 = vpop.permute.xlu0 %4376
      %4378 = vrot.lane.b32.xlu0 %v4066, 32
      %v4379 = vpop.permute.xlu0 %4378
      %4380 = vrot.lane.b32.xlu0 %v4067, 32
      %v4381 = vpop.permute.xlu0 %4380
      %4382 = vrot.lane.b32.xlu0 %v4068, 32
      %v4383 = vpop.permute.xlu0 %4382
      %4384 = vrot.lane.b32.xlu0 %v4069, 32
      %v4385 = vpop.permute.xlu0 %4384
      %4386 = vrot.lane.b32.xlu0 %v4070, 32
      %v4387 = vpop.permute.xlu0 %4386
      %4388 = vrot.lane.b32.xlu0 %v4071, 32
      %v4389 = vpop.permute.xlu0 %4388
      %4390 = vrot.lane.b32.xlu0 %v4072, 32
      %v4391 = vpop.permute.xlu0 %4390
      %4392 = vrot.lane.b32.xlu0 %v4073, 32
      %v4393 = vpop.permute.xlu0 %4392
      %4458 = vrot.lane.b32.xlu0 %v4074, 64
      %v4459 = vpop.permute.xlu0 %4458
      %4460 = vrot.lane.b32.xlu0 %v4075, 64
      %v4461 = vpop.permute.xlu0 %4460
      %4462 = vrot.lane.b32.xlu0 %v4076, 64
      %v4463 = vpop.permute.xlu0 %4462
      %4464 = vrot.lane.b32.xlu0 %v4077, 64
      %v4465 = vpop.permute.xlu0 %4464
      %4466 = vrot.lane.b32.xlu0 %v4078, 64
      %v4467 = vpop.permute.xlu0 %4466
      %4468 = vrot.lane.b32.xlu0 %v4079, 64
      %v4469 = vpop.permute.xlu0 %4468
      %4470 = vrot.lane.b32.xlu0 %v4080, 64
      %v4471 = vpop.permute.xlu0 %4470
      %4472 = vrot.lane.b32.xlu0 %v4081, 64
      %v4473 = vpop.permute.xlu0 %4472
      %4474 = vrot.lane.b32.xlu0 %v4082, 64
      %v4475 = vpop.permute.xlu0 %4474
      %4476 = vrot.lane.b32.xlu0 %v4083, 64
      %v4477 = vpop.permute.xlu0 %4476
      %4478 = vrot.lane.b32.xlu0 %v4084, 64
      %v4479 = vpop.permute.xlu0 %4478
      %4480 = vrot.lane.b32.xlu0 %v4085, 64
      %v4481 = vpop.permute.xlu0 %4480
      %4482 = vrot.lane.b32.xlu0 %v4086, 64
      %v4483 = vpop.permute.xlu0 %4482
      %4484 = vrot.lane.b32.xlu0 %v4087, 64
      %v4485 = vpop.permute.xlu0 %4484
      %4486 = vrot.lane.b32.xlu0 %v4088, 64
      %v4487 = vpop.permute.xlu0 %4486
      %4488 = vrot.lane.b32.xlu0 %v4089, 64
      %v4489 = vpop.permute.xlu0 %4488
      %4490 = vrot.lane.b32.xlu0 %v4090, 64
      %v4491 = vpop.permute.xlu0 %4490
      %4492 = vrot.lane.b32.xlu0 %v4091, 64
      %v4493 = vpop.permute.xlu0 %4492
      %4494 = vrot.lane.b32.xlu0 %v4092, 64
      %v4495 = vpop.permute.xlu0 %4494
      %4496 = vrot.lane.b32.xlu0 %v4093, 64
      %v4497 = vpop.permute.xlu0 %4496
      %4498 = vrot.lane.b32.xlu0 %v4094, 64
      %v4499 = vpop.permute.xlu0 %4498
      %4500 = vrot.lane.b32.xlu0 %v4095, 64
      %v4501 = vpop.permute.xlu0 %4500
      %4502 = vrot.lane.b32.xlu0 %v4096, 64
      %v4503 = vpop.permute.xlu0 %4502
      %4504 = vrot.lane.b32.xlu0 %v4097, 64
      %v4505 = vpop.permute.xlu0 %4504
      %4506 = vrot.lane.b32.xlu0 %v4098, 64
      %v4507 = vpop.permute.xlu0 %4506
      %4508 = vrot.lane.b32.xlu0 %v4099, 64
      %v4509 = vpop.permute.xlu0 %4508
      %4510 = vrot.lane.b32.xlu0 %v4100, 64
      %v4511 = vpop.permute.xlu0 %4510
      %4512 = vrot.lane.b32.xlu0 %v4101, 64
      %v4513 = vpop.permute.xlu0 %4512
      %4514 = vrot.lane.b32.xlu0 %v4102, 64
      %v4515 = vpop.permute.xlu0 %4514
      %4516 = vrot.lane.b32.xlu0 %v4103, 64
      %v4517 = vpop.permute.xlu0 %4516
      %4518 = vrot.lane.b32.xlu0 %v4104, 64
      %v4519 = vpop.permute.xlu0 %4518
      %4520 = vrot.lane.b32.xlu0 %v4105, 64
      %v4521 = vpop.permute.xlu0 %4520
      %4586 = vrot.lane.b32.xlu0 %v4106, 96
      %v4587 = vpop.permute.xlu0 %4586
      %4588 = vrot.lane.b32.xlu0 %v4107, 96
      %v4589 = vpop.permute.xlu0 %4588
      %4590 = vrot.lane.b32.xlu0 %v4108, 96
      %v4591 = vpop.permute.xlu0 %4590
      %4592 = vrot.lane.b32.xlu0 %v4109, 96
      %v4593 = vpop.permute.xlu0 %4592
      %4594 = vrot.lane.b32.xlu0 %v4110, 96
      %v4595 = vpop.permute.xlu0 %4594
      %4596 = vrot.lane.b32.xlu0 %v4111, 96
      %v4597 = vpop.permute.xlu0 %4596
      %4598 = vrot.lane.b32.xlu0 %v4112, 96
      %v4599 = vpop.permute.xlu0 %4598
      %4600 = vrot.lane.b32.xlu0 %v4113, 96
      %v4601 = vpop.permute.xlu0 %4600
      %4602 = vrot.lane.b32.xlu0 %v4114, 96
      %v4603 = vpop.permute.xlu0 %4602
      %4604 = vrot.lane.b32.xlu0 %v4115, 96
      %v4605 = vpop.permute.xlu0 %4604
      %4606 = vrot.lane.b32.xlu0 %v4116, 96
      %v4607 = vpop.permute.xlu0 %4606
      %4608 = vrot.lane.b32.xlu0 %v4117, 96
      %v4609 = vpop.permute.xlu0 %4608
      %4610 = vrot.lane.b32.xlu0 %v4118, 96
      %v4611 = vpop.permute.xlu0 %4610
      %4612 = vrot.lane.b32.xlu0 %v4119, 96
      %v4613 = vpop.permute.xlu0 %4612
      %4614 = vrot.lane.b32.xlu0 %v4120, 96
      %v4615 = vpop.permute.xlu0 %4614
      %4616 = vrot.lane.b32.xlu0 %v4121, 96
      %v4617 = vpop.permute.xlu0 %4616
      %4618 = vrot.lane.b32.xlu0 %v4122, 96
      %v4619 = vpop.permute.xlu0 %4618
      %4620 = vrot.lane.b32.xlu0 %v4123, 96
      %v4621 = vpop.permute.xlu0 %4620
      %4622 = vrot.lane.b32.xlu0 %v4124, 96
      %v4623 = vpop.permute.xlu0 %4622
      %4624 = vrot.lane.b32.xlu0 %v4125, 96
      %v4625 = vpop.permute.xlu0 %4624
      %4626 = vrot.lane.b32.xlu0 %v4126, 96
      %v4627 = vpop.permute.xlu0 %4626
      %4628 = vrot.lane.b32.xlu0 %v4127, 96
      %v4629 = vpop.permute.xlu0 %4628
      %4630 = vrot.lane.b32.xlu0 %v4128, 96
      %v4631 = vpop.permute.xlu0 %4630
      %4632 = vrot.lane.b32.xlu0 %v4129, 96
      %v4633 = vpop.permute.xlu0 %4632
      %4634 = vrot.lane.b32.xlu0 %v4130, 96
      %v4635 = vpop.permute.xlu0 %4634
      %4636 = vrot.lane.b32.xlu0 %v4131, 96
      %v4637 = vpop.permute.xlu0 %4636
      %4638 = vrot.lane.b32.xlu0 %v4132, 96
      %v4639 = vpop.permute.xlu0 %4638
      %4640 = vrot.lane.b32.xlu0 %v4133, 96
      %v4641 = vpop.permute.xlu0 %4640
      %4642 = vrot.lane.b32.xlu0 %v4134, 96
      %v4643 = vpop.permute.xlu0 %4642
      %4644 = vrot.lane.b32.xlu0 %v4135, 96
      %v4645 = vpop.permute.xlu0 %4644
      %4646 = vrot.lane.b32.xlu0 %v4136, 96
      %v4647 = vpop.permute.xlu0 %4646
      %4648 = vrot.lane.b32.xlu0 %v4137, 96
      %v4649 = vpop.permute.xlu0 %4648
      %4714 = vrot.lane.b32.xlu0 %v4170, 32
      %v4715 = vpop.permute.xlu0 %4714
      %4716 = vrot.lane.b32.xlu0 %v4171, 32
      %v4717 = vpop.permute.xlu0 %4716
      %4718 = vrot.lane.b32.xlu0 %v4172, 32
      %v4719 = vpop.permute.xlu0 %4718
      %4720 = vrot.lane.b32.xlu0 %v4173, 32
      %v4721 = vpop.permute.xlu0 %4720
      %4722 = vrot.lane.b32.xlu0 %v4174, 32
      %v4723 = vpop.permute.xlu0 %4722
      %4724 = vrot.lane.b32.xlu0 %v4175, 32
      %v4725 = vpop.permute.xlu0 %4724
      %4726 = vrot.lane.b32.xlu0 %v4176, 32
      %v4727 = vpop.permute.xlu0 %4726
      %4728 = vrot.lane.b32.xlu0 %v4177, 32
      %v4729 = vpop.permute.xlu0 %4728
      %4730 = vrot.lane.b32.xlu0 %v4178, 32
      %v4731 = vpop.permute.xlu0 %4730
      %4732 = vrot.lane.b32.xlu0 %v4179, 32
      %v4733 = vpop.permute.xlu0 %4732
      %4734 = vrot.lane.b32.xlu0 %v4180, 32
      %v4735 = vpop.permute.xlu0 %4734
      %4736 = vrot.lane.b32.xlu0 %v4181, 32
      %v4737 = vpop.permute.xlu0 %4736
      %4738 = vrot.lane.b32.xlu0 %v4182, 32
      %v4739 = vpop.permute.xlu0 %4738
      %4740 = vrot.lane.b32.xlu0 %v4183, 32
      %v4741 = vpop.permute.xlu0 %4740
      %4742 = vrot.lane.b32.xlu0 %v4184, 32
      %v4743 = vpop.permute.xlu0 %4742
      %4744 = vrot.lane.b32.xlu0 %v4185, 32
      %v4745 = vpop.permute.xlu0 %4744
      %4746 = vrot.lane.b32.xlu0 %v4186, 32
      %v4747 = vpop.permute.xlu0 %4746
      %4748 = vrot.lane.b32.xlu0 %v4187, 32
      %v4749 = vpop.permute.xlu0 %4748
      %4750 = vrot.lane.b32.xlu0 %v4188, 32
      %v4751 = vpop.permute.xlu0 %4750
      %4752 = vrot.lane.b32.xlu0 %v4189, 32
      %v4753 = vpop.permute.xlu0 %4752
      %4754 = vrot.lane.b32.xlu0 %v4190, 32
      %v4755 = vpop.permute.xlu0 %4754
      %4756 = vrot.lane.b32.xlu0 %v4191, 32
      %v4757 = vpop.permute.xlu0 %4756
      %4758 = vrot.lane.b32.xlu0 %v4192, 32
      %v4759 = vpop.permute.xlu0 %4758
      %4760 = vrot.lane.b32.xlu0 %v4193, 32
      %v4761 = vpop.permute.xlu0 %4760
      %4762 = vrot.lane.b32.xlu0 %v4194, 32
      %v4763 = vpop.permute.xlu0 %4762
      %4764 = vrot.lane.b32.xlu0 %v4195, 32
      %v4765 = vpop.permute.xlu0 %4764
      %4766 = vrot.lane.b32.xlu0 %v4196, 32
      %v4767 = vpop.permute.xlu0 %4766
      %4768 = vrot.lane.b32.xlu0 %v4197, 32
      %v4769 = vpop.permute.xlu0 %4768
      %4770 = vrot.lane.b32.xlu0 %v4198, 32
      %v4771 = vpop.permute.xlu0 %4770
      %4772 = vrot.lane.b32.xlu0 %v4199, 32
      %v4773 = vpop.permute.xlu0 %4772
      %4774 = vrot.lane.b32.xlu0 %v4200, 32
      %v4775 = vpop.permute.xlu0 %4774
      %4776 = vrot.lane.b32.xlu0 %v4201, 32
      %v4777 = vpop.permute.xlu0 %4776
      %4842 = vrot.lane.b32.xlu0 %v4202, 64
      %v4843 = vpop.permute.xlu0 %4842
      %4844 = vrot.lane.b32.xlu0 %v4203, 64
      %v4845 = vpop.permute.xlu0 %4844
      %4846 = vrot.lane.b32.xlu0 %v4204, 64
      %v4847 = vpop.permute.xlu0 %4846
      %4848 = vrot.lane.b32.xlu0 %v4205, 64
      %v4849 = vpop.permute.xlu0 %4848
      %4850 = vrot.lane.b32.xlu0 %v4206, 64
      %v4851 = vpop.permute.xlu0 %4850
      %4852 = vrot.lane.b32.xlu0 %v4207, 64
      %v4853 = vpop.permute.xlu0 %4852
      %4854 = vrot.lane.b32.xlu0 %v4208, 64
      %v4855 = vpop.permute.xlu0 %4854
      %4856 = vrot.lane.b32.xlu0 %v4209, 64
      %v4857 = vpop.permute.xlu0 %4856
      %4858 = vrot.lane.b32.xlu0 %v4210, 64
      %v4859 = vpop.permute.xlu0 %4858
      %4860 = vrot.lane.b32.xlu0 %v4211, 64
      %v4861 = vpop.permute.xlu0 %4860
      %4862 = vrot.lane.b32.xlu0 %v4212, 64
      %v4863 = vpop.permute.xlu0 %4862
      %4864 = vrot.lane.b32.xlu0 %v4213, 64
      %v4865 = vpop.permute.xlu0 %4864
      %4866 = vrot.lane.b32.xlu0 %v4214, 64
      %v4867 = vpop.permute.xlu0 %4866
      %4868 = vrot.lane.b32.xlu0 %v4215, 64
      %v4869 = vpop.permute.xlu0 %4868
      %4870 = vrot.lane.b32.xlu0 %v4216, 64
      %v4871 = vpop.permute.xlu0 %4870
      %4872 = vrot.lane.b32.xlu0 %v4217, 64
      %v4873 = vpop.permute.xlu0 %4872
      %4874 = vrot.lane.b32.xlu0 %v4218, 64
      %v4875 = vpop.permute.xlu0 %4874
      %4876 = vrot.lane.b32.xlu0 %v4219, 64
      %v4877 = vpop.permute.xlu0 %4876
      %4878 = vrot.lane.b32.xlu0 %v4220, 64
      %v4879 = vpop.permute.xlu0 %4878
      %4880 = vrot.lane.b32.xlu0 %v4221, 64
      %v4881 = vpop.permute.xlu0 %4880
      %4882 = vrot.lane.b32.xlu0 %v4222, 64
      %v4883 = vpop.permute.xlu0 %4882
      %4884 = vrot.lane.b32.xlu0 %v4223, 64
      %v4885 = vpop.permute.xlu0 %4884
      %4886 = vrot.lane.b32.xlu0 %v4224, 64
      %v4887 = vpop.permute.xlu0 %4886
      %4888 = vrot.lane.b32.xlu0 %v4225, 64
      %v4889 = vpop.permute.xlu0 %4888
      %4890 = vrot.lane.b32.xlu0 %v4226, 64
      %v4891 = vpop.permute.xlu0 %4890
      %4892 = vrot.lane.b32.xlu0 %v4227, 64
      %v4893 = vpop.permute.xlu0 %4892
      %4894 = vrot.lane.b32.xlu0 %v4228, 64
      %v4895 = vpop.permute.xlu0 %4894
      %4896 = vrot.lane.b32.xlu0 %v4229, 64
      %v4897 = vpop.permute.xlu0 %4896
      %4898 = vrot.lane.b32.xlu0 %v4230, 64
      %v4899 = vpop.permute.xlu0 %4898
      %4900 = vrot.lane.b32.xlu0 %v4231, 64
      %v4901 = vpop.permute.xlu0 %4900
      %4902 = vrot.lane.b32.xlu0 %v4232, 64
      %v4903 = vpop.permute.xlu0 %4902
      %4904 = vrot.lane.b32.xlu0 %v4233, 64
      %v4905 = vpop.permute.xlu0 %4904
      %4970 = vrot.lane.b32.xlu0 %v4234, 96
      %v4971 = vpop.permute.xlu0 %4970
      %4972 = vrot.lane.b32.xlu0 %v4235, 96
      %v4973 = vpop.permute.xlu0 %4972
      %4974 = vrot.lane.b32.xlu0 %v4236, 96
      %v4975 = vpop.permute.xlu0 %4974
      %4976 = vrot.lane.b32.xlu0 %v4237, 96
      %v4977 = vpop.permute.xlu0 %4976
      %4978 = vrot.lane.b32.xlu0 %v4238, 96
      %v4979 = vpop.permute.xlu0 %4978
      %4980 = vrot.lane.b32.xlu0 %v4239, 96
      %v4981 = vpop.permute.xlu0 %4980
      %4982 = vrot.lane.b32.xlu0 %v4240, 96
      %v4983 = vpop.permute.xlu0 %4982
      %4984 = vrot.lane.b32.xlu0 %v4241, 96
      %v4985 = vpop.permute.xlu0 %4984
      %4986 = vrot.lane.b32.xlu0 %v4242, 96
      %v4987 = vpop.permute.xlu0 %4986
      %4988 = vrot.lane.b32.xlu0 %v4243, 96
      %v4989 = vpop.permute.xlu0 %4988
      %4990 = vrot.lane.b32.xlu0 %v4244, 96
      %v4991 = vpop.permute.xlu0 %4990
      %4992 = vrot.lane.b32.xlu0 %v4245, 96
      %v4993 = vpop.permute.xlu0 %4992
      %4994 = vrot.lane.b32.xlu0 %v4246, 96
      %v4995 = vpop.permute.xlu0 %4994
      %4996 = vrot.lane.b32.xlu0 %v4247, 96
      %v4997 = vpop.permute.xlu0 %4996
      %4998 = vrot.lane.b32.xlu0 %v4248, 96
      %v4999 = vpop.permute.xlu0 %4998
      %5000 = vrot.lane.b32.xlu0 %v4249, 96
      %v5001 = vpop.permute.xlu0 %5000
      %5002 = vrot.lane.b32.xlu0 %v4250, 96
      %v5003 = vpop.permute.xlu0 %5002
      %5004 = vrot.lane.b32.xlu0 %v4251, 96
      %v5005 = vpop.permute.xlu0 %5004
      %5006 = vrot.lane.b32.xlu0 %v4252, 96
      %v5007 = vpop.permute.xlu0 %5006
      %5008 = vrot.lane.b32.xlu0 %v4253, 96
      %v5009 = vpop.permute.xlu0 %5008
      %5010 = vrot.lane.b32.xlu0 %v4254, 96
      %v5011 = vpop.permute.xlu0 %5010
      %5012 = vrot.lane.b32.xlu0 %v4255, 96
      %v5013 = vpop.permute.xlu0 %5012
      %5014 = vrot.lane.b32.xlu0 %v4256, 96
      %v5015 = vpop.permute.xlu0 %5014
      %5016 = vrot.lane.b32.xlu0 %v4257, 96
      %v5017 = vpop.permute.xlu0 %5016
      %5018 = vrot.lane.b32.xlu0 %v4258, 96
      %v5019 = vpop.permute.xlu0 %5018
      %5020 = vrot.lane.b32.xlu0 %v4259, 96
      %v5021 = vpop.permute.xlu0 %5020
      %5022 = vrot.lane.b32.xlu0 %v4260, 96
      %v5023 = vpop.permute.xlu0 %5022
      %5024 = vrot.lane.b32.xlu0 %v4261, 96
      %v5025 = vpop.permute.xlu0 %5024
      %5026 = vrot.lane.b32.xlu0 %v4262, 96
      %v5027 = vpop.permute.xlu0 %5026
      %5028 = vrot.lane.b32.xlu0 %v4263, 96
      %v5029 = vpop.permute.xlu0 %5028
      %5030 = vrot.lane.b32.xlu0 %v4264, 96
      %v5031 = vpop.permute.xlu0 %5030
      %5032 = vrot.lane.b32.xlu0 %v4265, 96
      %v5033 = vpop.permute.xlu0 %5032
      %v5066 = vsel %vm279, %v4010, %v4331
      %v5067 = vsel %vm279, %v4011, %v4333
      %v5068 = vsel %vm279, %v4012, %v4335
      %v5069 = vsel %vm279, %v4013, %v4337
      %v5070 = vsel %vm279, %v4014, %v4339
      %v5071 = vsel %vm279, %v4015, %v4341
      %v5072 = vsel %vm279, %v4016, %v4343
      %v5073 = vsel %vm279, %v4017, %v4345
      %v5074 = vsel %vm279, %v4018, %v4347
      %v5075 = vsel %vm279, %v4019, %v4349
      %v5076 = vsel %vm279, %v4020, %v4351
      %v5077 = vsel %vm279, %v4021, %v4353
      %v5078 = vsel %vm279, %v4022, %v4355
      %v5079 = vsel %vm279, %v4023, %v4357
      %v5080 = vsel %vm279, %v4024, %v4359
      %v5081 = vsel %vm279, %v4025, %v4361
      %v5082 = vsel %vm279, %v4026, %v4363
      %v5083 = vsel %vm279, %v4027, %v4365
      %v5084 = vsel %vm279, %v4028, %v4367
      %v5085 = vsel %vm279, %v4029, %v4369
      %v5086 = vsel %vm279, %v4030, %v4371
      %v5087 = vsel %vm279, %v4031, %v4373
      %v5088 = vsel %vm279, %v4032, %v4375
      %v5089 = vsel %vm279, %v4033, %v4377
      %v5090 = vsel %vm279, %v4034, %v4379
      %v5091 = vsel %vm279, %v4035, %v4381
      %v5092 = vsel %vm279, %v4036, %v4383
      %v5093 = vsel %vm279, %v4037, %v4385
      %v5094 = vsel %vm279, %v4038, %v4387
      %v5095 = vsel %vm279, %v4039, %v4389
      %v5096 = vsel %vm279, %v4040, %v4391
      %v5097 = vsel %vm279, %v4041, %v4393
      %v5098 = vsel %vm1522, %v5066, %v4459
      %v5099 = vsel %vm1522, %v5067, %v4461
      %v5100 = vsel %vm1522, %v5068, %v4463
      %v5101 = vsel %vm1522, %v5069, %v4465
      %v5102 = vsel %vm1522, %v5070, %v4467
      %v5103 = vsel %vm1522, %v5071, %v4469
      %v5104 = vsel %vm1522, %v5072, %v4471
      %v5105 = vsel %vm1522, %v5073, %v4473
      %v5106 = vsel %vm1522, %v5074, %v4475
      %v5107 = vsel %vm1522, %v5075, %v4477
      %v5108 = vsel %vm1522, %v5076, %v4479
      %v5109 = vsel %vm1522, %v5077, %v4481
      %v5110 = vsel %vm1522, %v5078, %v4483
      %v5111 = vsel %vm1522, %v5079, %v4485
      %v5112 = vsel %vm1522, %v5080, %v4487
      %v5113 = vsel %vm1522, %v5081, %v4489
      %v5114 = vsel %vm1522, %v5082, %v4491
      %v5115 = vsel %vm1522, %v5083, %v4493
      %v5116 = vsel %vm1522, %v5084, %v4495
      %v5117 = vsel %vm1522, %v5085, %v4497
      %v5118 = vsel %vm1522, %v5086, %v4499
      %v5119 = vsel %vm1522, %v5087, %v4501
      %v5120 = vsel %vm1522, %v5088, %v4503
      %v5121 = vsel %vm1522, %v5089, %v4505
      %v5122 = vsel %vm1522, %v5090, %v4507
      %v5123 = vsel %vm1522, %v5091, %v4509
      %v5124 = vsel %vm1522, %v5092, %v4511
      %v5125 = vsel %vm1522, %v5093, %v4513
      %v5126 = vsel %vm1522, %v5094, %v4515
      %v5127 = vsel %vm1522, %v5095, %v4517
      %v5128 = vsel %vm1522, %v5096, %v4519
      %v5129 = vsel %vm1522, %v5097, %v4521
      %v5130 = vsel %vm1555, %v5098, %v4587
      %v5131 = vsel %vm1555, %v5099, %v4589
      %v5132 = vsel %vm1555, %v5100, %v4591
      %v5133 = vsel %vm1555, %v5101, %v4593
      %v5134 = vsel %vm1555, %v5102, %v4595
      %v5135 = vsel %vm1555, %v5103, %v4597
      %v5136 = vsel %vm1555, %v5104, %v4599
      %v5137 = vsel %vm1555, %v5105, %v4601
      %v5138 = vsel %vm1555, %v5106, %v4603
      %v5139 = vsel %vm1555, %v5107, %v4605
      %v5140 = vsel %vm1555, %v5108, %v4607
      %v5141 = vsel %vm1555, %v5109, %v4609
      %v5142 = vsel %vm1555, %v5110, %v4611
      %v5143 = vsel %vm1555, %v5111, %v4613
      %v5144 = vsel %vm1555, %v5112, %v4615
      %v5145 = vsel %vm1555, %v5113, %v4617
      %v5146 = vsel %vm1555, %v5114, %v4619
      %v5147 = vsel %vm1555, %v5115, %v4621
      %v5148 = vsel %vm1555, %v5116, %v4623
      %v5149 = vsel %vm1555, %v5117, %v4625
      %v5150 = vsel %vm1555, %v5118, %v4627
      %v5151 = vsel %vm1555, %v5119, %v4629
      %v5152 = vsel %vm1555, %v5120, %v4631
      %v5153 = vsel %vm1555, %v5121, %v4633
      %v5154 = vsel %vm1555, %v5122, %v4635
      %v5155 = vsel %vm1555, %v5123, %v4637
      %v5156 = vsel %vm1555, %v5124, %v4639
      %v5157 = vsel %vm1555, %v5125, %v4641
      %v5158 = vsel %vm1555, %v5126, %v4643
      %v5159 = vsel %vm1555, %v5127, %v4645
      %v5160 = vsel %vm1555, %v5128, %v4647
      %v5161 = vsel %vm1555, %v5129, %v4649
      %v5162 = vsel %vm279, %v4138, %v4715
      %v5163 = vsel %vm279, %v4139, %v4717
      %v5164 = vsel %vm279, %v4140, %v4719
      %v5165 = vsel %vm279, %v4141, %v4721
      %v5166 = vsel %vm279, %v4142, %v4723
      %v5167 = vsel %vm279, %v4143, %v4725
      %v5168 = vsel %vm279, %v4144, %v4727
      %v5169 = vsel %vm279, %v4145, %v4729
      %v5170 = vsel %vm279, %v4146, %v4731
      %v5171 = vsel %vm279, %v4147, %v4733
      %v5172 = vsel %vm279, %v4148, %v4735
      %v5173 = vsel %vm279, %v4149, %v4737
      %v5174 = vsel %vm279, %v4150, %v4739
      %v5175 = vsel %vm279, %v4151, %v4741
      %v5176 = vsel %vm279, %v4152, %v4743
      %v5177 = vsel %vm279, %v4153, %v4745
      %v5178 = vsel %vm279, %v4154, %v4747
      %v5179 = vsel %vm279, %v4155, %v4749
      %v5180 = vsel %vm279, %v4156, %v4751
      %v5181 = vsel %vm279, %v4157, %v4753
      %v5182 = vsel %vm279, %v4158, %v4755
      %v5183 = vsel %vm279, %v4159, %v4757
      %v5184 = vsel %vm279, %v4160, %v4759
      %v5185 = vsel %vm279, %v4161, %v4761
      %v5186 = vsel %vm279, %v4162, %v4763
      %v5187 = vsel %vm279, %v4163, %v4765
      %v5188 = vsel %vm279, %v4164, %v4767
      %v5189 = vsel %vm279, %v4165, %v4769
      %v5190 = vsel %vm279, %v4166, %v4771
      %v5191 = vsel %vm279, %v4167, %v4773
      %v5192 = vsel %vm279, %v4168, %v4775
      %v5193 = vsel %vm279, %v4169, %v4777
      %v5194 = vsel %vm1522, %v5162, %v4843
      %v5195 = vsel %vm1522, %v5163, %v4845
      %v5196 = vsel %vm1522, %v5164, %v4847
      %v5197 = vsel %vm1522, %v5165, %v4849
      %v5198 = vsel %vm1522, %v5166, %v4851
      %v5199 = vsel %vm1522, %v5167, %v4853
      %v5200 = vsel %vm1522, %v5168, %v4855
      %v5201 = vsel %vm1522, %v5169, %v4857
      %v5202 = vsel %vm1522, %v5170, %v4859
      %v5203 = vsel %vm1522, %v5171, %v4861
      %v5204 = vsel %vm1522, %v5172, %v4863
      %v5205 = vsel %vm1522, %v5173, %v4865
      %v5206 = vsel %vm1522, %v5174, %v4867
      %v5207 = vsel %vm1522, %v5175, %v4869
      %v5208 = vsel %vm1522, %v5176, %v4871
      %v5209 = vsel %vm1522, %v5177, %v4873
      %v5210 = vsel %vm1522, %v5178, %v4875
      %v5211 = vsel %vm1522, %v5179, %v4877
      %v5212 = vsel %vm1522, %v5180, %v4879
      %v5213 = vsel %vm1522, %v5181, %v4881
      %v5214 = vsel %vm1522, %v5182, %v4883
      %v5215 = vsel %vm1522, %v5183, %v4885
      %v5216 = vsel %vm1522, %v5184, %v4887
      %v5217 = vsel %vm1522, %v5185, %v4889
      %v5218 = vsel %vm1522, %v5186, %v4891
      %v5219 = vsel %vm1522, %v5187, %v4893
      %v5220 = vsel %vm1522, %v5188, %v4895
      %v5221 = vsel %vm1522, %v5189, %v4897
      %v5222 = vsel %vm1522, %v5190, %v4899
      %v5223 = vsel %vm1522, %v5191, %v4901
      %v5224 = vsel %vm1522, %v5192, %v4903
      %v5225 = vsel %vm1522, %v5193, %v4905
      %v5226 = vsel %vm1555, %v5194, %v4971
      %v5227 = vsel %vm1555, %v5195, %v4973
      %v5228 = vsel %vm1555, %v5196, %v4975
      %v5229 = vsel %vm1555, %v5197, %v4977
      %v5230 = vsel %vm1555, %v5198, %v4979
      %v5231 = vsel %vm1555, %v5199, %v4981
      %v5232 = vsel %vm1555, %v5200, %v4983
      %v5233 = vsel %vm1555, %v5201, %v4985
      %v5234 = vsel %vm1555, %v5202, %v4987
      %v5235 = vsel %vm1555, %v5203, %v4989
      %v5236 = vsel %vm1555, %v5204, %v4991
      %v5237 = vsel %vm1555, %v5205, %v4993
      %v5238 = vsel %vm1555, %v5206, %v4995
      %v5239 = vsel %vm1555, %v5207, %v4997
      %v5240 = vsel %vm1555, %v5208, %v4999
      %v5241 = vsel %vm1555, %v5209, %v5001
      %v5242 = vsel %vm1555, %v5210, %v5003
      %v5243 = vsel %vm1555, %v5211, %v5005
      %v5244 = vsel %vm1555, %v5212, %v5007
      %v5245 = vsel %vm1555, %v5213, %v5009
      %v5246 = vsel %vm1555, %v5214, %v5011
      %v5247 = vsel %vm1555, %v5215, %v5013
      %v5248 = vsel %vm1555, %v5216, %v5015
      %v5249 = vsel %vm1555, %v5217, %v5017
      %v5250 = vsel %vm1555, %v5218, %v5019
      %v5251 = vsel %vm1555, %v5219, %v5021
      %v5252 = vsel %vm1555, %v5220, %v5023
      %v5253 = vsel %vm1555, %v5221, %v5025
      %v5254 = vsel %vm1555, %v5222, %v5027
      %v5255 = vsel %vm1555, %v5223, %v5029
      %v5256 = vsel %vm1555, %v5224, %v5031
      %v5257 = vsel %vm1555, %v5225, %v5033
      %v5258 = vld [vmem:[%s3] sm:$0xff]
      %v5259 = vld [vmem:[%s3 + $0x8] sm:$0xff]
      %v5260 = vld [vmem:[%s3 + $0x10] sm:$0xff]
      %v5261 = vld [vmem:[%s3 + $0x18] sm:$0xff]
      %v5262 = vld [vmem:[%s3 + $0x20] sm:$0xff]
      %v5263 = vld [vmem:[%s3 + $0x28] sm:$0xff]
      %v5264 = vld [vmem:[%s3 + $0x30] sm:$0xff]
      %v5265 = vld [vmem:[%s3 + $0x38] sm:$0xff]
      %v5266 = vld [vmem:[%s3 + $0x40] sm:$0xff]
      %v5267 = vld [vmem:[%s3 + $0x48] sm:$0xff]
      %v5268 = vld [vmem:[%s3 + $0x50] sm:$0xff]
      %v5269 = vld [vmem:[%s3 + $0x58] sm:$0xff]
      %v5270 = vld [vmem:[%s3 + $0x60] sm:$0xff]
      %v5271 = vld [vmem:[%s3 + $0x68] sm:$0xff]
      %v5272 = vld [vmem:[%s3 + $0x70] sm:$0xff]
      %v5273 = vld [vmem:[%s3 + $0x78] sm:$0xff]
      %v5274 = vld [vmem:[%s3 + $0x80] sm:$0xff]
      %v5275 = vld [vmem:[%s3 + $0x88] sm:$0xff]
      %v5276 = vld [vmem:[%s3 + $0x90] sm:$0xff]
      %v5277 = vld [vmem:[%s3 + $0x98] sm:$0xff]
      %v5278 = vld [vmem:[%s3 + $0xa0] sm:$0xff]
      %v5279 = vld [vmem:[%s3 + $0xa8] sm:$0xff]
      %v5280 = vld [vmem:[%s3 + $0xb0] sm:$0xff]
      %v5281 = vld [vmem:[%s3 + $0xb8] sm:$0xff]
      %v5282 = vld [vmem:[%s3 + $0xc0] sm:$0xff]
      %v5283 = vld [vmem:[%s3 + $0xc8] sm:$0xff]
      %v5284 = vld [vmem:[%s3 + $0xd0] sm:$0xff]
      %v5285 = vld [vmem:[%s3 + $0xd8] sm:$0xff]
      %v5286 = vld [vmem:[%s3 + $0xe0] sm:$0xff]
      %v5287 = vld [vmem:[%s3 + $0xe8] sm:$0xff]
      %v5288 = vld [vmem:[%s3 + $0xf0] sm:$0xff]
      %v5289 = vld [vmem:[%s3 + $0xf8] sm:$0xff]
      %v5290 = vld [vmem:[%s3 + $0x100] sm:$0xff]
      %v5291 = vld [vmem:[%s3 + $0x108] sm:$0xff]
      %v5292 = vld [vmem:[%s3 + $0x110] sm:$0xff]
      %v5293 = vld [vmem:[%s3 + $0x118] sm:$0xff]
      %v5294 = vld [vmem:[%s4] sm:$0x1]
      %v5296 = vperm.slane %v5294, 0
      %v5299 = vsel %vm279, %v4266, 0
      %v5302 = vsel %vm279, %v4267, 0
      %v5305 = vsel %vm279, %v4268, 0
      %v5308 = vsel %vm279, %v4269, 0
      %v5311 = vsel %vm279, %v4270, 0
      %v5314 = vsel %vm279, %v4271, 0
      %v5317 = vsel %vm279, %v4272, 0
      %v5320 = vsel %vm279, %v4273, 0
      %v5323 = vsel %vm279, %v4274, 0
      %v5326 = vsel %vm279, %v4275, 0
      %v5329 = vsel %vm279, %v4276, 0
      %v5332 = vsel %vm279, %v4277, 0
      %v5335 = vsel %vm279, %v4278, 0
      %v5338 = vsel %vm279, %v4279, 0
      %v5341 = vsel %vm279, %v4280, 0
      %v5344 = vsel %vm279, %v4281, 0
      %v5347 = vsel %vm279, %v4282, 0
      %v5350 = vsel %vm279, %v4283, 0
      %v5353 = vsel %vm279, %v4284, 0
      %v5356 = vsel %vm279, %v4285, 0
      %v5359 = vsel %vm279, %v4286, 0
      %v5362 = vsel %vm279, %v4287, 0
      %v5365 = vsel %vm279, %v4288, 0
      %v5368 = vsel %vm279, %v4289, 0
      %v5371 = vsel %vm279, %v4290, 0
      %v5374 = vsel %vm279, %v4291, 0
      %v5377 = vsel %vm279, %v4292, 0
      %v5380 = vsel %vm279, %v4293, 0
      %v5383 = vsel %vm279, %v4294, 0
      %v5386 = vsel %vm279, %v4295, 0
      %v5389 = vsel %vm279, %v4296, 0
      %v5392 = vsel %vm279, %v4297, 0
      %5394 = vmatpush.msra.mxu0 %v5273
      %5395 = vmatpush.msra.mxu0 %v5272
      %5396 = vmatpush.msra.mxu0 %v5271
      %5397 = vmatpush.msra.mxu0 %v5270
      %5398 = vmatpush.msra.mxu0 %v5269
      %5399 = vmatpush.msra.mxu0 %v5268
      %5400 = vmatpush.msra.mxu0 %v5267
      %5401 = vmatpush.msra.mxu0 %v5266
      %5402 = vmatpush.msra.mxu0 %v5265
      %5403 = vmatpush.msra.mxu0 %v5264
      %5404 = vmatpush.msra.mxu0 %v5263
      %5405 = vmatpush.msra.mxu0 %v5262
      %5406 = vmatpush.msra.mxu0 %v5261
      %5407 = vmatpush.msra.mxu0 %v5260
      %5408 = vmatpush.msra.mxu0 %v5259
      %5409 = vmatpush.msra.mxu0 %v5258
      %5410 = vmatmul.f32.gmra.mxu0 %v5130
      %v5411 = vpop.f32.mrf.mxu0
      %v5412 = vadd.f32 %v5296, %v5411
      %5413 = vmatmul.f32.gmra.mxu0 %v5131
      %v5414 = vpop.f32.mrf.mxu0
      %v5415 = vadd.f32 %v5296, %v5414
      %5416 = vmatmul.f32.gmra.mxu0 %v5132
      %v5417 = vpop.f32.mrf.mxu0
      %v5418 = vadd.f32 %v5296, %v5417
      %5419 = vmatmul.f32.gmra.mxu0 %v5133
      %v5420 = vpop.f32.mrf.mxu0
      %v5421 = vadd.f32 %v5296, %v5420
      %5422 = vmatmul.f32.gmra.mxu0 %v5134
      %v5423 = vpop.f32.mrf.mxu0
      %v5424 = vadd.f32 %v5296, %v5423
      %5425 = vmatmul.f32.gmra.mxu0 %v5135
      %v5426 = vpop.f32.mrf.mxu0
      %v5427 = vadd.f32 %v5296, %v5426
      %5428 = vmatmul.f32.gmra.mxu0 %v5136
      %v5429 = vpop.f32.mrf.mxu0
      %v5430 = vadd.f32 %v5296, %v5429
      %5431 = vmatmul.f32.gmra.mxu0 %v5137
      %v5432 = vpop.f32.mrf.mxu0
      %v5433 = vadd.f32 %v5296, %v5432
      %5434 = vmatmul.f32.gmra.mxu0 %v5138
      %v5435 = vpop.f32.mrf.mxu0
      %v5436 = vadd.f32 %v5296, %v5435
      %5437 = vmatmul.f32.gmra.mxu0 %v5139
      %v5438 = vpop.f32.mrf.mxu0
      %v5439 = vadd.f32 %v5296, %v5438
      %5440 = vmatmul.f32.gmra.mxu0 %v5140
      %v5441 = vpop.f32.mrf.mxu0
      %v5442 = vadd.f32 %v5296, %v5441
      %5443 = vmatmul.f32.gmra.mxu0 %v5141
      %v5444 = vpop.f32.mrf.mxu0
      %v5445 = vadd.f32 %v5296, %v5444
      %5446 = vmatmul.f32.gmra.mxu0 %v5142
      %v5447 = vpop.f32.mrf.mxu0
      %v5448 = vadd.f32 %v5296, %v5447
      %5449 = vmatmul.f32.gmra.mxu0 %v5143
      %v5450 = vpop.f32.mrf.mxu0
      %v5451 = vadd.f32 %v5296, %v5450
      %5452 = vmatmul.f32.gmra.mxu0 %v5144
      %v5453 = vpop.f32.mrf.mxu0
      %v5454 = vadd.f32 %v5296, %v5453
      %5455 = vmatmul.f32.gmra.mxu0 %v5145
      %v5456 = vpop.f32.mrf.mxu0
      %v5457 = vadd.f32 %v5296, %v5456
      %5458 = vmatmul.f32.gmra.mxu0 %v5146
      %v5459 = vpop.f32.mrf.mxu0
      %v5460 = vadd.f32 %v5296, %v5459
      %5461 = vmatmul.f32.gmra.mxu0 %v5147
      %v5462 = vpop.f32.mrf.mxu0
      %v5463 = vadd.f32 %v5296, %v5462
      %5464 = vmatmul.f32.gmra.mxu0 %v5148
      %v5465 = vpop.f32.mrf.mxu0
      %v5466 = vadd.f32 %v5296, %v5465
      %5467 = vmatmul.f32.gmra.mxu0 %v5149
      %v5468 = vpop.f32.mrf.mxu0
      %v5469 = vadd.f32 %v5296, %v5468
      %5470 = vmatmul.f32.gmra.mxu0 %v5150
      %v5471 = vpop.f32.mrf.mxu0
      %v5472 = vadd.f32 %v5296, %v5471
      %5473 = vmatmul.f32.gmra.mxu0 %v5151
      %v5474 = vpop.f32.mrf.mxu0
      %v5475 = vadd.f32 %v5296, %v5474
      %5476 = vmatmul.f32.gmra.mxu0 %v5152
      %v5477 = vpop.f32.mrf.mxu0
      %v5478 = vadd.f32 %v5296, %v5477
      %5479 = vmatmul.f32.gmra.mxu0 %v5153
      %v5480 = vpop.f32.mrf.mxu0
      %v5481 = vadd.f32 %v5296, %v5480
      %5482 = vmatmul.f32.gmra.mxu0 %v5154
      %v5483 = vpop.f32.mrf.mxu0
      %v5484 = vadd.f32 %v5296, %v5483
      %5485 = vmatmul.f32.gmra.mxu0 %v5155
      %v5486 = vpop.f32.mrf.mxu0
      %v5487 = vadd.f32 %v5296, %v5486
      %5488 = vmatmul.f32.gmra.mxu0 %v5156
      %v5489 = vpop.f32.mrf.mxu0
      %v5490 = vadd.f32 %v5296, %v5489
      %5491 = vmatmul.f32.gmra.mxu0 %v5157
      %v5492 = vpop.f32.mrf.mxu0
      %v5493 = vadd.f32 %v5296, %v5492
      %5494 = vmatmul.f32.gmra.mxu0 %v5158
      %v5495 = vpop.f32.mrf.mxu0
      %v5496 = vadd.f32 %v5296, %v5495
      %5497 = vmatmul.f32.gmra.mxu0 %v5159
      %v5498 = vpop.f32.mrf.mxu0
      %v5499 = vadd.f32 %v5296, %v5498
      %5500 = vmatmul.f32.gmra.mxu0 %v5160
      %v5501 = vpop.f32.mrf.mxu0
      %v5502 = vadd.f32 %v5296, %v5501
      %5503 = vmatmul.f32.gmra.mxu0 %v5161
      %v5504 = vpop.f32.mrf.mxu0
      %v5505 = vadd.f32 %v5296, %v5504
      %5506 = vdwg.mxu0
      %5507 = vmatpush.msra.mxu0 %v5289
      %5508 = vmatpush.msra.mxu0 %v5288
      %5509 = vmatpush.msra.mxu0 %v5287
      %5510 = vmatpush.msra.mxu0 %v5286
      %5511 = vmatpush.msra.mxu0 %v5285
      %5512 = vmatpush.msra.mxu0 %v5284
      %5513 = vmatpush.msra.mxu0 %v5283
      %5514 = vmatpush.msra.mxu0 %v5282
      %5515 = vmatpush.msra.mxu0 %v5281
      %5516 = vmatpush.msra.mxu0 %v5280
      %5517 = vmatpush.msra.mxu0 %v5279
      %5518 = vmatpush.msra.mxu0 %v5278
      %5519 = vmatpush.msra.mxu0 %v5277
      %5520 = vmatpush.msra.mxu0 %v5276
      %5521 = vmatpush.msra.mxu0 %v5275
      %5522 = vmatpush.msra.mxu0 %v5274
      %5523 = vmatmul.f32.gmra.mxu0 %v5226
      %v5524 = vpop.f32.mrf.mxu0
      %v5525 = vadd.f32 %v5412, %v5524
      %5526 = vmatmul.f32.gmra.mxu0 %v5227
      %v5527 = vpop.f32.mrf.mxu0
      %v5528 = vadd.f32 %v5415, %v5527
      %5529 = vmatmul.f32.gmra.mxu0 %v5228
      %v5530 = vpop.f32.mrf.mxu0
      %v5531 = vadd.f32 %v5418, %v5530
      %5532 = vmatmul.f32.gmra.mxu0 %v5229
      %v5533 = vpop.f32.mrf.mxu0
      %v5534 = vadd.f32 %v5421, %v5533
      %5535 = vmatmul.f32.gmra.mxu0 %v5230
      %v5536 = vpop.f32.mrf.mxu0
      %v5537 = vadd.f32 %v5424, %v5536
      %5538 = vmatmul.f32.gmra.mxu0 %v5231
      %v5539 = vpop.f32.mrf.mxu0
      %v5540 = vadd.f32 %v5427, %v5539
      %5541 = vmatmul.f32.gmra.mxu0 %v5232
      %v5542 = vpop.f32.mrf.mxu0
      %v5543 = vadd.f32 %v5430, %v5542
      %5544 = vmatmul.f32.gmra.mxu0 %v5233
      %v5545 = vpop.f32.mrf.mxu0
      %v5546 = vadd.f32 %v5433, %v5545
      %5547 = vmatmul.f32.gmra.mxu0 %v5234
      %v5548 = vpop.f32.mrf.mxu0
      %v5549 = vadd.f32 %v5436, %v5548
      %5550 = vmatmul.f32.gmra.mxu0 %v5235
      %v5551 = vpop.f32.mrf.mxu0
      %v5552 = vadd.f32 %v5439, %v5551
      %5553 = vmatmul.f32.gmra.mxu0 %v5236
      %v5554 = vpop.f32.mrf.mxu0
      %v5555 = vadd.f32 %v5442, %v5554
      %5556 = vmatmul.f32.gmra.mxu0 %v5237
      %v5557 = vpop.f32.mrf.mxu0
      %v5558 = vadd.f32 %v5445, %v5557
      %5559 = vmatmul.f32.gmra.mxu0 %v5238
      %v5560 = vpop.f32.mrf.mxu0
      %v5561 = vadd.f32 %v5448, %v5560
      %5562 = vmatmul.f32.gmra.mxu0 %v5239
      %v5563 = vpop.f32.mrf.mxu0
      %v5564 = vadd.f32 %v5451, %v5563
      %5565 = vmatmul.f32.gmra.mxu0 %v5240
      %v5566 = vpop.f32.mrf.mxu0
      %v5567 = vadd.f32 %v5454, %v5566
      %5568 = vmatmul.f32.gmra.mxu0 %v5241
      %v5569 = vpop.f32.mrf.mxu0
      %v5570 = vadd.f32 %v5457, %v5569
      %5571 = vmatmul.f32.gmra.mxu0 %v5242
      %v5572 = vpop.f32.mrf.mxu0
      %v5573 = vadd.f32 %v5460, %v5572
      %5574 = vmatmul.f32.gmra.mxu0 %v5243
      %v5575 = vpop.f32.mrf.mxu0
      %v5576 = vadd.f32 %v5463, %v5575
      %5577 = vmatmul.f32.gmra.mxu0 %v5244
      %v5578 = vpop.f32.mrf.mxu0
      %v5579 = vadd.f32 %v5466, %v5578
      %5580 = vmatmul.f32.gmra.mxu0 %v5245
      %v5581 = vpop.f32.mrf.mxu0
      %v5582 = vadd.f32 %v5469, %v5581
      %5583 = vmatmul.f32.gmra.mxu0 %v5246
      %v5584 = vpop.f32.mrf.mxu0
      %v5585 = vadd.f32 %v5472, %v5584
      %5586 = vmatmul.f32.gmra.mxu0 %v5247
      %v5587 = vpop.f32.mrf.mxu0
      %v5588 = vadd.f32 %v5475, %v5587
      %5589 = vmatmul.f32.gmra.mxu0 %v5248
      %v5590 = vpop.f32.mrf.mxu0
      %v5591 = vadd.f32 %v5478, %v5590
      %5592 = vmatmul.f32.gmra.mxu0 %v5249
      %v5593 = vpop.f32.mrf.mxu0
      %v5594 = vadd.f32 %v5481, %v5593
      %5595 = vmatmul.f32.gmra.mxu0 %v5250
      %v5596 = vpop.f32.mrf.mxu0
      %v5597 = vadd.f32 %v5484, %v5596
      %5598 = vmatmul.f32.gmra.mxu0 %v5251
      %v5599 = vpop.f32.mrf.mxu0
      %v5600 = vadd.f32 %v5487, %v5599
      %5601 = vmatmul.f32.gmra.mxu0 %v5252
      %v5602 = vpop.f32.mrf.mxu0
      %v5603 = vadd.f32 %v5490, %v5602
      %5604 = vmatmul.f32.gmra.mxu0 %v5253
      %v5605 = vpop.f32.mrf.mxu0
      %v5606 = vadd.f32 %v5493, %v5605
      %5607 = vmatmul.f32.gmra.mxu0 %v5254
      %v5608 = vpop.f32.mrf.mxu0
      %v5609 = vadd.f32 %v5496, %v5608
      %5610 = vmatmul.f32.gmra.mxu0 %v5255
      %v5611 = vpop.f32.mrf.mxu0
      %v5612 = vadd.f32 %v5499, %v5611
      %5613 = vmatmul.f32.gmra.mxu0 %v5256
      %v5614 = vpop.f32.mrf.mxu0
      %v5615 = vadd.f32 %v5502, %v5614
      %5616 = vmatmul.f32.gmra.mxu0 %v5257
      %v5617 = vpop.f32.mrf.mxu0
      %v5618 = vadd.f32 %v5505, %v5617
      %5619 = vdwg.mxu0
      %5620 = vmatpush.msra.mxu0 0.0
      %5621 = vmatpush.msra.mxu0 0.0
      %5622 = vmatpush.msra.mxu0 0.0
      %5623 = vmatpush.msra.mxu0 0.0
      %5624 = vmatpush.msra.mxu0 0.0
      %5625 = vmatpush.msra.mxu0 0.0
      %5626 = vmatpush.msra.mxu0 0.0
      %5627 = vmatpush.msra.mxu0 0.0
      %5628 = vmatpush.msra.mxu0 0.0
      %5629 = vmatpush.msra.mxu0 0.0
      %5630 = vmatpush.msra.mxu0 0.0
      %5631 = vmatpush.msra.mxu0 0.0
      %5632 = vmatpush.msra.mxu0 %v5293
      %5633 = vmatpush.msra.mxu0 %v5292
      %5634 = vmatpush.msra.mxu0 %v5291
      %5635 = vmatpush.msra.mxu0 %v5290
      %5636 = vmatmul.f32.gmra.mxu0 %v5299
      %v5637 = vpop.f32.mrf.mxu0
      %v5638 = vadd.f32 %v5525, %v5637
      %5639 = vmatmul.f32.gmra.mxu0 %v5302
      %v5640 = vpop.f32.mrf.mxu0
      %v5641 = vadd.f32 %v5528, %v5640
      %5642 = vmatmul.f32.gmra.mxu0 %v5305
      %v5643 = vpop.f32.mrf.mxu0
      %v5644 = vadd.f32 %v5531, %v5643
      %5645 = vmatmul.f32.gmra.mxu0 %v5308
      %v5646 = vpop.f32.mrf.mxu0
      %v5647 = vadd.f32 %v5534, %v5646
      %5648 = vmatmul.f32.gmra.mxu0 %v5311
      %v5649 = vpop.f32.mrf.mxu0
      %v5650 = vadd.f32 %v5537, %v5649
      %5651 = vmatmul.f32.gmra.mxu0 %v5314
      %v5652 = vpop.f32.mrf.mxu0
      %v5653 = vadd.f32 %v5540, %v5652
      %5654 = vmatmul.f32.gmra.mxu0 %v5317
      %v5655 = vpop.f32.mrf.mxu0
      %v5656 = vadd.f32 %v5543, %v5655
      %5657 = vmatmul.f32.gmra.mxu0 %v5320
      %v5658 = vpop.f32.mrf.mxu0
      %v5659 = vadd.f32 %v5546, %v5658
      %5660 = vmatmul.f32.gmra.mxu0 %v5323
      %v5661 = vpop.f32.mrf.mxu0
      %v5662 = vadd.f32 %v5549, %v5661
      %5663 = vmatmul.f32.gmra.mxu0 %v5326
      %v5664 = vpop.f32.mrf.mxu0
      %v5665 = vadd.f32 %v5552, %v5664
      %5666 = vmatmul.f32.gmra.mxu0 %v5329
      %v5667 = vpop.f32.mrf.mxu0
      %v5668 = vadd.f32 %v5555, %v5667
      %5669 = vmatmul.f32.gmra.mxu0 %v5332
      %v5670 = vpop.f32.mrf.mxu0
      %v5671 = vadd.f32 %v5558, %v5670
      %5672 = vmatmul.f32.gmra.mxu0 %v5335
      %v5673 = vpop.f32.mrf.mxu0
      %v5674 = vadd.f32 %v5561, %v5673
      %5675 = vmatmul.f32.gmra.mxu0 %v5338
      %v5676 = vpop.f32.mrf.mxu0
      %v5677 = vadd.f32 %v5564, %v5676
      %5678 = vmatmul.f32.gmra.mxu0 %v5341
      %v5679 = vpop.f32.mrf.mxu0
      %v5680 = vadd.f32 %v5567, %v5679
      %5681 = vmatmul.f32.gmra.mxu0 %v5344
      %v5682 = vpop.f32.mrf.mxu0
      %v5683 = vadd.f32 %v5570, %v5682
      %5684 = vmatmul.f32.gmra.mxu0 %v5347
      %v5685 = vpop.f32.mrf.mxu0
      %v5686 = vadd.f32 %v5573, %v5685
      %5687 = vmatmul.f32.gmra.mxu0 %v5350
      %v5688 = vpop.f32.mrf.mxu0
      %v5689 = vadd.f32 %v5576, %v5688
      %5690 = vmatmul.f32.gmra.mxu0 %v5353
      %v5691 = vpop.f32.mrf.mxu0
      %v5692 = vadd.f32 %v5579, %v5691
      %5693 = vmatmul.f32.gmra.mxu0 %v5356
      %v5694 = vpop.f32.mrf.mxu0
      %v5695 = vadd.f32 %v5582, %v5694
      %5696 = vmatmul.f32.gmra.mxu0 %v5359
      %v5697 = vpop.f32.mrf.mxu0
      %v5698 = vadd.f32 %v5585, %v5697
      %5699 = vmatmul.f32.gmra.mxu0 %v5362
      %v5700 = vpop.f32.mrf.mxu0
      %v5701 = vadd.f32 %v5588, %v5700
      %5702 = vmatmul.f32.gmra.mxu0 %v5365
      %v5703 = vpop.f32.mrf.mxu0
      %v5704 = vadd.f32 %v5591, %v5703
      %5705 = vmatmul.f32.gmra.mxu0 %v5368
      %v5706 = vpop.f32.mrf.mxu0
      %v5707 = vadd.f32 %v5594, %v5706
      %5708 = vmatmul.f32.gmra.mxu0 %v5371
      %v5709 = vpop.f32.mrf.mxu0
      %v5710 = vadd.f32 %v5597, %v5709
      %5711 = vmatmul.f32.gmra.mxu0 %v5374
      %v5712 = vpop.f32.mrf.mxu0
      %v5713 = vadd.f32 %v5600, %v5712
      %5714 = vmatmul.f32.gmra.mxu0 %v5377
      %v5715 = vpop.f32.mrf.mxu0
      %v5716 = vadd.f32 %v5603, %v5715
      %5717 = vmatmul.f32.gmra.mxu0 %v5380
      %v5718 = vpop.f32.mrf.mxu0
      %v5719 = vadd.f32 %v5606, %v5718
      %5720 = vmatmul.f32.gmra.mxu0 %v5383
      %v5721 = vpop.f32.mrf.mxu0
      %v5722 = vadd.f32 %v5609, %v5721
      %5723 = vmatmul.f32.gmra.mxu0 %v5386
      %v5724 = vpop.f32.mrf.mxu0
      %v5725 = vadd.f32 %v5612, %v5724
      %5726 = vmatmul.f32.gmra.mxu0 %v5389
      %v5727 = vpop.f32.mrf.mxu0
      %v5728 = vadd.f32 %v5615, %v5727
      %5729 = vmatmul.f32.gmra.mxu0 %v5392
      %v5730 = vpop.f32.mrf.mxu0
      %v5731 = vadd.f32 %v5618, %v5730
      %5732 = vdwg.mxu0
      %v5733 = vmax.f32 %v5638, 0.0
      %v5734 = vmax.f32 %v5641, 0.0
      %v5735 = vmax.f32 %v5644, 0.0
      %v5736 = vmax.f32 %v5647, 0.0
      %v5737 = vmax.f32 %v5650, 0.0
      %v5738 = vmax.f32 %v5653, 0.0
      %v5739 = vmax.f32 %v5656, 0.0
      %v5740 = vmax.f32 %v5659, 0.0
      %v5741 = vmax.f32 %v5662, 0.0
      %v5742 = vmax.f32 %v5665, 0.0
      %v5743 = vmax.f32 %v5668, 0.0
      %v5744 = vmax.f32 %v5671, 0.0
      %v5745 = vmax.f32 %v5674, 0.0
      %v5746 = vmax.f32 %v5677, 0.0
      %v5747 = vmax.f32 %v5680, 0.0
      %v5748 = vmax.f32 %v5683, 0.0
      %v5749 = vmax.f32 %v5686, 0.0
      %v5750 = vmax.f32 %v5689, 0.0
      %v5751 = vmax.f32 %v5692, 0.0
      %v5752 = vmax.f32 %v5695, 0.0
      %v5753 = vmax.f32 %v5698, 0.0
      %v5754 = vmax.f32 %v5701, 0.0
      %v5755 = vmax.f32 %v5704, 0.0
      %v5756 = vmax.f32 %v5707, 0.0
      %v5757 = vmax.f32 %v5710, 0.0
      %v5758 = vmax.f32 %v5713, 0.0
      %v5759 = vmax.f32 %v5716, 0.0
      %v5760 = vmax.f32 %v5719, 0.0
      %v5761 = vmax.f32 %v5722, 0.0
      %v5762 = vmax.f32 %v5725, 0.0
      %v5763 = vmax.f32 %v5728, 0.0
      %v5764 = vmax.f32 %v5731, 0.0
      %5765 = vst.msk [vmem:[%s400 + $0x1] sm:$0xff] %vm279, %v5733
      %5766 = vst.msk [vmem:[%s400 + $0x9] sm:$0xff] %vm279, %v5734
      %5767 = vst.msk [vmem:[%s400 + $0x19] sm:$0xff] %vm279, %v5735
      %5768 = vst.msk [vmem:[%s400 + $0x21] sm:$0xff] %vm279, %v5736
      %5769 = vst.msk [vmem:[%s400 + $0x31] sm:$0xff] %vm279, %v5737
      %5770 = vst.msk [vmem:[%s400 + $0x39] sm:$0xff] %vm279, %v5738
      %5771 = vst.msk [vmem:[%s400 + $0x49] sm:$0xff] %vm279, %v5739
      %5772 = vst.msk [vmem:[%s400 + $0x51] sm:$0xff] %vm279, %v5740
      %5773 = vst.msk [vmem:[%s400 + $0x61] sm:$0xff] %vm279, %v5741
      %5774 = vst.msk [vmem:[%s400 + $0x69] sm:$0xff] %vm279, %v5742
      %5775 = vst.msk [vmem:[%s400 + $0x79] sm:$0xff] %vm279, %v5743
      %5776 = vst.msk [vmem:[%s400 + $0x81] sm:$0xff] %vm279, %v5744
      %5777 = vst.msk [vmem:[%s400 + $0x91] sm:$0xff] %vm279, %v5745
      %5778 = vst.msk [vmem:[%s400 + $0x99] sm:$0xff] %vm279, %v5746
      %5779 = vst.msk [vmem:[%s400 + $0xa9] sm:$0xff] %vm279, %v5747
      %5780 = vst.msk [vmem:[%s400 + $0xb1] sm:$0xff] %vm279, %v5748
      %5781 = vst.msk [vmem:[%s400 + $0xc1] sm:$0xff] %vm279, %v5749
      %5782 = vst.msk [vmem:[%s400 + $0xc9] sm:$0xff] %vm279, %v5750
      %5783 = vst.msk [vmem:[%s400 + $0xd9] sm:$0xff] %vm279, %v5751
      %5784 = vst.msk [vmem:[%s400 + $0xe1] sm:$0xff] %vm279, %v5752
      %5785 = vst.msk [vmem:[%s400 + $0xf1] sm:$0xff] %vm279, %v5753
      %5786 = vst.msk [vmem:[%s400 + $0xf9] sm:$0xff] %vm279, %v5754
      %5787 = vst.msk [vmem:[%s400 + $0x109] sm:$0xff] %vm279, %v5755
      %5788 = vst.msk [vmem:[%s400 + $0x111] sm:$0xff] %vm279, %v5756
      %5789 = vst.msk [vmem:[%s400 + $0x121] sm:$0xff] %vm279, %v5757
      %5790 = vst.msk [vmem:[%s400 + $0x129] sm:$0xff] %vm279, %v5758
      %5791 = vst.msk [vmem:[%s400 + $0x139] sm:$0xff] %vm279, %v5759
      %5792 = vst.msk [vmem:[%s400 + $0x141] sm:$0xff] %vm279, %v5760
      %5793 = vst.msk [vmem:[%s400 + $0x151] sm:$0xff] %vm279, %v5761
      %5794 = vst.msk [vmem:[%s400 + $0x159] sm:$0xff] %vm279, %v5762
      %5795 = vst.msk [vmem:[%s400 + $0x169] sm:$0xff] %vm279, %v5763
      %5796 = vst.msk [vmem:[%s400 + $0x171] sm:$0xff] %vm279, %v5764
      %v5797 = vld [vmem:[#allocation2] sm:$0xff]
      %v5798 = vld [vmem:[#allocation2 + $0x8] sm:$0xff]
      %v5799 = vld [vmem:[#allocation2 + $0x18] sm:$0xff]
      %v5800 = vld [vmem:[#allocation2 + $0x20] sm:$0xff]
      %v5801 = vld [vmem:[#allocation2 + $0x30] sm:$0xff]
      %v5802 = vld [vmem:[#allocation2 + $0x38] sm:$0xff]
      %v5803 = vld [vmem:[#allocation2 + $0x48] sm:$0xff]
      %v5804 = vld [vmem:[#allocation2 + $0x50] sm:$0xff]
      %v5805 = vld [vmem:[#allocation2 + $0x60] sm:$0xff]
      %v5806 = vld [vmem:[#allocation2 + $0x68] sm:$0xff]
      %v5807 = vld [vmem:[#allocation2 + $0x78] sm:$0xff]
      %v5808 = vld [vmem:[#allocation2 + $0x80] sm:$0xff]
      %v5809 = vld [vmem:[#allocation2 + $0x90] sm:$0xff]
      %v5810 = vld [vmem:[#allocation2 + $0x98] sm:$0xff]
      %v5811 = vld [vmem:[#allocation2 + $0xa8] sm:$0xff]
      %v5812 = vld [vmem:[#allocation2 + $0xb0] sm:$0xff]
      %v5813 = vld [vmem:[#allocation2 + $0xc0] sm:$0xff]
      %v5814 = vld [vmem:[#allocation2 + $0xc8] sm:$0xff]
      %v5815 = vld [vmem:[#allocation2 + $0xd8] sm:$0xff]
      %v5816 = vld [vmem:[#allocation2 + $0xe0] sm:$0xff]
      %v5817 = vld [vmem:[#allocation2 + $0xf0] sm:$0xff]
      %v5818 = vld [vmem:[#allocation2 + $0xf8] sm:$0xff]
      %v5819 = vld [vmem:[#allocation2 + $0x108] sm:$0xff]
      %v5820 = vld [vmem:[#allocation2 + $0x110] sm:$0xff]
      %v5821 = vld [vmem:[#allocation2 + $0x120] sm:$0xff]
      %v5822 = vld [vmem:[#allocation2 + $0x128] sm:$0xff]
      %v5823 = vld [vmem:[#allocation2 + $0x138] sm:$0xff]
      %v5824 = vld [vmem:[#allocation2 + $0x140] sm:$0xff]
      %v5825 = vld [vmem:[#allocation2 + $0x150] sm:$0xff]
      %v5826 = vld [vmem:[#allocation2 + $0x158] sm:$0xff]
      %v5827 = vld [vmem:[#allocation2 + $0x168] sm:$0xff]
      %v5828 = vld [vmem:[#allocation2 + $0x170] sm:$0xff]
      %v5829 = vld [vmem:[#allocation2 + $0x1] sm:$0xff]
      %v5830 = vld [vmem:[#allocation2 + $0x9] sm:$0xff]
      %v5831 = vld [vmem:[#allocation2 + $0x19] sm:$0xff]
      %v5832 = vld [vmem:[#allocation2 + $0x21] sm:$0xff]
      %v5833 = vld [vmem:[#allocation2 + $0x31] sm:$0xff]
      %v5834 = vld [vmem:[#allocation2 + $0x39] sm:$0xff]
      %v5835 = vld [vmem:[#allocation2 + $0x49] sm:$0xff]
      %v5836 = vld [vmem:[#allocation2 + $0x51] sm:$0xff]
      %v5837 = vld [vmem:[#allocation2 + $0x61] sm:$0xff]
      %v5838 = vld [vmem:[#allocation2 + $0x69] sm:$0xff]
      %v5839 = vld [vmem:[#allocation2 + $0x79] sm:$0xff]
      %v5840 = vld [vmem:[#allocation2 + $0x81] sm:$0xff]
      %v5841 = vld [vmem:[#allocation2 + $0x91] sm:$0xff]
      %v5842 = vld [vmem:[#allocation2 + $0x99] sm:$0xff]
      %v5843 = vld [vmem:[#allocation2 + $0xa9] sm:$0xff]
      %v5844 = vld [vmem:[#allocation2 + $0xb1] sm:$0xff]
      %v5845 = vld [vmem:[#allocation2 + $0xc1] sm:$0xff]
      %v5846 = vld [vmem:[#allocation2 + $0xc9] sm:$0xff]
      %v5847 = vld [vmem:[#allocation2 + $0xd9] sm:$0xff]
      %v5848 = vld [vmem:[#allocation2 + $0xe1] sm:$0xff]
      %v5849 = vld [vmem:[#allocation2 + $0xf1] sm:$0xff]
      %v5850 = vld [vmem:[#allocation2 + $0xf9] sm:$0xff]
      %v5851 = vld [vmem:[#allocation2 + $0x109] sm:$0xff]
      %v5852 = vld [vmem:[#allocation2 + $0x111] sm:$0xff]
      %v5853 = vld [vmem:[#allocation2 + $0x121] sm:$0xff]
      %v5854 = vld [vmem:[#allocation2 + $0x129] sm:$0xff]
      %v5855 = vld [vmem:[#allocation2 + $0x139] sm:$0xff]
      %v5856 = vld [vmem:[#allocation2 + $0x141] sm:$0xff]
      %v5857 = vld [vmem:[#allocation2 + $0x151] sm:$0xff]
      %v5858 = vld [vmem:[#allocation2 + $0x159] sm:$0xff]
      %v5859 = vld [vmem:[#allocation2 + $0x169] sm:$0xff]
      %v5860 = vld [vmem:[#allocation2 + $0x171] sm:$0xff]
      %v5861 = vld [vmem:[#allocation2 + $0x2] sm:$0xff]
      %v5862 = vld [vmem:[#allocation2 + $0xa] sm:$0xff]
      %v5863 = vld [vmem:[#allocation2 + $0x1a] sm:$0xff]
      %v5864 = vld [vmem:[#allocation2 + $0x22] sm:$0xff]
      %v5865 = vld [vmem:[#allocation2 + $0x32] sm:$0xff]
      %v5866 = vld [vmem:[#allocation2 + $0x3a] sm:$0xff]
      %v5867 = vld [vmem:[#allocation2 + $0x4a] sm:$0xff]
      %v5868 = vld [vmem:[#allocation2 + $0x52] sm:$0xff]
      %v5869 = vld [vmem:[#allocation2 + $0x62] sm:$0xff]
      %v5870 = vld [vmem:[#allocation2 + $0x6a] sm:$0xff]
      %v5871 = vld [vmem:[#allocation2 + $0x7a] sm:$0xff]
      %v5872 = vld [vmem:[#allocation2 + $0x82] sm:$0xff]
      %v5873 = vld [vmem:[#allocation2 + $0x92] sm:$0xff]
      %v5874 = vld [vmem:[#allocation2 + $0x9a] sm:$0xff]
      %v5875 = vld [vmem:[#allocation2 + $0xaa] sm:$0xff]
      %v5876 = vld [vmem:[#allocation2 + $0xb2] sm:$0xff]
      %v5877 = vld [vmem:[#allocation2 + $0xc2] sm:$0xff]
      %v5878 = vld [vmem:[#allocation2 + $0xca] sm:$0xff]
      %v5879 = vld [vmem:[#allocation2 + $0xda] sm:$0xff]
      %v5880 = vld [vmem:[#allocation2 + $0xe2] sm:$0xff]
      %v5881 = vld [vmem:[#allocation2 + $0xf2] sm:$0xff]
      %v5882 = vld [vmem:[#allocation2 + $0xfa] sm:$0xff]
      %v5883 = vld [vmem:[#allocation2 + $0x10a] sm:$0xff]
      %v5884 = vld [vmem:[#allocation2 + $0x112] sm:$0xff]
      %v5885 = vld [vmem:[#allocation2 + $0x122] sm:$0xff]
      %v5886 = vld [vmem:[#allocation2 + $0x12a] sm:$0xff]
      %v5887 = vld [vmem:[#allocation2 + $0x13a] sm:$0xff]
      %v5888 = vld [vmem:[#allocation2 + $0x142] sm:$0xff]
      %v5889 = vld [vmem:[#allocation2 + $0x152] sm:$0xff]
      %v5890 = vld [vmem:[#allocation2 + $0x15a] sm:$0xff]
      %v5891 = vld [vmem:[#allocation2 + $0x16a] sm:$0xff]
      %v5892 = vld [vmem:[#allocation2 + $0x172] sm:$0xff]
      %v5893 = vld [vmem:[%s400] sm:$0xff]
      %v5894 = vld [vmem:[%s400 + $0x8] sm:$0xff]
      %v5895 = vld [vmem:[%s400 + $0x18] sm:$0xff]
      %v5896 = vld [vmem:[%s400 + $0x20] sm:$0xff]
      %v5897 = vld [vmem:[%s400 + $0x30] sm:$0xff]
      %v5898 = vld [vmem:[%s400 + $0x38] sm:$0xff]
      %v5899 = vld [vmem:[%s400 + $0x48] sm:$0xff]
      %v5900 = vld [vmem:[%s400 + $0x50] sm:$0xff]
      %v5901 = vld [vmem:[%s400 + $0x60] sm:$0xff]
      %v5902 = vld [vmem:[%s400 + $0x68] sm:$0xff]
      %v5903 = vld [vmem:[%s400 + $0x78] sm:$0xff]
      %v5904 = vld [vmem:[%s400 + $0x80] sm:$0xff]
      %v5905 = vld [vmem:[%s400 + $0x90] sm:$0xff]
      %v5906 = vld [vmem:[%s400 + $0x98] sm:$0xff]
      %v5907 = vld [vmem:[%s400 + $0xa8] sm:$0xff]
      %v5908 = vld [vmem:[%s400 + $0xb0] sm:$0xff]
      %v5909 = vld [vmem:[%s400 + $0xc0] sm:$0xff]
      %v5910 = vld [vmem:[%s400 + $0xc8] sm:$0xff]
      %v5911 = vld [vmem:[%s400 + $0xd8] sm:$0xff]
      %v5912 = vld [vmem:[%s400 + $0xe0] sm:$0xff]
      %v5913 = vld [vmem:[%s400 + $0xf0] sm:$0xff]
      %v5914 = vld [vmem:[%s400 + $0xf8] sm:$0xff]
      %v5915 = vld [vmem:[%s400 + $0x108] sm:$0xff]
      %v5916 = vld [vmem:[%s400 + $0x110] sm:$0xff]
      %v5917 = vld [vmem:[%s400 + $0x120] sm:$0xff]
      %v5918 = vld [vmem:[%s400 + $0x128] sm:$0xff]
      %v5919 = vld [vmem:[%s400 + $0x138] sm:$0xff]
      %v5920 = vld [vmem:[%s400 + $0x140] sm:$0xff]
      %v5921 = vld [vmem:[%s400 + $0x150] sm:$0xff]
      %v5922 = vld [vmem:[%s400 + $0x158] sm:$0xff]
      %v5923 = vld [vmem:[%s400 + $0x168] sm:$0xff]
      %v5924 = vld [vmem:[%s400 + $0x170] sm:$0xff]
      %v5925 = vld [vmem:[%s400 + $0x1] sm:$0xff]
      %v5926 = vld [vmem:[%s400 + $0x9] sm:$0xff]
      %v5927 = vld [vmem:[%s400 + $0x19] sm:$0xff]
      %v5928 = vld [vmem:[%s400 + $0x21] sm:$0xff]
      %v5929 = vld [vmem:[%s400 + $0x31] sm:$0xff]
      %v5930 = vld [vmem:[%s400 + $0x39] sm:$0xff]
      %v5931 = vld [vmem:[%s400 + $0x49] sm:$0xff]
      %v5932 = vld [vmem:[%s400 + $0x51] sm:$0xff]
      %v5933 = vld [vmem:[%s400 + $0x61] sm:$0xff]
      %v5934 = vld [vmem:[%s400 + $0x69] sm:$0xff]
      %v5935 = vld [vmem:[%s400 + $0x79] sm:$0xff]
      %v5936 = vld [vmem:[%s400 + $0x81] sm:$0xff]
      %v5937 = vld [vmem:[%s400 + $0x91] sm:$0xff]
      %v5938 = vld [vmem:[%s400 + $0x99] sm:$0xff]
      %v5939 = vld [vmem:[%s400 + $0xa9] sm:$0xff]
      %v5940 = vld [vmem:[%s400 + $0xb1] sm:$0xff]
      %v5941 = vld [vmem:[%s400 + $0xc1] sm:$0xff]
      %v5942 = vld [vmem:[%s400 + $0xc9] sm:$0xff]
      %v5943 = vld [vmem:[%s400 + $0xd9] sm:$0xff]
      %v5944 = vld [vmem:[%s400 + $0xe1] sm:$0xff]
      %v5945 = vld [vmem:[%s400 + $0xf1] sm:$0xff]
      %v5946 = vld [vmem:[%s400 + $0xf9] sm:$0xff]
      %v5947 = vld [vmem:[%s400 + $0x109] sm:$0xff]
      %v5948 = vld [vmem:[%s400 + $0x111] sm:$0xff]
      %v5949 = vld [vmem:[%s400 + $0x121] sm:$0xff]
      %v5950 = vld [vmem:[%s400 + $0x129] sm:$0xff]
      %v5951 = vld [vmem:[%s400 + $0x139] sm:$0xff]
      %v5952 = vld [vmem:[%s400 + $0x141] sm:$0xff]
      %v5953 = vld [vmem:[%s400 + $0x151] sm:$0xff]
      %v5954 = vld [vmem:[%s400 + $0x159] sm:$0xff]
      %v5955 = vld [vmem:[%s400 + $0x169] sm:$0xff]
      %v5956 = vld [vmem:[%s400 + $0x171] sm:$0xff]
      %v5957 = vld [vmem:[%s400 + $0x2] sm:$0xff]
      %v5958 = vld [vmem:[%s400 + $0xa] sm:$0xff]
      %v5959 = vld [vmem:[%s400 + $0x1a] sm:$0xff]
      %v5960 = vld [vmem:[%s400 + $0x22] sm:$0xff]
      %v5961 = vld [vmem:[%s400 + $0x32] sm:$0xff]
      %v5962 = vld [vmem:[%s400 + $0x3a] sm:$0xff]
      %v5963 = vld [vmem:[%s400 + $0x4a] sm:$0xff]
      %v5964 = vld [vmem:[%s400 + $0x52] sm:$0xff]
      %v5965 = vld [vmem:[%s400 + $0x62] sm:$0xff]
      %v5966 = vld [vmem:[%s400 + $0x6a] sm:$0xff]
      %v5967 = vld [vmem:[%s400 + $0x7a] sm:$0xff]
      %v5968 = vld [vmem:[%s400 + $0x82] sm:$0xff]
      %v5969 = vld [vmem:[%s400 + $0x92] sm:$0xff]
      %v5970 = vld [vmem:[%s400 + $0x9a] sm:$0xff]
      %v5971 = vld [vmem:[%s400 + $0xaa] sm:$0xff]
      %v5972 = vld [vmem:[%s400 + $0xb2] sm:$0xff]
      %v5973 = vld [vmem:[%s400 + $0xc2] sm:$0xff]
      %v5974 = vld [vmem:[%s400 + $0xca] sm:$0xff]
      %v5975 = vld [vmem:[%s400 + $0xda] sm:$0xff]
      %v5976 = vld [vmem:[%s400 + $0xe2] sm:$0xff]
      %v5977 = vld [vmem:[%s400 + $0xf2] sm:$0xff]
      %v5978 = vld [vmem:[%s400 + $0xfa] sm:$0xff]
      %v5979 = vld [vmem:[%s400 + $0x10a] sm:$0xff]
      %v5980 = vld [vmem:[%s400 + $0x112] sm:$0xff]
      %v5981 = vld [vmem:[%s400 + $0x122] sm:$0xff]
      %v5982 = vld [vmem:[%s400 + $0x12a] sm:$0xff]
      %v5983 = vld [vmem:[%s400 + $0x13a] sm:$0xff]
      %v5984 = vld [vmem:[%s400 + $0x142] sm:$0xff]
      %v5985 = vld [vmem:[%s400 + $0x152] sm:$0xff]
      %v5986 = vld [vmem:[%s400 + $0x15a] sm:$0xff]
      %v5987 = vld [vmem:[%s400 + $0x16a] sm:$0xff]
      %v5988 = vld [vmem:[%s400 + $0x172] sm:$0xff]
      %v5989 = vld [vmem:[%s625] sm:$0xff]
      %v5990 = vld [vmem:[%s625 + $0x8] sm:$0xff]
      %v5991 = vld [vmem:[%s625 + $0x18] sm:$0xff]
      %v5992 = vld [vmem:[%s625 + $0x20] sm:$0xff]
      %v5993 = vld [vmem:[%s625 + $0x30] sm:$0xff]
      %v5994 = vld [vmem:[%s625 + $0x38] sm:$0xff]
      %v5995 = vld [vmem:[%s625 + $0x48] sm:$0xff]
      %v5996 = vld [vmem:[%s625 + $0x50] sm:$0xff]
      %v5997 = vld [vmem:[%s625 + $0x60] sm:$0xff]
      %v5998 = vld [vmem:[%s625 + $0x68] sm:$0xff]
      %v5999 = vld [vmem:[%s625 + $0x78] sm:$0xff]
      %v6000 = vld [vmem:[%s625 + $0x80] sm:$0xff]
      %v6001 = vld [vmem:[%s625 + $0x90] sm:$0xff]
      %v6002 = vld [vmem:[%s625 + $0x98] sm:$0xff]
      %v6003 = vld [vmem:[%s625 + $0xa8] sm:$0xff]
      %v6004 = vld [vmem:[%s625 + $0xb0] sm:$0xff]
      %v6005 = vld [vmem:[%s625 + $0xc0] sm:$0xff]
      %v6006 = vld [vmem:[%s625 + $0xc8] sm:$0xff]
      %v6007 = vld [vmem:[%s625 + $0xd8] sm:$0xff]
      %v6008 = vld [vmem:[%s625 + $0xe0] sm:$0xff]
      %v6009 = vld [vmem:[%s625 + $0xf0] sm:$0xff]
      %v6010 = vld [vmem:[%s625 + $0xf8] sm:$0xff]
      %v6011 = vld [vmem:[%s625 + $0x108] sm:$0xff]
      %v6012 = vld [vmem:[%s625 + $0x110] sm:$0xff]
      %v6013 = vld [vmem:[%s625 + $0x120] sm:$0xff]
      %v6014 = vld [vmem:[%s625 + $0x128] sm:$0xff]
      %v6015 = vld [vmem:[%s625 + $0x138] sm:$0xff]
      %v6016 = vld [vmem:[%s625 + $0x140] sm:$0xff]
      %v6017 = vld [vmem:[%s625 + $0x150] sm:$0xff]
      %v6018 = vld [vmem:[%s625 + $0x158] sm:$0xff]
      %v6019 = vld [vmem:[%s625 + $0x168] sm:$0xff]
      %v6020 = vld [vmem:[%s625 + $0x170] sm:$0xff]
      %v6021 = vld [vmem:[%s625 + $0x1] sm:$0xff]
      %v6022 = vld [vmem:[%s625 + $0x9] sm:$0xff]
      %v6023 = vld [vmem:[%s625 + $0x19] sm:$0xff]
      %v6024 = vld [vmem:[%s625 + $0x21] sm:$0xff]
      %v6025 = vld [vmem:[%s625 + $0x31] sm:$0xff]
      %v6026 = vld [vmem:[%s625 + $0x39] sm:$0xff]
      %v6027 = vld [vmem:[%s625 + $0x49] sm:$0xff]
      %v6028 = vld [vmem:[%s625 + $0x51] sm:$0xff]
      %v6029 = vld [vmem:[%s625 + $0x61] sm:$0xff]
      %v6030 = vld [vmem:[%s625 + $0x69] sm:$0xff]
      %v6031 = vld [vmem:[%s625 + $0x79] sm:$0xff]
      %v6032 = vld [vmem:[%s625 + $0x81] sm:$0xff]
      %v6033 = vld [vmem:[%s625 + $0x91] sm:$0xff]
      %v6034 = vld [vmem:[%s625 + $0x99] sm:$0xff]
      %v6035 = vld [vmem:[%s625 + $0xa9] sm:$0xff]
      %v6036 = vld [vmem:[%s625 + $0xb1] sm:$0xff]
      %v6037 = vld [vmem:[%s625 + $0xc1] sm:$0xff]
      %v6038 = vld [vmem:[%s625 + $0xc9] sm:$0xff]
      %v6039 = vld [vmem:[%s625 + $0xd9] sm:$0xff]
      %v6040 = vld [vmem:[%s625 + $0xe1] sm:$0xff]
      %v6041 = vld [vmem:[%s625 + $0xf1] sm:$0xff]
      %v6042 = vld [vmem:[%s625 + $0xf9] sm:$0xff]
      %v6043 = vld [vmem:[%s625 + $0x109] sm:$0xff]
      %v6044 = vld [vmem:[%s625 + $0x111] sm:$0xff]
      %v6045 = vld [vmem:[%s625 + $0x121] sm:$0xff]
      %v6046 = vld [vmem:[%s625 + $0x129] sm:$0xff]
      %v6047 = vld [vmem:[%s625 + $0x139] sm:$0xff]
      %v6048 = vld [vmem:[%s625 + $0x141] sm:$0xff]
      %v6049 = vld [vmem:[%s625 + $0x151] sm:$0xff]
      %v6050 = vld [vmem:[%s625 + $0x159] sm:$0xff]
      %v6051 = vld [vmem:[%s625 + $0x169] sm:$0xff]
      %v6052 = vld [vmem:[%s625 + $0x171] sm:$0xff]
      %v6053 = vld [vmem:[%s625 + $0x2] sm:$0xff]
      %v6054 = vld [vmem:[%s625 + $0xa] sm:$0xff]
      %v6055 = vld [vmem:[%s625 + $0x1a] sm:$0xff]
      %v6056 = vld [vmem:[%s625 + $0x22] sm:$0xff]
      %v6057 = vld [vmem:[%s625 + $0x32] sm:$0xff]
      %v6058 = vld [vmem:[%s625 + $0x3a] sm:$0xff]
      %v6059 = vld [vmem:[%s625 + $0x4a] sm:$0xff]
      %v6060 = vld [vmem:[%s625 + $0x52] sm:$0xff]
      %v6061 = vld [vmem:[%s625 + $0x62] sm:$0xff]
      %v6062 = vld [vmem:[%s625 + $0x6a] sm:$0xff]
      %v6063 = vld [vmem:[%s625 + $0x7a] sm:$0xff]
      %v6064 = vld [vmem:[%s625 + $0x82] sm:$0xff]
      %v6065 = vld [vmem:[%s625 + $0x92] sm:$0xff]
      %v6066 = vld [vmem:[%s625 + $0x9a] sm:$0xff]
      %v6067 = vld [vmem:[%s625 + $0xaa] sm:$0xff]
      %v6068 = vld [vmem:[%s625 + $0xb2] sm:$0xff]
      %v6069 = vld [vmem:[%s625 + $0xc2] sm:$0xff]
      %v6070 = vld [vmem:[%s625 + $0xca] sm:$0xff]
      %v6071 = vld [vmem:[%s625 + $0xda] sm:$0xff]
      %v6072 = vld [vmem:[%s625 + $0xe2] sm:$0xff]
      %v6073 = vld [vmem:[%s625 + $0xf2] sm:$0xff]
      %v6074 = vld [vmem:[%s625 + $0xfa] sm:$0xff]
      %v6075 = vld [vmem:[%s625 + $0x10a] sm:$0xff]
      %v6076 = vld [vmem:[%s625 + $0x112] sm:$0xff]
      %v6077 = vld [vmem:[%s625 + $0x122] sm:$0xff]
      %v6078 = vld [vmem:[%s625 + $0x12a] sm:$0xff]
      %v6079 = vld [vmem:[%s625 + $0x13a] sm:$0xff]
      %v6080 = vld [vmem:[%s625 + $0x142] sm:$0xff]
      %v6081 = vld [vmem:[%s625 + $0x152] sm:$0xff]
      %v6082 = vld [vmem:[%s625 + $0x15a] sm:$0xff]
      %v6083 = vld [vmem:[%s625 + $0x16a] sm:$0xff]
      %v6084 = vld [vmem:[%s625 + $0x172] sm:$0xff]
      %6117 = vrot.lane.b32.xlu0 %v5829, 32
      %v6118 = vpop.permute.xlu0 %6117
      %6119 = vrot.lane.b32.xlu0 %v5830, 32
      %v6120 = vpop.permute.xlu0 %6119
      %6121 = vrot.lane.b32.xlu0 %v5831, 32
      %v6122 = vpop.permute.xlu0 %6121
      %6123 = vrot.lane.b32.xlu0 %v5832, 32
      %v6124 = vpop.permute.xlu0 %6123
      %6125 = vrot.lane.b32.xlu0 %v5833, 32
      %v6126 = vpop.permute.xlu0 %6125
      %6127 = vrot.lane.b32.xlu0 %v5834, 32
      %v6128 = vpop.permute.xlu0 %6127
      %6129 = vrot.lane.b32.xlu0 %v5835, 32
      %v6130 = vpop.permute.xlu0 %6129
      %6131 = vrot.lane.b32.xlu0 %v5836, 32
      %v6132 = vpop.permute.xlu0 %6131
      %6133 = vrot.lane.b32.xlu0 %v5837, 32
      %v6134 = vpop.permute.xlu0 %6133
      %6135 = vrot.lane.b32.xlu0 %v5838, 32
      %v6136 = vpop.permute.xlu0 %6135
      %6137 = vrot.lane.b32.xlu0 %v5839, 32
      %v6138 = vpop.permute.xlu0 %6137
      %6139 = vrot.lane.b32.xlu0 %v5840, 32
      %v6140 = vpop.permute.xlu0 %6139
      %6141 = vrot.lane.b32.xlu0 %v5841, 32
      %v6142 = vpop.permute.xlu0 %6141
      %6143 = vrot.lane.b32.xlu0 %v5842, 32
      %v6144 = vpop.permute.xlu0 %6143
      %6145 = vrot.lane.b32.xlu0 %v5843, 32
      %v6146 = vpop.permute.xlu0 %6145
      %6147 = vrot.lane.b32.xlu0 %v5844, 32
      %v6148 = vpop.permute.xlu0 %6147
      %6149 = vrot.lane.b32.xlu0 %v5845, 32
      %v6150 = vpop.permute.xlu0 %6149
      %6151 = vrot.lane.b32.xlu0 %v5846, 32
      %v6152 = vpop.permute.xlu0 %6151
      %6153 = vrot.lane.b32.xlu0 %v5847, 32
      %v6154 = vpop.permute.xlu0 %6153
      %6155 = vrot.lane.b32.xlu0 %v5848, 32
      %v6156 = vpop.permute.xlu0 %6155
      %6157 = vrot.lane.b32.xlu0 %v5849, 32
      %v6158 = vpop.permute.xlu0 %6157
      %6159 = vrot.lane.b32.xlu0 %v5850, 32
      %v6160 = vpop.permute.xlu0 %6159
      %6161 = vrot.lane.b32.xlu0 %v5851, 32
      %v6162 = vpop.permute.xlu0 %6161
      %6163 = vrot.lane.b32.xlu0 %v5852, 32
      %v6164 = vpop.permute.xlu0 %6163
      %6165 = vrot.lane.b32.xlu0 %v5853, 32
      %v6166 = vpop.permute.xlu0 %6165
      %6167 = vrot.lane.b32.xlu0 %v5854, 32
      %v6168 = vpop.permute.xlu0 %6167
      %6169 = vrot.lane.b32.xlu0 %v5855, 32
      %v6170 = vpop.permute.xlu0 %6169
      %6171 = vrot.lane.b32.xlu0 %v5856, 32
      %v6172 = vpop.permute.xlu0 %6171
      %6173 = vrot.lane.b32.xlu0 %v5857, 32
      %v6174 = vpop.permute.xlu0 %6173
      %6175 = vrot.lane.b32.xlu0 %v5858, 32
      %v6176 = vpop.permute.xlu0 %6175
      %6177 = vrot.lane.b32.xlu0 %v5859, 32
      %v6178 = vpop.permute.xlu0 %6177
      %6179 = vrot.lane.b32.xlu0 %v5860, 32
      %v6180 = vpop.permute.xlu0 %6179
      %6245 = vrot.lane.b32.xlu0 %v5861, 64
      %v6246 = vpop.permute.xlu0 %6245
      %6247 = vrot.lane.b32.xlu0 %v5862, 64
      %v6248 = vpop.permute.xlu0 %6247
      %6249 = vrot.lane.b32.xlu0 %v5863, 64
      %v6250 = vpop.permute.xlu0 %6249
      %6251 = vrot.lane.b32.xlu0 %v5864, 64
      %v6252 = vpop.permute.xlu0 %6251
      %6253 = vrot.lane.b32.xlu0 %v5865, 64
      %v6254 = vpop.permute.xlu0 %6253
      %6255 = vrot.lane.b32.xlu0 %v5866, 64
      %v6256 = vpop.permute.xlu0 %6255
      %6257 = vrot.lane.b32.xlu0 %v5867, 64
      %v6258 = vpop.permute.xlu0 %6257
      %6259 = vrot.lane.b32.xlu0 %v5868, 64
      %v6260 = vpop.permute.xlu0 %6259
      %6261 = vrot.lane.b32.xlu0 %v5869, 64
      %v6262 = vpop.permute.xlu0 %6261
      %6263 = vrot.lane.b32.xlu0 %v5870, 64
      %v6264 = vpop.permute.xlu0 %6263
      %6265 = vrot.lane.b32.xlu0 %v5871, 64
      %v6266 = vpop.permute.xlu0 %6265
      %6267 = vrot.lane.b32.xlu0 %v5872, 64
      %v6268 = vpop.permute.xlu0 %6267
      %6269 = vrot.lane.b32.xlu0 %v5873, 64
      %v6270 = vpop.permute.xlu0 %6269
      %6271 = vrot.lane.b32.xlu0 %v5874, 64
      %v6272 = vpop.permute.xlu0 %6271
      %6273 = vrot.lane.b32.xlu0 %v5875, 64
      %v6274 = vpop.permute.xlu0 %6273
      %6275 = vrot.lane.b32.xlu0 %v5876, 64
      %v6276 = vpop.permute.xlu0 %6275
      %6277 = vrot.lane.b32.xlu0 %v5877, 64
      %v6278 = vpop.permute.xlu0 %6277
      %6279 = vrot.lane.b32.xlu0 %v5878, 64
      %v6280 = vpop.permute.xlu0 %6279
      %6281 = vrot.lane.b32.xlu0 %v5879, 64
      %v6282 = vpop.permute.xlu0 %6281
      %6283 = vrot.lane.b32.xlu0 %v5880, 64
      %v6284 = vpop.permute.xlu0 %6283
      %6285 = vrot.lane.b32.xlu0 %v5881, 64
      %v6286 = vpop.permute.xlu0 %6285
      %6287 = vrot.lane.b32.xlu0 %v5882, 64
      %v6288 = vpop.permute.xlu0 %6287
      %6289 = vrot.lane.b32.xlu0 %v5883, 64
      %v6290 = vpop.permute.xlu0 %6289
      %6291 = vrot.lane.b32.xlu0 %v5884, 64
      %v6292 = vpop.permute.xlu0 %6291
      %6293 = vrot.lane.b32.xlu0 %v5885, 64
      %v6294 = vpop.permute.xlu0 %6293
      %6295 = vrot.lane.b32.xlu0 %v5886, 64
      %v6296 = vpop.permute.xlu0 %6295
      %6297 = vrot.lane.b32.xlu0 %v5887, 64
      %v6298 = vpop.permute.xlu0 %6297
      %6299 = vrot.lane.b32.xlu0 %v5888, 64
      %v6300 = vpop.permute.xlu0 %6299
      %6301 = vrot.lane.b32.xlu0 %v5889, 64
      %v6302 = vpop.permute.xlu0 %6301
      %6303 = vrot.lane.b32.xlu0 %v5890, 64
      %v6304 = vpop.permute.xlu0 %6303
      %6305 = vrot.lane.b32.xlu0 %v5891, 64
      %v6306 = vpop.permute.xlu0 %6305
      %6307 = vrot.lane.b32.xlu0 %v5892, 64
      %v6308 = vpop.permute.xlu0 %6307
      %6373 = vrot.lane.b32.xlu0 %v5893, 96
      %v6374 = vpop.permute.xlu0 %6373
      %6375 = vrot.lane.b32.xlu0 %v5894, 96
      %v6376 = vpop.permute.xlu0 %6375
      %6377 = vrot.lane.b32.xlu0 %v5895, 96
      %v6378 = vpop.permute.xlu0 %6377
      %6379 = vrot.lane.b32.xlu0 %v5896, 96
      %v6380 = vpop.permute.xlu0 %6379
      %6381 = vrot.lane.b32.xlu0 %v5897, 96
      %v6382 = vpop.permute.xlu0 %6381
      %6383 = vrot.lane.b32.xlu0 %v5898, 96
      %v6384 = vpop.permute.xlu0 %6383
      %6385 = vrot.lane.b32.xlu0 %v5899, 96
      %v6386 = vpop.permute.xlu0 %6385
      %6387 = vrot.lane.b32.xlu0 %v5900, 96
      %v6388 = vpop.permute.xlu0 %6387
      %6389 = vrot.lane.b32.xlu0 %v5901, 96
      %v6390 = vpop.permute.xlu0 %6389
      %6391 = vrot.lane.b32.xlu0 %v5902, 96
      %v6392 = vpop.permute.xlu0 %6391
      %6393 = vrot.lane.b32.xlu0 %v5903, 96
      %v6394 = vpop.permute.xlu0 %6393
      %6395 = vrot.lane.b32.xlu0 %v5904, 96
      %v6396 = vpop.permute.xlu0 %6395
      %6397 = vrot.lane.b32.xlu0 %v5905, 96
      %v6398 = vpop.permute.xlu0 %6397
      %6399 = vrot.lane.b32.xlu0 %v5906, 96
      %v6400 = vpop.permute.xlu0 %6399
      %6401 = vrot.lane.b32.xlu0 %v5907, 96
      %v6402 = vpop.permute.xlu0 %6401
      %6403 = vrot.lane.b32.xlu0 %v5908, 96
      %v6404 = vpop.permute.xlu0 %6403
      %6405 = vrot.lane.b32.xlu0 %v5909, 96
      %v6406 = vpop.permute.xlu0 %6405
      %6407 = vrot.lane.b32.xlu0 %v5910, 96
      %v6408 = vpop.permute.xlu0 %6407
      %6409 = vrot.lane.b32.xlu0 %v5911, 96
      %v6410 = vpop.permute.xlu0 %6409
      %6411 = vrot.lane.b32.xlu0 %v5912, 96
      %v6412 = vpop.permute.xlu0 %6411
      %6413 = vrot.lane.b32.xlu0 %v5913, 96
      %v6414 = vpop.permute.xlu0 %6413
      %6415 = vrot.lane.b32.xlu0 %v5914, 96
      %v6416 = vpop.permute.xlu0 %6415
      %6417 = vrot.lane.b32.xlu0 %v5915, 96
      %v6418 = vpop.permute.xlu0 %6417
      %6419 = vrot.lane.b32.xlu0 %v5916, 96
      %v6420 = vpop.permute.xlu0 %6419
      %6421 = vrot.lane.b32.xlu0 %v5917, 96
      %v6422 = vpop.permute.xlu0 %6421
      %6423 = vrot.lane.b32.xlu0 %v5918, 96
      %v6424 = vpop.permute.xlu0 %6423
      %6425 = vrot.lane.b32.xlu0 %v5919, 96
      %v6426 = vpop.permute.xlu0 %6425
      %6427 = vrot.lane.b32.xlu0 %v5920, 96
      %v6428 = vpop.permute.xlu0 %6427
      %6429 = vrot.lane.b32.xlu0 %v5921, 96
      %v6430 = vpop.permute.xlu0 %6429
      %6431 = vrot.lane.b32.xlu0 %v5922, 96
      %v6432 = vpop.permute.xlu0 %6431
      %6433 = vrot.lane.b32.xlu0 %v5923, 96
      %v6434 = vpop.permute.xlu0 %6433
      %6435 = vrot.lane.b32.xlu0 %v5924, 96
      %v6436 = vpop.permute.xlu0 %6435
      %6501 = vrot.lane.b32.xlu0 %v5957, 32
      %v6502 = vpop.permute.xlu0 %6501
      %6503 = vrot.lane.b32.xlu0 %v5958, 32
      %v6504 = vpop.permute.xlu0 %6503
      %6505 = vrot.lane.b32.xlu0 %v5959, 32
      %v6506 = vpop.permute.xlu0 %6505
      %6507 = vrot.lane.b32.xlu0 %v5960, 32
      %v6508 = vpop.permute.xlu0 %6507
      %6509 = vrot.lane.b32.xlu0 %v5961, 32
      %v6510 = vpop.permute.xlu0 %6509
      %6511 = vrot.lane.b32.xlu0 %v5962, 32
      %v6512 = vpop.permute.xlu0 %6511
      %6513 = vrot.lane.b32.xlu0 %v5963, 32
      %v6514 = vpop.permute.xlu0 %6513
      %6515 = vrot.lane.b32.xlu0 %v5964, 32
      %v6516 = vpop.permute.xlu0 %6515
      %6517 = vrot.lane.b32.xlu0 %v5965, 32
      %v6518 = vpop.permute.xlu0 %6517
      %6519 = vrot.lane.b32.xlu0 %v5966, 32
      %v6520 = vpop.permute.xlu0 %6519
      %6521 = vrot.lane.b32.xlu0 %v5967, 32
      %v6522 = vpop.permute.xlu0 %6521
      %6523 = vrot.lane.b32.xlu0 %v5968, 32
      %v6524 = vpop.permute.xlu0 %6523
      %6525 = vrot.lane.b32.xlu0 %v5969, 32
      %v6526 = vpop.permute.xlu0 %6525
      %6527 = vrot.lane.b32.xlu0 %v5970, 32
      %v6528 = vpop.permute.xlu0 %6527
      %6529 = vrot.lane.b32.xlu0 %v5971, 32
      %v6530 = vpop.permute.xlu0 %6529
      %6531 = vrot.lane.b32.xlu0 %v5972, 32
      %v6532 = vpop.permute.xlu0 %6531
      %6533 = vrot.lane.b32.xlu0 %v5973, 32
      %v6534 = vpop.permute.xlu0 %6533
      %6535 = vrot.lane.b32.xlu0 %v5974, 32
      %v6536 = vpop.permute.xlu0 %6535
      %6537 = vrot.lane.b32.xlu0 %v5975, 32
      %v6538 = vpop.permute.xlu0 %6537
      %6539 = vrot.lane.b32.xlu0 %v5976, 32
      %v6540 = vpop.permute.xlu0 %6539
      %6541 = vrot.lane.b32.xlu0 %v5977, 32
      %v6542 = vpop.permute.xlu0 %6541
      %6543 = vrot.lane.b32.xlu0 %v5978, 32
      %v6544 = vpop.permute.xlu0 %6543
      %6545 = vrot.lane.b32.xlu0 %v5979, 32
      %v6546 = vpop.permute.xlu0 %6545
      %6547 = vrot.lane.b32.xlu0 %v5980, 32
      %v6548 = vpop.permute.xlu0 %6547
      %6549 = vrot.lane.b32.xlu0 %v5981, 32
      %v6550 = vpop.permute.xlu0 %6549
      %6551 = vrot.lane.b32.xlu0 %v5982, 32
      %v6552 = vpop.permute.xlu0 %6551
      %6553 = vrot.lane.b32.xlu0 %v5983, 32
      %v6554 = vpop.permute.xlu0 %6553
      %6555 = vrot.lane.b32.xlu0 %v5984, 32
      %v6556 = vpop.permute.xlu0 %6555
      %6557 = vrot.lane.b32.xlu0 %v5985, 32
      %v6558 = vpop.permute.xlu0 %6557
      %6559 = vrot.lane.b32.xlu0 %v5986, 32
      %v6560 = vpop.permute.xlu0 %6559
      %6561 = vrot.lane.b32.xlu0 %v5987, 32
      %v6562 = vpop.permute.xlu0 %6561
      %6563 = vrot.lane.b32.xlu0 %v5988, 32
      %v6564 = vpop.permute.xlu0 %6563
      %6629 = vrot.lane.b32.xlu0 %v5989, 64
      %v6630 = vpop.permute.xlu0 %6629
      %6631 = vrot.lane.b32.xlu0 %v5990, 64
      %v6632 = vpop.permute.xlu0 %6631
      %6633 = vrot.lane.b32.xlu0 %v5991, 64
      %v6634 = vpop.permute.xlu0 %6633
      %6635 = vrot.lane.b32.xlu0 %v5992, 64
      %v6636 = vpop.permute.xlu0 %6635
      %6637 = vrot.lane.b32.xlu0 %v5993, 64
      %v6638 = vpop.permute.xlu0 %6637
      %6639 = vrot.lane.b32.xlu0 %v5994, 64
      %v6640 = vpop.permute.xlu0 %6639
      %6641 = vrot.lane.b32.xlu0 %v5995, 64
      %v6642 = vpop.permute.xlu0 %6641
      %6643 = vrot.lane.b32.xlu0 %v5996, 64
      %v6644 = vpop.permute.xlu0 %6643
      %6645 = vrot.lane.b32.xlu0 %v5997, 64
      %v6646 = vpop.permute.xlu0 %6645
      %6647 = vrot.lane.b32.xlu0 %v5998, 64
      %v6648 = vpop.permute.xlu0 %6647
      %6649 = vrot.lane.b32.xlu0 %v5999, 64
      %v6650 = vpop.permute.xlu0 %6649
      %6651 = vrot.lane.b32.xlu0 %v6000, 64
      %v6652 = vpop.permute.xlu0 %6651
      %6653 = vrot.lane.b32.xlu0 %v6001, 64
      %v6654 = vpop.permute.xlu0 %6653
      %6655 = vrot.lane.b32.xlu0 %v6002, 64
      %v6656 = vpop.permute.xlu0 %6655
      %6657 = vrot.lane.b32.xlu0 %v6003, 64
      %v6658 = vpop.permute.xlu0 %6657
      %6659 = vrot.lane.b32.xlu0 %v6004, 64
      %v6660 = vpop.permute.xlu0 %6659
      %6661 = vrot.lane.b32.xlu0 %v6005, 64
      %v6662 = vpop.permute.xlu0 %6661
      %6663 = vrot.lane.b32.xlu0 %v6006, 64
      %v6664 = vpop.permute.xlu0 %6663
      %6665 = vrot.lane.b32.xlu0 %v6007, 64
      %v6666 = vpop.permute.xlu0 %6665
      %6667 = vrot.lane.b32.xlu0 %v6008, 64
      %v6668 = vpop.permute.xlu0 %6667
      %6669 = vrot.lane.b32.xlu0 %v6009, 64
      %v6670 = vpop.permute.xlu0 %6669
      %6671 = vrot.lane.b32.xlu0 %v6010, 64
      %v6672 = vpop.permute.xlu0 %6671
      %6673 = vrot.lane.b32.xlu0 %v6011, 64
      %v6674 = vpop.permute.xlu0 %6673
      %6675 = vrot.lane.b32.xlu0 %v6012, 64
      %v6676 = vpop.permute.xlu0 %6675
      %6677 = vrot.lane.b32.xlu0 %v6013, 64
      %v6678 = vpop.permute.xlu0 %6677
      %6679 = vrot.lane.b32.xlu0 %v6014, 64
      %v6680 = vpop.permute.xlu0 %6679
      %6681 = vrot.lane.b32.xlu0 %v6015, 64
      %v6682 = vpop.permute.xlu0 %6681
      %6683 = vrot.lane.b32.xlu0 %v6016, 64
      %v6684 = vpop.permute.xlu0 %6683
      %6685 = vrot.lane.b32.xlu0 %v6017, 64
      %v6686 = vpop.permute.xlu0 %6685
      %6687 = vrot.lane.b32.xlu0 %v6018, 64
      %v6688 = vpop.permute.xlu0 %6687
      %6689 = vrot.lane.b32.xlu0 %v6019, 64
      %v6690 = vpop.permute.xlu0 %6689
      %6691 = vrot.lane.b32.xlu0 %v6020, 64
      %v6692 = vpop.permute.xlu0 %6691
      %6757 = vrot.lane.b32.xlu0 %v6021, 96
      %v6758 = vpop.permute.xlu0 %6757
      %6759 = vrot.lane.b32.xlu0 %v6022, 96
      %v6760 = vpop.permute.xlu0 %6759
      %6761 = vrot.lane.b32.xlu0 %v6023, 96
      %v6762 = vpop.permute.xlu0 %6761
      %6763 = vrot.lane.b32.xlu0 %v6024, 96
      %v6764 = vpop.permute.xlu0 %6763
      %6765 = vrot.lane.b32.xlu0 %v6025, 96
      %v6766 = vpop.permute.xlu0 %6765
      %6767 = vrot.lane.b32.xlu0 %v6026, 96
      %v6768 = vpop.permute.xlu0 %6767
      %6769 = vrot.lane.b32.xlu0 %v6027, 96
      %v6770 = vpop.permute.xlu0 %6769
      %6771 = vrot.lane.b32.xlu0 %v6028, 96
      %v6772 = vpop.permute.xlu0 %6771
      %6773 = vrot.lane.b32.xlu0 %v6029, 96
      %v6774 = vpop.permute.xlu0 %6773
      %6775 = vrot.lane.b32.xlu0 %v6030, 96
      %v6776 = vpop.permute.xlu0 %6775
      %6777 = vrot.lane.b32.xlu0 %v6031, 96
      %v6778 = vpop.permute.xlu0 %6777
      %6779 = vrot.lane.b32.xlu0 %v6032, 96
      %v6780 = vpop.permute.xlu0 %6779
      %6781 = vrot.lane.b32.xlu0 %v6033, 96
      %v6782 = vpop.permute.xlu0 %6781
      %6783 = vrot.lane.b32.xlu0 %v6034, 96
      %v6784 = vpop.permute.xlu0 %6783
      %6785 = vrot.lane.b32.xlu0 %v6035, 96
      %v6786 = vpop.permute.xlu0 %6785
      %6787 = vrot.lane.b32.xlu0 %v6036, 96
      %v6788 = vpop.permute.xlu0 %6787
      %6789 = vrot.lane.b32.xlu0 %v6037, 96
      %v6790 = vpop.permute.xlu0 %6789
      %6791 = vrot.lane.b32.xlu0 %v6038, 96
      %v6792 = vpop.permute.xlu0 %6791
      %6793 = vrot.lane.b32.xlu0 %v6039, 96
      %v6794 = vpop.permute.xlu0 %6793
      %6795 = vrot.lane.b32.xlu0 %v6040, 96
      %v6796 = vpop.permute.xlu0 %6795
      %6797 = vrot.lane.b32.xlu0 %v6041, 96
      %v6798 = vpop.permute.xlu0 %6797
      %6799 = vrot.lane.b32.xlu0 %v6042, 96
      %v6800 = vpop.permute.xlu0 %6799
      %6801 = vrot.lane.b32.xlu0 %v6043, 96
      %v6802 = vpop.permute.xlu0 %6801
      %6803 = vrot.lane.b32.xlu0 %v6044, 96
      %v6804 = vpop.permute.xlu0 %6803
      %6805 = vrot.lane.b32.xlu0 %v6045, 96
      %v6806 = vpop.permute.xlu0 %6805
      %6807 = vrot.lane.b32.xlu0 %v6046, 96
      %v6808 = vpop.permute.xlu0 %6807
      %6809 = vrot.lane.b32.xlu0 %v6047, 96
      %v6810 = vpop.permute.xlu0 %6809
      %6811 = vrot.lane.b32.xlu0 %v6048, 96
      %v6812 = vpop.permute.xlu0 %6811
      %6813 = vrot.lane.b32.xlu0 %v6049, 96
      %v6814 = vpop.permute.xlu0 %6813
      %6815 = vrot.lane.b32.xlu0 %v6050, 96
      %v6816 = vpop.permute.xlu0 %6815
      %6817 = vrot.lane.b32.xlu0 %v6051, 96
      %v6818 = vpop.permute.xlu0 %6817
      %6819 = vrot.lane.b32.xlu0 %v6052, 96
      %v6820 = vpop.permute.xlu0 %6819
      %v6853 = vsel %vm279, %v5797, %v6118
      %v6854 = vsel %vm279, %v5798, %v6120
      %v6855 = vsel %vm279, %v5799, %v6122
      %v6856 = vsel %vm279, %v5800, %v6124
      %v6857 = vsel %vm279, %v5801, %v6126
      %v6858 = vsel %vm279, %v5802, %v6128
      %v6859 = vsel %vm279, %v5803, %v6130
      %v6860 = vsel %vm279, %v5804, %v6132
      %v6861 = vsel %vm279, %v5805, %v6134
      %v6862 = vsel %vm279, %v5806, %v6136
      %v6863 = vsel %vm279, %v5807, %v6138
      %v6864 = vsel %vm279, %v5808, %v6140
      %v6865 = vsel %vm279, %v5809, %v6142
      %v6866 = vsel %vm279, %v5810, %v6144
      %v6867 = vsel %vm279, %v5811, %v6146
      %v6868 = vsel %vm279, %v5812, %v6148
      %v6869 = vsel %vm279, %v5813, %v6150
      %v6870 = vsel %vm279, %v5814, %v6152
      %v6871 = vsel %vm279, %v5815, %v6154
      %v6872 = vsel %vm279, %v5816, %v6156
      %v6873 = vsel %vm279, %v5817, %v6158
      %v6874 = vsel %vm279, %v5818, %v6160
      %v6875 = vsel %vm279, %v5819, %v6162
      %v6876 = vsel %vm279, %v5820, %v6164
      %v6877 = vsel %vm279, %v5821, %v6166
      %v6878 = vsel %vm279, %v5822, %v6168
      %v6879 = vsel %vm279, %v5823, %v6170
      %v6880 = vsel %vm279, %v5824, %v6172
      %v6881 = vsel %vm279, %v5825, %v6174
      %v6882 = vsel %vm279, %v5826, %v6176
      %v6883 = vsel %vm279, %v5827, %v6178
      %v6884 = vsel %vm279, %v5828, %v6180
      %v6885 = vsel %vm1522, %v6853, %v6246
      %v6886 = vsel %vm1522, %v6854, %v6248
      %v6887 = vsel %vm1522, %v6855, %v6250
      %v6888 = vsel %vm1522, %v6856, %v6252
      %v6889 = vsel %vm1522, %v6857, %v6254
      %v6890 = vsel %vm1522, %v6858, %v6256
      %v6891 = vsel %vm1522, %v6859, %v6258
      %v6892 = vsel %vm1522, %v6860, %v6260
      %v6893 = vsel %vm1522, %v6861, %v6262
      %v6894 = vsel %vm1522, %v6862, %v6264
      %v6895 = vsel %vm1522, %v6863, %v6266
      %v6896 = vsel %vm1522, %v6864, %v6268
      %v6897 = vsel %vm1522, %v6865, %v6270
      %v6898 = vsel %vm1522, %v6866, %v6272
      %v6899 = vsel %vm1522, %v6867, %v6274
      %v6900 = vsel %vm1522, %v6868, %v6276
      %v6901 = vsel %vm1522, %v6869, %v6278
      %v6902 = vsel %vm1522, %v6870, %v6280
      %v6903 = vsel %vm1522, %v6871, %v6282
      %v6904 = vsel %vm1522, %v6872, %v6284
      %v6905 = vsel %vm1522, %v6873, %v6286
      %v6906 = vsel %vm1522, %v6874, %v6288
      %v6907 = vsel %vm1522, %v6875, %v6290
      %v6908 = vsel %vm1522, %v6876, %v6292
      %v6909 = vsel %vm1522, %v6877, %v6294
      %v6910 = vsel %vm1522, %v6878, %v6296
      %v6911 = vsel %vm1522, %v6879, %v6298
      %v6912 = vsel %vm1522, %v6880, %v6300
      %v6913 = vsel %vm1522, %v6881, %v6302
      %v6914 = vsel %vm1522, %v6882, %v6304
      %v6915 = vsel %vm1522, %v6883, %v6306
      %v6916 = vsel %vm1522, %v6884, %v6308
      %v6917 = vsel %vm1555, %v6885, %v6374
      %v6918 = vsel %vm1555, %v6886, %v6376
      %v6919 = vsel %vm1555, %v6887, %v6378
      %v6920 = vsel %vm1555, %v6888, %v6380
      %v6921 = vsel %vm1555, %v6889, %v6382
      %v6922 = vsel %vm1555, %v6890, %v6384
      %v6923 = vsel %vm1555, %v6891, %v6386
      %v6924 = vsel %vm1555, %v6892, %v6388
      %v6925 = vsel %vm1555, %v6893, %v6390
      %v6926 = vsel %vm1555, %v6894, %v6392
      %v6927 = vsel %vm1555, %v6895, %v6394
      %v6928 = vsel %vm1555, %v6896, %v6396
      %v6929 = vsel %vm1555, %v6897, %v6398
      %v6930 = vsel %vm1555, %v6898, %v6400
      %v6931 = vsel %vm1555, %v6899, %v6402
      %v6932 = vsel %vm1555, %v6900, %v6404
      %v6933 = vsel %vm1555, %v6901, %v6406
      %v6934 = vsel %vm1555, %v6902, %v6408
      %v6935 = vsel %vm1555, %v6903, %v6410
      %v6936 = vsel %vm1555, %v6904, %v6412
      %v6937 = vsel %vm1555, %v6905, %v6414
      %v6938 = vsel %vm1555, %v6906, %v6416
      %v6939 = vsel %vm1555, %v6907, %v6418
      %v6940 = vsel %vm1555, %v6908, %v6420
      %v6941 = vsel %vm1555, %v6909, %v6422
      %v6942 = vsel %vm1555, %v6910, %v6424
      %v6943 = vsel %vm1555, %v6911, %v6426
      %v6944 = vsel %vm1555, %v6912, %v6428
      %v6945 = vsel %vm1555, %v6913, %v6430
      %v6946 = vsel %vm1555, %v6914, %v6432
      %v6947 = vsel %vm1555, %v6915, %v6434
      %v6948 = vsel %vm1555, %v6916, %v6436
      %v6949 = vsel %vm279, %v5925, %v6502
      %v6950 = vsel %vm279, %v5926, %v6504
      %v6951 = vsel %vm279, %v5927, %v6506
      %v6952 = vsel %vm279, %v5928, %v6508
      %v6953 = vsel %vm279, %v5929, %v6510
      %v6954 = vsel %vm279, %v5930, %v6512
      %v6955 = vsel %vm279, %v5931, %v6514
      %v6956 = vsel %vm279, %v5932, %v6516
      %v6957 = vsel %vm279, %v5933, %v6518
      %v6958 = vsel %vm279, %v5934, %v6520
      %v6959 = vsel %vm279, %v5935, %v6522
      %v6960 = vsel %vm279, %v5936, %v6524
      %v6961 = vsel %vm279, %v5937, %v6526
      %v6962 = vsel %vm279, %v5938, %v6528
      %v6963 = vsel %vm279, %v5939, %v6530
      %v6964 = vsel %vm279, %v5940, %v6532
      %v6965 = vsel %vm279, %v5941, %v6534
      %v6966 = vsel %vm279, %v5942, %v6536
      %v6967 = vsel %vm279, %v5943, %v6538
      %v6968 = vsel %vm279, %v5944, %v6540
      %v6969 = vsel %vm279, %v5945, %v6542
      %v6970 = vsel %vm279, %v5946, %v6544
      %v6971 = vsel %vm279, %v5947, %v6546
      %v6972 = vsel %vm279, %v5948, %v6548
      %v6973 = vsel %vm279, %v5949, %v6550
      %v6974 = vsel %vm279, %v5950, %v6552
      %v6975 = vsel %vm279, %v5951, %v6554
      %v6976 = vsel %vm279, %v5952, %v6556
      %v6977 = vsel %vm279, %v5953, %v6558
      %v6978 = vsel %vm279, %v5954, %v6560
      %v6979 = vsel %vm279, %v5955, %v6562
      %v6980 = vsel %vm279, %v5956, %v6564
      %v6981 = vsel %vm1522, %v6949, %v6630
      %v6982 = vsel %vm1522, %v6950, %v6632
      %v6983 = vsel %vm1522, %v6951, %v6634
      %v6984 = vsel %vm1522, %v6952, %v6636
      %v6985 = vsel %vm1522, %v6953, %v6638
      %v6986 = vsel %vm1522, %v6954, %v6640
      %v6987 = vsel %vm1522, %v6955, %v6642
      %v6988 = vsel %vm1522, %v6956, %v6644
      %v6989 = vsel %vm1522, %v6957, %v6646
      %v6990 = vsel %vm1522, %v6958, %v6648
      %v6991 = vsel %vm1522, %v6959, %v6650
      %v6992 = vsel %vm1522, %v6960, %v6652
      %v6993 = vsel %vm1522, %v6961, %v6654
      %v6994 = vsel %vm1522, %v6962, %v6656
      %v6995 = vsel %vm1522, %v6963, %v6658
      %v6996 = vsel %vm1522, %v6964, %v6660
      %v6997 = vsel %vm1522, %v6965, %v6662
      %v6998 = vsel %vm1522, %v6966, %v6664
      %v6999 = vsel %vm1522, %v6967, %v6666
      %v7000 = vsel %vm1522, %v6968, %v6668
      %v7001 = vsel %vm1522, %v6969, %v6670
      %v7002 = vsel %vm1522, %v6970, %v6672
      %v7003 = vsel %vm1522, %v6971, %v6674
      %v7004 = vsel %vm1522, %v6972, %v6676
      %v7005 = vsel %vm1522, %v6973, %v6678
      %v7006 = vsel %vm1522, %v6974, %v6680
      %v7007 = vsel %vm1522, %v6975, %v6682
      %v7008 = vsel %vm1522, %v6976, %v6684
      %v7009 = vsel %vm1522, %v6977, %v6686
      %v7010 = vsel %vm1522, %v6978, %v6688
      %v7011 = vsel %vm1522, %v6979, %v6690
      %v7012 = vsel %vm1522, %v6980, %v6692
      %v7013 = vsel %vm1555, %v6981, %v6758
      %v7014 = vsel %vm1555, %v6982, %v6760
      %v7015 = vsel %vm1555, %v6983, %v6762
      %v7016 = vsel %vm1555, %v6984, %v6764
      %v7017 = vsel %vm1555, %v6985, %v6766
      %v7018 = vsel %vm1555, %v6986, %v6768
      %v7019 = vsel %vm1555, %v6987, %v6770
      %v7020 = vsel %vm1555, %v6988, %v6772
      %v7021 = vsel %vm1555, %v6989, %v6774
      %v7022 = vsel %vm1555, %v6990, %v6776
      %v7023 = vsel %vm1555, %v6991, %v6778
      %v7024 = vsel %vm1555, %v6992, %v6780
      %v7025 = vsel %vm1555, %v6993, %v6782
      %v7026 = vsel %vm1555, %v6994, %v6784
      %v7027 = vsel %vm1555, %v6995, %v6786
      %v7028 = vsel %vm1555, %v6996, %v6788
      %v7029 = vsel %vm1555, %v6997, %v6790
      %v7030 = vsel %vm1555, %v6998, %v6792
      %v7031 = vsel %vm1555, %v6999, %v6794
      %v7032 = vsel %vm1555, %v7000, %v6796
      %v7033 = vsel %vm1555, %v7001, %v6798
      %v7034 = vsel %vm1555, %v7002, %v6800
      %v7035 = vsel %vm1555, %v7003, %v6802
      %v7036 = vsel %vm1555, %v7004, %v6804
      %v7037 = vsel %vm1555, %v7005, %v6806
      %v7038 = vsel %vm1555, %v7006, %v6808
      %v7039 = vsel %vm1555, %v7007, %v6810
      %v7040 = vsel %vm1555, %v7008, %v6812
      %v7041 = vsel %vm1555, %v7009, %v6814
      %v7042 = vsel %vm1555, %v7010, %v6816
      %v7043 = vsel %vm1555, %v7011, %v6818
      %v7044 = vsel %vm1555, %v7012, %v6820
      %v7045 = vld [vmem:[%s3] sm:$0xff]
      %v7046 = vld [vmem:[%s3 + $0x8] sm:$0xff]
      %v7047 = vld [vmem:[%s3 + $0x10] sm:$0xff]
      %v7048 = vld [vmem:[%s3 + $0x18] sm:$0xff]
      %v7049 = vld [vmem:[%s3 + $0x20] sm:$0xff]
      %v7050 = vld [vmem:[%s3 + $0x28] sm:$0xff]
      %v7051 = vld [vmem:[%s3 + $0x30] sm:$0xff]
      %v7052 = vld [vmem:[%s3 + $0x38] sm:$0xff]
      %v7053 = vld [vmem:[%s3 + $0x40] sm:$0xff]
      %v7054 = vld [vmem:[%s3 + $0x48] sm:$0xff]
      %v7055 = vld [vmem:[%s3 + $0x50] sm:$0xff]
      %v7056 = vld [vmem:[%s3 + $0x58] sm:$0xff]
      %v7057 = vld [vmem:[%s3 + $0x60] sm:$0xff]
      %v7058 = vld [vmem:[%s3 + $0x68] sm:$0xff]
      %v7059 = vld [vmem:[%s3 + $0x70] sm:$0xff]
      %v7060 = vld [vmem:[%s3 + $0x78] sm:$0xff]
      %v7061 = vld [vmem:[%s3 + $0x80] sm:$0xff]
      %v7062 = vld [vmem:[%s3 + $0x88] sm:$0xff]
      %v7063 = vld [vmem:[%s3 + $0x90] sm:$0xff]
      %v7064 = vld [vmem:[%s3 + $0x98] sm:$0xff]
      %v7065 = vld [vmem:[%s3 + $0xa0] sm:$0xff]
      %v7066 = vld [vmem:[%s3 + $0xa8] sm:$0xff]
      %v7067 = vld [vmem:[%s3 + $0xb0] sm:$0xff]
      %v7068 = vld [vmem:[%s3 + $0xb8] sm:$0xff]
      %v7069 = vld [vmem:[%s3 + $0xc0] sm:$0xff]
      %v7070 = vld [vmem:[%s3 + $0xc8] sm:$0xff]
      %v7071 = vld [vmem:[%s3 + $0xd0] sm:$0xff]
      %v7072 = vld [vmem:[%s3 + $0xd8] sm:$0xff]
      %v7073 = vld [vmem:[%s3 + $0xe0] sm:$0xff]
      %v7074 = vld [vmem:[%s3 + $0xe8] sm:$0xff]
      %v7075 = vld [vmem:[%s3 + $0xf0] sm:$0xff]
      %v7076 = vld [vmem:[%s3 + $0xf8] sm:$0xff]
      %v7077 = vld [vmem:[%s3 + $0x100] sm:$0xff]
      %v7078 = vld [vmem:[%s3 + $0x108] sm:$0xff]
      %v7079 = vld [vmem:[%s3 + $0x110] sm:$0xff]
      %v7080 = vld [vmem:[%s3 + $0x118] sm:$0xff]
      %v7081 = vld [vmem:[%s4] sm:$0x1]
      %v7083 = vperm.slane %v7081, 0
      %v7086 = vsel %vm279, %v6053, 0
      %v7089 = vsel %vm279, %v6054, 0
      %v7092 = vsel %vm279, %v6055, 0
      %v7095 = vsel %vm279, %v6056, 0
      %v7098 = vsel %vm279, %v6057, 0
      %v7101 = vsel %vm279, %v6058, 0
      %v7104 = vsel %vm279, %v6059, 0
      %v7107 = vsel %vm279, %v6060, 0
      %v7110 = vsel %vm279, %v6061, 0
      %v7113 = vsel %vm279, %v6062, 0
      %v7116 = vsel %vm279, %v6063, 0
      %v7119 = vsel %vm279, %v6064, 0
      %v7122 = vsel %vm279, %v6065, 0
      %v7125 = vsel %vm279, %v6066, 0
      %v7128 = vsel %vm279, %v6067, 0
      %v7131 = vsel %vm279, %v6068, 0
      %v7134 = vsel %vm279, %v6069, 0
      %v7137 = vsel %vm279, %v6070, 0
      %v7140 = vsel %vm279, %v6071, 0
      %v7143 = vsel %vm279, %v6072, 0
      %v7146 = vsel %vm279, %v6073, 0
      %v7149 = vsel %vm279, %v6074, 0
      %v7152 = vsel %vm279, %v6075, 0
      %v7155 = vsel %vm279, %v6076, 0
      %v7158 = vsel %vm279, %v6077, 0
      %v7161 = vsel %vm279, %v6078, 0
      %v7164 = vsel %vm279, %v6079, 0
      %v7167 = vsel %vm279, %v6080, 0
      %v7170 = vsel %vm279, %v6081, 0
      %v7173 = vsel %vm279, %v6082, 0
      %v7176 = vsel %vm279, %v6083, 0
      %v7179 = vsel %vm279, %v6084, 0
      %7181 = vmatpush.msra.mxu0 %v7060
      %7182 = vmatpush.msra.mxu0 %v7059
      %7183 = vmatpush.msra.mxu0 %v7058
      %7184 = vmatpush.msra.mxu0 %v7057
      %7185 = vmatpush.msra.mxu0 %v7056
      %7186 = vmatpush.msra.mxu0 %v7055
      %7187 = vmatpush.msra.mxu0 %v7054
      %7188 = vmatpush.msra.mxu0 %v7053
      %7189 = vmatpush.msra.mxu0 %v7052
      %7190 = vmatpush.msra.mxu0 %v7051
      %7191 = vmatpush.msra.mxu0 %v7050
      %7192 = vmatpush.msra.mxu0 %v7049
      %7193 = vmatpush.msra.mxu0 %v7048
      %7194 = vmatpush.msra.mxu0 %v7047
      %7195 = vmatpush.msra.mxu0 %v7046
      %7196 = vmatpush.msra.mxu0 %v7045
      %7197 = vmatmul.f32.gmra.mxu0 %v6917
      %v7198 = vpop.f32.mrf.mxu0
      %v7199 = vadd.f32 %v7083, %v7198
      %7200 = vmatmul.f32.gmra.mxu0 %v6918
      %v7201 = vpop.f32.mrf.mxu0
      %v7202 = vadd.f32 %v7083, %v7201
      %7203 = vmatmul.f32.gmra.mxu0 %v6919
      %v7204 = vpop.f32.mrf.mxu0
      %v7205 = vadd.f32 %v7083, %v7204
      %7206 = vmatmul.f32.gmra.mxu0 %v6920
      %v7207 = vpop.f32.mrf.mxu0
      %v7208 = vadd.f32 %v7083, %v7207
      %7209 = vmatmul.f32.gmra.mxu0 %v6921
      %v7210 = vpop.f32.mrf.mxu0
      %v7211 = vadd.f32 %v7083, %v7210
      %7212 = vmatmul.f32.gmra.mxu0 %v6922
      %v7213 = vpop.f32.mrf.mxu0
      %v7214 = vadd.f32 %v7083, %v7213
      %7215 = vmatmul.f32.gmra.mxu0 %v6923
      %v7216 = vpop.f32.mrf.mxu0
      %v7217 = vadd.f32 %v7083, %v7216
      %7218 = vmatmul.f32.gmra.mxu0 %v6924
      %v7219 = vpop.f32.mrf.mxu0
      %v7220 = vadd.f32 %v7083, %v7219
      %7221 = vmatmul.f32.gmra.mxu0 %v6925
      %v7222 = vpop.f32.mrf.mxu0
      %v7223 = vadd.f32 %v7083, %v7222
      %7224 = vmatmul.f32.gmra.mxu0 %v6926
      %v7225 = vpop.f32.mrf.mxu0
      %v7226 = vadd.f32 %v7083, %v7225
      %7227 = vmatmul.f32.gmra.mxu0 %v6927
      %v7228 = vpop.f32.mrf.mxu0
      %v7229 = vadd.f32 %v7083, %v7228
      %7230 = vmatmul.f32.gmra.mxu0 %v6928
      %v7231 = vpop.f32.mrf.mxu0
      %v7232 = vadd.f32 %v7083, %v7231
      %7233 = vmatmul.f32.gmra.mxu0 %v6929
      %v7234 = vpop.f32.mrf.mxu0
      %v7235 = vadd.f32 %v7083, %v7234
      %7236 = vmatmul.f32.gmra.mxu0 %v6930
      %v7237 = vpop.f32.mrf.mxu0
      %v7238 = vadd.f32 %v7083, %v7237
      %7239 = vmatmul.f32.gmra.mxu0 %v6931
      %v7240 = vpop.f32.mrf.mxu0
      %v7241 = vadd.f32 %v7083, %v7240
      %7242 = vmatmul.f32.gmra.mxu0 %v6932
      %v7243 = vpop.f32.mrf.mxu0
      %v7244 = vadd.f32 %v7083, %v7243
      %7245 = vmatmul.f32.gmra.mxu0 %v6933
      %v7246 = vpop.f32.mrf.mxu0
      %v7247 = vadd.f32 %v7083, %v7246
      %7248 = vmatmul.f32.gmra.mxu0 %v6934
      %v7249 = vpop.f32.mrf.mxu0
      %v7250 = vadd.f32 %v7083, %v7249
      %7251 = vmatmul.f32.gmra.mxu0 %v6935
      %v7252 = vpop.f32.mrf.mxu0
      %v7253 = vadd.f32 %v7083, %v7252
      %7254 = vmatmul.f32.gmra.mxu0 %v6936
      %v7255 = vpop.f32.mrf.mxu0
      %v7256 = vadd.f32 %v7083, %v7255
      %7257 = vmatmul.f32.gmra.mxu0 %v6937
      %v7258 = vpop.f32.mrf.mxu0
      %v7259 = vadd.f32 %v7083, %v7258
      %7260 = vmatmul.f32.gmra.mxu0 %v6938
      %v7261 = vpop.f32.mrf.mxu0
      %v7262 = vadd.f32 %v7083, %v7261
      %7263 = vmatmul.f32.gmra.mxu0 %v6939
      %v7264 = vpop.f32.mrf.mxu0
      %v7265 = vadd.f32 %v7083, %v7264
      %7266 = vmatmul.f32.gmra.mxu0 %v6940
      %v7267 = vpop.f32.mrf.mxu0
      %v7268 = vadd.f32 %v7083, %v7267
      %7269 = vmatmul.f32.gmra.mxu0 %v6941
      %v7270 = vpop.f32.mrf.mxu0
      %v7271 = vadd.f32 %v7083, %v7270
      %7272 = vmatmul.f32.gmra.mxu0 %v6942
      %v7273 = vpop.f32.mrf.mxu0
      %v7274 = vadd.f32 %v7083, %v7273
      %7275 = vmatmul.f32.gmra.mxu0 %v6943
      %v7276 = vpop.f32.mrf.mxu0
      %v7277 = vadd.f32 %v7083, %v7276
      %7278 = vmatmul.f32.gmra.mxu0 %v6944
      %v7279 = vpop.f32.mrf.mxu0
      %v7280 = vadd.f32 %v7083, %v7279
      %7281 = vmatmul.f32.gmra.mxu0 %v6945
      %v7282 = vpop.f32.mrf.mxu0
      %v7283 = vadd.f32 %v7083, %v7282
      %7284 = vmatmul.f32.gmra.mxu0 %v6946
      %v7285 = vpop.f32.mrf.mxu0
      %v7286 = vadd.f32 %v7083, %v7285
      %7287 = vmatmul.f32.gmra.mxu0 %v6947
      %v7288 = vpop.f32.mrf.mxu0
      %v7289 = vadd.f32 %v7083, %v7288
      %7290 = vmatmul.f32.gmra.mxu0 %v6948
      %v7291 = vpop.f32.mrf.mxu0
      %v7292 = vadd.f32 %v7083, %v7291
      %7293 = vdwg.mxu0
      %7294 = vmatpush.msra.mxu0 %v7076
      %7295 = vmatpush.msra.mxu0 %v7075
      %7296 = vmatpush.msra.mxu0 %v7074
      %7297 = vmatpush.msra.mxu0 %v7073
      %7298 = vmatpush.msra.mxu0 %v7072
      %7299 = vmatpush.msra.mxu0 %v7071
      %7300 = vmatpush.msra.mxu0 %v7070
      %7301 = vmatpush.msra.mxu0 %v7069
      %7302 = vmatpush.msra.mxu0 %v7068
      %7303 = vmatpush.msra.mxu0 %v7067
      %7304 = vmatpush.msra.mxu0 %v7066
      %7305 = vmatpush.msra.mxu0 %v7065
      %7306 = vmatpush.msra.mxu0 %v7064
      %7307 = vmatpush.msra.mxu0 %v7063
      %7308 = vmatpush.msra.mxu0 %v7062
      %7309 = vmatpush.msra.mxu0 %v7061
      %7310 = vmatmul.f32.gmra.mxu0 %v7013
      %v7311 = vpop.f32.mrf.mxu0
      %v7312 = vadd.f32 %v7199, %v7311
      %7313 = vmatmul.f32.gmra.mxu0 %v7014
      %v7314 = vpop.f32.mrf.mxu0
      %v7315 = vadd.f32 %v7202, %v7314
      %7316 = vmatmul.f32.gmra.mxu0 %v7015
      %v7317 = vpop.f32.mrf.mxu0
      %v7318 = vadd.f32 %v7205, %v7317
      %7319 = vmatmul.f32.gmra.mxu0 %v7016
      %v7320 = vpop.f32.mrf.mxu0
      %v7321 = vadd.f32 %v7208, %v7320
      %7322 = vmatmul.f32.gmra.mxu0 %v7017
      %v7323 = vpop.f32.mrf.mxu0
      %v7324 = vadd.f32 %v7211, %v7323
      %7325 = vmatmul.f32.gmra.mxu0 %v7018
      %v7326 = vpop.f32.mrf.mxu0
      %v7327 = vadd.f32 %v7214, %v7326
      %7328 = vmatmul.f32.gmra.mxu0 %v7019
      %v7329 = vpop.f32.mrf.mxu0
      %v7330 = vadd.f32 %v7217, %v7329
      %7331 = vmatmul.f32.gmra.mxu0 %v7020
      %v7332 = vpop.f32.mrf.mxu0
      %v7333 = vadd.f32 %v7220, %v7332
      %7334 = vmatmul.f32.gmra.mxu0 %v7021
      %v7335 = vpop.f32.mrf.mxu0
      %v7336 = vadd.f32 %v7223, %v7335
      %7337 = vmatmul.f32.gmra.mxu0 %v7022
      %v7338 = vpop.f32.mrf.mxu0
      %v7339 = vadd.f32 %v7226, %v7338
      %7340 = vmatmul.f32.gmra.mxu0 %v7023
      %v7341 = vpop.f32.mrf.mxu0
      %v7342 = vadd.f32 %v7229, %v7341
      %7343 = vmatmul.f32.gmra.mxu0 %v7024
      %v7344 = vpop.f32.mrf.mxu0
      %v7345 = vadd.f32 %v7232, %v7344
      %7346 = vmatmul.f32.gmra.mxu0 %v7025
      %v7347 = vpop.f32.mrf.mxu0
      %v7348 = vadd.f32 %v7235, %v7347
      %7349 = vmatmul.f32.gmra.mxu0 %v7026
      %v7350 = vpop.f32.mrf.mxu0
      %v7351 = vadd.f32 %v7238, %v7350
      %7352 = vmatmul.f32.gmra.mxu0 %v7027
      %v7353 = vpop.f32.mrf.mxu0
      %v7354 = vadd.f32 %v7241, %v7353
      %7355 = vmatmul.f32.gmra.mxu0 %v7028
      %v7356 = vpop.f32.mrf.mxu0
      %v7357 = vadd.f32 %v7244, %v7356
      %7358 = vmatmul.f32.gmra.mxu0 %v7029
      %v7359 = vpop.f32.mrf.mxu0
      %v7360 = vadd.f32 %v7247, %v7359
      %7361 = vmatmul.f32.gmra.mxu0 %v7030
      %v7362 = vpop.f32.mrf.mxu0
      %v7363 = vadd.f32 %v7250, %v7362
      %7364 = vmatmul.f32.gmra.mxu0 %v7031
      %v7365 = vpop.f32.mrf.mxu0
      %v7366 = vadd.f32 %v7253, %v7365
      %7367 = vmatmul.f32.gmra.mxu0 %v7032
      %v7368 = vpop.f32.mrf.mxu0
      %v7369 = vadd.f32 %v7256, %v7368
      %7370 = vmatmul.f32.gmra.mxu0 %v7033
      %v7371 = vpop.f32.mrf.mxu0
      %v7372 = vadd.f32 %v7259, %v7371
      %7373 = vmatmul.f32.gmra.mxu0 %v7034
      %v7374 = vpop.f32.mrf.mxu0
      %v7375 = vadd.f32 %v7262, %v7374
      %7376 = vmatmul.f32.gmra.mxu0 %v7035
      %v7377 = vpop.f32.mrf.mxu0
      %v7378 = vadd.f32 %v7265, %v7377
      %7379 = vmatmul.f32.gmra.mxu0 %v7036
      %v7380 = vpop.f32.mrf.mxu0
      %v7381 = vadd.f32 %v7268, %v7380
      %7382 = vmatmul.f32.gmra.mxu0 %v7037
      %v7383 = vpop.f32.mrf.mxu0
      %v7384 = vadd.f32 %v7271, %v7383
      %7385 = vmatmul.f32.gmra.mxu0 %v7038
      %v7386 = vpop.f32.mrf.mxu0
      %v7387 = vadd.f32 %v7274, %v7386
      %7388 = vmatmul.f32.gmra.mxu0 %v7039
      %v7389 = vpop.f32.mrf.mxu0
      %v7390 = vadd.f32 %v7277, %v7389
      %7391 = vmatmul.f32.gmra.mxu0 %v7040
      %v7392 = vpop.f32.mrf.mxu0
      %v7393 = vadd.f32 %v7280, %v7392
      %7394 = vmatmul.f32.gmra.mxu0 %v7041
      %v7395 = vpop.f32.mrf.mxu0
      %v7396 = vadd.f32 %v7283, %v7395
      %7397 = vmatmul.f32.gmra.mxu0 %v7042
      %v7398 = vpop.f32.mrf.mxu0
      %v7399 = vadd.f32 %v7286, %v7398
      %7400 = vmatmul.f32.gmra.mxu0 %v7043
      %v7401 = vpop.f32.mrf.mxu0
      %v7402 = vadd.f32 %v7289, %v7401
      %7403 = vmatmul.f32.gmra.mxu0 %v7044
      %v7404 = vpop.f32.mrf.mxu0
      %v7405 = vadd.f32 %v7292, %v7404
      %7406 = vdwg.mxu0
      %7407 = vmatpush.msra.mxu0 0.0
      %7408 = vmatpush.msra.mxu0 0.0
      %7409 = vmatpush.msra.mxu0 0.0
      %7410 = vmatpush.msra.mxu0 0.0
      %7411 = vmatpush.msra.mxu0 0.0
      %7412 = vmatpush.msra.mxu0 0.0
      %7413 = vmatpush.msra.mxu0 0.0
      %7414 = vmatpush.msra.mxu0 0.0
      %7415 = vmatpush.msra.mxu0 0.0
      %7416 = vmatpush.msra.mxu0 0.0
      %7417 = vmatpush.msra.mxu0 0.0
      %7418 = vmatpush.msra.mxu0 0.0
      %7419 = vmatpush.msra.mxu0 %v7080
      %7420 = vmatpush.msra.mxu0 %v7079
      %7421 = vmatpush.msra.mxu0 %v7078
      %7422 = vmatpush.msra.mxu0 %v7077
      %7423 = vmatmul.f32.gmra.mxu0 %v7086
      %v7424 = vpop.f32.mrf.mxu0
      %v7425 = vadd.f32 %v7312, %v7424
      %7426 = vmatmul.f32.gmra.mxu0 %v7089
      %v7427 = vpop.f32.mrf.mxu0
      %v7428 = vadd.f32 %v7315, %v7427
      %7429 = vmatmul.f32.gmra.mxu0 %v7092
      %v7430 = vpop.f32.mrf.mxu0
      %v7431 = vadd.f32 %v7318, %v7430
      %7432 = vmatmul.f32.gmra.mxu0 %v7095
      %v7433 = vpop.f32.mrf.mxu0
      %v7434 = vadd.f32 %v7321, %v7433
      %7435 = vmatmul.f32.gmra.mxu0 %v7098
      %v7436 = vpop.f32.mrf.mxu0
      %v7437 = vadd.f32 %v7324, %v7436
      %7438 = vmatmul.f32.gmra.mxu0 %v7101
      %v7439 = vpop.f32.mrf.mxu0
      %v7440 = vadd.f32 %v7327, %v7439
      %7441 = vmatmul.f32.gmra.mxu0 %v7104
      %v7442 = vpop.f32.mrf.mxu0
      %v7443 = vadd.f32 %v7330, %v7442
      %7444 = vmatmul.f32.gmra.mxu0 %v7107
      %v7445 = vpop.f32.mrf.mxu0
      %v7446 = vadd.f32 %v7333, %v7445
      %7447 = vmatmul.f32.gmra.mxu0 %v7110
      %v7448 = vpop.f32.mrf.mxu0
      %v7449 = vadd.f32 %v7336, %v7448
      %7450 = vmatmul.f32.gmra.mxu0 %v7113
      %v7451 = vpop.f32.mrf.mxu0
      %v7452 = vadd.f32 %v7339, %v7451
      %7453 = vmatmul.f32.gmra.mxu0 %v7116
      %v7454 = vpop.f32.mrf.mxu0
      %v7455 = vadd.f32 %v7342, %v7454
      %7456 = vmatmul.f32.gmra.mxu0 %v7119
      %v7457 = vpop.f32.mrf.mxu0
      %v7458 = vadd.f32 %v7345, %v7457
      %7459 = vmatmul.f32.gmra.mxu0 %v7122
      %v7460 = vpop.f32.mrf.mxu0
      %v7461 = vadd.f32 %v7348, %v7460
      %7462 = vmatmul.f32.gmra.mxu0 %v7125
      %v7463 = vpop.f32.mrf.mxu0
      %v7464 = vadd.f32 %v7351, %v7463
      %7465 = vmatmul.f32.gmra.mxu0 %v7128
      %v7466 = vpop.f32.mrf.mxu0
      %v7467 = vadd.f32 %v7354, %v7466
      %7468 = vmatmul.f32.gmra.mxu0 %v7131
      %v7469 = vpop.f32.mrf.mxu0
      %v7470 = vadd.f32 %v7357, %v7469
      %7471 = vmatmul.f32.gmra.mxu0 %v7134
      %v7472 = vpop.f32.mrf.mxu0
      %v7473 = vadd.f32 %v7360, %v7472
      %7474 = vmatmul.f32.gmra.mxu0 %v7137
      %v7475 = vpop.f32.mrf.mxu0
      %v7476 = vadd.f32 %v7363, %v7475
      %7477 = vmatmul.f32.gmra.mxu0 %v7140
      %v7478 = vpop.f32.mrf.mxu0
      %v7479 = vadd.f32 %v7366, %v7478
      %7480 = vmatmul.f32.gmra.mxu0 %v7143
      %v7481 = vpop.f32.mrf.mxu0
      %v7482 = vadd.f32 %v7369, %v7481
      %7483 = vmatmul.f32.gmra.mxu0 %v7146
      %v7484 = vpop.f32.mrf.mxu0
      %v7485 = vadd.f32 %v7372, %v7484
      %7486 = vmatmul.f32.gmra.mxu0 %v7149
      %v7487 = vpop.f32.mrf.mxu0
      %v7488 = vadd.f32 %v7375, %v7487
      %7489 = vmatmul.f32.gmra.mxu0 %v7152
      %v7490 = vpop.f32.mrf.mxu0
      %v7491 = vadd.f32 %v7378, %v7490
      %7492 = vmatmul.f32.gmra.mxu0 %v7155
      %v7493 = vpop.f32.mrf.mxu0
      %v7494 = vadd.f32 %v7381, %v7493
      %7495 = vmatmul.f32.gmra.mxu0 %v7158
      %v7496 = vpop.f32.mrf.mxu0
      %v7497 = vadd.f32 %v7384, %v7496
      %7498 = vmatmul.f32.gmra.mxu0 %v7161
      %v7499 = vpop.f32.mrf.mxu0
      %v7500 = vadd.f32 %v7387, %v7499
      %7501 = vmatmul.f32.gmra.mxu0 %v7164
      %v7502 = vpop.f32.mrf.mxu0
      %v7503 = vadd.f32 %v7390, %v7502
      %7504 = vmatmul.f32.gmra.mxu0 %v7167
      %v7505 = vpop.f32.mrf.mxu0
      %v7506 = vadd.f32 %v7393, %v7505
      %7507 = vmatmul.f32.gmra.mxu0 %v7170
      %v7508 = vpop.f32.mrf.mxu0
      %v7509 = vadd.f32 %v7396, %v7508
      %7510 = vmatmul.f32.gmra.mxu0 %v7173
      %v7511 = vpop.f32.mrf.mxu0
      %v7512 = vadd.f32 %v7399, %v7511
      %7513 = vmatmul.f32.gmra.mxu0 %v7176
      %v7514 = vpop.f32.mrf.mxu0
      %v7515 = vadd.f32 %v7402, %v7514
      %7516 = vmatmul.f32.gmra.mxu0 %v7179
      %v7517 = vpop.f32.mrf.mxu0
      %v7518 = vadd.f32 %v7405, %v7517
      %7519 = vdwg.mxu0
      %v7520 = vmax.f32 %v7425, 0.0
      %v7521 = vmax.f32 %v7428, 0.0
      %v7522 = vmax.f32 %v7431, 0.0
      %v7523 = vmax.f32 %v7434, 0.0
      %v7524 = vmax.f32 %v7437, 0.0
      %v7525 = vmax.f32 %v7440, 0.0
      %v7526 = vmax.f32 %v7443, 0.0
      %v7527 = vmax.f32 %v7446, 0.0
      %v7528 = vmax.f32 %v7449, 0.0
      %v7529 = vmax.f32 %v7452, 0.0
      %v7530 = vmax.f32 %v7455, 0.0
      %v7531 = vmax.f32 %v7458, 0.0
      %v7532 = vmax.f32 %v7461, 0.0
      %v7533 = vmax.f32 %v7464, 0.0
      %v7534 = vmax.f32 %v7467, 0.0
      %v7535 = vmax.f32 %v7470, 0.0
      %v7536 = vmax.f32 %v7473, 0.0
      %v7537 = vmax.f32 %v7476, 0.0
      %v7538 = vmax.f32 %v7479, 0.0
      %v7539 = vmax.f32 %v7482, 0.0
      %v7540 = vmax.f32 %v7485, 0.0
      %v7541 = vmax.f32 %v7488, 0.0
      %v7542 = vmax.f32 %v7491, 0.0
      %v7543 = vmax.f32 %v7494, 0.0
      %v7544 = vmax.f32 %v7497, 0.0
      %v7545 = vmax.f32 %v7500, 0.0
      %v7546 = vmax.f32 %v7503, 0.0
      %v7547 = vmax.f32 %v7506, 0.0
      %v7548 = vmax.f32 %v7509, 0.0
      %v7549 = vmax.f32 %v7512, 0.0
      %v7550 = vmax.f32 %v7515, 0.0
      %v7551 = vmax.f32 %v7518, 0.0
      %7552 = vst.msk [vmem:[%s400 + $0x1] sm:$0xff] %vm279, %v7520
      %7553 = vst.msk [vmem:[%s400 + $0x9] sm:$0xff] %vm279, %v7521
      %7554 = vst.msk [vmem:[%s400 + $0x19] sm:$0xff] %vm279, %v7522
      %7555 = vst.msk [vmem:[%s400 + $0x21] sm:$0xff] %vm279, %v7523
      %7556 = vst.msk [vmem:[%s400 + $0x31] sm:$0xff] %vm279, %v7524
      %7557 = vst.msk [vmem:[%s400 + $0x39] sm:$0xff] %vm279, %v7525
      %7558 = vst.msk [vmem:[%s400 + $0x49] sm:$0xff] %vm279, %v7526
      %7559 = vst.msk [vmem:[%s400 + $0x51] sm:$0xff] %vm279, %v7527
      %7560 = vst.msk [vmem:[%s400 + $0x61] sm:$0xff] %vm279, %v7528
      %7561 = vst.msk [vmem:[%s400 + $0x69] sm:$0xff] %vm279, %v7529
      %7562 = vst.msk [vmem:[%s400 + $0x79] sm:$0xff] %vm279, %v7530
      %7563 = vst.msk [vmem:[%s400 + $0x81] sm:$0xff] %vm279, %v7531
      %7564 = vst.msk [vmem:[%s400 + $0x91] sm:$0xff] %vm279, %v7532
      %7565 = vst.msk [vmem:[%s400 + $0x99] sm:$0xff] %vm279, %v7533
      %7566 = vst.msk [vmem:[%s400 + $0xa9] sm:$0xff] %vm279, %v7534
      %7567 = vst.msk [vmem:[%s400 + $0xb1] sm:$0xff] %vm279, %v7535
      %7568 = vst.msk [vmem:[%s400 + $0xc1] sm:$0xff] %vm279, %v7536
      %7569 = vst.msk [vmem:[%s400 + $0xc9] sm:$0xff] %vm279, %v7537
      %7570 = vst.msk [vmem:[%s400 + $0xd9] sm:$0xff] %vm279, %v7538
      %7571 = vst.msk [vmem:[%s400 + $0xe1] sm:$0xff] %vm279, %v7539
      %7572 = vst.msk [vmem:[%s400 + $0xf1] sm:$0xff] %vm279, %v7540
      %7573 = vst.msk [vmem:[%s400 + $0xf9] sm:$0xff] %vm279, %v7541
      %7574 = vst.msk [vmem:[%s400 + $0x109] sm:$0xff] %vm279, %v7542
      %7575 = vst.msk [vmem:[%s400 + $0x111] sm:$0xff] %vm279, %v7543
      %7576 = vst.msk [vmem:[%s400 + $0x121] sm:$0xff] %vm279, %v7544
      %7577 = vst.msk [vmem:[%s400 + $0x129] sm:$0xff] %vm279, %v7545
      %7578 = vst.msk [vmem:[%s400 + $0x139] sm:$0xff] %vm279, %v7546
      %7579 = vst.msk [vmem:[%s400 + $0x141] sm:$0xff] %vm279, %v7547
      %7580 = vst.msk [vmem:[%s400 + $0x151] sm:$0xff] %vm279, %v7548
      %7581 = vst.msk [vmem:[%s400 + $0x159] sm:$0xff] %vm279, %v7549
      %7582 = vst.msk [vmem:[%s400 + $0x169] sm:$0xff] %vm279, %v7550
      %7583 = vst.msk [vmem:[%s400 + $0x171] sm:$0xff] %vm279, %v7551
      %v7584 = vld [vmem:[#allocation2] sm:$0xff]
      %v7585 = vld [vmem:[#allocation2 + $0x8] sm:$0xff]
      %v7586 = vld [vmem:[#allocation2 + $0x18] sm:$0xff]
      %v7587 = vld [vmem:[#allocation2 + $0x20] sm:$0xff]
      %v7588 = vld [vmem:[#allocation2 + $0x30] sm:$0xff]
      %v7589 = vld [vmem:[#allocation2 + $0x38] sm:$0xff]
      %v7590 = vld [vmem:[#allocation2 + $0x48] sm:$0xff]
      %v7591 = vld [vmem:[#allocation2 + $0x50] sm:$0xff]
      %v7592 = vld [vmem:[#allocation2 + $0x60] sm:$0xff]
      %v7593 = vld [vmem:[#allocation2 + $0x68] sm:$0xff]
      %v7594 = vld [vmem:[#allocation2 + $0x78] sm:$0xff]
      %v7595 = vld [vmem:[#allocation2 + $0x80] sm:$0xff]
      %v7596 = vld [vmem:[#allocation2 + $0x90] sm:$0xff]
      %v7597 = vld [vmem:[#allocation2 + $0x98] sm:$0xff]
      %v7598 = vld [vmem:[#allocation2 + $0xa8] sm:$0xff]
      %v7599 = vld [vmem:[#allocation2 + $0xb0] sm:$0xff]
      %v7600 = vld [vmem:[#allocation2 + $0xc0] sm:$0xff]
      %v7601 = vld [vmem:[#allocation2 + $0xc8] sm:$0xff]
      %v7602 = vld [vmem:[#allocation2 + $0xd8] sm:$0xff]
      %v7603 = vld [vmem:[#allocation2 + $0xe0] sm:$0xff]
      %v7604 = vld [vmem:[#allocation2 + $0xf0] sm:$0xff]
      %v7605 = vld [vmem:[#allocation2 + $0xf8] sm:$0xff]
      %v7606 = vld [vmem:[#allocation2 + $0x108] sm:$0xff]
      %v7607 = vld [vmem:[#allocation2 + $0x110] sm:$0xff]
      %v7608 = vld [vmem:[#allocation2 + $0x120] sm:$0xff]
      %v7609 = vld [vmem:[#allocation2 + $0x128] sm:$0xff]
      %v7610 = vld [vmem:[#allocation2 + $0x138] sm:$0xff]
      %v7611 = vld [vmem:[#allocation2 + $0x140] sm:$0xff]
      %v7612 = vld [vmem:[#allocation2 + $0x150] sm:$0xff]
      %v7613 = vld [vmem:[#allocation2 + $0x158] sm:$0xff]
      %v7614 = vld [vmem:[#allocation2 + $0x168] sm:$0xff]
      %v7615 = vld [vmem:[#allocation2 + $0x170] sm:$0xff]
      %v7616 = vld [vmem:[#allocation2 + $0x1] sm:$0xff]
      %v7617 = vld [vmem:[#allocation2 + $0x9] sm:$0xff]
      %v7618 = vld [vmem:[#allocation2 + $0x19] sm:$0xff]
      %v7619 = vld [vmem:[#allocation2 + $0x21] sm:$0xff]
      %v7620 = vld [vmem:[#allocation2 + $0x31] sm:$0xff]
      %v7621 = vld [vmem:[#allocation2 + $0x39] sm:$0xff]
      %v7622 = vld [vmem:[#allocation2 + $0x49] sm:$0xff]
      %v7623 = vld [vmem:[#allocation2 + $0x51] sm:$0xff]
      %v7624 = vld [vmem:[#allocation2 + $0x61] sm:$0xff]
      %v7625 = vld [vmem:[#allocation2 + $0x69] sm:$0xff]
      %v7626 = vld [vmem:[#allocation2 + $0x79] sm:$0xff]
      %v7627 = vld [vmem:[#allocation2 + $0x81] sm:$0xff]
      %v7628 = vld [vmem:[#allocation2 + $0x91] sm:$0xff]
      %v7629 = vld [vmem:[#allocation2 + $0x99] sm:$0xff]
      %v7630 = vld [vmem:[#allocation2 + $0xa9] sm:$0xff]
      %v7631 = vld [vmem:[#allocation2 + $0xb1] sm:$0xff]
      %v7632 = vld [vmem:[#allocation2 + $0xc1] sm:$0xff]
      %v7633 = vld [vmem:[#allocation2 + $0xc9] sm:$0xff]
      %v7634 = vld [vmem:[#allocation2 + $0xd9] sm:$0xff]
      %v7635 = vld [vmem:[#allocation2 + $0xe1] sm:$0xff]
      %v7636 = vld [vmem:[#allocation2 + $0xf1] sm:$0xff]
      %v7637 = vld [vmem:[#allocation2 + $0xf9] sm:$0xff]
      %v7638 = vld [vmem:[#allocation2 + $0x109] sm:$0xff]
      %v7639 = vld [vmem:[#allocation2 + $0x111] sm:$0xff]
      %v7640 = vld [vmem:[#allocation2 + $0x121] sm:$0xff]
      %v7641 = vld [vmem:[#allocation2 + $0x129] sm:$0xff]
      %v7642 = vld [vmem:[#allocation2 + $0x139] sm:$0xff]
      %v7643 = vld [vmem:[#allocation2 + $0x141] sm:$0xff]
      %v7644 = vld [vmem:[#allocation2 + $0x151] sm:$0xff]
      %v7645 = vld [vmem:[#allocation2 + $0x159] sm:$0xff]
      %v7646 = vld [vmem:[#allocation2 + $0x169] sm:$0xff]
      %v7647 = vld [vmem:[#allocation2 + $0x171] sm:$0xff]
      %v7648 = vld [vmem:[#allocation2 + $0x2] sm:$0xff]
      %v7649 = vld [vmem:[#allocation2 + $0xa] sm:$0xff]
      %v7650 = vld [vmem:[#allocation2 + $0x1a] sm:$0xff]
      %v7651 = vld [vmem:[#allocation2 + $0x22] sm:$0xff]
      %v7652 = vld [vmem:[#allocation2 + $0x32] sm:$0xff]
      %v7653 = vld [vmem:[#allocation2 + $0x3a] sm:$0xff]
      %v7654 = vld [vmem:[#allocation2 + $0x4a] sm:$0xff]
      %v7655 = vld [vmem:[#allocation2 + $0x52] sm:$0xff]
      %v7656 = vld [vmem:[#allocation2 + $0x62] sm:$0xff]
      %v7657 = vld [vmem:[#allocation2 + $0x6a] sm:$0xff]
      %v7658 = vld [vmem:[#allocation2 + $0x7a] sm:$0xff]
      %v7659 = vld [vmem:[#allocation2 + $0x82] sm:$0xff]
      %v7660 = vld [vmem:[#allocation2 + $0x92] sm:$0xff]
      %v7661 = vld [vmem:[#allocation2 + $0x9a] sm:$0xff]
      %v7662 = vld [vmem:[#allocation2 + $0xaa] sm:$0xff]
      %v7663 = vld [vmem:[#allocation2 + $0xb2] sm:$0xff]
      %v7664 = vld [vmem:[#allocation2 + $0xc2] sm:$0xff]
      %v7665 = vld [vmem:[#allocation2 + $0xca] sm:$0xff]
      %v7666 = vld [vmem:[#allocation2 + $0xda] sm:$0xff]
      %v7667 = vld [vmem:[#allocation2 + $0xe2] sm:$0xff]
      %v7668 = vld [vmem:[#allocation2 + $0xf2] sm:$0xff]
      %v7669 = vld [vmem:[#allocation2 + $0xfa] sm:$0xff]
      %v7670 = vld [vmem:[#allocation2 + $0x10a] sm:$0xff]
      %v7671 = vld [vmem:[#allocation2 + $0x112] sm:$0xff]
      %v7672 = vld [vmem:[#allocation2 + $0x122] sm:$0xff]
      %v7673 = vld [vmem:[#allocation2 + $0x12a] sm:$0xff]
      %v7674 = vld [vmem:[#allocation2 + $0x13a] sm:$0xff]
      %v7675 = vld [vmem:[#allocation2 + $0x142] sm:$0xff]
      %v7676 = vld [vmem:[#allocation2 + $0x152] sm:$0xff]
      %v7677 = vld [vmem:[#allocation2 + $0x15a] sm:$0xff]
      %v7678 = vld [vmem:[#allocation2 + $0x16a] sm:$0xff]
      %v7679 = vld [vmem:[#allocation2 + $0x172] sm:$0xff]
      %v7680 = vld [vmem:[%s400] sm:$0xff]
      %v7681 = vld [vmem:[%s400 + $0x8] sm:$0xff]
      %v7682 = vld [vmem:[%s400 + $0x18] sm:$0xff]
      %v7683 = vld [vmem:[%s400 + $0x20] sm:$0xff]
      %v7684 = vld [vmem:[%s400 + $0x30] sm:$0xff]
      %v7685 = vld [vmem:[%s400 + $0x38] sm:$0xff]
      %v7686 = vld [vmem:[%s400 + $0x48] sm:$0xff]
      %v7687 = vld [vmem:[%s400 + $0x50] sm:$0xff]
      %v7688 = vld [vmem:[%s400 + $0x60] sm:$0xff]
      %v7689 = vld [vmem:[%s400 + $0x68] sm:$0xff]
      %v7690 = vld [vmem:[%s400 + $0x78] sm:$0xff]
      %v7691 = vld [vmem:[%s400 + $0x80] sm:$0xff]
      %v7692 = vld [vmem:[%s400 + $0x90] sm:$0xff]
      %v7693 = vld [vmem:[%s400 + $0x98] sm:$0xff]
      %v7694 = vld [vmem:[%s400 + $0xa8] sm:$0xff]
      %v7695 = vld [vmem:[%s400 + $0xb0] sm:$0xff]
      %v7696 = vld [vmem:[%s400 + $0xc0] sm:$0xff]
      %v7697 = vld [vmem:[%s400 + $0xc8] sm:$0xff]
      %v7698 = vld [vmem:[%s400 + $0xd8] sm:$0xff]
      %v7699 = vld [vmem:[%s400 + $0xe0] sm:$0xff]
      %v7700 = vld [vmem:[%s400 + $0xf0] sm:$0xff]
      %v7701 = vld [vmem:[%s400 + $0xf8] sm:$0xff]
      %v7702 = vld [vmem:[%s400 + $0x108] sm:$0xff]
      %v7703 = vld [vmem:[%s400 + $0x110] sm:$0xff]
      %v7704 = vld [vmem:[%s400 + $0x120] sm:$0xff]
      %v7705 = vld [vmem:[%s400 + $0x128] sm:$0xff]
      %v7706 = vld [vmem:[%s400 + $0x138] sm:$0xff]
      %v7707 = vld [vmem:[%s400 + $0x140] sm:$0xff]
      %v7708 = vld [vmem:[%s400 + $0x150] sm:$0xff]
      %v7709 = vld [vmem:[%s400 + $0x158] sm:$0xff]
      %v7710 = vld [vmem:[%s400 + $0x168] sm:$0xff]
      %v7711 = vld [vmem:[%s400 + $0x170] sm:$0xff]
      %v7712 = vld [vmem:[%s400 + $0x1] sm:$0xff]
      %v7713 = vld [vmem:[%s400 + $0x9] sm:$0xff]
      %v7714 = vld [vmem:[%s400 + $0x19] sm:$0xff]
      %v7715 = vld [vmem:[%s400 + $0x21] sm:$0xff]
      %v7716 = vld [vmem:[%s400 + $0x31] sm:$0xff]
      %v7717 = vld [vmem:[%s400 + $0x39] sm:$0xff]
      %v7718 = vld [vmem:[%s400 + $0x49] sm:$0xff]
      %v7719 = vld [vmem:[%s400 + $0x51] sm:$0xff]
      %v7720 = vld [vmem:[%s400 + $0x61] sm:$0xff]
      %v7721 = vld [vmem:[%s400 + $0x69] sm:$0xff]
      %v7722 = vld [vmem:[%s400 + $0x79] sm:$0xff]
      %v7723 = vld [vmem:[%s400 + $0x81] sm:$0xff]
      %v7724 = vld [vmem:[%s400 + $0x91] sm:$0xff]
      %v7725 = vld [vmem:[%s400 + $0x99] sm:$0xff]
      %v7726 = vld [vmem:[%s400 + $0xa9] sm:$0xff]
      %v7727 = vld [vmem:[%s400 + $0xb1] sm:$0xff]
      %v7728 = vld [vmem:[%s400 + $0xc1] sm:$0xff]
      %v7729 = vld [vmem:[%s400 + $0xc9] sm:$0xff]
      %v7730 = vld [vmem:[%s400 + $0xd9] sm:$0xff]
      %v7731 = vld [vmem:[%s400 + $0xe1] sm:$0xff]
      %v7732 = vld [vmem:[%s400 + $0xf1] sm:$0xff]
      %v7733 = vld [vmem:[%s400 + $0xf9] sm:$0xff]
      %v7734 = vld [vmem:[%s400 + $0x109] sm:$0xff]
      %v7735 = vld [vmem:[%s400 + $0x111] sm:$0xff]
      %v7736 = vld [vmem:[%s400 + $0x121] sm:$0xff]
      %v7737 = vld [vmem:[%s400 + $0x129] sm:$0xff]
      %v7738 = vld [vmem:[%s400 + $0x139] sm:$0xff]
      %v7739 = vld [vmem:[%s400 + $0x141] sm:$0xff]
      %v7740 = vld [vmem:[%s400 + $0x151] sm:$0xff]
      %v7741 = vld [vmem:[%s400 + $0x159] sm:$0xff]
      %v7742 = vld [vmem:[%s400 + $0x169] sm:$0xff]
      %v7743 = vld [vmem:[%s400 + $0x171] sm:$0xff]
      %v7744 = vld [vmem:[%s400 + $0x2] sm:$0xff]
      %v7745 = vld [vmem:[%s400 + $0xa] sm:$0xff]
      %v7746 = vld [vmem:[%s400 + $0x1a] sm:$0xff]
      %v7747 = vld [vmem:[%s400 + $0x22] sm:$0xff]
      %v7748 = vld [vmem:[%s400 + $0x32] sm:$0xff]
      %v7749 = vld [vmem:[%s400 + $0x3a] sm:$0xff]
      %v7750 = vld [vmem:[%s400 + $0x4a] sm:$0xff]
      %v7751 = vld [vmem:[%s400 + $0x52] sm:$0xff]
      %v7752 = vld [vmem:[%s400 + $0x62] sm:$0xff]
      %v7753 = vld [vmem:[%s400 + $0x6a] sm:$0xff]
      %v7754 = vld [vmem:[%s400 + $0x7a] sm:$0xff]
      %v7755 = vld [vmem:[%s400 + $0x82] sm:$0xff]
      %v7756 = vld [vmem:[%s400 + $0x92] sm:$0xff]
      %v7757 = vld [vmem:[%s400 + $0x9a] sm:$0xff]
      %v7758 = vld [vmem:[%s400 + $0xaa] sm:$0xff]
      %v7759 = vld [vmem:[%s400 + $0xb2] sm:$0xff]
      %v7760 = vld [vmem:[%s400 + $0xc2] sm:$0xff]
      %v7761 = vld [vmem:[%s400 + $0xca] sm:$0xff]
      %v7762 = vld [vmem:[%s400 + $0xda] sm:$0xff]
      %v7763 = vld [vmem:[%s400 + $0xe2] sm:$0xff]
      %v7764 = vld [vmem:[%s400 + $0xf2] sm:$0xff]
      %v7765 = vld [vmem:[%s400 + $0xfa] sm:$0xff]
      %v7766 = vld [vmem:[%s400 + $0x10a] sm:$0xff]
      %v7767 = vld [vmem:[%s400 + $0x112] sm:$0xff]
      %v7768 = vld [vmem:[%s400 + $0x122] sm:$0xff]
      %v7769 = vld [vmem:[%s400 + $0x12a] sm:$0xff]
      %v7770 = vld [vmem:[%s400 + $0x13a] sm:$0xff]
      %v7771 = vld [vmem:[%s400 + $0x142] sm:$0xff]
      %v7772 = vld [vmem:[%s400 + $0x152] sm:$0xff]
      %v7773 = vld [vmem:[%s400 + $0x15a] sm:$0xff]
      %v7774 = vld [vmem:[%s400 + $0x16a] sm:$0xff]
      %v7775 = vld [vmem:[%s400 + $0x172] sm:$0xff]
      %v7776 = vld [vmem:[%s625] sm:$0xff]
      %v7777 = vld [vmem:[%s625 + $0x8] sm:$0xff]
      %v7778 = vld [vmem:[%s625 + $0x18] sm:$0xff]
      %v7779 = vld [vmem:[%s625 + $0x20] sm:$0xff]
      %v7780 = vld [vmem:[%s625 + $0x30] sm:$0xff]
      %v7781 = vld [vmem:[%s625 + $0x38] sm:$0xff]
      %v7782 = vld [vmem:[%s625 + $0x48] sm:$0xff]
      %v7783 = vld [vmem:[%s625 + $0x50] sm:$0xff]
      %v7784 = vld [vmem:[%s625 + $0x60] sm:$0xff]
      %v7785 = vld [vmem:[%s625 + $0x68] sm:$0xff]
      %v7786 = vld [vmem:[%s625 + $0x78] sm:$0xff]
      %v7787 = vld [vmem:[%s625 + $0x80] sm:$0xff]
      %v7788 = vld [vmem:[%s625 + $0x90] sm:$0xff]
      %v7789 = vld [vmem:[%s625 + $0x98] sm:$0xff]
      %v7790 = vld [vmem:[%s625 + $0xa8] sm:$0xff]
      %v7791 = vld [vmem:[%s625 + $0xb0] sm:$0xff]
      %v7792 = vld [vmem:[%s625 + $0xc0] sm:$0xff]
      %v7793 = vld [vmem:[%s625 + $0xc8] sm:$0xff]
      %v7794 = vld [vmem:[%s625 + $0xd8] sm:$0xff]
      %v7795 = vld [vmem:[%s625 + $0xe0] sm:$0xff]
      %v7796 = vld [vmem:[%s625 + $0xf0] sm:$0xff]
      %v7797 = vld [vmem:[%s625 + $0xf8] sm:$0xff]
      %v7798 = vld [vmem:[%s625 + $0x108] sm:$0xff]
      %v7799 = vld [vmem:[%s625 + $0x110] sm:$0xff]
      %v7800 = vld [vmem:[%s625 + $0x120] sm:$0xff]
      %v7801 = vld [vmem:[%s625 + $0x128] sm:$0xff]
      %v7802 = vld [vmem:[%s625 + $0x138] sm:$0xff]
      %v7803 = vld [vmem:[%s625 + $0x140] sm:$0xff]
      %v7804 = vld [vmem:[%s625 + $0x150] sm:$0xff]
      %v7805 = vld [vmem:[%s625 + $0x158] sm:$0xff]
      %v7806 = vld [vmem:[%s625 + $0x168] sm:$0xff]
      %v7807 = vld [vmem:[%s625 + $0x170] sm:$0xff]
      %v7808 = vld [vmem:[%s625 + $0x1] sm:$0xff]
      %v7809 = vld [vmem:[%s625 + $0x9] sm:$0xff]
      %v7810 = vld [vmem:[%s625 + $0x19] sm:$0xff]
      %v7811 = vld [vmem:[%s625 + $0x21] sm:$0xff]
      %v7812 = vld [vmem:[%s625 + $0x31] sm:$0xff]
      %v7813 = vld [vmem:[%s625 + $0x39] sm:$0xff]
      %v7814 = vld [vmem:[%s625 + $0x49] sm:$0xff]
      %v7815 = vld [vmem:[%s625 + $0x51] sm:$0xff]
      %v7816 = vld [vmem:[%s625 + $0x61] sm:$0xff]
      %v7817 = vld [vmem:[%s625 + $0x69] sm:$0xff]
      %v7818 = vld [vmem:[%s625 + $0x79] sm:$0xff]
      %v7819 = vld [vmem:[%s625 + $0x81] sm:$0xff]
      %v7820 = vld [vmem:[%s625 + $0x91] sm:$0xff]
      %v7821 = vld [vmem:[%s625 + $0x99] sm:$0xff]
      %v7822 = vld [vmem:[%s625 + $0xa9] sm:$0xff]
      %v7823 = vld [vmem:[%s625 + $0xb1] sm:$0xff]
      %v7824 = vld [vmem:[%s625 + $0xc1] sm:$0xff]
      %v7825 = vld [vmem:[%s625 + $0xc9] sm:$0xff]
      %v7826 = vld [vmem:[%s625 + $0xd9] sm:$0xff]
      %v7827 = vld [vmem:[%s625 + $0xe1] sm:$0xff]
      %v7828 = vld [vmem:[%s625 + $0xf1] sm:$0xff]
      %v7829 = vld [vmem:[%s625 + $0xf9] sm:$0xff]
      %v7830 = vld [vmem:[%s625 + $0x109] sm:$0xff]
      %v7831 = vld [vmem:[%s625 + $0x111] sm:$0xff]
      %v7832 = vld [vmem:[%s625 + $0x121] sm:$0xff]
      %v7833 = vld [vmem:[%s625 + $0x129] sm:$0xff]
      %v7834 = vld [vmem:[%s625 + $0x139] sm:$0xff]
      %v7835 = vld [vmem:[%s625 + $0x141] sm:$0xff]
      %v7836 = vld [vmem:[%s625 + $0x151] sm:$0xff]
      %v7837 = vld [vmem:[%s625 + $0x159] sm:$0xff]
      %v7838 = vld [vmem:[%s625 + $0x169] sm:$0xff]
      %v7839 = vld [vmem:[%s625 + $0x171] sm:$0xff]
      %v7840 = vld [vmem:[%s625 + $0x2] sm:$0xff]
      %v7841 = vld [vmem:[%s625 + $0xa] sm:$0xff]
      %v7842 = vld [vmem:[%s625 + $0x1a] sm:$0xff]
      %v7843 = vld [vmem:[%s625 + $0x22] sm:$0xff]
      %v7844 = vld [vmem:[%s625 + $0x32] sm:$0xff]
      %v7845 = vld [vmem:[%s625 + $0x3a] sm:$0xff]
      %v7846 = vld [vmem:[%s625 + $0x4a] sm:$0xff]
      %v7847 = vld [vmem:[%s625 + $0x52] sm:$0xff]
      %v7848 = vld [vmem:[%s625 + $0x62] sm:$0xff]
      %v7849 = vld [vmem:[%s625 + $0x6a] sm:$0xff]
      %v7850 = vld [vmem:[%s625 + $0x7a] sm:$0xff]
      %v7851 = vld [vmem:[%s625 + $0x82] sm:$0xff]
      %v7852 = vld [vmem:[%s625 + $0x92] sm:$0xff]
      %v7853 = vld [vmem:[%s625 + $0x9a] sm:$0xff]
      %v7854 = vld [vmem:[%s625 + $0xaa] sm:$0xff]
      %v7855 = vld [vmem:[%s625 + $0xb2] sm:$0xff]
      %v7856 = vld [vmem:[%s625 + $0xc2] sm:$0xff]
      %v7857 = vld [vmem:[%s625 + $0xca] sm:$0xff]
      %v7858 = vld [vmem:[%s625 + $0xda] sm:$0xff]
      %v7859 = vld [vmem:[%s625 + $0xe2] sm:$0xff]
      %v7860 = vld [vmem:[%s625 + $0xf2] sm:$0xff]
      %v7861 = vld [vmem:[%s625 + $0xfa] sm:$0xff]
      %v7862 = vld [vmem:[%s625 + $0x10a] sm:$0xff]
      %v7863 = vld [vmem:[%s625 + $0x112] sm:$0xff]
      %v7864 = vld [vmem:[%s625 + $0x122] sm:$0xff]
      %v7865 = vld [vmem:[%s625 + $0x12a] sm:$0xff]
      %v7866 = vld [vmem:[%s625 + $0x13a] sm:$0xff]
      %v7867 = vld [vmem:[%s625 + $0x142] sm:$0xff]
      %v7868 = vld [vmem:[%s625 + $0x152] sm:$0xff]
      %v7869 = vld [vmem:[%s625 + $0x15a] sm:$0xff]
      %v7870 = vld [vmem:[%s625 + $0x16a] sm:$0xff]
      %v7871 = vld [vmem:[%s625 + $0x172] sm:$0xff]
      %7904 = vrot.lane.b32.xlu0 %v7616, 32
      %v7905 = vpop.permute.xlu0 %7904
      %7906 = vrot.lane.b32.xlu0 %v7617, 32
      %v7907 = vpop.permute.xlu0 %7906
      %7908 = vrot.lane.b32.xlu0 %v7618, 32
      %v7909 = vpop.permute.xlu0 %7908
      %7910 = vrot.lane.b32.xlu0 %v7619, 32
      %v7911 = vpop.permute.xlu0 %7910
      %7912 = vrot.lane.b32.xlu0 %v7620, 32
      %v7913 = vpop.permute.xlu0 %7912
      %7914 = vrot.lane.b32.xlu0 %v7621, 32
      %v7915 = vpop.permute.xlu0 %7914
      %7916 = vrot.lane.b32.xlu0 %v7622, 32
      %v7917 = vpop.permute.xlu0 %7916
      %7918 = vrot.lane.b32.xlu0 %v7623, 32
      %v7919 = vpop.permute.xlu0 %7918
      %7920 = vrot.lane.b32.xlu0 %v7624, 32
      %v7921 = vpop.permute.xlu0 %7920
      %7922 = vrot.lane.b32.xlu0 %v7625, 32
      %v7923 = vpop.permute.xlu0 %7922
      %7924 = vrot.lane.b32.xlu0 %v7626, 32
      %v7925 = vpop.permute.xlu0 %7924
      %7926 = vrot.lane.b32.xlu0 %v7627, 32
      %v7927 = vpop.permute.xlu0 %7926
      %7928 = vrot.lane.b32.xlu0 %v7628, 32
      %v7929 = vpop.permute.xlu0 %7928
      %7930 = vrot.lane.b32.xlu0 %v7629, 32
      %v7931 = vpop.permute.xlu0 %7930
      %7932 = vrot.lane.b32.xlu0 %v7630, 32
      %v7933 = vpop.permute.xlu0 %7932
      %7934 = vrot.lane.b32.xlu0 %v7631, 32
      %v7935 = vpop.permute.xlu0 %7934
      %7936 = vrot.lane.b32.xlu0 %v7632, 32
      %v7937 = vpop.permute.xlu0 %7936
      %7938 = vrot.lane.b32.xlu0 %v7633, 32
      %v7939 = vpop.permute.xlu0 %7938
      %7940 = vrot.lane.b32.xlu0 %v7634, 32
      %v7941 = vpop.permute.xlu0 %7940
      %7942 = vrot.lane.b32.xlu0 %v7635, 32
      %v7943 = vpop.permute.xlu0 %7942
      %7944 = vrot.lane.b32.xlu0 %v7636, 32
      %v7945 = vpop.permute.xlu0 %7944
      %7946 = vrot.lane.b32.xlu0 %v7637, 32
      %v7947 = vpop.permute.xlu0 %7946
      %7948 = vrot.lane.b32.xlu0 %v7638, 32
      %v7949 = vpop.permute.xlu0 %7948
      %7950 = vrot.lane.b32.xlu0 %v7639, 32
      %v7951 = vpop.permute.xlu0 %7950
      %7952 = vrot.lane.b32.xlu0 %v7640, 32
      %v7953 = vpop.permute.xlu0 %7952
      %7954 = vrot.lane.b32.xlu0 %v7641, 32
      %v7955 = vpop.permute.xlu0 %7954
      %7956 = vrot.lane.b32.xlu0 %v7642, 32
      %v7957 = vpop.permute.xlu0 %7956
      %7958 = vrot.lane.b32.xlu0 %v7643, 32
      %v7959 = vpop.permute.xlu0 %7958
      %7960 = vrot.lane.b32.xlu0 %v7644, 32
      %v7961 = vpop.permute.xlu0 %7960
      %7962 = vrot.lane.b32.xlu0 %v7645, 32
      %v7963 = vpop.permute.xlu0 %7962
      %7964 = vrot.lane.b32.xlu0 %v7646, 32
      %v7965 = vpop.permute.xlu0 %7964
      %7966 = vrot.lane.b32.xlu0 %v7647, 32
      %v7967 = vpop.permute.xlu0 %7966
      %8032 = vrot.lane.b32.xlu0 %v7648, 64
      %v8033 = vpop.permute.xlu0 %8032
      %8034 = vrot.lane.b32.xlu0 %v7649, 64
      %v8035 = vpop.permute.xlu0 %8034
      %8036 = vrot.lane.b32.xlu0 %v7650, 64
      %v8037 = vpop.permute.xlu0 %8036
      %8038 = vrot.lane.b32.xlu0 %v7651, 64
      %v8039 = vpop.permute.xlu0 %8038
      %8040 = vrot.lane.b32.xlu0 %v7652, 64
      %v8041 = vpop.permute.xlu0 %8040
      %8042 = vrot.lane.b32.xlu0 %v7653, 64
      %v8043 = vpop.permute.xlu0 %8042
      %8044 = vrot.lane.b32.xlu0 %v7654, 64
      %v8045 = vpop.permute.xlu0 %8044
      %8046 = vrot.lane.b32.xlu0 %v7655, 64
      %v8047 = vpop.permute.xlu0 %8046
      %8048 = vrot.lane.b32.xlu0 %v7656, 64
      %v8049 = vpop.permute.xlu0 %8048
      %8050 = vrot.lane.b32.xlu0 %v7657, 64
      %v8051 = vpop.permute.xlu0 %8050
      %8052 = vrot.lane.b32.xlu0 %v7658, 64
      %v8053 = vpop.permute.xlu0 %8052
      %8054 = vrot.lane.b32.xlu0 %v7659, 64
      %v8055 = vpop.permute.xlu0 %8054
      %8056 = vrot.lane.b32.xlu0 %v7660, 64
      %v8057 = vpop.permute.xlu0 %8056
      %8058 = vrot.lane.b32.xlu0 %v7661, 64
      %v8059 = vpop.permute.xlu0 %8058
      %8060 = vrot.lane.b32.xlu0 %v7662, 64
      %v8061 = vpop.permute.xlu0 %8060
      %8062 = vrot.lane.b32.xlu0 %v7663, 64
      %v8063 = vpop.permute.xlu0 %8062
      %8064 = vrot.lane.b32.xlu0 %v7664, 64
      %v8065 = vpop.permute.xlu0 %8064
      %8066 = vrot.lane.b32.xlu0 %v7665, 64
      %v8067 = vpop.permute.xlu0 %8066
      %8068 = vrot.lane.b32.xlu0 %v7666, 64
      %v8069 = vpop.permute.xlu0 %8068
      %8070 = vrot.lane.b32.xlu0 %v7667, 64
      %v8071 = vpop.permute.xlu0 %8070
      %8072 = vrot.lane.b32.xlu0 %v7668, 64
      %v8073 = vpop.permute.xlu0 %8072
      %8074 = vrot.lane.b32.xlu0 %v7669, 64
      %v8075 = vpop.permute.xlu0 %8074
      %8076 = vrot.lane.b32.xlu0 %v7670, 64
      %v8077 = vpop.permute.xlu0 %8076
      %8078 = vrot.lane.b32.xlu0 %v7671, 64
      %v8079 = vpop.permute.xlu0 %8078
      %8080 = vrot.lane.b32.xlu0 %v7672, 64
      %v8081 = vpop.permute.xlu0 %8080
      %8082 = vrot.lane.b32.xlu0 %v7673, 64
      %v8083 = vpop.permute.xlu0 %8082
      %8084 = vrot.lane.b32.xlu0 %v7674, 64
      %v8085 = vpop.permute.xlu0 %8084
      %8086 = vrot.lane.b32.xlu0 %v7675, 64
      %v8087 = vpop.permute.xlu0 %8086
      %8088 = vrot.lane.b32.xlu0 %v7676, 64
      %v8089 = vpop.permute.xlu0 %8088
      %8090 = vrot.lane.b32.xlu0 %v7677, 64
      %v8091 = vpop.permute.xlu0 %8090
      %8092 = vrot.lane.b32.xlu0 %v7678, 64
      %v8093 = vpop.permute.xlu0 %8092
      %8094 = vrot.lane.b32.xlu0 %v7679, 64
      %v8095 = vpop.permute.xlu0 %8094
      %8160 = vrot.lane.b32.xlu0 %v7680, 96
      %v8161 = vpop.permute.xlu0 %8160
      %8162 = vrot.lane.b32.xlu0 %v7681, 96
      %v8163 = vpop.permute.xlu0 %8162
      %8164 = vrot.lane.b32.xlu0 %v7682, 96
      %v8165 = vpop.permute.xlu0 %8164
      %8166 = vrot.lane.b32.xlu0 %v7683, 96
      %v8167 = vpop.permute.xlu0 %8166
      %8168 = vrot.lane.b32.xlu0 %v7684, 96
      %v8169 = vpop.permute.xlu0 %8168
      %8170 = vrot.lane.b32.xlu0 %v7685, 96
      %v8171 = vpop.permute.xlu0 %8170
      %8172 = vrot.lane.b32.xlu0 %v7686, 96
      %v8173 = vpop.permute.xlu0 %8172
      %8174 = vrot.lane.b32.xlu0 %v7687, 96
      %v8175 = vpop.permute.xlu0 %8174
      %8176 = vrot.lane.b32.xlu0 %v7688, 96
      %v8177 = vpop.permute.xlu0 %8176
      %8178 = vrot.lane.b32.xlu0 %v7689, 96
      %v8179 = vpop.permute.xlu0 %8178
      %8180 = vrot.lane.b32.xlu0 %v7690, 96
      %v8181 = vpop.permute.xlu0 %8180
      %8182 = vrot.lane.b32.xlu0 %v7691, 96
      %v8183 = vpop.permute.xlu0 %8182
      %8184 = vrot.lane.b32.xlu0 %v7692, 96
      %v8185 = vpop.permute.xlu0 %8184
      %8186 = vrot.lane.b32.xlu0 %v7693, 96
      %v8187 = vpop.permute.xlu0 %8186
      %8188 = vrot.lane.b32.xlu0 %v7694, 96
      %v8189 = vpop.permute.xlu0 %8188
      %8190 = vrot.lane.b32.xlu0 %v7695, 96
      %v8191 = vpop.permute.xlu0 %8190
      %8192 = vrot.lane.b32.xlu0 %v7696, 96
      %v8193 = vpop.permute.xlu0 %8192
      %8194 = vrot.lane.b32.xlu0 %v7697, 96
      %v8195 = vpop.permute.xlu0 %8194
      %8196 = vrot.lane.b32.xlu0 %v7698, 96
      %v8197 = vpop.permute.xlu0 %8196
      %8198 = vrot.lane.b32.xlu0 %v7699, 96
      %v8199 = vpop.permute.xlu0 %8198
      %8200 = vrot.lane.b32.xlu0 %v7700, 96
      %v8201 = vpop.permute.xlu0 %8200
      %8202 = vrot.lane.b32.xlu0 %v7701, 96
      %v8203 = vpop.permute.xlu0 %8202
      %8204 = vrot.lane.b32.xlu0 %v7702, 96
      %v8205 = vpop.permute.xlu0 %8204
      %8206 = vrot.lane.b32.xlu0 %v7703, 96
      %v8207 = vpop.permute.xlu0 %8206
      %8208 = vrot.lane.b32.xlu0 %v7704, 96
      %v8209 = vpop.permute.xlu0 %8208
      %8210 = vrot.lane.b32.xlu0 %v7705, 96
      %v8211 = vpop.permute.xlu0 %8210
      %8212 = vrot.lane.b32.xlu0 %v7706, 96
      %v8213 = vpop.permute.xlu0 %8212
      %8214 = vrot.lane.b32.xlu0 %v7707, 96
      %v8215 = vpop.permute.xlu0 %8214
      %8216 = vrot.lane.b32.xlu0 %v7708, 96
      %v8217 = vpop.permute.xlu0 %8216
      %8218 = vrot.lane.b32.xlu0 %v7709, 96
      %v8219 = vpop.permute.xlu0 %8218
      %8220 = vrot.lane.b32.xlu0 %v7710, 96
      %v8221 = vpop.permute.xlu0 %8220
      %8222 = vrot.lane.b32.xlu0 %v7711, 96
      %v8223 = vpop.permute.xlu0 %8222
      %8288 = vrot.lane.b32.xlu0 %v7744, 32
      %v8289 = vpop.permute.xlu0 %8288
      %8290 = vrot.lane.b32.xlu0 %v7745, 32
      %v8291 = vpop.permute.xlu0 %8290
      %8292 = vrot.lane.b32.xlu0 %v7746, 32
      %v8293 = vpop.permute.xlu0 %8292
      %8294 = vrot.lane.b32.xlu0 %v7747, 32
      %v8295 = vpop.permute.xlu0 %8294
      %8296 = vrot.lane.b32.xlu0 %v7748, 32
      %v8297 = vpop.permute.xlu0 %8296
      %8298 = vrot.lane.b32.xlu0 %v7749, 32
      %v8299 = vpop.permute.xlu0 %8298
      %8300 = vrot.lane.b32.xlu0 %v7750, 32
      %v8301 = vpop.permute.xlu0 %8300
      %8302 = vrot.lane.b32.xlu0 %v7751, 32
      %v8303 = vpop.permute.xlu0 %8302
      %8304 = vrot.lane.b32.xlu0 %v7752, 32
      %v8305 = vpop.permute.xlu0 %8304
      %8306 = vrot.lane.b32.xlu0 %v7753, 32
      %v8307 = vpop.permute.xlu0 %8306
      %8308 = vrot.lane.b32.xlu0 %v7754, 32
      %v8309 = vpop.permute.xlu0 %8308
      %8310 = vrot.lane.b32.xlu0 %v7755, 32
      %v8311 = vpop.permute.xlu0 %8310
      %8312 = vrot.lane.b32.xlu0 %v7756, 32
      %v8313 = vpop.permute.xlu0 %8312
      %8314 = vrot.lane.b32.xlu0 %v7757, 32
      %v8315 = vpop.permute.xlu0 %8314
      %8316 = vrot.lane.b32.xlu0 %v7758, 32
      %v8317 = vpop.permute.xlu0 %8316
      %8318 = vrot.lane.b32.xlu0 %v7759, 32
      %v8319 = vpop.permute.xlu0 %8318
      %8320 = vrot.lane.b32.xlu0 %v7760, 32
      %v8321 = vpop.permute.xlu0 %8320
      %8322 = vrot.lane.b32.xlu0 %v7761, 32
      %v8323 = vpop.permute.xlu0 %8322
      %8324 = vrot.lane.b32.xlu0 %v7762, 32
      %v8325 = vpop.permute.xlu0 %8324
      %8326 = vrot.lane.b32.xlu0 %v7763, 32
      %v8327 = vpop.permute.xlu0 %8326
      %8328 = vrot.lane.b32.xlu0 %v7764, 32
      %v8329 = vpop.permute.xlu0 %8328
      %8330 = vrot.lane.b32.xlu0 %v7765, 32
      %v8331 = vpop.permute.xlu0 %8330
      %8332 = vrot.lane.b32.xlu0 %v7766, 32
      %v8333 = vpop.permute.xlu0 %8332
      %8334 = vrot.lane.b32.xlu0 %v7767, 32
      %v8335 = vpop.permute.xlu0 %8334
      %8336 = vrot.lane.b32.xlu0 %v7768, 32
      %v8337 = vpop.permute.xlu0 %8336
      %8338 = vrot.lane.b32.xlu0 %v7769, 32
      %v8339 = vpop.permute.xlu0 %8338
      %8340 = vrot.lane.b32.xlu0 %v7770, 32
      %v8341 = vpop.permute.xlu0 %8340
      %8342 = vrot.lane.b32.xlu0 %v7771, 32
      %v8343 = vpop.permute.xlu0 %8342
      %8344 = vrot.lane.b32.xlu0 %v7772, 32
      %v8345 = vpop.permute.xlu0 %8344
      %8346 = vrot.lane.b32.xlu0 %v7773, 32
      %v8347 = vpop.permute.xlu0 %8346
      %8348 = vrot.lane.b32.xlu0 %v7774, 32
      %v8349 = vpop.permute.xlu0 %8348
      %8350 = vrot.lane.b32.xlu0 %v7775, 32
      %v8351 = vpop.permute.xlu0 %8350
      %8416 = vrot.lane.b32.xlu0 %v7776, 64
      %v8417 = vpop.permute.xlu0 %8416
      %8418 = vrot.lane.b32.xlu0 %v7777, 64
      %v8419 = vpop.permute.xlu0 %8418
      %8420 = vrot.lane.b32.xlu0 %v7778, 64
      %v8421 = vpop.permute.xlu0 %8420
      %8422 = vrot.lane.b32.xlu0 %v7779, 64
      %v8423 = vpop.permute.xlu0 %8422
      %8424 = vrot.lane.b32.xlu0 %v7780, 64
      %v8425 = vpop.permute.xlu0 %8424
      %8426 = vrot.lane.b32.xlu0 %v7781, 64
      %v8427 = vpop.permute.xlu0 %8426
      %8428 = vrot.lane.b32.xlu0 %v7782, 64
      %v8429 = vpop.permute.xlu0 %8428
      %8430 = vrot.lane.b32.xlu0 %v7783, 64
      %v8431 = vpop.permute.xlu0 %8430
      %8432 = vrot.lane.b32.xlu0 %v7784, 64
      %v8433 = vpop.permute.xlu0 %8432
      %8434 = vrot.lane.b32.xlu0 %v7785, 64
      %v8435 = vpop.permute.xlu0 %8434
      %8436 = vrot.lane.b32.xlu0 %v7786, 64
      %v8437 = vpop.permute.xlu0 %8436
      %8438 = vrot.lane.b32.xlu0 %v7787, 64
      %v8439 = vpop.permute.xlu0 %8438
      %8440 = vrot.lane.b32.xlu0 %v7788, 64
      %v8441 = vpop.permute.xlu0 %8440
      %8442 = vrot.lane.b32.xlu0 %v7789, 64
      %v8443 = vpop.permute.xlu0 %8442
      %8444 = vrot.lane.b32.xlu0 %v7790, 64
      %v8445 = vpop.permute.xlu0 %8444
      %8446 = vrot.lane.b32.xlu0 %v7791, 64
      %v8447 = vpop.permute.xlu0 %8446
      %8448 = vrot.lane.b32.xlu0 %v7792, 64
      %v8449 = vpop.permute.xlu0 %8448
      %8450 = vrot.lane.b32.xlu0 %v7793, 64
      %v8451 = vpop.permute.xlu0 %8450
      %8452 = vrot.lane.b32.xlu0 %v7794, 64
      %v8453 = vpop.permute.xlu0 %8452
      %8454 = vrot.lane.b32.xlu0 %v7795, 64
      %v8455 = vpop.permute.xlu0 %8454
      %8456 = vrot.lane.b32.xlu0 %v7796, 64
      %v8457 = vpop.permute.xlu0 %8456
      %8458 = vrot.lane.b32.xlu0 %v7797, 64
      %v8459 = vpop.permute.xlu0 %8458
      %8460 = vrot.lane.b32.xlu0 %v7798, 64
      %v8461 = vpop.permute.xlu0 %8460
      %8462 = vrot.lane.b32.xlu0 %v7799, 64
      %v8463 = vpop.permute.xlu0 %8462
      %8464 = vrot.lane.b32.xlu0 %v7800, 64
      %v8465 = vpop.permute.xlu0 %8464
      %8466 = vrot.lane.b32.xlu0 %v7801, 64
      %v8467 = vpop.permute.xlu0 %8466
      %8468 = vrot.lane.b32.xlu0 %v7802, 64
      %v8469 = vpop.permute.xlu0 %8468
      %8470 = vrot.lane.b32.xlu0 %v7803, 64
      %v8471 = vpop.permute.xlu0 %8470
      %8472 = vrot.lane.b32.xlu0 %v7804, 64
      %v8473 = vpop.permute.xlu0 %8472
      %8474 = vrot.lane.b32.xlu0 %v7805, 64
      %v8475 = vpop.permute.xlu0 %8474
      %8476 = vrot.lane.b32.xlu0 %v7806, 64
      %v8477 = vpop.permute.xlu0 %8476
      %8478 = vrot.lane.b32.xlu0 %v7807, 64
      %v8479 = vpop.permute.xlu0 %8478
      %8544 = vrot.lane.b32.xlu0 %v7808, 96
      %v8545 = vpop.permute.xlu0 %8544
      %8546 = vrot.lane.b32.xlu0 %v7809, 96
      %v8547 = vpop.permute.xlu0 %8546
      %8548 = vrot.lane.b32.xlu0 %v7810, 96
      %v8549 = vpop.permute.xlu0 %8548
      %8550 = vrot.lane.b32.xlu0 %v7811, 96
      %v8551 = vpop.permute.xlu0 %8550
      %8552 = vrot.lane.b32.xlu0 %v7812, 96
      %v8553 = vpop.permute.xlu0 %8552
      %8554 = vrot.lane.b32.xlu0 %v7813, 96
      %v8555 = vpop.permute.xlu0 %8554
      %8556 = vrot.lane.b32.xlu0 %v7814, 96
      %v8557 = vpop.permute.xlu0 %8556
      %8558 = vrot.lane.b32.xlu0 %v7815, 96
      %v8559 = vpop.permute.xlu0 %8558
      %8560 = vrot.lane.b32.xlu0 %v7816, 96
      %v8561 = vpop.permute.xlu0 %8560
      %8562 = vrot.lane.b32.xlu0 %v7817, 96
      %v8563 = vpop.permute.xlu0 %8562
      %8564 = vrot.lane.b32.xlu0 %v7818, 96
      %v8565 = vpop.permute.xlu0 %8564
      %8566 = vrot.lane.b32.xlu0 %v7819, 96
      %v8567 = vpop.permute.xlu0 %8566
      %8568 = vrot.lane.b32.xlu0 %v7820, 96
      %v8569 = vpop.permute.xlu0 %8568
      %8570 = vrot.lane.b32.xlu0 %v7821, 96
      %v8571 = vpop.permute.xlu0 %8570
      %8572 = vrot.lane.b32.xlu0 %v7822, 96
      %v8573 = vpop.permute.xlu0 %8572
      %8574 = vrot.lane.b32.xlu0 %v7823, 96
      %v8575 = vpop.permute.xlu0 %8574
      %8576 = vrot.lane.b32.xlu0 %v7824, 96
      %v8577 = vpop.permute.xlu0 %8576
      %8578 = vrot.lane.b32.xlu0 %v7825, 96
      %v8579 = vpop.permute.xlu0 %8578
      %8580 = vrot.lane.b32.xlu0 %v7826, 96
      %v8581 = vpop.permute.xlu0 %8580
      %8582 = vrot.lane.b32.xlu0 %v7827, 96
      %v8583 = vpop.permute.xlu0 %8582
      %8584 = vrot.lane.b32.xlu0 %v7828, 96
      %v8585 = vpop.permute.xlu0 %8584
      %8586 = vrot.lane.b32.xlu0 %v7829, 96
      %v8587 = vpop.permute.xlu0 %8586
      %8588 = vrot.lane.b32.xlu0 %v7830, 96
      %v8589 = vpop.permute.xlu0 %8588
      %8590 = vrot.lane.b32.xlu0 %v7831, 96
      %v8591 = vpop.permute.xlu0 %8590
      %8592 = vrot.lane.b32.xlu0 %v7832, 96
      %v8593 = vpop.permute.xlu0 %8592
      %8594 = vrot.lane.b32.xlu0 %v7833, 96
      %v8595 = vpop.permute.xlu0 %8594
      %8596 = vrot.lane.b32.xlu0 %v7834, 96
      %v8597 = vpop.permute.xlu0 %8596
      %8598 = vrot.lane.b32.xlu0 %v7835, 96
      %v8599 = vpop.permute.xlu0 %8598
      %8600 = vrot.lane.b32.xlu0 %v7836, 96
      %v8601 = vpop.permute.xlu0 %8600
      %8602 = vrot.lane.b32.xlu0 %v7837, 96
      %v8603 = vpop.permute.xlu0 %8602
      %8604 = vrot.lane.b32.xlu0 %v7838, 96
      %v8605 = vpop.permute.xlu0 %8604
      %8606 = vrot.lane.b32.xlu0 %v7839, 96
      %v8607 = vpop.permute.xlu0 %8606
      %v8640 = vsel %vm279, %v7584, %v7905
      %v8641 = vsel %vm279, %v7585, %v7907
      %v8642 = vsel %vm279, %v7586, %v7909
      %v8643 = vsel %vm279, %v7587, %v7911
      %v8644 = vsel %vm279, %v7588, %v7913
      %v8645 = vsel %vm279, %v7589, %v7915
      %v8646 = vsel %vm279, %v7590, %v7917
      %v8647 = vsel %vm279, %v7591, %v7919
      %v8648 = vsel %vm279, %v7592, %v7921
      %v8649 = vsel %vm279, %v7593, %v7923
      %v8650 = vsel %vm279, %v7594, %v7925
      %v8651 = vsel %vm279, %v7595, %v7927
      %v8652 = vsel %vm279, %v7596, %v7929
      %v8653 = vsel %vm279, %v7597, %v7931
      %v8654 = vsel %vm279, %v7598, %v7933
      %v8655 = vsel %vm279, %v7599, %v7935
      %v8656 = vsel %vm279, %v7600, %v7937
      %v8657 = vsel %vm279, %v7601, %v7939
      %v8658 = vsel %vm279, %v7602, %v7941
      %v8659 = vsel %vm279, %v7603, %v7943
      %v8660 = vsel %vm279, %v7604, %v7945
      %v8661 = vsel %vm279, %v7605, %v7947
      %v8662 = vsel %vm279, %v7606, %v7949
      %v8663 = vsel %vm279, %v7607, %v7951
      %v8664 = vsel %vm279, %v7608, %v7953
      %v8665 = vsel %vm279, %v7609, %v7955
      %v8666 = vsel %vm279, %v7610, %v7957
      %v8667 = vsel %vm279, %v7611, %v7959
      %v8668 = vsel %vm279, %v7612, %v7961
      %v8669 = vsel %vm279, %v7613, %v7963
      %v8670 = vsel %vm279, %v7614, %v7965
      %v8671 = vsel %vm279, %v7615, %v7967
      %v8672 = vsel %vm1522, %v8640, %v8033
      %v8673 = vsel %vm1522, %v8641, %v8035
      %v8674 = vsel %vm1522, %v8642, %v8037
      %v8675 = vsel %vm1522, %v8643, %v8039
      %v8676 = vsel %vm1522, %v8644, %v8041
      %v8677 = vsel %vm1522, %v8645, %v8043
      %v8678 = vsel %vm1522, %v8646, %v8045
      %v8679 = vsel %vm1522, %v8647, %v8047
      %v8680 = vsel %vm1522, %v8648, %v8049
      %v8681 = vsel %vm1522, %v8649, %v8051
      %v8682 = vsel %vm1522, %v8650, %v8053
      %v8683 = vsel %vm1522, %v8651, %v8055
      %v8684 = vsel %vm1522, %v8652, %v8057
      %v8685 = vsel %vm1522, %v8653, %v8059
      %v8686 = vsel %vm1522, %v8654, %v8061
      %v8687 = vsel %vm1522, %v8655, %v8063
      %v8688 = vsel %vm1522, %v8656, %v8065
      %v8689 = vsel %vm1522, %v8657, %v8067
      %v8690 = vsel %vm1522, %v8658, %v8069
      %v8691 = vsel %vm1522, %v8659, %v8071
      %v8692 = vsel %vm1522, %v8660, %v8073
      %v8693 = vsel %vm1522, %v8661, %v8075
      %v8694 = vsel %vm1522, %v8662, %v8077
      %v8695 = vsel %vm1522, %v8663, %v8079
      %v8696 = vsel %vm1522, %v8664, %v8081
      %v8697 = vsel %vm1522, %v8665, %v8083
      %v8698 = vsel %vm1522, %v8666, %v8085
      %v8699 = vsel %vm1522, %v8667, %v8087
      %v8700 = vsel %vm1522, %v8668, %v8089
      %v8701 = vsel %vm1522, %v8669, %v8091
      %v8702 = vsel %vm1522, %v8670, %v8093
      %v8703 = vsel %vm1522, %v8671, %v8095
      %v8704 = vsel %vm1555, %v8672, %v8161
      %v8705 = vsel %vm1555, %v8673, %v8163
      %v8706 = vsel %vm1555, %v8674, %v8165
      %v8707 = vsel %vm1555, %v8675, %v8167
      %v8708 = vsel %vm1555, %v8676, %v8169
      %v8709 = vsel %vm1555, %v8677, %v8171
      %v8710 = vsel %vm1555, %v8678, %v8173
      %v8711 = vsel %vm1555, %v8679, %v8175
      %v8712 = vsel %vm1555, %v8680, %v8177
      %v8713 = vsel %vm1555, %v8681, %v8179
      %v8714 = vsel %vm1555, %v8682, %v8181
      %v8715 = vsel %vm1555, %v8683, %v8183
      %v8716 = vsel %vm1555, %v8684, %v8185
      %v8717 = vsel %vm1555, %v8685, %v8187
      %v8718 = vsel %vm1555, %v8686, %v8189
      %v8719 = vsel %vm1555, %v8687, %v8191
      %v8720 = vsel %vm1555, %v8688, %v8193
      %v8721 = vsel %vm1555, %v8689, %v8195
      %v8722 = vsel %vm1555, %v8690, %v8197
      %v8723 = vsel %vm1555, %v8691, %v8199
      %v8724 = vsel %vm1555, %v8692, %v8201
      %v8725 = vsel %vm1555, %v8693, %v8203
      %v8726 = vsel %vm1555, %v8694, %v8205
      %v8727 = vsel %vm1555, %v8695, %v8207
      %v8728 = vsel %vm1555, %v8696, %v8209
      %v8729 = vsel %vm1555, %v8697, %v8211
      %v8730 = vsel %vm1555, %v8698, %v8213
      %v8731 = vsel %vm1555, %v8699, %v8215
      %v8732 = vsel %vm1555, %v8700, %v8217
      %v8733 = vsel %vm1555, %v8701, %v8219
      %v8734 = vsel %vm1555, %v8702, %v8221
      %v8735 = vsel %vm1555, %v8703, %v8223
      %v8736 = vsel %vm279, %v7712, %v8289
      %v8737 = vsel %vm279, %v7713, %v8291
      %v8738 = vsel %vm279, %v7714, %v8293
      %v8739 = vsel %vm279, %v7715, %v8295
      %v8740 = vsel %vm279, %v7716, %v8297
      %v8741 = vsel %vm279, %v7717, %v8299
      %v8742 = vsel %vm279, %v7718, %v8301
      %v8743 = vsel %vm279, %v7719, %v8303
      %v8744 = vsel %vm279, %v7720, %v8305
      %v8745 = vsel %vm279, %v7721, %v8307
      %v8746 = vsel %vm279, %v7722, %v8309
      %v8747 = vsel %vm279, %v7723, %v8311
      %v8748 = vsel %vm279, %v7724, %v8313
      %v8749 = vsel %vm279, %v7725, %v8315
      %v8750 = vsel %vm279, %v7726, %v8317
      %v8751 = vsel %vm279, %v7727, %v8319
      %v8752 = vsel %vm279, %v7728, %v8321
      %v8753 = vsel %vm279, %v7729, %v8323
      %v8754 = vsel %vm279, %v7730, %v8325
      %v8755 = vsel %vm279, %v7731, %v8327
      %v8756 = vsel %vm279, %v7732, %v8329
      %v8757 = vsel %vm279, %v7733, %v8331
      %v8758 = vsel %vm279, %v7734, %v8333
      %v8759 = vsel %vm279, %v7735, %v8335
      %v8760 = vsel %vm279, %v7736, %v8337
      %v8761 = vsel %vm279, %v7737, %v8339
      %v8762 = vsel %vm279, %v7738, %v8341
      %v8763 = vsel %vm279, %v7739, %v8343
      %v8764 = vsel %vm279, %v7740, %v8345
      %v8765 = vsel %vm279, %v7741, %v8347
      %v8766 = vsel %vm279, %v7742, %v8349
      %v8767 = vsel %vm279, %v7743, %v8351
      %v8768 = vsel %vm1522, %v8736, %v8417
      %v8769 = vsel %vm1522, %v8737, %v8419
      %v8770 = vsel %vm1522, %v8738, %v8421
      %v8771 = vsel %vm1522, %v8739, %v8423
      %v8772 = vsel %vm1522, %v8740, %v8425
      %v8773 = vsel %vm1522, %v8741, %v8427
      %v8774 = vsel %vm1522, %v8742, %v8429
      %v8775 = vsel %vm1522, %v8743, %v8431
      %v8776 = vsel %vm1522, %v8744, %v8433
      %v8777 = vsel %vm1522, %v8745, %v8435
      %v8778 = vsel %vm1522, %v8746, %v8437
      %v8779 = vsel %vm1522, %v8747, %v8439
      %v8780 = vsel %vm1522, %v8748, %v8441
      %v8781 = vsel %vm1522, %v8749, %v8443
      %v8782 = vsel %vm1522, %v8750, %v8445
      %v8783 = vsel %vm1522, %v8751, %v8447
      %v8784 = vsel %vm1522, %v8752, %v8449
      %v8785 = vsel %vm1522, %v8753, %v8451
      %v8786 = vsel %vm1522, %v8754, %v8453
      %v8787 = vsel %vm1522, %v8755, %v8455
      %v8788 = vsel %vm1522, %v8756, %v8457
      %v8789 = vsel %vm1522, %v8757, %v8459
      %v8790 = vsel %vm1522, %v8758, %v8461
      %v8791 = vsel %vm1522, %v8759, %v8463
      %v8792 = vsel %vm1522, %v8760, %v8465
      %v8793 = vsel %vm1522, %v8761, %v8467
      %v8794 = vsel %vm1522, %v8762, %v8469
      %v8795 = vsel %vm1522, %v8763, %v8471
      %v8796 = vsel %vm1522, %v8764, %v8473
      %v8797 = vsel %vm1522, %v8765, %v8475
      %v8798 = vsel %vm1522, %v8766, %v8477
      %v8799 = vsel %vm1522, %v8767, %v8479
      %v8800 = vsel %vm1555, %v8768, %v8545
      %v8801 = vsel %vm1555, %v8769, %v8547
      %v8802 = vsel %vm1555, %v8770, %v8549
      %v8803 = vsel %vm1555, %v8771, %v8551
      %v8804 = vsel %vm1555, %v8772, %v8553
      %v8805 = vsel %vm1555, %v8773, %v8555
      %v8806 = vsel %vm1555, %v8774, %v8557
      %v8807 = vsel %vm1555, %v8775, %v8559
      %v8808 = vsel %vm1555, %v8776, %v8561
      %v8809 = vsel %vm1555, %v8777, %v8563
      %v8810 = vsel %vm1555, %v8778, %v8565
      %v8811 = vsel %vm1555, %v8779, %v8567
      %v8812 = vsel %vm1555, %v8780, %v8569
      %v8813 = vsel %vm1555, %v8781, %v8571
      %v8814 = vsel %vm1555, %v8782, %v8573
      %v8815 = vsel %vm1555, %v8783, %v8575
      %v8816 = vsel %vm1555, %v8784, %v8577
      %v8817 = vsel %vm1555, %v8785, %v8579
      %v8818 = vsel %vm1555, %v8786, %v8581
      %v8819 = vsel %vm1555, %v8787, %v8583
      %v8820 = vsel %vm1555, %v8788, %v8585
      %v8821 = vsel %vm1555, %v8789, %v8587
      %v8822 = vsel %vm1555, %v8790, %v8589
      %v8823 = vsel %vm1555, %v8791, %v8591
      %v8824 = vsel %vm1555, %v8792, %v8593
      %v8825 = vsel %vm1555, %v8793, %v8595
      %v8826 = vsel %vm1555, %v8794, %v8597
      %v8827 = vsel %vm1555, %v8795, %v8599
      %v8828 = vsel %vm1555, %v8796, %v8601
      %v8829 = vsel %vm1555, %v8797, %v8603
      %v8830 = vsel %vm1555, %v8798, %v8605
      %v8831 = vsel %vm1555, %v8799, %v8607
      %v8832 = vld [vmem:[%s5] sm:$0xff]
      %v8833 = vld [vmem:[%s5 + $0x8] sm:$0xff]
      %v8834 = vld [vmem:[%s5 + $0x10] sm:$0xff]
      %v8835 = vld [vmem:[%s5 + $0x18] sm:$0xff]
      %v8836 = vld [vmem:[%s5 + $0x20] sm:$0xff]
      %v8837 = vld [vmem:[%s5 + $0x28] sm:$0xff]
      %v8838 = vld [vmem:[%s5 + $0x30] sm:$0xff]
      %v8839 = vld [vmem:[%s5 + $0x38] sm:$0xff]
      %v8840 = vld [vmem:[%s5 + $0x40] sm:$0xff]
      %v8841 = vld [vmem:[%s5 + $0x48] sm:$0xff]
      %v8842 = vld [vmem:[%s5 + $0x50] sm:$0xff]
      %v8843 = vld [vmem:[%s5 + $0x58] sm:$0xff]
      %v8844 = vld [vmem:[%s5 + $0x60] sm:$0xff]
      %v8845 = vld [vmem:[%s5 + $0x68] sm:$0xff]
      %v8846 = vld [vmem:[%s5 + $0x70] sm:$0xff]
      %v8847 = vld [vmem:[%s5 + $0x78] sm:$0xff]
      %v8848 = vld [vmem:[%s5 + $0x80] sm:$0xff]
      %v8849 = vld [vmem:[%s5 + $0x88] sm:$0xff]
      %v8850 = vld [vmem:[%s5 + $0x90] sm:$0xff]
      %v8851 = vld [vmem:[%s5 + $0x98] sm:$0xff]
      %v8852 = vld [vmem:[%s5 + $0xa0] sm:$0xff]
      %v8853 = vld [vmem:[%s5 + $0xa8] sm:$0xff]
      %v8854 = vld [vmem:[%s5 + $0xb0] sm:$0xff]
      %v8855 = vld [vmem:[%s5 + $0xb8] sm:$0xff]
      %v8856 = vld [vmem:[%s5 + $0xc0] sm:$0xff]
      %v8857 = vld [vmem:[%s5 + $0xc8] sm:$0xff]
      %v8858 = vld [vmem:[%s5 + $0xd0] sm:$0xff]
      %v8859 = vld [vmem:[%s5 + $0xd8] sm:$0xff]
      %v8860 = vld [vmem:[%s5 + $0xe0] sm:$0xff]
      %v8861 = vld [vmem:[%s5 + $0xe8] sm:$0xff]
      %v8862 = vld [vmem:[%s5 + $0xf0] sm:$0xff]
      %v8863 = vld [vmem:[%s5 + $0xf8] sm:$0xff]
      %v8864 = vld [vmem:[%s5 + $0x100] sm:$0xff]
      %v8865 = vld [vmem:[%s5 + $0x108] sm:$0xff]
      %v8866 = vld [vmem:[%s5 + $0x110] sm:$0xff]
      %v8867 = vld [vmem:[%s5 + $0x118] sm:$0xff]
      %v8868 = vld [vmem:[%s6] sm:$0x1]
      %v8870 = vperm.slane %v8868, 0
      %v8873 = vsel %vm279, %v7840, 0
      %v8876 = vsel %vm279, %v7841, 0
      %v8879 = vsel %vm279, %v7842, 0
      %v8882 = vsel %vm279, %v7843, 0
      %v8885 = vsel %vm279, %v7844, 0
      %v8888 = vsel %vm279, %v7845, 0
      %v8891 = vsel %vm279, %v7846, 0
      %v8894 = vsel %vm279, %v7847, 0
      %v8897 = vsel %vm279, %v7848, 0
      %v8900 = vsel %vm279, %v7849, 0
      %v8903 = vsel %vm279, %v7850, 0
      %v8906 = vsel %vm279, %v7851, 0
      %v8909 = vsel %vm279, %v7852, 0
      %v8912 = vsel %vm279, %v7853, 0
      %v8915 = vsel %vm279, %v7854, 0
      %v8918 = vsel %vm279, %v7855, 0
      %v8921 = vsel %vm279, %v7856, 0
      %v8924 = vsel %vm279, %v7857, 0
      %v8927 = vsel %vm279, %v7858, 0
      %v8930 = vsel %vm279, %v7859, 0
      %v8933 = vsel %vm279, %v7860, 0
      %v8936 = vsel %vm279, %v7861, 0
      %v8939 = vsel %vm279, %v7862, 0
      %v8942 = vsel %vm279, %v7863, 0
      %v8945 = vsel %vm279, %v7864, 0
      %v8948 = vsel %vm279, %v7865, 0
      %v8951 = vsel %vm279, %v7866, 0
      %v8954 = vsel %vm279, %v7867, 0
      %v8957 = vsel %vm279, %v7868, 0
      %v8960 = vsel %vm279, %v7869, 0
      %v8963 = vsel %vm279, %v7870, 0
      %v8966 = vsel %vm279, %v7871, 0
      %8968 = vmatpush.msra.mxu0 %v8847
      %8969 = vmatpush.msra.mxu0 %v8846
      %8970 = vmatpush.msra.mxu0 %v8845
      %8971 = vmatpush.msra.mxu0 %v8844
      %8972 = vmatpush.msra.mxu0 %v8843
      %8973 = vmatpush.msra.mxu0 %v8842
      %8974 = vmatpush.msra.mxu0 %v8841
      %8975 = vmatpush.msra.mxu0 %v8840
      %8976 = vmatpush.msra.mxu0 %v8839
      %8977 = vmatpush.msra.mxu0 %v8838
      %8978 = vmatpush.msra.mxu0 %v8837
      %8979 = vmatpush.msra.mxu0 %v8836
      %8980 = vmatpush.msra.mxu0 %v8835
      %8981 = vmatpush.msra.mxu0 %v8834
      %8982 = vmatpush.msra.mxu0 %v8833
      %8983 = vmatpush.msra.mxu0 %v8832
      %8984 = vmatmul.f32.gmra.mxu0 %v8704
      %v8985 = vpop.f32.mrf.mxu0
      %v8986 = vadd.f32 %v8870, %v8985
      %8987 = vmatmul.f32.gmra.mxu0 %v8705
      %v8988 = vpop.f32.mrf.mxu0
      %v8989 = vadd.f32 %v8870, %v8988
      %8990 = vmatmul.f32.gmra.mxu0 %v8706
      %v8991 = vpop.f32.mrf.mxu0
      %v8992 = vadd.f32 %v8870, %v8991
      %8993 = vmatmul.f32.gmra.mxu0 %v8707
      %v8994 = vpop.f32.mrf.mxu0
      %v8995 = vadd.f32 %v8870, %v8994
      %8996 = vmatmul.f32.gmra.mxu0 %v8708
      %v8997 = vpop.f32.mrf.mxu0
      %v8998 = vadd.f32 %v8870, %v8997
      %8999 = vmatmul.f32.gmra.mxu0 %v8709
      %v9000 = vpop.f32.mrf.mxu0
      %v9001 = vadd.f32 %v8870, %v9000
      %9002 = vmatmul.f32.gmra.mxu0 %v8710
      %v9003 = vpop.f32.mrf.mxu0
      %v9004 = vadd.f32 %v8870, %v9003
      %9005 = vmatmul.f32.gmra.mxu0 %v8711
      %v9006 = vpop.f32.mrf.mxu0
      %v9007 = vadd.f32 %v8870, %v9006
      %9008 = vmatmul.f32.gmra.mxu0 %v8712
      %v9009 = vpop.f32.mrf.mxu0
      %v9010 = vadd.f32 %v8870, %v9009
      %9011 = vmatmul.f32.gmra.mxu0 %v8713
      %v9012 = vpop.f32.mrf.mxu0
      %v9013 = vadd.f32 %v8870, %v9012
      %9014 = vmatmul.f32.gmra.mxu0 %v8714
      %v9015 = vpop.f32.mrf.mxu0
      %v9016 = vadd.f32 %v8870, %v9015
      %9017 = vmatmul.f32.gmra.mxu0 %v8715
      %v9018 = vpop.f32.mrf.mxu0
      %v9019 = vadd.f32 %v8870, %v9018
      %9020 = vmatmul.f32.gmra.mxu0 %v8716
      %v9021 = vpop.f32.mrf.mxu0
      %v9022 = vadd.f32 %v8870, %v9021
      %9023 = vmatmul.f32.gmra.mxu0 %v8717
      %v9024 = vpop.f32.mrf.mxu0
      %v9025 = vadd.f32 %v8870, %v9024
      %9026 = vmatmul.f32.gmra.mxu0 %v8718
      %v9027 = vpop.f32.mrf.mxu0
      %v9028 = vadd.f32 %v8870, %v9027
      %9029 = vmatmul.f32.gmra.mxu0 %v8719
      %v9030 = vpop.f32.mrf.mxu0
      %v9031 = vadd.f32 %v8870, %v9030
      %9032 = vmatmul.f32.gmra.mxu0 %v8720
      %v9033 = vpop.f32.mrf.mxu0
      %v9034 = vadd.f32 %v8870, %v9033
      %9035 = vmatmul.f32.gmra.mxu0 %v8721
      %v9036 = vpop.f32.mrf.mxu0
      %v9037 = vadd.f32 %v8870, %v9036
      %9038 = vmatmul.f32.gmra.mxu0 %v8722
      %v9039 = vpop.f32.mrf.mxu0
      %v9040 = vadd.f32 %v8870, %v9039
      %9041 = vmatmul.f32.gmra.mxu0 %v8723
      %v9042 = vpop.f32.mrf.mxu0
      %v9043 = vadd.f32 %v8870, %v9042
      %9044 = vmatmul.f32.gmra.mxu0 %v8724
      %v9045 = vpop.f32.mrf.mxu0
      %v9046 = vadd.f32 %v8870, %v9045
      %9047 = vmatmul.f32.gmra.mxu0 %v8725
      %v9048 = vpop.f32.mrf.mxu0
      %v9049 = vadd.f32 %v8870, %v9048
      %9050 = vmatmul.f32.gmra.mxu0 %v8726
      %v9051 = vpop.f32.mrf.mxu0
      %v9052 = vadd.f32 %v8870, %v9051
      %9053 = vmatmul.f32.gmra.mxu0 %v8727
      %v9054 = vpop.f32.mrf.mxu0
      %v9055 = vadd.f32 %v8870, %v9054
      %9056 = vmatmul.f32.gmra.mxu0 %v8728
      %v9057 = vpop.f32.mrf.mxu0
      %v9058 = vadd.f32 %v8870, %v9057
      %9059 = vmatmul.f32.gmra.mxu0 %v8729
      %v9060 = vpop.f32.mrf.mxu0
      %v9061 = vadd.f32 %v8870, %v9060
      %9062 = vmatmul.f32.gmra.mxu0 %v8730
      %v9063 = vpop.f32.mrf.mxu0
      %v9064 = vadd.f32 %v8870, %v9063
      %9065 = vmatmul.f32.gmra.mxu0 %v8731
      %v9066 = vpop.f32.mrf.mxu0
      %v9067 = vadd.f32 %v8870, %v9066
      %9068 = vmatmul.f32.gmra.mxu0 %v8732
      %v9069 = vpop.f32.mrf.mxu0
      %v9070 = vadd.f32 %v8870, %v9069
      %9071 = vmatmul.f32.gmra.mxu0 %v8733
      %v9072 = vpop.f32.mrf.mxu0
      %v9073 = vadd.f32 %v8870, %v9072
      %9074 = vmatmul.f32.gmra.mxu0 %v8734
      %v9075 = vpop.f32.mrf.mxu0
      %v9076 = vadd.f32 %v8870, %v9075
      %9077 = vmatmul.f32.gmra.mxu0 %v8735
      %v9078 = vpop.f32.mrf.mxu0
      %v9079 = vadd.f32 %v8870, %v9078
      %9080 = vdwg.mxu0
      %9081 = vmatpush.msra.mxu0 %v8863
      %9082 = vmatpush.msra.mxu0 %v8862
      %9083 = vmatpush.msra.mxu0 %v8861
      %9084 = vmatpush.msra.mxu0 %v8860
      %9085 = vmatpush.msra.mxu0 %v8859
      %9086 = vmatpush.msra.mxu0 %v8858
      %9087 = vmatpush.msra.mxu0 %v8857
      %9088 = vmatpush.msra.mxu0 %v8856
      %9089 = vmatpush.msra.mxu0 %v8855
      %9090 = vmatpush.msra.mxu0 %v8854
      %9091 = vmatpush.msra.mxu0 %v8853
      %9092 = vmatpush.msra.mxu0 %v8852
      %9093 = vmatpush.msra.mxu0 %v8851
      %9094 = vmatpush.msra.mxu0 %v8850
      %9095 = vmatpush.msra.mxu0 %v8849
      %9096 = vmatpush.msra.mxu0 %v8848
      %9097 = vmatmul.f32.gmra.mxu0 %v8800
      %v9098 = vpop.f32.mrf.mxu0
      %v9099 = vadd.f32 %v8986, %v9098
      %9100 = vmatmul.f32.gmra.mxu0 %v8801
      %v9101 = vpop.f32.mrf.mxu0
      %v9102 = vadd.f32 %v8989, %v9101
      %9103 = vmatmul.f32.gmra.mxu0 %v8802
      %v9104 = vpop.f32.mrf.mxu0
      %v9105 = vadd.f32 %v8992, %v9104
      %9106 = vmatmul.f32.gmra.mxu0 %v8803
      %v9107 = vpop.f32.mrf.mxu0
      %v9108 = vadd.f32 %v8995, %v9107
      %9109 = vmatmul.f32.gmra.mxu0 %v8804
      %v9110 = vpop.f32.mrf.mxu0
      %v9111 = vadd.f32 %v8998, %v9110
      %9112 = vmatmul.f32.gmra.mxu0 %v8805
      %v9113 = vpop.f32.mrf.mxu0
      %v9114 = vadd.f32 %v9001, %v9113
      %9115 = vmatmul.f32.gmra.mxu0 %v8806
      %v9116 = vpop.f32.mrf.mxu0
      %v9117 = vadd.f32 %v9004, %v9116
      %9118 = vmatmul.f32.gmra.mxu0 %v8807
      %v9119 = vpop.f32.mrf.mxu0
      %v9120 = vadd.f32 %v9007, %v9119
      %9121 = vmatmul.f32.gmra.mxu0 %v8808
      %v9122 = vpop.f32.mrf.mxu0
      %v9123 = vadd.f32 %v9010, %v9122
      %9124 = vmatmul.f32.gmra.mxu0 %v8809
      %v9125 = vpop.f32.mrf.mxu0
      %v9126 = vadd.f32 %v9013, %v9125
      %9127 = vmatmul.f32.gmra.mxu0 %v8810
      %v9128 = vpop.f32.mrf.mxu0
      %v9129 = vadd.f32 %v9016, %v9128
      %9130 = vmatmul.f32.gmra.mxu0 %v8811
      %v9131 = vpop.f32.mrf.mxu0
      %v9132 = vadd.f32 %v9019, %v9131
      %9133 = vmatmul.f32.gmra.mxu0 %v8812
      %v9134 = vpop.f32.mrf.mxu0
      %v9135 = vadd.f32 %v9022, %v9134
      %9136 = vmatmul.f32.gmra.mxu0 %v8813
      %v9137 = vpop.f32.mrf.mxu0
      %v9138 = vadd.f32 %v9025, %v9137
      %9139 = vmatmul.f32.gmra.mxu0 %v8814
      %v9140 = vpop.f32.mrf.mxu0
      %v9141 = vadd.f32 %v9028, %v9140
      %9142 = vmatmul.f32.gmra.mxu0 %v8815
      %v9143 = vpop.f32.mrf.mxu0
      %v9144 = vadd.f32 %v9031, %v9143
      %9145 = vmatmul.f32.gmra.mxu0 %v8816
      %v9146 = vpop.f32.mrf.mxu0
      %v9147 = vadd.f32 %v9034, %v9146
      %9148 = vmatmul.f32.gmra.mxu0 %v8817
      %v9149 = vpop.f32.mrf.mxu0
      %v9150 = vadd.f32 %v9037, %v9149
      %9151 = vmatmul.f32.gmra.mxu0 %v8818
      %v9152 = vpop.f32.mrf.mxu0
      %v9153 = vadd.f32 %v9040, %v9152
      %9154 = vmatmul.f32.gmra.mxu0 %v8819
      %v9155 = vpop.f32.mrf.mxu0
      %v9156 = vadd.f32 %v9043, %v9155
      %9157 = vmatmul.f32.gmra.mxu0 %v8820
      %v9158 = vpop.f32.mrf.mxu0
      %v9159 = vadd.f32 %v9046, %v9158
      %9160 = vmatmul.f32.gmra.mxu0 %v8821
      %v9161 = vpop.f32.mrf.mxu0
      %v9162 = vadd.f32 %v9049, %v9161
      %9163 = vmatmul.f32.gmra.mxu0 %v8822
      %v9164 = vpop.f32.mrf.mxu0
      %v9165 = vadd.f32 %v9052, %v9164
      %9166 = vmatmul.f32.gmra.mxu0 %v8823
      %v9167 = vpop.f32.mrf.mxu0
      %v9168 = vadd.f32 %v9055, %v9167
      %9169 = vmatmul.f32.gmra.mxu0 %v8824
      %v9170 = vpop.f32.mrf.mxu0
      %v9171 = vadd.f32 %v9058, %v9170
      %9172 = vmatmul.f32.gmra.mxu0 %v8825
      %v9173 = vpop.f32.mrf.mxu0
      %v9174 = vadd.f32 %v9061, %v9173
      %9175 = vmatmul.f32.gmra.mxu0 %v8826
      %v9176 = vpop.f32.mrf.mxu0
      %v9177 = vadd.f32 %v9064, %v9176
      %9178 = vmatmul.f32.gmra.mxu0 %v8827
      %v9179 = vpop.f32.mrf.mxu0
      %v9180 = vadd.f32 %v9067, %v9179
      %9181 = vmatmul.f32.gmra.mxu0 %v8828
      %v9182 = vpop.f32.mrf.mxu0
      %v9183 = vadd.f32 %v9070, %v9182
      %9184 = vmatmul.f32.gmra.mxu0 %v8829
      %v9185 = vpop.f32.mrf.mxu0
      %v9186 = vadd.f32 %v9073, %v9185
      %9187 = vmatmul.f32.gmra.mxu0 %v8830
      %v9188 = vpop.f32.mrf.mxu0
      %v9189 = vadd.f32 %v9076, %v9188
      %9190 = vmatmul.f32.gmra.mxu0 %v8831
      %v9191 = vpop.f32.mrf.mxu0
      %v9192 = vadd.f32 %v9079, %v9191
      %9193 = vdwg.mxu0
      %9194 = vmatpush.msra.mxu0 0.0
      %9195 = vmatpush.msra.mxu0 0.0
      %9196 = vmatpush.msra.mxu0 0.0
      %9197 = vmatpush.msra.mxu0 0.0
      %9198 = vmatpush.msra.mxu0 0.0
      %9199 = vmatpush.msra.mxu0 0.0
      %9200 = vmatpush.msra.mxu0 0.0
      %9201 = vmatpush.msra.mxu0 0.0
      %9202 = vmatpush.msra.mxu0 0.0
      %9203 = vmatpush.msra.mxu0 0.0
      %9204 = vmatpush.msra.mxu0 0.0
      %9205 = vmatpush.msra.mxu0 0.0
      %9206 = vmatpush.msra.mxu0 %v8867
      %9207 = vmatpush.msra.mxu0 %v8866
      %9208 = vmatpush.msra.mxu0 %v8865
      %9209 = vmatpush.msra.mxu0 %v8864
      %9210 = vmatmul.f32.gmra.mxu0 %v8873
      %v9211 = vpop.f32.mrf.mxu0
      %v9212 = vadd.f32 %v9099, %v9211
      %9213 = vmatmul.f32.gmra.mxu0 %v8876
      %v9214 = vpop.f32.mrf.mxu0
      %v9215 = vadd.f32 %v9102, %v9214
      %9216 = vmatmul.f32.gmra.mxu0 %v8879
      %v9217 = vpop.f32.mrf.mxu0
      %v9218 = vadd.f32 %v9105, %v9217
      %9219 = vmatmul.f32.gmra.mxu0 %v8882
      %v9220 = vpop.f32.mrf.mxu0
      %v9221 = vadd.f32 %v9108, %v9220
      %9222 = vmatmul.f32.gmra.mxu0 %v8885
      %v9223 = vpop.f32.mrf.mxu0
      %v9224 = vadd.f32 %v9111, %v9223
      %9225 = vmatmul.f32.gmra.mxu0 %v8888
      %v9226 = vpop.f32.mrf.mxu0
      %v9227 = vadd.f32 %v9114, %v9226
      %9228 = vmatmul.f32.gmra.mxu0 %v8891
      %v9229 = vpop.f32.mrf.mxu0
      %v9230 = vadd.f32 %v9117, %v9229
      %9231 = vmatmul.f32.gmra.mxu0 %v8894
      %v9232 = vpop.f32.mrf.mxu0
      %v9233 = vadd.f32 %v9120, %v9232
      %9234 = vmatmul.f32.gmra.mxu0 %v8897
      %v9235 = vpop.f32.mrf.mxu0
      %v9236 = vadd.f32 %v9123, %v9235
      %9237 = vmatmul.f32.gmra.mxu0 %v8900
      %v9238 = vpop.f32.mrf.mxu0
      %v9239 = vadd.f32 %v9126, %v9238
      %9240 = vmatmul.f32.gmra.mxu0 %v8903
      %v9241 = vpop.f32.mrf.mxu0
      %v9242 = vadd.f32 %v9129, %v9241
      %9243 = vmatmul.f32.gmra.mxu0 %v8906
      %v9244 = vpop.f32.mrf.mxu0
      %v9245 = vadd.f32 %v9132, %v9244
      %9246 = vmatmul.f32.gmra.mxu0 %v8909
      %v9247 = vpop.f32.mrf.mxu0
      %v9248 = vadd.f32 %v9135, %v9247
      %9249 = vmatmul.f32.gmra.mxu0 %v8912
      %v9250 = vpop.f32.mrf.mxu0
      %v9251 = vadd.f32 %v9138, %v9250
      %9252 = vmatmul.f32.gmra.mxu0 %v8915
      %v9253 = vpop.f32.mrf.mxu0
      %v9254 = vadd.f32 %v9141, %v9253
      %9255 = vmatmul.f32.gmra.mxu0 %v8918
      %v9256 = vpop.f32.mrf.mxu0
      %v9257 = vadd.f32 %v9144, %v9256
      %9258 = vmatmul.f32.gmra.mxu0 %v8921
      %v9259 = vpop.f32.mrf.mxu0
      %v9260 = vadd.f32 %v9147, %v9259
      %9261 = vmatmul.f32.gmra.mxu0 %v8924
      %v9262 = vpop.f32.mrf.mxu0
      %v9263 = vadd.f32 %v9150, %v9262
      %9264 = vmatmul.f32.gmra.mxu0 %v8927
      %v9265 = vpop.f32.mrf.mxu0
      %v9266 = vadd.f32 %v9153, %v9265
      %9267 = vmatmul.f32.gmra.mxu0 %v8930
      %v9268 = vpop.f32.mrf.mxu0
      %v9269 = vadd.f32 %v9156, %v9268
      %9270 = vmatmul.f32.gmra.mxu0 %v8933
      %v9271 = vpop.f32.mrf.mxu0
      %v9272 = vadd.f32 %v9159, %v9271
      %9273 = vmatmul.f32.gmra.mxu0 %v8936
      %v9274 = vpop.f32.mrf.mxu0
      %v9275 = vadd.f32 %v9162, %v9274
      %9276 = vmatmul.f32.gmra.mxu0 %v8939
      %v9277 = vpop.f32.mrf.mxu0
      %v9278 = vadd.f32 %v9165, %v9277
      %9279 = vmatmul.f32.gmra.mxu0 %v8942
      %v9280 = vpop.f32.mrf.mxu0
      %v9281 = vadd.f32 %v9168, %v9280
      %9282 = vmatmul.f32.gmra.mxu0 %v8945
      %v9283 = vpop.f32.mrf.mxu0
      %v9284 = vadd.f32 %v9171, %v9283
      %9285 = vmatmul.f32.gmra.mxu0 %v8948
      %v9286 = vpop.f32.mrf.mxu0
      %v9287 = vadd.f32 %v9174, %v9286
      %9288 = vmatmul.f32.gmra.mxu0 %v8951
      %v9289 = vpop.f32.mrf.mxu0
      %v9290 = vadd.f32 %v9177, %v9289
      %9291 = vmatmul.f32.gmra.mxu0 %v8954
      %v9292 = vpop.f32.mrf.mxu0
      %v9293 = vadd.f32 %v9180, %v9292
      %9294 = vmatmul.f32.gmra.mxu0 %v8957
      %v9295 = vpop.f32.mrf.mxu0
      %v9296 = vadd.f32 %v9183, %v9295
      %9297 = vmatmul.f32.gmra.mxu0 %v8960
      %v9298 = vpop.f32.mrf.mxu0
      %v9299 = vadd.f32 %v9186, %v9298
      %9300 = vmatmul.f32.gmra.mxu0 %v8963
      %v9301 = vpop.f32.mrf.mxu0
      %v9302 = vadd.f32 %v9189, %v9301
      %9303 = vmatmul.f32.gmra.mxu0 %v8966
      %v9304 = vpop.f32.mrf.mxu0
      %v9305 = vadd.f32 %v9192, %v9304
      %9306 = vdwg.mxu0
      %v9307 = vmax.f32 %v9212, 0.0
      %v9308 = vmax.f32 %v9215, 0.0
      %v9309 = vmax.f32 %v9218, 0.0
      %v9310 = vmax.f32 %v9221, 0.0
      %v9311 = vmax.f32 %v9224, 0.0
      %v9312 = vmax.f32 %v9227, 0.0
      %v9313 = vmax.f32 %v9230, 0.0
      %v9314 = vmax.f32 %v9233, 0.0
      %v9315 = vmax.f32 %v9236, 0.0
      %v9316 = vmax.f32 %v9239, 0.0
      %v9317 = vmax.f32 %v9242, 0.0
      %v9318 = vmax.f32 %v9245, 0.0
      %v9319 = vmax.f32 %v9248, 0.0
      %v9320 = vmax.f32 %v9251, 0.0
      %v9321 = vmax.f32 %v9254, 0.0
      %v9322 = vmax.f32 %v9257, 0.0
      %v9323 = vmax.f32 %v9260, 0.0
      %v9324 = vmax.f32 %v9263, 0.0
      %v9325 = vmax.f32 %v9266, 0.0
      %v9326 = vmax.f32 %v9269, 0.0
      %v9327 = vmax.f32 %v9272, 0.0
      %v9328 = vmax.f32 %v9275, 0.0
      %v9329 = vmax.f32 %v9278, 0.0
      %v9330 = vmax.f32 %v9281, 0.0
      %v9331 = vmax.f32 %v9284, 0.0
      %v9332 = vmax.f32 %v9287, 0.0
      %v9333 = vmax.f32 %v9290, 0.0
      %v9334 = vmax.f32 %v9293, 0.0
      %v9335 = vmax.f32 %v9296, 0.0
      %v9336 = vmax.f32 %v9299, 0.0
      %v9337 = vmax.f32 %v9302, 0.0
      %v9338 = vmax.f32 %v9305, 0.0
      %9339 = vxpose.xlu0.b32.start [1/16] %v9307, 128
      %9340 = vxpose.xlu0.b32.cont [2/16] %v9308, 128
      %9341 = vxpose.xlu0.b32.cont [3/16] %v9309, 128
      %9342 = vxpose.xlu0.b32.cont [4/16] %v9310, 128
      %9343 = vxpose.xlu0.b32.cont [5/16] %v9311, 128
      %9344 = vxpose.xlu0.b32.cont [6/16] %v9312, 128
      %9345 = vxpose.xlu0.b32.cont [7/16] %v9313, 128
      %9346 = vxpose.xlu0.b32.cont [8/16] %v9314, 128
      %9347 = vxpose.xlu0.b32.cont [9/16] %v9315, 128
      %9348 = vxpose.xlu0.b32.cont [10/16] %v9316, 128
      %9349 = vxpose.xlu0.b32.cont [11/16] %v9317, 128
      %9350 = vxpose.xlu0.b32.cont [12/16] %v9318, 128
      %9351 = vxpose.xlu0.b32.cont [13/16] %v9319, 128
      %9352 = vxpose.xlu0.b32.cont [14/16] %v9320, 128
      %9353 = vxpose.xlu0.b32.cont [15/16] %v9321, 128
      %9354 = vxpose.xlu0.b32.end [16/16] %v9322, 128
      %v9355 = vpop.trf.xlu0
      %v9356 = vpop.trf.xlu0
      %v9357 = vpop.trf.xlu0
      %v9358 = vpop.trf.xlu0
      %v9359 = vpop.trf.xlu0
      %v9360 = vpop.trf.xlu0
      %v9361 = vpop.trf.xlu0
      %v9362 = vpop.trf.xlu0
      %v9363 = vpop.trf.xlu0
      %v9364 = vpop.trf.xlu0
      %v9365 = vpop.trf.xlu0
      %v9366 = vpop.trf.xlu0
      %v9367 = vpop.trf.xlu0
      %v9368 = vpop.trf.xlu0
      %v9369 = vpop.trf.xlu0
      %v9370 = vpop.trf.xlu0
      %9371 = vxpose.xlu0.b32.start [1/16] %v9323, 128
      %9372 = vxpose.xlu0.b32.cont [2/16] %v9324, 128
      %9373 = vxpose.xlu0.b32.cont [3/16] %v9325, 128
      %9374 = vxpose.xlu0.b32.cont [4/16] %v9326, 128
      %9375 = vxpose.xlu0.b32.cont [5/16] %v9327, 128
      %9376 = vxpose.xlu0.b32.cont [6/16] %v9328, 128
      %9377 = vxpose.xlu0.b32.cont [7/16] %v9329, 128
      %9378 = vxpose.xlu0.b32.cont [8/16] %v9330, 128
      %9379 = vxpose.xlu0.b32.cont [9/16] %v9331, 128
      %9380 = vxpose.xlu0.b32.cont [10/16] %v9332, 128
      %9381 = vxpose.xlu0.b32.cont [11/16] %v9333, 128
      %9382 = vxpose.xlu0.b32.cont [12/16] %v9334, 128
      %9383 = vxpose.xlu0.b32.cont [13/16] %v9335, 128
      %9384 = vxpose.xlu0.b32.cont [14/16] %v9336, 128
      %9385 = vxpose.xlu0.b32.cont [15/16] %v9337, 128
      %9386 = vxpose.xlu0.b32.end [16/16] %v9338, 128
      %v9387 = vpop.trf.xlu0
      %v9388 = vpop.trf.xlu0
      %v9389 = vpop.trf.xlu0
      %v9390 = vpop.trf.xlu0
      %v9391 = vpop.trf.xlu0
      %v9392 = vpop.trf.xlu0
      %v9393 = vpop.trf.xlu0
      %v9394 = vpop.trf.xlu0
      %v9395 = vpop.trf.xlu0
      %v9396 = vpop.trf.xlu0
      %v9397 = vpop.trf.xlu0
      %v9398 = vpop.trf.xlu0
      %v9399 = vpop.trf.xlu0
      %v9400 = vpop.trf.xlu0
      %v9401 = vpop.trf.xlu0
      %v9402 = vpop.trf.xlu0
      %v9405 = vrot.slane %v9387, 4
      %vm9406 = vcmask 1043456
      %v9407 = vsel %vm9406, %v9355, %v9405
      %9409 = vst [vmem:[%s278] sm:$0x77] %v9407
      %p9410 = scmp.lt.s32.totalorder %s18, 1
      %s9411 = scalar_select %p9410, %s18, 1
      %s9412 = smul.addr %s9411, 2
      %s9413 = smul.addr %s9412, 4
      %s9414 = scalar_lea.vmem %s7, %s9413
      // Predicated region
      $region49: #{fcn_forward.1} parent=47 // pred_check
        %p9415 = pneg %p188
      $region50: #{fcn_forward.1} parent=47 // pred_check_branch
        %9417 = sbr.rel (%p9415) target = $region52
      $region51: #{fcn_forward.1} parent=47 // pred_region
        _
      $region52: #{fcn_forward.1} parent=47 // pred_fallthru
        _
    $region48: #{fcn_forward.1} parent=5 // pred_fallthru
      _
    %p9418 = scmp.le.s32.totalorder 2, %s13
    // Predicated region
    $region53: #{fcn_forward.1} parent=5 // pred_check
      %p9419 = pneg %p9418
    $region54: #{fcn_forward.1} parent=5 // pred_check_branch
      %9421 = sbr.rel (%p9419) target = $region56
    $region55: #{fcn_forward.1} parent=5 // pred_region
      %s9422 = ssub.s32 %s13, 2
      // Predicated region
      $region57: #{fcn_forward.1} parent=55 // pred_check
        %p9423 = pneg %p194
      $region58: #{fcn_forward.1} parent=55 // pred_check_branch
        %9425 = sbr.rel (%p9423) target = $region60
      $region59: #{fcn_forward.1} parent=55 // pred_region
        %p9426 = scmp.lt.s32.totalorder %s19, 1
        %s9427 = scalar_select %p9426, %s19, 1
        %s9428 = smul.addr %s9427, 2
        %s9429 = smul.addr %s9428, 4
        %s9430 = scalar_lea.vmem %s7, %s9429
      $region60: #{fcn_forward.1} parent=55 // pred_fallthru
        _
    $region56: #{fcn_forward.1} parent=5 // pred_fallthru
      _
  $region6: #{fcn_forward.1} parent=0 // loop_footer
    %s17 = sadd.s32 1, %s13
  $region7: #{fcn_forward.1} parent=0 // loop_footer_branch
    %12 = sbr.rel target = $region3
  $region8: #{fcn_forward.1} parent=0 // loop_exit
    _

</llo_original>
